<compile_context>
chip_gen: v5e
topology: v5e:2x2
jax: 0.10.0
libtpu: 0.0.40
codegen_flags: <defaults>
</compile_context>

<pallas_src>
from functools import partial

import jax
import jax.numpy as jnp
from jax.experimental import pallas as pl
from jax.experimental.pallas import tpu as pltpu


_VMEM = pl.BlockSpec(memory_space=pltpu.MemorySpace.VMEM)
_HBM = pl.BlockSpec(memory_space=pl.ANY)


# --------------------------------------------------------------------------
# One 3x3 / stride-1 / pad-1 conv + bias + ReLU on a flat (M, Ci) activation.
# Row m of `a` is spatial position (n, w), m = n*W + w.  One MXU matmul per
# layer (im2col LHS built from cheap row shifts + border masks).
# --------------------------------------------------------------------------
def _conv3x3_relu(a, w9, b, W, mask_l, mask_r):
    M, Ci = a.shape
    taps = []
    for dy in range(3):
        for dx in range(3):
            s = (dy - 1) * W + (dx - 1)
            if s > 0:
                t = jnp.concatenate(
                    [a[s:, :], jnp.zeros((s, Ci), a.dtype)], axis=0)
            elif s < 0:
                t = jnp.concatenate(
                    [jnp.zeros((-s, Ci), a.dtype), a[:M + s, :]], axis=0)
            else:
                t = a
            # The zero blocks above already give the vertical (top/bottom) zero
            # padding; the masks give the horizontal (left/right) one and also
            # kill the row-wrap of the flat shift.
            if dx == 0:
                t = jnp.where(mask_l, t, 0.0)
            elif dx == 2:
                t = jnp.where(mask_r, t, 0.0)
            taps.append(t.astype(jnp.bfloat16))
    lhs = jnp.concatenate(taps, axis=1)                        # (M, 9*Ci) bf16
    acc = jnp.dot(lhs, w9, preferred_element_type=jnp.float32)  # f32 accum
    return jnp.maximum(acc + b, 0.0)


# --------------------------------------------------------------------------
# Fully fused forward pass: 5 convs -> NCHW flatten -> fcl -> p / rb heads.
# --------------------------------------------------------------------------
def _cnn_forward_kernel(W,
                        x9_ref,
                        w1_ref, b1_ref, w2_ref, b2_ref, w3_ref, b3_ref,
                        w4_ref, b4_ref, w5_hbm, b5_ref,
                        fw1_hbm, fb1_ref, fw2_ref, fb2_ref,
                        pw_ref, pb_ref, rw_ref, rbb_ref,
                        p_out, rb_out,
                        w5_buf, fw1_buf, dma_sem):
    M = x9_ref.shape[0]

    # Kick off background DMA of the two big, late-use weights so their HBM
    # traffic overlaps the layer 1-4 compute.
    cp_w5 = pltpu.make_async_copy(w5_hbm, w5_buf, dma_sem.at[0])
    cp_w5.start()
    cp_f1 = pltpu.make_async_copy(fw1_hbm, fw1_buf, dma_sem.at[1])
    cp_f1.start()

    # Horizontal border masks shared by all conv layers (hoisted).
    wcol = jax.lax.broadcasted_iota(jnp.int32, (M, 1), 0) % W
    mask_l = wcol >= 1           # taps that read column w-1
    mask_r = wcol < (W - 1)      # taps that read column w+1

    # Layer 1: the (M, 9K) im2col LHS was built on the host from the input.
    a = jnp.maximum(
        jnp.dot(x9_ref[...], w1_ref[...], preferred_element_type=jnp.float32)
        + b1_ref[...], 0.0)

    # Layers 2-4.
    for w_ref, b_ref in ((w2_ref, b2_ref), (w3_ref, b3_ref), (w4_ref, b4_ref)):
        a = _conv3x3_relu(a, w_ref[...], b_ref[...], W, mask_l, mask_r)

    # Layer 5: its weight arrives via the background DMA.
    cp_w5.wait()
    a = _conv3x3_relu(a, w5_buf[...], b5_ref[...], W, mask_l, mask_r)  # (M, C5)

    # ---- flatten: PyTorch `x.view(x.shape[-1], -1)` on the contiguous NCHW
    # tensor:  x_flat[i, cc*M + m] = a[m, i*CB + cc].  Done as a 2-D transpose
    # + sublane-split reshape + lane concatenation so fcl-1 becomes ONE
    # (W, CB*M) x (CB*M, 100) matmul (no per-channel-block loop).
    C5 = a.shape[1]
    CB = C5 // W
    yt3 = jnp.transpose(a).reshape(W, CB, M)                  # [i, cc, m]
    xflat = jnp.concatenate([yt3[:, cc, :] for cc in range(CB)], axis=1)
    xflat = xflat.astype(jnp.bfloat16)                        # (W, CB*M)

    cp_f1.wait()
    h = jnp.maximum(
        jnp.dot(xflat, fw1_buf[...], preferred_element_type=jnp.float32)
        + fb1_ref[...], 0.0)
    z = (jnp.dot(h.astype(jnp.bfloat16), fw2_ref[...],
                 preferred_element_type=jnp.float32) + fb2_ref[...])
    zb = z.astype(jnp.bfloat16)

    # p head: exact sigmoid (tiny vector, exact divide is free).
    p_logit = (jnp.dot(zb, pw_ref[...], preferred_element_type=jnp.float32)
               + pb_ref[...])
    p_out[...] = 1.0 / (1.0 + jnp.exp(-p_logit))

    # rb head: exact softmax over dim 1.
    r_logit = (jnp.dot(zb, rw_ref[...], preferred_element_type=jnp.float32)
               + rbb_ref[...])
    r_max = jnp.max(r_logit, axis=1, keepdims=True)
    e = jnp.exp(r_logit - r_max)
    rb_out[...] = e / jnp.sum(e, axis=1, keepdims=True)


# --------------------------------------------------------------------------
# Parameters (deterministic synthetic init; shapes from CNN_model.__init__).
# Conv kernels in (kh, kw, Ci, Co) layout, Linear weights in (din, dout).
# --------------------------------------------------------------------------
def init_params(key, K, N):
    chans = [K, 16, 32, 64, 128, 256]
    keys = iter(jax.random.split(key, 32))

    def conv_init(ci, co):
        w = jax.random.normal(next(keys), (3, 3, ci, co), jnp.float32) * 0.05
        b = jax.random.normal(next(keys), (co,), jnp.float32) * 0.05
        return w, b

    def lin_init(din, dout):
        w = jax.random.normal(next(keys), (din, dout), jnp.float32) * (din ** -0.5)
        b = jax.random.normal(next(keys), (dout,), jnp.float32) * 0.05
        return w, b

    return {
        "convs": [conv_init(ci, co) for ci, co in zip(chans[:-1], chans[1:])],
        "fcl": [lin_init(N * 256, 100), lin_init(100, 50)],
        "p": lin_init(50, 1),
        "rb": lin_init(50, K),
    }


# --------------------------------------------------------------------------
# Wrapper matching CNN_model.forward.  csi: (1, K, N, W) float32 NCHW.
# --------------------------------------------------------------------------
def cnn_model_forward(csi, params):
    B, K, N, W = csi.shape
    assert B == 1, "reference model's view / fcl dims imply batch=1"
    H, M = N, N * W

    conv_ws = [w for w, _ in params["convs"]]
    conv_bs = [b.reshape(1, -1) for _, b in params["convs"]]
    # Host-side prep: (3,3,Ci,Co) -> (9*Ci, Co) im2col weight layout, bf16
    # matmul operands (f32 accumulation stays in-kernel).  Row (dy*3+dx)*Ci + c
    # matches the in-kernel tap concatenation order.
    w9s = [w.reshape(9 * w.shape[2], w.shape[3]).astype(jnp.bfloat16)
           for w in conv_ws]

    C5 = conv_ws[-1].shape[-1]
    assert C5 % W == 0, "flatten rows must align with channel blocks"

    (w1, b1), (w2, b2) = params["fcl"]
    wp, bp = params["p"]
    wrb, brb = params["rb"]
    assert w1.shape[0] == C5 * H                      # == N * 256

    # Layer-1 im2col of the input, built on the host.
    x = jnp.transpose(csi[0], (1, 2, 0))              # (N, W, K) channels-last
    xp = jnp.pad(x, ((1, 1), (1, 1), (0, 0)))
    x9 = jnp.concatenate(
        [xp[dy:dy + H, dx:dx + W, :].reshape(M, K)
         for dy in range(3) for dx in range(3)],
        axis=1).astype(jnp.bfloat16)                  # (M, 9K)

    fw1 = w1.astype(jnp.bfloat16)                     # kept as (N*256, 100)

    out_shape = (jax.ShapeDtypeStruct((W, wp.shape[1]), jnp.float32),
                 jax.ShapeDtypeStruct((W, wrb.shape[1]), jnp.float32))

    p, rb = pl.pallas_call(
        partial(_cnn_forward_kernel, W),
        out_shape=out_shape,
        in_specs=[_VMEM,                               # x9 (layer-1 im2col)
                  _VMEM, _VMEM, _VMEM, _VMEM,          # w9_1, b1, w9_2, b2
                  _VMEM, _VMEM, _VMEM, _VMEM,          # w9_3, b3, w9_4, b4
                  _HBM, _VMEM,                         # w9_5 (HBM), b5
                  _HBM, _VMEM,                         # fw1  (HBM), fb1
                  _VMEM, _VMEM, _VMEM, _VMEM, _VMEM, _VMEM],
        out_specs=(_VMEM, _VMEM),
        scratch_shapes=[pltpu.VMEM(w9s[4].shape, jnp.bfloat16),
                        pltpu.VMEM(fw1.shape, jnp.bfloat16),
                        pltpu.SemaphoreType.DMA((2,))],
    )(x9,
      w9s[0], conv_bs[0], w9s[1], conv_bs[1],
      w9s[2], conv_bs[2], w9s[3], conv_bs[3],
      w9s[4], conv_bs[4],
      fw1, b1.reshape(1, -1),
      w2.astype(jnp.bfloat16), b2.reshape(1, -1),
      wp.astype(jnp.bfloat16), bp.reshape(1, -1),
      wrb.astype(jnp.bfloat16), brb.reshape(1, -1))
    return p, rb


# --------------------------------------------------------------------------
# Pure-JAX f32 reference of the same forward pass (for a numeric cross-check).
# --------------------------------------------------------------------------
def _reference_forward(csi, params):
    x = jnp.transpose(csi, (0, 2, 3, 1))              # NHWC
    for w, b in params["convs"]:
        x = jax.lax.conv_general_dilated(
            x, w, window_strides=(1, 1), padding="SAME",
            dimension_numbers=("NHWC", "HWIO", "NHWC"))
        x = jnp.maximum(x + b, 0.0)
    x_nchw = jnp.transpose(x, (0, 3, 1, 2))           # (1, 256, N, W)
    W = x_nchw.shape[-1]
    xf = x_nchw.reshape(W, -1)                        # == torch .view(W, -1)
    (w1, b1), (w2, b2) = params["fcl"]
    h = jnp.maximum(xf @ w1 + b1, 0.0)
    z = h @ w2 + b2
    p = jax.nn.sigmoid(z @ params["p"][0] + params["p"][1])
    rb = jax.nn.softmax(z @ params["rb"][0] + params["rb"][1], axis=1)
    return p, rb


if __name__ == "__main__":
    key = jax.random.PRNGKey(0)
    K, N, W = 4, 8, 8                                 # net_par = {'K': 4, 'N': 8}
    k_in, k_par = jax.random.split(key)

    csi = jax.random.normal(k_in, (1, K, N, W), jnp.float32)
    params = init_params(k_par, K, N)

    fwd = jax.jit(cnn_model_forward)
    p, rb = fwd(csi, params)
    jax.block_until_ready((p, rb))

    assert p.shape == (W, 1) and rb.shape == (W, K)
    assert bool(jnp.all(jnp.isfinite(p))) and bool(jnp.all(jnp.isfinite(rb)))
    assert bool(jnp.allclose(jnp.sum(rb, axis=1), 1.0, atol=1e-5))

    # Cross-check against the pure-JAX f32 reference (kernel uses bf16 matmul
    # operands with f32 accumulation -> loose tolerance on [0,1] outputs).
    p_ref, rb_ref = _reference_forward(csi, params)
    assert bool(jnp.allclose(p, p_ref, atol=5e-2)), "p mismatch vs reference"
    assert bool(jnp.allclose(rb, rb_ref, atol=5e-2)), "rb mismatch vs reference"

    print("KERNEL_OK")
</pallas_src>

<mosaic_0001>
module attributes {stable_mosaic.version = 11 : i64} {
  func.func @_cnn_forward_kernel(%arg0: memref<64x36xbf16, #tpu.memory_space<vmem>>, %arg1: memref<36x16xbf16, #tpu.memory_space<vmem>>, %arg2: memref<1x16xf32, #tpu.memory_space<vmem>>, %arg3: memref<144x32xbf16, #tpu.memory_space<vmem>>, %arg4: memref<1x32xf32, #tpu.memory_space<vmem>>, %arg5: memref<288x64xbf16, #tpu.memory_space<vmem>>, %arg6: memref<1x64xf32, #tpu.memory_space<vmem>>, %arg7: memref<576x128xbf16, #tpu.memory_space<vmem>>, %arg8: memref<1x128xf32, #tpu.memory_space<vmem>>, %arg9: memref<1152x256xbf16, #tpu.memory_space<any>>, %arg10: memref<1x256xf32, #tpu.memory_space<vmem>>, %arg11: memref<2048x100xbf16, #tpu.memory_space<any>>, %arg12: memref<1x100xf32, #tpu.memory_space<vmem>>, %arg13: memref<100x50xbf16, #tpu.memory_space<vmem>>, %arg14: memref<1x50xf32, #tpu.memory_space<vmem>>, %arg15: memref<50x1xbf16, #tpu.memory_space<vmem>>, %arg16: memref<1x1xf32, #tpu.memory_space<vmem>>, %arg17: memref<50x4xbf16, #tpu.memory_space<vmem>>, %arg18: memref<1x4xf32, #tpu.memory_space<vmem>>, %arg19: memref<8x1xf32, #tpu.memory_space<vmem>>, %arg20: memref<8x4xf32, #tpu.memory_space<vmem>>, %arg21: memref<1152x256xbf16, #tpu.memory_space<vmem>>, %arg22: memref<2048x100xbf16, #tpu.memory_space<vmem>>, %arg23: memref<2x!tpu.dma_semaphore, #tpu.memory_space<semaphore_mem>>) attributes {dimension_semantics = [], scalar_prefetch = 0 : i64, scratch_operands = 3 : i64, tpu.core_type = #tpu.core_type<tc>} {
    %c0_i32 = arith.constant 0 : i32
    %0 = tpu.memref_slice %arg23[%c0_i32] : memref<2x!tpu.dma_semaphore, #tpu.memory_space<semaphore_mem>> -> memref<1x!tpu.dma_semaphore, #tpu.memory_space<semaphore_mem>>
    %1 = tpu.memref_squeeze %0 : memref<1x!tpu.dma_semaphore, #tpu.memory_space<semaphore_mem>> -> memref<!tpu.dma_semaphore, #tpu.memory_space<semaphore_mem>>
    tpu.enqueue_dma source(%arg9 : memref<1152x256xbf16, #tpu.memory_space<any>>) target(%arg21 : memref<1152x256xbf16, #tpu.memory_space<vmem>>) target_semaphore(%1 : memref<!tpu.dma_semaphore, #tpu.memory_space<semaphore_mem>>)
    %c1_i32 = arith.constant 1 : i32
    %2 = tpu.memref_slice %arg23[%c1_i32] : memref<2x!tpu.dma_semaphore, #tpu.memory_space<semaphore_mem>> -> memref<1x!tpu.dma_semaphore, #tpu.memory_space<semaphore_mem>>
    %3 = tpu.memref_squeeze %2 : memref<1x!tpu.dma_semaphore, #tpu.memory_space<semaphore_mem>> -> memref<!tpu.dma_semaphore, #tpu.memory_space<semaphore_mem>>
    tpu.enqueue_dma source(%arg11 : memref<2048x100xbf16, #tpu.memory_space<any>>) target(%arg22 : memref<2048x100xbf16, #tpu.memory_space<vmem>>) target_semaphore(%3 : memref<!tpu.dma_semaphore, #tpu.memory_space<semaphore_mem>>)
    %4 = tpu.iota {dimensions = array<i32: 0>} : vector<64x1xi32>
    %c8_i32 = arith.constant 8 : i32
    %c0_i32_0 = arith.constant 0 : i32
    %5 = arith.cmpi eq, %c8_i32, %c0_i32_0 : i32
    %c1_i32_1 = arith.constant 1 : i32
    %6 = arith.select %5, %c1_i32_1, %c8_i32 : i32
    %7 = vector.broadcast %6 : i32 to vector<64x1xi32>
    %8 = arith.remsi %4, %7 : vector<64x1xi32>
    %c0_i32_2 = arith.constant 0 : i32
    %9 = vector.broadcast %c0_i32_2 : i32 to vector<64x1xi32>
    %10 = arith.cmpi ne, %8, %9 : vector<64x1xi32>
    %c0_i32_3 = arith.constant 0 : i32
    %11 = vector.broadcast %c0_i32_3 : i32 to vector<64x1xi32>
    %12 = arith.cmpi slt, %8, %11 : vector<64x1xi32>
    %c0_i32_4 = arith.constant 0 : i32
    %13 = arith.cmpi slt, %6, %c0_i32_4 : i32
    %14 = vector.broadcast %13 : i1 to vector<64x1xi1>
    %15 = vector.broadcast %14 : vector<64x1xi1> to vector<64x1xi1>
    %16 = arith.xori %12, %15 : vector<64x1xi1>
    %17 = arith.andi %16, %10 : vector<64x1xi1>
    %18 = vector.broadcast %6 : i32 to vector<64x1xi32>
    %19 = arith.addi %8, %18 : vector<64x1xi32>
    %20 = arith.select %17, %19, %8 : vector<64x1xi1>, vector<64x1xi32>
    %c1_i32_5 = arith.constant 1 : i32
    %21 = vector.broadcast %c1_i32_5 : i32 to vector<64x1xi32>
    %22 = arith.cmpi sge, %20, %21 : vector<64x1xi32>
    %c7_i32 = arith.constant 7 : i32
    %23 = vector.broadcast %c7_i32 : i32 to vector<64x1xi32>
    %24 = arith.cmpi slt, %20, %23 : vector<64x1xi32>
    %c0 = arith.constant 0 : index
    %c0_6 = arith.constant 0 : index
    %25 = vector.load %arg0[%c0, %c0_6] : memref<64x36xbf16, #tpu.memory_space<vmem>>, vector<64x36xbf16>
    %c0_7 = arith.constant 0 : index
    %c0_8 = arith.constant 0 : index
    %26 = vector.load %arg1[%c0_7, %c0_8] : memref<36x16xbf16, #tpu.memory_space<vmem>>, vector<36x16xbf16>
    %cst = arith.constant dense<0.000000e+00> : vector<64x16xf32>
    %27 = tpu.matmul %25, %26, %cst {dimension_numbers = #tpu.dot_dimension_numbers<[1], [0], [0], [1], [0, 0, 1, 1], [], []>} : vector<64x36xbf16>, vector<36x16xbf16>, vector<64x16xf32> -> vector<64x16xf32>
    %c0_9 = arith.constant 0 : index
    %c0_10 = arith.constant 0 : index
    %28 = vector.load %arg2[%c0_9, %c0_10] : memref<1x16xf32, #tpu.memory_space<vmem>>, vector<1x16xf32>
    %29 = vector.broadcast %28 : vector<1x16xf32> to vector<64x16xf32>
    %30 = arith.addf %27, %29 : vector<64x16xf32>
    %cst_11 = arith.constant 0.000000e+00 : f32
    %31 = vector.broadcast %cst_11 : f32 to vector<64x16xf32>
    %32 = arith.maximumf %30, %31 : vector<64x16xf32>
    %c0_12 = arith.constant 0 : index
    %c0_13 = arith.constant 0 : index
    %33 = vector.load %arg3[%c0_12, %c0_13] : memref<144x32xbf16, #tpu.memory_space<vmem>>, vector<144x32xbf16>
    %c0_14 = arith.constant 0 : index
    %c0_15 = arith.constant 0 : index
    %34 = vector.load %arg4[%c0_14, %c0_15] : memref<1x32xf32, #tpu.memory_space<vmem>>, vector<1x32xf32>
    %cst_16 = arith.constant 0.000000e+00 : f32
    %35 = vector.broadcast %cst_16 : f32 to vector<9x16xf32>
    %36 = vector.extract_strided_slice %32 {offsets = [0, 0], sizes = [55, 16], strides = [1, 1]} : vector<64x16xf32> to vector<55x16xf32>
    %37 = tpu.concatenate %35, %36 in 0 : vector<9x16xf32>, vector<55x16xf32> -> vector<64x16xf32>
    %cst_17 = arith.constant 0.000000e+00 : f32
    %38 = vector.shape_cast %22 : vector<64x1xi1> to vector<64x1xi1>
    %39 = vector.broadcast %38 : vector<64x1xi1> to vector<64x16xi1>
    %40 = vector.broadcast %cst_17 : f32 to vector<64x16xf32>
    %41 = arith.select %39, %37, %40 : vector<64x16xi1>, vector<64x16xf32>
    %42 = arith.truncf %41 : vector<64x16xf32> to vector<64x16xbf16>
    %cst_18 = arith.constant 0.000000e+00 : f32
    %43 = vector.broadcast %cst_18 : f32 to vector<8x16xf32>
    %44 = vector.extract_strided_slice %32 {offsets = [0, 0], sizes = [56, 16], strides = [1, 1]} : vector<64x16xf32> to vector<56x16xf32>
    %45 = tpu.concatenate %43, %44 in 0 : vector<8x16xf32>, vector<56x16xf32> -> vector<64x16xf32>
    %46 = arith.truncf %45 : vector<64x16xf32> to vector<64x16xbf16>
    %cst_19 = arith.constant 0.000000e+00 : f32
    %47 = vector.broadcast %cst_19 : f32 to vector<7x16xf32>
    %48 = vector.extract_strided_slice %32 {offsets = [0, 0], sizes = [57, 16], strides = [1, 1]} : vector<64x16xf32> to vector<57x16xf32>
    %49 = tpu.concatenate %47, %48 in 0 : vector<7x16xf32>, vector<57x16xf32> -> vector<64x16xf32>
    %cst_20 = arith.constant 0.000000e+00 : f32
    %50 = vector.shape_cast %24 : vector<64x1xi1> to vector<64x1xi1>
    %51 = vector.broadcast %50 : vector<64x1xi1> to vector<64x16xi1>
    %52 = vector.broadcast %cst_20 : f32 to vector<64x16xf32>
    %53 = arith.select %51, %49, %52 : vector<64x16xi1>, vector<64x16xf32>
    %54 = arith.truncf %53 : vector<64x16xf32> to vector<64x16xbf16>
    %cst_21 = arith.constant 0.000000e+00 : f32
    %55 = vector.broadcast %cst_21 : f32 to vector<1x16xf32>
    %56 = vector.extract_strided_slice %32 {offsets = [0, 0], sizes = [63, 16], strides = [1, 1]} : vector<64x16xf32> to vector<63x16xf32>
    %57 = tpu.concatenate %55, %56 in 0 : vector<1x16xf32>, vector<63x16xf32> -> vector<64x16xf32>
    %cst_22 = arith.constant 0.000000e+00 : f32
    %58 = vector.shape_cast %22 : vector<64x1xi1> to vector<64x1xi1>
    %59 = vector.broadcast %58 : vector<64x1xi1> to vector<64x16xi1>
    %60 = vector.broadcast %cst_22 : f32 to vector<64x16xf32>
    %61 = arith.select %59, %57, %60 : vector<64x16xi1>, vector<64x16xf32>
    %62 = arith.truncf %61 : vector<64x16xf32> to vector<64x16xbf16>
    %63 = arith.truncf %32 : vector<64x16xf32> to vector<64x16xbf16>
    %64 = vector.extract_strided_slice %32 {offsets = [1, 0], sizes = [63, 16], strides = [1, 1]} : vector<64x16xf32> to vector<63x16xf32>
    %cst_23 = arith.constant 0.000000e+00 : f32
    %65 = vector.broadcast %cst_23 : f32 to vector<1x16xf32>
    %66 = tpu.concatenate %64, %65 in 0 : vector<63x16xf32>, vector<1x16xf32> -> vector<64x16xf32>
    %cst_24 = arith.constant 0.000000e+00 : f32
    %67 = vector.shape_cast %24 : vector<64x1xi1> to vector<64x1xi1>
    %68 = vector.broadcast %67 : vector<64x1xi1> to vector<64x16xi1>
    %69 = vector.broadcast %cst_24 : f32 to vector<64x16xf32>
    %70 = arith.select %68, %66, %69 : vector<64x16xi1>, vector<64x16xf32>
    %71 = arith.truncf %70 : vector<64x16xf32> to vector<64x16xbf16>
    %72 = vector.extract_strided_slice %32 {offsets = [7, 0], sizes = [57, 16], strides = [1, 1]} : vector<64x16xf32> to vector<57x16xf32>
    %cst_25 = arith.constant 0.000000e+00 : f32
    %73 = vector.broadcast %cst_25 : f32 to vector<7x16xf32>
    %74 = tpu.concatenate %72, %73 in 0 : vector<57x16xf32>, vector<7x16xf32> -> vector<64x16xf32>
    %cst_26 = arith.constant 0.000000e+00 : f32
    %75 = vector.shape_cast %22 : vector<64x1xi1> to vector<64x1xi1>
    %76 = vector.broadcast %75 : vector<64x1xi1> to vector<64x16xi1>
    %77 = vector.broadcast %cst_26 : f32 to vector<64x16xf32>
    %78 = arith.select %76, %74, %77 : vector<64x16xi1>, vector<64x16xf32>
    %79 = arith.truncf %78 : vector<64x16xf32> to vector<64x16xbf16>
    %80 = vector.extract_strided_slice %32 {offsets = [8, 0], sizes = [56, 16], strides = [1, 1]} : vector<64x16xf32> to vector<56x16xf32>
    %cst_27 = arith.constant 0.000000e+00 : f32
    %81 = vector.broadcast %cst_27 : f32 to vector<8x16xf32>
    %82 = tpu.concatenate %80, %81 in 0 : vector<56x16xf32>, vector<8x16xf32> -> vector<64x16xf32>
    %83 = arith.truncf %82 : vector<64x16xf32> to vector<64x16xbf16>
    %84 = vector.extract_strided_slice %32 {offsets = [9, 0], sizes = [55, 16], strides = [1, 1]} : vector<64x16xf32> to vector<55x16xf32>
    %cst_28 = arith.constant 0.000000e+00 : f32
    %85 = vector.broadcast %cst_28 : f32 to vector<9x16xf32>
    %86 = tpu.concatenate %84, %85 in 0 : vector<55x16xf32>, vector<9x16xf32> -> vector<64x16xf32>
    %cst_29 = arith.constant 0.000000e+00 : f32
    %87 = vector.shape_cast %24 : vector<64x1xi1> to vector<64x1xi1>
    %88 = vector.broadcast %87 : vector<64x1xi1> to vector<64x16xi1>
    %89 = vector.broadcast %cst_29 : f32 to vector<64x16xf32>
    %90 = arith.select %88, %86, %89 : vector<64x16xi1>, vector<64x16xf32>
    %91 = arith.truncf %90 : vector<64x16xf32> to vector<64x16xbf16>
    %92 = tpu.concatenate %42, %46, %54, %62, %63, %71, %79, %83, %91 in 1 : vector<64x16xbf16>, vector<64x16xbf16>, vector<64x16xbf16>, vector<64x16xbf16>, vector<64x16xbf16>, vector<64x16xbf16>, vector<64x16xbf16>, vector<64x16xbf16>, vector<64x16xbf16> -> vector<64x144xbf16>
    %cst_30 = arith.constant dense<0.000000e+00> : vector<64x32xf32>
    %93 = tpu.matmul %92, %33, %cst_30 {dimension_numbers = #tpu.dot_dimension_numbers<[1], [0], [0], [1], [0, 0, 1, 1], [], []>} : vector<64x144xbf16>, vector<144x32xbf16>, vector<64x32xf32> -> vector<64x32xf32>
    %94 = vector.broadcast %34 : vector<1x32xf32> to vector<64x32xf32>
    %95 = arith.addf %93, %94 : vector<64x32xf32>
    %cst_31 = arith.constant 0.000000e+00 : f32
    %96 = vector.broadcast %cst_31 : f32 to vector<64x32xf32>
    %97 = arith.maximumf %95, %96 : vector<64x32xf32>
    %c0_32 = arith.constant 0 : index
    %c0_33 = arith.constant 0 : index
    %98 = vector.load %arg5[%c0_32, %c0_33] : memref<288x64xbf16, #tpu.memory_space<vmem>>, vector<288x64xbf16>
    %c0_34 = arith.constant 0 : index
    %c0_35 = arith.constant 0 : index
    %99 = vector.load %arg6[%c0_34, %c0_35] : memref<1x64xf32, #tpu.memory_space<vmem>>, vector<1x64xf32>
    %cst_36 = arith.constant 0.000000e+00 : f32
    %100 = vector.broadcast %cst_36 : f32 to vector<9x32xf32>
    %101 = vector.extract_strided_slice %97 {offsets = [0, 0], sizes = [55, 32], strides = [1, 1]} : vector<64x32xf32> to vector<55x32xf32>
    %102 = tpu.concatenate %100, %101 in 0 : vector<9x32xf32>, vector<55x32xf32> -> vector<64x32xf32>
    %cst_37 = arith.constant 0.000000e+00 : f32
    %103 = vector.shape_cast %22 : vector<64x1xi1> to vector<64x1xi1>
    %104 = vector.broadcast %103 : vector<64x1xi1> to vector<64x32xi1>
    %105 = vector.broadcast %cst_37 : f32 to vector<64x32xf32>
    %106 = arith.select %104, %102, %105 : vector<64x32xi1>, vector<64x32xf32>
    %107 = arith.truncf %106 : vector<64x32xf32> to vector<64x32xbf16>
    %cst_38 = arith.constant 0.000000e+00 : f32
    %108 = vector.broadcast %cst_38 : f32 to vector<8x32xf32>
    %109 = vector.extract_strided_slice %97 {offsets = [0, 0], sizes = [56, 32], strides = [1, 1]} : vector<64x32xf32> to vector<56x32xf32>
    %110 = tpu.concatenate %108, %109 in 0 : vector<8x32xf32>, vector<56x32xf32> -> vector<64x32xf32>
    %111 = arith.truncf %110 : vector<64x32xf32> to vector<64x32xbf16>
    %cst_39 = arith.constant 0.000000e+00 : f32
    %112 = vector.broadcast %cst_39 : f32 to vector<7x32xf32>
    %113 = vector.extract_strided_slice %97 {offsets = [0, 0], sizes = [57, 32], strides = [1, 1]} : vector<64x32xf32> to vector<57x32xf32>
    %114 = tpu.concatenate %112, %113 in 0 : vector<7x32xf32>, vector<57x32xf32> -> vector<64x32xf32>
    %cst_40 = arith.constant 0.000000e+00 : f32
    %115 = vector.shape_cast %24 : vector<64x1xi1> to vector<64x1xi1>
    %116 = vector.broadcast %115 : vector<64x1xi1> to vector<64x32xi1>
    %117 = vector.broadcast %cst_40 : f32 to vector<64x32xf32>
    %118 = arith.select %116, %114, %117 : vector<64x32xi1>, vector<64x32xf32>
    %119 = arith.truncf %118 : vector<64x32xf32> to vector<64x32xbf16>
    %cst_41 = arith.constant 0.000000e+00 : f32
    %120 = vector.broadcast %cst_41 : f32 to vector<1x32xf32>
    %121 = vector.extract_strided_slice %97 {offsets = [0, 0], sizes = [63, 32], strides = [1, 1]} : vector<64x32xf32> to vector<63x32xf32>
    %122 = tpu.concatenate %120, %121 in 0 : vector<1x32xf32>, vector<63x32xf32> -> vector<64x32xf32>
    %cst_42 = arith.constant 0.000000e+00 : f32
    %123 = vector.shape_cast %22 : vector<64x1xi1> to vector<64x1xi1>
    %124 = vector.broadcast %123 : vector<64x1xi1> to vector<64x32xi1>
    %125 = vector.broadcast %cst_42 : f32 to vector<64x32xf32>
    %126 = arith.select %124, %122, %125 : vector<64x32xi1>, vector<64x32xf32>
    %127 = arith.truncf %126 : vector<64x32xf32> to vector<64x32xbf16>
    %128 = arith.truncf %97 : vector<64x32xf32> to vector<64x32xbf16>
    %129 = vector.extract_strided_slice %97 {offsets = [1, 0], sizes = [63, 32], strides = [1, 1]} : vector<64x32xf32> to vector<63x32xf32>
    %cst_43 = arith.constant 0.000000e+00 : f32
    %130 = vector.broadcast %cst_43 : f32 to vector<1x32xf32>
    %131 = tpu.concatenate %129, %130 in 0 : vector<63x32xf32>, vector<1x32xf32> -> vector<64x32xf32>
    %cst_44 = arith.constant 0.000000e+00 : f32
    %132 = vector.shape_cast %24 : vector<64x1xi1> to vector<64x1xi1>
    %133 = vector.broadcast %132 : vector<64x1xi1> to vector<64x32xi1>
    %134 = vector.broadcast %cst_44 : f32 to vector<64x32xf32>
    %135 = arith.select %133, %131, %134 : vector<64x32xi1>, vector<64x32xf32>
    %136 = arith.truncf %135 : vector<64x32xf32> to vector<64x32xbf16>
    %137 = vector.extract_strided_slice %97 {offsets = [7, 0], sizes = [57, 32], strides = [1, 1]} : vector<64x32xf32> to vector<57x32xf32>
    %cst_45 = arith.constant 0.000000e+00 : f32
    %138 = vector.broadcast %cst_45 : f32 to vector<7x32xf32>
    %139 = tpu.concatenate %137, %138 in 0 : vector<57x32xf32>, vector<7x32xf32> -> vector<64x32xf32>
    %cst_46 = arith.constant 0.000000e+00 : f32
    %140 = vector.shape_cast %22 : vector<64x1xi1> to vector<64x1xi1>
    %141 = vector.broadcast %140 : vector<64x1xi1> to vector<64x32xi1>
    %142 = vector.broadcast %cst_46 : f32 to vector<64x32xf32>
    %143 = arith.select %141, %139, %142 : vector<64x32xi1>, vector<64x32xf32>
    %144 = arith.truncf %143 : vector<64x32xf32> to vector<64x32xbf16>
    %145 = vector.extract_strided_slice %97 {offsets = [8, 0], sizes = [56, 32], strides = [1, 1]} : vector<64x32xf32> to vector<56x32xf32>
    %cst_47 = arith.constant 0.000000e+00 : f32
    %146 = vector.broadcast %cst_47 : f32 to vector<8x32xf32>
    %147 = tpu.concatenate %145, %146 in 0 : vector<56x32xf32>, vector<8x32xf32> -> vector<64x32xf32>
    %148 = arith.truncf %147 : vector<64x32xf32> to vector<64x32xbf16>
    %149 = vector.extract_strided_slice %97 {offsets = [9, 0], sizes = [55, 32], strides = [1, 1]} : vector<64x32xf32> to vector<55x32xf32>
    %cst_48 = arith.constant 0.000000e+00 : f32
    %150 = vector.broadcast %cst_48 : f32 to vector<9x32xf32>
    %151 = tpu.concatenate %149, %150 in 0 : vector<55x32xf32>, vector<9x32xf32> -> vector<64x32xf32>
    %cst_49 = arith.constant 0.000000e+00 : f32
    %152 = vector.shape_cast %24 : vector<64x1xi1> to vector<64x1xi1>
    %153 = vector.broadcast %152 : vector<64x1xi1> to vector<64x32xi1>
    %154 = vector.broadcast %cst_49 : f32 to vector<64x32xf32>
    %155 = arith.select %153, %151, %154 : vector<64x32xi1>, vector<64x32xf32>
    %156 = arith.truncf %155 : vector<64x32xf32> to vector<64x32xbf16>
    %157 = tpu.concatenate %107, %111, %119, %127, %128, %136, %144, %148, %156 in 1 : vector<64x32xbf16>, vector<64x32xbf16>, vector<64x32xbf16>, vector<64x32xbf16>, vector<64x32xbf16>, vector<64x32xbf16>, vector<64x32xbf16>, vector<64x32xbf16>, vector<64x32xbf16> -> vector<64x288xbf16>
    %cst_50 = arith.constant dense<0.000000e+00> : vector<64x64xf32>
    %158 = tpu.matmul %157, %98, %cst_50 {dimension_numbers = #tpu.dot_dimension_numbers<[1], [0], [0], [1], [0, 0, 1, 1], [], []>} : vector<64x288xbf16>, vector<288x64xbf16>, vector<64x64xf32> -> vector<64x64xf32>
    %159 = vector.broadcast %99 : vector<1x64xf32> to vector<64x64xf32>
    %160 = arith.addf %158, %159 : vector<64x64xf32>
    %cst_51 = arith.constant 0.000000e+00 : f32
    %161 = vector.broadcast %cst_51 : f32 to vector<64x64xf32>
    %162 = arith.maximumf %160, %161 : vector<64x64xf32>
    %c0_52 = arith.constant 0 : index
    %c0_53 = arith.constant 0 : index
    %163 = vector.load %arg7[%c0_52, %c0_53] : memref<576x128xbf16, #tpu.memory_space<vmem>>, vector<576x128xbf16>
    %c0_54 = arith.constant 0 : index
    %c0_55 = arith.constant 0 : index
    %164 = vector.load %arg8[%c0_54, %c0_55] : memref<1x128xf32, #tpu.memory_space<vmem>>, vector<1x128xf32>
    %cst_56 = arith.constant 0.000000e+00 : f32
    %165 = vector.broadcast %cst_56 : f32 to vector<9x64xf32>
    %166 = vector.extract_strided_slice %162 {offsets = [0, 0], sizes = [55, 64], strides = [1, 1]} : vector<64x64xf32> to vector<55x64xf32>
    %167 = tpu.concatenate %165, %166 in 0 : vector<9x64xf32>, vector<55x64xf32> -> vector<64x64xf32>
    %cst_57 = arith.constant 0.000000e+00 : f32
    %168 = vector.shape_cast %22 : vector<64x1xi1> to vector<64x1xi1>
    %169 = vector.broadcast %168 : vector<64x1xi1> to vector<64x64xi1>
    %170 = vector.broadcast %cst_57 : f32 to vector<64x64xf32>
    %171 = arith.select %169, %167, %170 : vector<64x64xi1>, vector<64x64xf32>
    %172 = arith.truncf %171 : vector<64x64xf32> to vector<64x64xbf16>
    %cst_58 = arith.constant 0.000000e+00 : f32
    %173 = vector.broadcast %cst_58 : f32 to vector<8x64xf32>
    %174 = vector.extract_strided_slice %162 {offsets = [0, 0], sizes = [56, 64], strides = [1, 1]} : vector<64x64xf32> to vector<56x64xf32>
    %175 = tpu.concatenate %173, %174 in 0 : vector<8x64xf32>, vector<56x64xf32> -> vector<64x64xf32>
    %176 = arith.truncf %175 : vector<64x64xf32> to vector<64x64xbf16>
    %cst_59 = arith.constant 0.000000e+00 : f32
    %177 = vector.broadcast %cst_59 : f32 to vector<7x64xf32>
    %178 = vector.extract_strided_slice %162 {offsets = [0, 0], sizes = [57, 64], strides = [1, 1]} : vector<64x64xf32> to vector<57x64xf32>
    %179 = tpu.concatenate %177, %178 in 0 : vector<7x64xf32>, vector<57x64xf32> -> vector<64x64xf32>
    %cst_60 = arith.constant 0.000000e+00 : f32
    %180 = vector.shape_cast %24 : vector<64x1xi1> to vector<64x1xi1>
    %181 = vector.broadcast %180 : vector<64x1xi1> to vector<64x64xi1>
    %182 = vector.broadcast %cst_60 : f32 to vector<64x64xf32>
    %183 = arith.select %181, %179, %182 : vector<64x64xi1>, vector<64x64xf32>
    %184 = arith.truncf %183 : vector<64x64xf32> to vector<64x64xbf16>
    %cst_61 = arith.constant 0.000000e+00 : f32
    %185 = vector.broadcast %cst_61 : f32 to vector<1x64xf32>
    %186 = vector.extract_strided_slice %162 {offsets = [0, 0], sizes = [63, 64], strides = [1, 1]} : vector<64x64xf32> to vector<63x64xf32>
    %187 = tpu.concatenate %185, %186 in 0 : vector<1x64xf32>, vector<63x64xf32> -> vector<64x64xf32>
    %cst_62 = arith.constant 0.000000e+00 : f32
    %188 = vector.shape_cast %22 : vector<64x1xi1> to vector<64x1xi1>
    %189 = vector.broadcast %188 : vector<64x1xi1> to vector<64x64xi1>
    %190 = vector.broadcast %cst_62 : f32 to vector<64x64xf32>
    %191 = arith.select %189, %187, %190 : vector<64x64xi1>, vector<64x64xf32>
    %192 = arith.truncf %191 : vector<64x64xf32> to vector<64x64xbf16>
    %193 = arith.truncf %162 : vector<64x64xf32> to vector<64x64xbf16>
    %194 = vector.extract_strided_slice %162 {offsets = [1, 0], sizes = [63, 64], strides = [1, 1]} : vector<64x64xf32> to vector<63x64xf32>
    %cst_63 = arith.constant 0.000000e+00 : f32
    %195 = vector.broadcast %cst_63 : f32 to vector<1x64xf32>
    %196 = tpu.concatenate %194, %195 in 0 : vector<63x64xf32>, vector<1x64xf32> -> vector<64x64xf32>
    %cst_64 = arith.constant 0.000000e+00 : f32
    %197 = vector.shape_cast %24 : vector<64x1xi1> to vector<64x1xi1>
    %198 = vector.broadcast %197 : vector<64x1xi1> to vector<64x64xi1>
    %199 = vector.broadcast %cst_64 : f32 to vector<64x64xf32>
    %200 = arith.select %198, %196, %199 : vector<64x64xi1>, vector<64x64xf32>
    %201 = arith.truncf %200 : vector<64x64xf32> to vector<64x64xbf16>
    %202 = vector.extract_strided_slice %162 {offsets = [7, 0], sizes = [57, 64], strides = [1, 1]} : vector<64x64xf32> to vector<57x64xf32>
    %cst_65 = arith.constant 0.000000e+00 : f32
    %203 = vector.broadcast %cst_65 : f32 to vector<7x64xf32>
    %204 = tpu.concatenate %202, %203 in 0 : vector<57x64xf32>, vector<7x64xf32> -> vector<64x64xf32>
    %cst_66 = arith.constant 0.000000e+00 : f32
    %205 = vector.shape_cast %22 : vector<64x1xi1> to vector<64x1xi1>
    %206 = vector.broadcast %205 : vector<64x1xi1> to vector<64x64xi1>
    %207 = vector.broadcast %cst_66 : f32 to vector<64x64xf32>
    %208 = arith.select %206, %204, %207 : vector<64x64xi1>, vector<64x64xf32>
    %209 = arith.truncf %208 : vector<64x64xf32> to vector<64x64xbf16>
    %210 = vector.extract_strided_slice %162 {offsets = [8, 0], sizes = [56, 64], strides = [1, 1]} : vector<64x64xf32> to vector<56x64xf32>
    %cst_67 = arith.constant 0.000000e+00 : f32
    %211 = vector.broadcast %cst_67 : f32 to vector<8x64xf32>
    %212 = tpu.concatenate %210, %211 in 0 : vector<56x64xf32>, vector<8x64xf32> -> vector<64x64xf32>
    %213 = arith.truncf %212 : vector<64x64xf32> to vector<64x64xbf16>
    %214 = vector.extract_strided_slice %162 {offsets = [9, 0], sizes = [55, 64], strides = [1, 1]} : vector<64x64xf32> to vector<55x64xf32>
    %cst_68 = arith.constant 0.000000e+00 : f32
    %215 = vector.broadcast %cst_68 : f32 to vector<9x64xf32>
    %216 = tpu.concatenate %214, %215 in 0 : vector<55x64xf32>, vector<9x64xf32> -> vector<64x64xf32>
    %cst_69 = arith.constant 0.000000e+00 : f32
    %217 = vector.shape_cast %24 : vector<64x1xi1> to vector<64x1xi1>
    %218 = vector.broadcast %217 : vector<64x1xi1> to vector<64x64xi1>
    %219 = vector.broadcast %cst_69 : f32 to vector<64x64xf32>
    %220 = arith.select %218, %216, %219 : vector<64x64xi1>, vector<64x64xf32>
    %221 = arith.truncf %220 : vector<64x64xf32> to vector<64x64xbf16>
    %222 = tpu.concatenate %172, %176, %184, %192, %193, %201, %209, %213, %221 in 1 : vector<64x64xbf16>, vector<64x64xbf16>, vector<64x64xbf16>, vector<64x64xbf16>, vector<64x64xbf16>, vector<64x64xbf16>, vector<64x64xbf16>, vector<64x64xbf16>, vector<64x64xbf16> -> vector<64x576xbf16>
    %cst_70 = arith.constant dense<0.000000e+00> : vector<64x128xf32>
    %223 = tpu.matmul %222, %163, %cst_70 {dimension_numbers = #tpu.dot_dimension_numbers<[1], [0], [0], [1], [0, 0, 1, 1], [], []>} : vector<64x576xbf16>, vector<576x128xbf16>, vector<64x128xf32> -> vector<64x128xf32>
    %224 = vector.broadcast %164 : vector<1x128xf32> to vector<64x128xf32>
    %225 = arith.addf %223, %224 : vector<64x128xf32>
    %cst_71 = arith.constant 0.000000e+00 : f32
    %226 = vector.broadcast %cst_71 : f32 to vector<64x128xf32>
    %227 = arith.maximumf %225, %226 : vector<64x128xf32>
    %c0_i32_72 = arith.constant 0 : i32
    %228 = tpu.memref_slice %arg23[%c0_i32_72] : memref<2x!tpu.dma_semaphore, #tpu.memory_space<semaphore_mem>> -> memref<1x!tpu.dma_semaphore, #tpu.memory_space<semaphore_mem>>
    %229 = tpu.memref_squeeze %228 : memref<1x!tpu.dma_semaphore, #tpu.memory_space<semaphore_mem>> -> memref<!tpu.dma_semaphore, #tpu.memory_space<semaphore_mem>>
    tpu.wait_dma2 semaphore(%229 : memref<!tpu.dma_semaphore, #tpu.memory_space<semaphore_mem>>) src(%arg9 : memref<1152x256xbf16, #tpu.memory_space<any>>) dst(%arg21 : memref<1152x256xbf16, #tpu.memory_space<vmem>>)
    %c0_73 = arith.constant 0 : index
    %c0_74 = arith.constant 0 : index
    %230 = vector.load %arg21[%c0_73, %c0_74] : memref<1152x256xbf16, #tpu.memory_space<vmem>>, vector<1152x256xbf16>
    %c0_75 = arith.constant 0 : index
    %c0_76 = arith.constant 0 : index
    %231 = vector.load %arg10[%c0_75, %c0_76] : memref<1x256xf32, #tpu.memory_space<vmem>>, vector<1x256xf32>
    %cst_77 = arith.constant 0.000000e+00 : f32
    %232 = vector.broadcast %cst_77 : f32 to vector<9x128xf32>
    %233 = vector.extract_strided_slice %227 {offsets = [0, 0], sizes = [55, 128], strides = [1, 1]} : vector<64x128xf32> to vector<55x128xf32>
    %234 = tpu.concatenate %232, %233 in 0 : vector<9x128xf32>, vector<55x128xf32> -> vector<64x128xf32>
    %cst_78 = arith.constant 0.000000e+00 : f32
    %235 = vector.shape_cast %22 : vector<64x1xi1> to vector<64x1xi1>
    %236 = vector.broadcast %235 : vector<64x1xi1> to vector<64x128xi1>
    %237 = vector.broadcast %cst_78 : f32 to vector<64x128xf32>
    %238 = arith.select %236, %234, %237 : vector<64x128xi1>, vector<64x128xf32>
    %239 = arith.truncf %238 : vector<64x128xf32> to vector<64x128xbf16>
    %cst_79 = arith.constant 0.000000e+00 : f32
    %240 = vector.broadcast %cst_79 : f32 to vector<8x128xf32>
    %241 = vector.extract_strided_slice %227 {offsets = [0, 0], sizes = [56, 128], strides = [1, 1]} : vector<64x128xf32> to vector<56x128xf32>
    %242 = tpu.concatenate %240, %241 in 0 : vector<8x128xf32>, vector<56x128xf32> -> vector<64x128xf32>
    %243 = arith.truncf %242 : vector<64x128xf32> to vector<64x128xbf16>
    %cst_80 = arith.constant 0.000000e+00 : f32
    %244 = vector.broadcast %cst_80 : f32 to vector<7x128xf32>
    %245 = vector.extract_strided_slice %227 {offsets = [0, 0], sizes = [57, 128], strides = [1, 1]} : vector<64x128xf32> to vector<57x128xf32>
    %246 = tpu.concatenate %244, %245 in 0 : vector<7x128xf32>, vector<57x128xf32> -> vector<64x128xf32>
    %cst_81 = arith.constant 0.000000e+00 : f32
    %247 = vector.shape_cast %24 : vector<64x1xi1> to vector<64x1xi1>
    %248 = vector.broadcast %247 : vector<64x1xi1> to vector<64x128xi1>
    %249 = vector.broadcast %cst_81 : f32 to vector<64x128xf32>
    %250 = arith.select %248, %246, %249 : vector<64x128xi1>, vector<64x128xf32>
    %251 = arith.truncf %250 : vector<64x128xf32> to vector<64x128xbf16>
    %cst_82 = arith.constant 0.000000e+00 : f32
    %252 = vector.broadcast %cst_82 : f32 to vector<1x128xf32>
    %253 = vector.extract_strided_slice %227 {offsets = [0, 0], sizes = [63, 128], strides = [1, 1]} : vector<64x128xf32> to vector<63x128xf32>
    %254 = tpu.concatenate %252, %253 in 0 : vector<1x128xf32>, vector<63x128xf32> -> vector<64x128xf32>
    %cst_83 = arith.constant 0.000000e+00 : f32
    %255 = vector.shape_cast %22 : vector<64x1xi1> to vector<64x1xi1>
    %256 = vector.broadcast %255 : vector<64x1xi1> to vector<64x128xi1>
    %257 = vector.broadcast %cst_83 : f32 to vector<64x128xf32>
    %258 = arith.select %256, %254, %257 : vector<64x128xi1>, vector<64x128xf32>
    %259 = arith.truncf %258 : vector<64x128xf32> to vector<64x128xbf16>
    %260 = arith.truncf %227 : vector<64x128xf32> to vector<64x128xbf16>
    %261 = vector.extract_strided_slice %227 {offsets = [1, 0], sizes = [63, 128], strides = [1, 1]} : vector<64x128xf32> to vector<63x128xf32>
    %cst_84 = arith.constant 0.000000e+00 : f32
    %262 = vector.broadcast %cst_84 : f32 to vector<1x128xf32>
    %263 = tpu.concatenate %261, %262 in 0 : vector<63x128xf32>, vector<1x128xf32> -> vector<64x128xf32>
    %cst_85 = arith.constant 0.000000e+00 : f32
    %264 = vector.shape_cast %24 : vector<64x1xi1> to vector<64x1xi1>
    %265 = vector.broadcast %264 : vector<64x1xi1> to vector<64x128xi1>
    %266 = vector.broadcast %cst_85 : f32 to vector<64x128xf32>
    %267 = arith.select %265, %263, %266 : vector<64x128xi1>, vector<64x128xf32>
    %268 = arith.truncf %267 : vector<64x128xf32> to vector<64x128xbf16>
    %269 = vector.extract_strided_slice %227 {offsets = [7, 0], sizes = [57, 128], strides = [1, 1]} : vector<64x128xf32> to vector<57x128xf32>
    %cst_86 = arith.constant 0.000000e+00 : f32
    %270 = vector.broadcast %cst_86 : f32 to vector<7x128xf32>
    %271 = tpu.concatenate %269, %270 in 0 : vector<57x128xf32>, vector<7x128xf32> -> vector<64x128xf32>
    %cst_87 = arith.constant 0.000000e+00 : f32
    %272 = vector.shape_cast %22 : vector<64x1xi1> to vector<64x1xi1>
    %273 = vector.broadcast %272 : vector<64x1xi1> to vector<64x128xi1>
    %274 = vector.broadcast %cst_87 : f32 to vector<64x128xf32>
    %275 = arith.select %273, %271, %274 : vector<64x128xi1>, vector<64x128xf32>
    %276 = arith.truncf %275 : vector<64x128xf32> to vector<64x128xbf16>
    %277 = vector.extract_strided_slice %227 {offsets = [8, 0], sizes = [56, 128], strides = [1, 1]} : vector<64x128xf32> to vector<56x128xf32>
    %cst_88 = arith.constant 0.000000e+00 : f32
    %278 = vector.broadcast %cst_88 : f32 to vector<8x128xf32>
    %279 = tpu.concatenate %277, %278 in 0 : vector<56x128xf32>, vector<8x128xf32> -> vector<64x128xf32>
    %280 = arith.truncf %279 : vector<64x128xf32> to vector<64x128xbf16>
    %281 = vector.extract_strided_slice %227 {offsets = [9, 0], sizes = [55, 128], strides = [1, 1]} : vector<64x128xf32> to vector<55x128xf32>
    %cst_89 = arith.constant 0.000000e+00 : f32
    %282 = vector.broadcast %cst_89 : f32 to vector<9x128xf32>
    %283 = tpu.concatenate %281, %282 in 0 : vector<55x128xf32>, vector<9x128xf32> -> vector<64x128xf32>
    %cst_90 = arith.constant 0.000000e+00 : f32
    %284 = vector.shape_cast %24 : vector<64x1xi1> to vector<64x1xi1>
    %285 = vector.broadcast %284 : vector<64x1xi1> to vector<64x128xi1>
    %286 = vector.broadcast %cst_90 : f32 to vector<64x128xf32>
    %287 = arith.select %285, %283, %286 : vector<64x128xi1>, vector<64x128xf32>
    %288 = arith.truncf %287 : vector<64x128xf32> to vector<64x128xbf16>
    %289 = tpu.concatenate %239, %243, %251, %259, %260, %268, %276, %280, %288 in 1 : vector<64x128xbf16>, vector<64x128xbf16>, vector<64x128xbf16>, vector<64x128xbf16>, vector<64x128xbf16>, vector<64x128xbf16>, vector<64x128xbf16>, vector<64x128xbf16>, vector<64x128xbf16> -> vector<64x1152xbf16>
    %cst_91 = arith.constant dense<0.000000e+00> : vector<64x256xf32>
    %290 = tpu.matmul %289, %230, %cst_91 {dimension_numbers = #tpu.dot_dimension_numbers<[1], [0], [0], [1], [0, 0, 1, 1], [], []>} : vector<64x1152xbf16>, vector<1152x256xbf16>, vector<64x256xf32> -> vector<64x256xf32>
    %291 = vector.broadcast %231 : vector<1x256xf32> to vector<64x256xf32>
    %292 = arith.addf %290, %291 : vector<64x256xf32>
    %cst_92 = arith.constant 0.000000e+00 : f32
    %293 = vector.broadcast %cst_92 : f32 to vector<64x256xf32>
    %294 = arith.maximumf %292, %293 : vector<64x256xf32>
    %295 = tpu.transpose %294, [1, 0] : vector<64x256xf32> -> vector<256x64xf32>
    %296 = vector.shape_cast %295 : vector<256x64xf32> to vector<8x32x64xf32>
    %297 = vector.extract_strided_slice %296 {offsets = [0, 0, 0], sizes = [8, 1, 64], strides = [1, 1, 1]} : vector<8x32x64xf32> to vector<8x1x64xf32>
    %298 = vector.shape_cast %297 : vector<8x1x64xf32> to vector<8x64xf32>
    %299 = vector.extract_strided_slice %296 {offsets = [0, 1, 0], sizes = [8, 1, 64], strides = [1, 1, 1]} : vector<8x32x64xf32> to vector<8x1x64xf32>
    %300 = vector.shape_cast %299 : vector<8x1x64xf32> to vector<8x64xf32>
    %301 = vector.extract_strided_slice %296 {offsets = [0, 2, 0], sizes = [8, 1, 64], strides = [1, 1, 1]} : vector<8x32x64xf32> to vector<8x1x64xf32>
    %302 = vector.shape_cast %301 : vector<8x1x64xf32> to vector<8x64xf32>
    %303 = vector.extract_strided_slice %296 {offsets = [0, 3, 0], sizes = [8, 1, 64], strides = [1, 1, 1]} : vector<8x32x64xf32> to vector<8x1x64xf32>
    %304 = vector.shape_cast %303 : vector<8x1x64xf32> to vector<8x64xf32>
    %305 = vector.extract_strided_slice %296 {offsets = [0, 4, 0], sizes = [8, 1, 64], strides = [1, 1, 1]} : vector<8x32x64xf32> to vector<8x1x64xf32>
    %306 = vector.shape_cast %305 : vector<8x1x64xf32> to vector<8x64xf32>
    %307 = vector.extract_strided_slice %296 {offsets = [0, 5, 0], sizes = [8, 1, 64], strides = [1, 1, 1]} : vector<8x32x64xf32> to vector<8x1x64xf32>
    %308 = vector.shape_cast %307 : vector<8x1x64xf32> to vector<8x64xf32>
    %309 = vector.extract_strided_slice %296 {offsets = [0, 6, 0], sizes = [8, 1, 64], strides = [1, 1, 1]} : vector<8x32x64xf32> to vector<8x1x64xf32>
    %310 = vector.shape_cast %309 : vector<8x1x64xf32> to vector<8x64xf32>
    %311 = vector.extract_strided_slice %296 {offsets = [0, 7, 0], sizes = [8, 1, 64], strides = [1, 1, 1]} : vector<8x32x64xf32> to vector<8x1x64xf32>
    %312 = vector.shape_cast %311 : vector<8x1x64xf32> to vector<8x64xf32>
    %313 = vector.extract_strided_slice %296 {offsets = [0, 8, 0], sizes = [8, 1, 64], strides = [1, 1, 1]} : vector<8x32x64xf32> to vector<8x1x64xf32>
    %314 = vector.shape_cast %313 : vector<8x1x64xf32> to vector<8x64xf32>
    %315 = vector.extract_strided_slice %296 {offsets = [0, 9, 0], sizes = [8, 1, 64], strides = [1, 1, 1]} : vector<8x32x64xf32> to vector<8x1x64xf32>
    %316 = vector.shape_cast %315 : vector<8x1x64xf32> to vector<8x64xf32>
    %317 = vector.extract_strided_slice %296 {offsets = [0, 10, 0], sizes = [8, 1, 64], strides = [1, 1, 1]} : vector<8x32x64xf32> to vector<8x1x64xf32>
    %318 = vector.shape_cast %317 : vector<8x1x64xf32> to vector<8x64xf32>
    %319 = vector.extract_strided_slice %296 {offsets = [0, 11, 0], sizes = [8, 1, 64], strides = [1, 1, 1]} : vector<8x32x64xf32> to vector<8x1x64xf32>
    %320 = vector.shape_cast %319 : vector<8x1x64xf32> to vector<8x64xf32>
    %321 = vector.extract_strided_slice %296 {offsets = [0, 12, 0], sizes = [8, 1, 64], strides = [1, 1, 1]} : vector<8x32x64xf32> to vector<8x1x64xf32>
    %322 = vector.shape_cast %321 : vector<8x1x64xf32> to vector<8x64xf32>
    %323 = vector.extract_strided_slice %296 {offsets = [0, 13, 0], sizes = [8, 1, 64], strides = [1, 1, 1]} : vector<8x32x64xf32> to vector<8x1x64xf32>
    %324 = vector.shape_cast %323 : vector<8x1x64xf32> to vector<8x64xf32>
    %325 = vector.extract_strided_slice %296 {offsets = [0, 14, 0], sizes = [8, 1, 64], strides = [1, 1, 1]} : vector<8x32x64xf32> to vector<8x1x64xf32>
    %326 = vector.shape_cast %325 : vector<8x1x64xf32> to vector<8x64xf32>
    %327 = vector.extract_strided_slice %296 {offsets = [0, 15, 0], sizes = [8, 1, 64], strides = [1, 1, 1]} : vector<8x32x64xf32> to vector<8x1x64xf32>
    %328 = vector.shape_cast %327 : vector<8x1x64xf32> to vector<8x64xf32>
    %329 = vector.extract_strided_slice %296 {offsets = [0, 16, 0], sizes = [8, 1, 64], strides = [1, 1, 1]} : vector<8x32x64xf32> to vector<8x1x64xf32>
    %330 = vector.shape_cast %329 : vector<8x1x64xf32> to vector<8x64xf32>
    %331 = vector.extract_strided_slice %296 {offsets = [0, 17, 0], sizes = [8, 1, 64], strides = [1, 1, 1]} : vector<8x32x64xf32> to vector<8x1x64xf32>
    %332 = vector.shape_cast %331 : vector<8x1x64xf32> to vector<8x64xf32>
    %333 = vector.extract_strided_slice %296 {offsets = [0, 18, 0], sizes = [8, 1, 64], strides = [1, 1, 1]} : vector<8x32x64xf32> to vector<8x1x64xf32>
    %334 = vector.shape_cast %333 : vector<8x1x64xf32> to vector<8x64xf32>
    %335 = vector.extract_strided_slice %296 {offsets = [0, 19, 0], sizes = [8, 1, 64], strides = [1, 1, 1]} : vector<8x32x64xf32> to vector<8x1x64xf32>
    %336 = vector.shape_cast %335 : vector<8x1x64xf32> to vector<8x64xf32>
    %337 = vector.extract_strided_slice %296 {offsets = [0, 20, 0], sizes = [8, 1, 64], strides = [1, 1, 1]} : vector<8x32x64xf32> to vector<8x1x64xf32>
    %338 = vector.shape_cast %337 : vector<8x1x64xf32> to vector<8x64xf32>
    %339 = vector.extract_strided_slice %296 {offsets = [0, 21, 0], sizes = [8, 1, 64], strides = [1, 1, 1]} : vector<8x32x64xf32> to vector<8x1x64xf32>
    %340 = vector.shape_cast %339 : vector<8x1x64xf32> to vector<8x64xf32>
    %341 = vector.extract_strided_slice %296 {offsets = [0, 22, 0], sizes = [8, 1, 64], strides = [1, 1, 1]} : vector<8x32x64xf32> to vector<8x1x64xf32>
    %342 = vector.shape_cast %341 : vector<8x1x64xf32> to vector<8x64xf32>
    %343 = vector.extract_strided_slice %296 {offsets = [0, 23, 0], sizes = [8, 1, 64], strides = [1, 1, 1]} : vector<8x32x64xf32> to vector<8x1x64xf32>
    %344 = vector.shape_cast %343 : vector<8x1x64xf32> to vector<8x64xf32>
    %345 = vector.extract_strided_slice %296 {offsets = [0, 24, 0], sizes = [8, 1, 64], strides = [1, 1, 1]} : vector<8x32x64xf32> to vector<8x1x64xf32>
    %346 = vector.shape_cast %345 : vector<8x1x64xf32> to vector<8x64xf32>
    %347 = vector.extract_strided_slice %296 {offsets = [0, 25, 0], sizes = [8, 1, 64], strides = [1, 1, 1]} : vector<8x32x64xf32> to vector<8x1x64xf32>
    %348 = vector.shape_cast %347 : vector<8x1x64xf32> to vector<8x64xf32>
    %349 = vector.extract_strided_slice %296 {offsets = [0, 26, 0], sizes = [8, 1, 64], strides = [1, 1, 1]} : vector<8x32x64xf32> to vector<8x1x64xf32>
    %350 = vector.shape_cast %349 : vector<8x1x64xf32> to vector<8x64xf32>
    %351 = vector.extract_strided_slice %296 {offsets = [0, 27, 0], sizes = [8, 1, 64], strides = [1, 1, 1]} : vector<8x32x64xf32> to vector<8x1x64xf32>
    %352 = vector.shape_cast %351 : vector<8x1x64xf32> to vector<8x64xf32>
    %353 = vector.extract_strided_slice %296 {offsets = [0, 28, 0], sizes = [8, 1, 64], strides = [1, 1, 1]} : vector<8x32x64xf32> to vector<8x1x64xf32>
    %354 = vector.shape_cast %353 : vector<8x1x64xf32> to vector<8x64xf32>
    %355 = vector.extract_strided_slice %296 {offsets = [0, 29, 0], sizes = [8, 1, 64], strides = [1, 1, 1]} : vector<8x32x64xf32> to vector<8x1x64xf32>
    %356 = vector.shape_cast %355 : vector<8x1x64xf32> to vector<8x64xf32>
    %357 = vector.extract_strided_slice %296 {offsets = [0, 30, 0], sizes = [8, 1, 64], strides = [1, 1, 1]} : vector<8x32x64xf32> to vector<8x1x64xf32>
    %358 = vector.shape_cast %357 : vector<8x1x64xf32> to vector<8x64xf32>
    %359 = vector.extract_strided_slice %296 {offsets = [0, 31, 0], sizes = [8, 1, 64], strides = [1, 1, 1]} : vector<8x32x64xf32> to vector<8x1x64xf32>
    %360 = vector.shape_cast %359 : vector<8x1x64xf32> to vector<8x64xf32>
    %361 = tpu.concatenate %298, %300, %302, %304, %306, %308, %310, %312, %314, %316, %318, %320, %322, %324, %326, %328 in 1 : vector<8x64xf32>, vector<8x64xf32>, vector<8x64xf32>, vector<8x64xf32>, vector<8x64xf32>, vector<8x64xf32>, vector<8x64xf32>, vector<8x64xf32>, vector<8x64xf32>, vector<8x64xf32>, vector<8x64xf32>, vector<8x64xf32>, vector<8x64xf32>, vector<8x64xf32>, vector<8x64xf32>, vector<8x64xf32> -> vector<8x1024xf32>
    %362 = tpu.concatenate %330, %332, %334, %336, %338, %340, %342, %344, %346, %348, %350, %352, %354, %356, %358, %360 in 1 : vector<8x64xf32>, vector<8x64xf32>, vector<8x64xf32>, vector<8x64xf32>, vector<8x64xf32>, vector<8x64xf32>, vector<8x64xf32>, vector<8x64xf32>, vector<8x64xf32>, vector<8x64xf32>, vector<8x64xf32>, vector<8x64xf32>, vector<8x64xf32>, vector<8x64xf32>, vector<8x64xf32>, vector<8x64xf32> -> vector<8x1024xf32>
    %363 = tpu.concatenate %361, %362 in 1 : vector<8x1024xf32>, vector<8x1024xf32> -> vector<8x2048xf32>
    %364 = arith.truncf %363 : vector<8x2048xf32> to vector<8x2048xbf16>
    %c1_i32_93 = arith.constant 1 : i32
    %365 = tpu.memref_slice %arg23[%c1_i32_93] : memref<2x!tpu.dma_semaphore, #tpu.memory_space<semaphore_mem>> -> memref<1x!tpu.dma_semaphore, #tpu.memory_space<semaphore_mem>>
    %366 = tpu.memref_squeeze %365 : memref<1x!tpu.dma_semaphore, #tpu.memory_space<semaphore_mem>> -> memref<!tpu.dma_semaphore, #tpu.memory_space<semaphore_mem>>
    tpu.wait_dma2 semaphore(%366 : memref<!tpu.dma_semaphore, #tpu.memory_space<semaphore_mem>>) src(%arg11 : memref<2048x100xbf16, #tpu.memory_space<any>>) dst(%arg22 : memref<2048x100xbf16, #tpu.memory_space<vmem>>)
    %c0_94 = arith.constant 0 : index
    %c0_95 = arith.constant 0 : index
    %367 = vector.load %arg22[%c0_94, %c0_95] : memref<2048x100xbf16, #tpu.memory_space<vmem>>, vector<2048x100xbf16>
    %cst_96 = arith.constant dense<0.000000e+00> : vector<8x100xf32>
    %368 = tpu.matmul %364, %367, %cst_96 {dimension_numbers = #tpu.dot_dimension_numbers<[1], [0], [0], [1], [0, 0, 1, 1], [], []>} : vector<8x2048xbf16>, vector<2048x100xbf16>, vector<8x100xf32> -> vector<8x100xf32>
    %c0_97 = arith.constant 0 : index
    %c0_98 = arith.constant 0 : index
    %369 = vector.load %arg12[%c0_97, %c0_98] : memref<1x100xf32, #tpu.memory_space<vmem>>, vector<1x100xf32>
    %370 = vector.broadcast %369 : vector<1x100xf32> to vector<8x100xf32>
    %371 = arith.addf %368, %370 : vector<8x100xf32>
    %cst_99 = arith.constant 0.000000e+00 : f32
    %372 = vector.broadcast %cst_99 : f32 to vector<8x100xf32>
    %373 = arith.maximumf %371, %372 : vector<8x100xf32>
    %374 = arith.truncf %373 : vector<8x100xf32> to vector<8x100xbf16>
    %c0_100 = arith.constant 0 : index
    %c0_101 = arith.constant 0 : index
    %375 = vector.load %arg13[%c0_100, %c0_101] : memref<100x50xbf16, #tpu.memory_space<vmem>>, vector<100x50xbf16>
    %cst_102 = arith.constant dense<0.000000e+00> : vector<8x50xf32>
    %376 = tpu.matmul %374, %375, %cst_102 {dimension_numbers = #tpu.dot_dimension_numbers<[1], [0], [0], [1], [0, 0, 1, 1], [], []>} : vector<8x100xbf16>, vector<100x50xbf16>, vector<8x50xf32> -> vector<8x50xf32>
    %c0_103 = arith.constant 0 : index
    %c0_104 = arith.constant 0 : index
    %377 = vector.load %arg14[%c0_103, %c0_104] : memref<1x50xf32, #tpu.memory_space<vmem>>, vector<1x50xf32>
    %378 = vector.broadcast %377 : vector<1x50xf32> to vector<8x50xf32>
    %379 = arith.addf %376, %378 : vector<8x50xf32>
    %380 = arith.truncf %379 : vector<8x50xf32> to vector<8x50xbf16>
    %c0_105 = arith.constant 0 : index
    %c0_106 = arith.constant 0 : index
    %381 = vector.load %arg15[%c0_105, %c0_106] : memref<50x1xbf16, #tpu.memory_space<vmem>>, vector<50x1xbf16>
    %cst_107 = arith.constant dense<0.000000e+00> : vector<8x1xf32>
    %382 = tpu.matmul %380, %381, %cst_107 {dimension_numbers = #tpu.dot_dimension_numbers<[1], [0], [0], [1], [0, 0, 1, 1], [], []>} : vector<8x50xbf16>, vector<50x1xbf16>, vector<8x1xf32> -> vector<8x1xf32>
    %c0_108 = arith.constant 0 : index
    %c0_109 = arith.constant 0 : index
    %383 = vector.load %arg16[%c0_108, %c0_109] : memref<1x1xf32, #tpu.memory_space<vmem>>, vector<1x1xf32>
    %384 = vector.broadcast %383 : vector<1x1xf32> to vector<8x1xf32>
    %385 = arith.addf %382, %384 : vector<8x1xf32>
    %cst_110 = arith.constant 0.000000e+00 : f32
    %386 = vector.broadcast %cst_110 : f32 to vector<8x1xf32>
    %387 = arith.subf %386, %385 : vector<8x1xf32>
    %388 = math.exp %387 : vector<8x1xf32>
    %cst_111 = arith.constant 1.000000e+00 : f32
    %389 = vector.broadcast %cst_111 : f32 to vector<8x1xf32>
    %390 = arith.addf %389, %388 : vector<8x1xf32>
    %cst_112 = arith.constant 1.000000e+00 : f32
    %391 = vector.broadcast %cst_112 : f32 to vector<8x1xf32>
    %392 = arith.divf %391, %390 : vector<8x1xf32>
    %c0_113 = arith.constant 0 : index
    %c0_114 = arith.constant 0 : index
    %393 = vector.load %arg19[%c0_113, %c0_114] : memref<8x1xf32, #tpu.memory_space<vmem>>, vector<8x1xf32>
    tpu.vector_store %arg19[%c0_113, %c0_114], %392 {strides = array<i32>} : memref<8x1xf32, #tpu.memory_space<vmem>>, vector<8x1xf32>,
    %c0_115 = arith.constant 0 : index
    %c0_116 = arith.constant 0 : index
    %394 = vector.load %arg17[%c0_115, %c0_116] : memref<50x4xbf16, #tpu.memory_space<vmem>>, vector<50x4xbf16>
    %cst_117 = arith.constant dense<0.000000e+00> : vector<8x4xf32>
    %395 = tpu.matmul %380, %394, %cst_117 {dimension_numbers = #tpu.dot_dimension_numbers<[1], [0], [0], [1], [0, 0, 1, 1], [], []>} : vector<8x50xbf16>, vector<50x4xbf16>, vector<8x4xf32> -> vector<8x4xf32>
    %c0_118 = arith.constant 0 : index
    %c0_119 = arith.constant 0 : index
    %396 = vector.load %arg18[%c0_118, %c0_119] : memref<1x4xf32, #tpu.memory_space<vmem>>, vector<1x4xf32>
    %397 = vector.broadcast %396 : vector<1x4xf32> to vector<8x4xf32>
    %398 = arith.addf %395, %397 : vector<8x4xf32>
    %cst_120 = arith.constant dense<0xFF800000> : vector<8xf32>
    %399 = vector.multi_reduction <maximumf>, %398, %cst_120 [1] : vector<8x4xf32> to vector<8xf32>
    %400 = vector.shape_cast %399 : vector<8xf32> to vector<8x1xf32>
    %401 = vector.broadcast %400 : vector<8x1xf32> to vector<8x4xf32>
    %402 = arith.subf %398, %401 : vector<8x4xf32>
    %403 = math.exp %402 : vector<8x4xf32>
    %cst_121 = arith.constant dense<0.000000e+00> : vector<8xf32>
    %404 = vector.multi_reduction <add>, %403, %cst_121 [1] : vector<8x4xf32> to vector<8xf32>
    %405 = vector.shape_cast %404 : vector<8xf32> to vector<8x1xf32>
    %406 = vector.broadcast %405 : vector<8x1xf32> to vector<8x4xf32>
    %407 = arith.divf %403, %406 : vector<8x4xf32>
    %c0_122 = arith.constant 0 : index
    %c0_123 = arith.constant 0 : index
    %408 = vector.load %arg20[%c0_122, %c0_123] : memref<8x4xf32, #tpu.memory_space<vmem>>, vector<8x4xf32>
    tpu.vector_store %arg20[%c0_122, %c0_123], %407 {strides = array<i32>} : memref<8x4xf32, #tpu.memory_space<vmem>>, vector<8x4xf32>,
    return
  }
}

</mosaic_0001>

<llo_original>
// kernel: cnn_model_forward.1
$region0: #{cnn_model_forward.1}
  #allocation0 [shape = 'u32[]', space=smem, size = 0x4, offset = 0x4, fixed_abs, tag = 'smem constant byte address 0x4 - core index']
  #allocation1 [shape = 'u32[72,128]{1,0:T(1,128)}', space=vmem, size = 0x9000, scoped, tag = 'internal scratch']
  #allocation2 [shape = 'bf16[1152,256]{1,0:T(8,128)(2,1)}', space=vmem, size = 0x90000, scoped, tag = 'scratch operand']
  #allocation3 [shape = 'bf16[2048,100]{1,0:T(8,128)(2,1)}', space=vmem, size = 0x80000, scoped, tag = 'scratch operand']
  #allocation4 [shape = 's32[2]{0}', space=sflag, size = 0x8, scoped, tag = 'scratch operand']
  #allocation5 [shape = 'f32[1,1]{1,0:T(1,128)S(1)}', space=vmem, size = 0x200, scoped, tag = 'scoped memory for cnn_model_forward.1']
  #allocation6 [shape = 's32[]', space=sflag, size = 0x4, offset = 0, fixed_abs, tag = 'sflag constant byte address 0x0 - dummy sync flag']
  #allocation7 [shape = 's32[]', space=sflag, size = 0x4, offset = 0, fixed_abs, tag = 'sflag constant byte address 0x0 - dummy sync flag']
  %s0 = inlined_call_operand.vmem [shape: bf16[64,36], index: 0, kind: input, shape index: {}]
  %s1 = inlined_call_operand.vmem [shape: bf16[36,16], index: 1, kind: input, shape index: {}]
  %s2 = inlined_call_operand.vmem [shape: f32[1,16], index: 2, kind: input, shape index: {}]
  %s3 = inlined_call_operand.vmem [shape: bf16[144,32], index: 3, kind: input, shape index: {}]
  %s4 = inlined_call_operand.vmem [shape: f32[1,32], index: 4, kind: input, shape index: {}]
  %s5 = inlined_call_operand.vmem [shape: bf16[288,64], index: 5, kind: input, shape index: {}]
  %s6 = inlined_call_operand.vmem [shape: f32[1,64], index: 6, kind: input, shape index: {}]
  %s7 = inlined_call_operand.vmem [shape: bf16[576,128], index: 7, kind: input, shape index: {}]
  %s8 = inlined_call_operand.vmem [shape: f32[1,128], index: 8, kind: input, shape index: {}]
  %s9 = inlined_call_operand.vmem [shape: bf16[1152,256], index: 9, kind: input, shape index: {}]
  %s10 = inlined_call_operand.vmem [shape: f32[1,256], index: 10, kind: input, shape index: {}]
  %s11 = inlined_call_operand.vmem [shape: bf16[2048,100], index: 11, kind: input, shape index: {}]
  %s12 = inlined_call_operand.vmem [shape: f32[1,100], index: 12, kind: input, shape index: {}]
  %s13 = inlined_call_operand.vmem [shape: bf16[100,50], index: 13, kind: input, shape index: {}]
  %s14 = inlined_call_operand.vmem [shape: f32[1,50], index: 14, kind: input, shape index: {}]
  %s15 = inlined_call_operand.vmem [shape: bf16[50,1], index: 15, kind: input, shape index: {}]
  %s16 = inlined_call_operand.<no memory space> [shape: f32[1,1], index: 16, kind: input, shape index: {}]
  %s17 = inlined_call_operand.vmem [shape: bf16[50,4], index: 17, kind: input, shape index: {}]
  %s18 = inlined_call_operand.vmem [shape: f32[1,4], index: 18, kind: input, shape index: {}]
  %s19 = inlined_call_operand.vmem [shape: f32[8,1], index: 19, kind: output, shape index: {0}]
  %s20 = inlined_call_operand.vmem [shape: f32[8,4], index: 20, kind: output, shape index: {1}]
  %21 = xla_tuple %s19, %s20
  %s22 = sld [smem:[#allocation0]]
  $region124: #{cnn_model_forward.1} parent=0
    _
  %s24 = ssub.s32 1, %s22
  %s25 = scalar_select 0, %s24, %s22
  %v26 = vstv %s16
  %27 = vst [vmem:[#allocation5] sm:$0x1] %v26
  // Predicated region
  $region2: #{cnn_model_forward.1} parent=0 // pred_check
    _
  $region3: #{cnn_model_forward.1} parent=0 // pred_check_branch
    %29 = sbr.rel (0) target = $region5
  $region4: #{cnn_model_forward.1} parent=0 // pred_region
    _
  $region5: #{cnn_model_forward.1} parent=0 // pred_fallthru
    _
  // Predicated region
  $region6: #{cnn_model_forward.1} parent=0 // pred_check
    _
  $region7: #{cnn_model_forward.1} parent=0 // pred_check_branch
    %31 = sbr.rel (0) target = $region9
  $region8: #{cnn_model_forward.1} parent=0 // pred_region
    _
  $region9: #{cnn_model_forward.1} parent=0 // pred_fallthru
    _
  // Predicated region
  $region10: #{cnn_model_forward.1} parent=0 // pred_check
    _
  $region11: #{cnn_model_forward.1} parent=0 // pred_check_branch
    %33 = sbr.rel (0) target = $region13
  $region12: #{cnn_model_forward.1} parent=0 // pred_region
    _
  $region13: #{cnn_model_forward.1} parent=0 // pred_fallthru
    _
  // Predicated region
  $region14: #{cnn_model_forward.1} parent=0 // pred_check
    _
  $region15: #{cnn_model_forward.1} parent=0 // pred_check_branch
    %35 = sbr.rel (0) target = $region17
  $region16: #{cnn_model_forward.1} parent=0 // pred_region
    _
  $region17: #{cnn_model_forward.1} parent=0 // pred_fallthru
    _
  // Predicated region
  $region18: #{cnn_model_forward.1} parent=0 // pred_check
    _
  $region19: #{cnn_model_forward.1} parent=0 // pred_check_branch
    %37 = sbr.rel (0) target = $region21
  $region20: #{cnn_model_forward.1} parent=0 // pred_region
    _
  $region21: #{cnn_model_forward.1} parent=0 // pred_fallthru
    _
  // Predicated region
  $region22: #{cnn_model_forward.1} parent=0 // pred_check
    _
  $region23: #{cnn_model_forward.1} parent=0 // pred_check_branch
    %39 = sbr.rel (0) target = $region25
  $region24: #{cnn_model_forward.1} parent=0 // pred_region
    _
  $region25: #{cnn_model_forward.1} parent=0 // pred_fallthru
    _
  // Predicated region
  $region26: #{cnn_model_forward.1} parent=0 // pred_check
    _
  $region27: #{cnn_model_forward.1} parent=0 // pred_check_branch
    %41 = sbr.rel (0) target = $region29
  $region28: #{cnn_model_forward.1} parent=0 // pred_region
    _
  $region29: #{cnn_model_forward.1} parent=0 // pred_fallthru
    _
  // Predicated region
  $region30: #{cnn_model_forward.1} parent=0 // pred_check
    _
  $region31: #{cnn_model_forward.1} parent=0 // pred_check_branch
    %43 = sbr.rel (0) target = $region33
  $region32: #{cnn_model_forward.1} parent=0 // pred_region
    _
  $region33: #{cnn_model_forward.1} parent=0 // pred_fallthru
    _
  // Predicated region
  $region34: #{cnn_model_forward.1} parent=0 // pred_check
    _
  $region35: #{cnn_model_forward.1} parent=0 // pred_check_branch
    %45 = sbr.rel (0) target = $region37
  $region36: #{cnn_model_forward.1} parent=0 // pred_region
    _
  $region37: #{cnn_model_forward.1} parent=0 // pred_fallthru
    _
  // Predicated region
  $region38: #{cnn_model_forward.1} parent=0 // pred_check
    _
  $region39: #{cnn_model_forward.1} parent=0 // pred_check_branch
    %47 = sbr.rel (0) target = $region41
  $region40: #{cnn_model_forward.1} parent=0 // pred_region
    _
  $region41: #{cnn_model_forward.1} parent=0 // pred_fallthru
    _
  // Predicated region
  $region42: #{cnn_model_forward.1} parent=0 // pred_check
    _
  $region43: #{cnn_model_forward.1} parent=0 // pred_check_branch
    %49 = sbr.rel (0) target = $region45
  $region44: #{cnn_model_forward.1} parent=0 // pred_region
    _
  $region45: #{cnn_model_forward.1} parent=0 // pred_fallthru
    _
  // Predicated region
  $region46: #{cnn_model_forward.1} parent=0 // pred_check
    _
  $region47: #{cnn_model_forward.1} parent=0 // pred_check_branch
    %51 = sbr.rel (0) target = $region49
  $region48: #{cnn_model_forward.1} parent=0 // pred_region
    _
  $region49: #{cnn_model_forward.1} parent=0 // pred_fallthru
    _
  // Predicated region
  $region50: #{cnn_model_forward.1} parent=0 // pred_check
    _
  $region51: #{cnn_model_forward.1} parent=0 // pred_check_branch
    %53 = sbr.rel (0) target = $region53
  $region52: #{cnn_model_forward.1} parent=0 // pred_region
    _
  $region53: #{cnn_model_forward.1} parent=0 // pred_fallthru
    _
  // Predicated region
  $region54: #{cnn_model_forward.1} parent=0 // pred_check
    _
  $region55: #{cnn_model_forward.1} parent=0 // pred_check_branch
    %55 = sbr.rel (0) target = $region57
  $region56: #{cnn_model_forward.1} parent=0 // pred_region
    _
  $region57: #{cnn_model_forward.1} parent=0 // pred_fallthru
    _
  // Predicated region
  $region58: #{cnn_model_forward.1} parent=0 // pred_check
    _
  $region59: #{cnn_model_forward.1} parent=0 // pred_check_branch
    %57 = sbr.rel (0) target = $region61
  $region60: #{cnn_model_forward.1} parent=0 // pred_region
    _
  $region61: #{cnn_model_forward.1} parent=0 // pred_fallthru
    _
  // Predicated region
  $region62: #{cnn_model_forward.1} parent=0 // pred_check
    _
  $region63: #{cnn_model_forward.1} parent=0 // pred_check_branch
    %59 = sbr.rel (0) target = $region65
  $region64: #{cnn_model_forward.1} parent=0 // pred_region
    _
  $region65: #{cnn_model_forward.1} parent=0 // pred_fallthru
    _
  // Predicated region
  $region66: #{cnn_model_forward.1} parent=0 // pred_check
    _
  $region67: #{cnn_model_forward.1} parent=0 // pred_check_branch
    %61 = sbr.rel (0) target = $region69
  $region68: #{cnn_model_forward.1} parent=0 // pred_region
    _
  $region69: #{cnn_model_forward.1} parent=0 // pred_fallthru
    _
  // Predicated region
  $region70: #{cnn_model_forward.1} parent=0 // pred_check
    _
  $region71: #{cnn_model_forward.1} parent=0 // pred_check_branch
    %64 = sbr.rel (0) target = $region73
  $region72: #{cnn_model_forward.1} parent=0 // pred_region
    loop: start=0, step=1, limit=1
    $region74: #{cnn_model_forward.1} parent=72 // loop_pre_header
      _
    $region75: #{cnn_model_forward.1} parent=72 // loop_header
      %s66 = sphi 0, %s70
      %p67 = scmp.ge.s32.totalorder %s66, 1
      %s71 = sphi %s9, %s9
      %s72 = sphi [#allocation2], [#allocation2]
    $region76: #{cnn_model_forward.1} parent=72 // loop_header_branch
      %69 = sbr.rel (%p67) target = $region80
    $region77: #{cnn_model_forward.1} parent=72 // loop_body
      %v73 = vld [vmem:[%s71] sm:$0xff]
      %74 = vst [vmem:[%s72] sm:$0xff] %v73
      %v75 = vld [vmem:[%s71 + $0x8] sm:$0xff]
      %76 = vst [vmem:[%s72 + $0x8] sm:$0xff] %v75
      %v77 = vld [vmem:[%s71 + $0x10] sm:$0xff]
      %78 = vst [vmem:[%s72 + $0x10] sm:$0xff] %v77
      %v79 = vld [vmem:[%s71 + $0x18] sm:$0xff]
      %80 = vst [vmem:[%s72 + $0x18] sm:$0xff] %v79
      %v81 = vld [vmem:[%s71 + $0x20] sm:$0xff]
      %82 = vst [vmem:[%s72 + $0x20] sm:$0xff] %v81
      %v83 = vld [vmem:[%s71 + $0x28] sm:$0xff]
      %84 = vst [vmem:[%s72 + $0x28] sm:$0xff] %v83
      %v85 = vld [vmem:[%s71 + $0x30] sm:$0xff]
      %86 = vst [vmem:[%s72 + $0x30] sm:$0xff] %v85
      %v87 = vld [vmem:[%s71 + $0x38] sm:$0xff]
      %88 = vst [vmem:[%s72 + $0x38] sm:$0xff] %v87
      %v89 = vld [vmem:[%s71 + $0x40] sm:$0xff]
      %90 = vst [vmem:[%s72 + $0x40] sm:$0xff] %v89
      %v91 = vld [vmem:[%s71 + $0x48] sm:$0xff]
      %92 = vst [vmem:[%s72 + $0x48] sm:$0xff] %v91
      %v93 = vld [vmem:[%s71 + $0x50] sm:$0xff]
      %94 = vst [vmem:[%s72 + $0x50] sm:$0xff] %v93
      %v95 = vld [vmem:[%s71 + $0x58] sm:$0xff]
      %96 = vst [vmem:[%s72 + $0x58] sm:$0xff] %v95
      %v97 = vld [vmem:[%s71 + $0x60] sm:$0xff]
      %98 = vst [vmem:[%s72 + $0x60] sm:$0xff] %v97
      %v99 = vld [vmem:[%s71 + $0x68] sm:$0xff]
      %100 = vst [vmem:[%s72 + $0x68] sm:$0xff] %v99
      %v101 = vld [vmem:[%s71 + $0x70] sm:$0xff]
      %102 = vst [vmem:[%s72 + $0x70] sm:$0xff] %v101
      %v103 = vld [vmem:[%s71 + $0x78] sm:$0xff]
      %104 = vst [vmem:[%s72 + $0x78] sm:$0xff] %v103
      %v105 = vld [vmem:[%s71 + $0x80] sm:$0xff]
      %106 = vst [vmem:[%s72 + $0x80] sm:$0xff] %v105
      %v107 = vld [vmem:[%s71 + $0x88] sm:$0xff]
      %108 = vst [vmem:[%s72 + $0x88] sm:$0xff] %v107
      %v109 = vld [vmem:[%s71 + $0x90] sm:$0xff]
      %110 = vst [vmem:[%s72 + $0x90] sm:$0xff] %v109
      %v111 = vld [vmem:[%s71 + $0x98] sm:$0xff]
      %112 = vst [vmem:[%s72 + $0x98] sm:$0xff] %v111
      %v113 = vld [vmem:[%s71 + $0xa0] sm:$0xff]
      %114 = vst [vmem:[%s72 + $0xa0] sm:$0xff] %v113
      %v115 = vld [vmem:[%s71 + $0xa8] sm:$0xff]
      %116 = vst [vmem:[%s72 + $0xa8] sm:$0xff] %v115
      %v117 = vld [vmem:[%s71 + $0xb0] sm:$0xff]
      %118 = vst [vmem:[%s72 + $0xb0] sm:$0xff] %v117
      %v119 = vld [vmem:[%s71 + $0xb8] sm:$0xff]
      %120 = vst [vmem:[%s72 + $0xb8] sm:$0xff] %v119
      %v121 = vld [vmem:[%s71 + $0xc0] sm:$0xff]
      %122 = vst [vmem:[%s72 + $0xc0] sm:$0xff] %v121
      %v123 = vld [vmem:[%s71 + $0xc8] sm:$0xff]
      %124 = vst [vmem:[%s72 + $0xc8] sm:$0xff] %v123
      %v125 = vld [vmem:[%s71 + $0xd0] sm:$0xff]
      %126 = vst [vmem:[%s72 + $0xd0] sm:$0xff] %v125
      %v127 = vld [vmem:[%s71 + $0xd8] sm:$0xff]
      %128 = vst [vmem:[%s72 + $0xd8] sm:$0xff] %v127
      %v129 = vld [vmem:[%s71 + $0xe0] sm:$0xff]
      %130 = vst [vmem:[%s72 + $0xe0] sm:$0xff] %v129
      %v131 = vld [vmem:[%s71 + $0xe8] sm:$0xff]
      %132 = vst [vmem:[%s72 + $0xe8] sm:$0xff] %v131
      %v133 = vld [vmem:[%s71 + $0xf0] sm:$0xff]
      %134 = vst [vmem:[%s72 + $0xf0] sm:$0xff] %v133
      %v135 = vld [vmem:[%s71 + $0xf8] sm:$0xff]
      %136 = vst [vmem:[%s72 + $0xf8] sm:$0xff] %v135
      %v137 = vld [vmem:[%s71 + $0x100] sm:$0xff]
      %138 = vst [vmem:[%s72 + $0x100] sm:$0xff] %v137
      %v139 = vld [vmem:[%s71 + $0x108] sm:$0xff]
      %140 = vst [vmem:[%s72 + $0x108] sm:$0xff] %v139
      %v141 = vld [vmem:[%s71 + $0x110] sm:$0xff]
      %142 = vst [vmem:[%s72 + $0x110] sm:$0xff] %v141
      %v143 = vld [vmem:[%s71 + $0x118] sm:$0xff]
      %144 = vst [vmem:[%s72 + $0x118] sm:$0xff] %v143
      %v145 = vld [vmem:[%s71 + $0x120] sm:$0xff]
      %146 = vst [vmem:[%s72 + $0x120] sm:$0xff] %v145
      %v147 = vld [vmem:[%s71 + $0x128] sm:$0xff]
      %148 = vst [vmem:[%s72 + $0x128] sm:$0xff] %v147
      %v149 = vld [vmem:[%s71 + $0x130] sm:$0xff]
      %150 = vst [vmem:[%s72 + $0x130] sm:$0xff] %v149
      %v151 = vld [vmem:[%s71 + $0x138] sm:$0xff]
      %152 = vst [vmem:[%s72 + $0x138] sm:$0xff] %v151
      %v153 = vld [vmem:[%s71 + $0x140] sm:$0xff]
      %154 = vst [vmem:[%s72 + $0x140] sm:$0xff] %v153
      %v155 = vld [vmem:[%s71 + $0x148] sm:$0xff]
      %156 = vst [vmem:[%s72 + $0x148] sm:$0xff] %v155
      %v157 = vld [vmem:[%s71 + $0x150] sm:$0xff]
      %158 = vst [vmem:[%s72 + $0x150] sm:$0xff] %v157
      %v159 = vld [vmem:[%s71 + $0x158] sm:$0xff]
      %160 = vst [vmem:[%s72 + $0x158] sm:$0xff] %v159
      %v161 = vld [vmem:[%s71 + $0x160] sm:$0xff]
      %162 = vst [vmem:[%s72 + $0x160] sm:$0xff] %v161
      %v163 = vld [vmem:[%s71 + $0x168] sm:$0xff]
      %164 = vst [vmem:[%s72 + $0x168] sm:$0xff] %v163
      %v165 = vld [vmem:[%s71 + $0x170] sm:$0xff]
      %166 = vst [vmem:[%s72 + $0x170] sm:$0xff] %v165
      %v167 = vld [vmem:[%s71 + $0x178] sm:$0xff]
      %168 = vst [vmem:[%s72 + $0x178] sm:$0xff] %v167
      %v169 = vld [vmem:[%s71 + $0x180] sm:$0xff]
      %170 = vst [vmem:[%s72 + $0x180] sm:$0xff] %v169
      %v171 = vld [vmem:[%s71 + $0x188] sm:$0xff]
      %172 = vst [vmem:[%s72 + $0x188] sm:$0xff] %v171
      %v173 = vld [vmem:[%s71 + $0x190] sm:$0xff]
      %174 = vst [vmem:[%s72 + $0x190] sm:$0xff] %v173
      %v175 = vld [vmem:[%s71 + $0x198] sm:$0xff]
      %176 = vst [vmem:[%s72 + $0x198] sm:$0xff] %v175
      %v177 = vld [vmem:[%s71 + $0x1a0] sm:$0xff]
      %178 = vst [vmem:[%s72 + $0x1a0] sm:$0xff] %v177
      %v179 = vld [vmem:[%s71 + $0x1a8] sm:$0xff]
      %180 = vst [vmem:[%s72 + $0x1a8] sm:$0xff] %v179
      %v181 = vld [vmem:[%s71 + $0x1b0] sm:$0xff]
      %182 = vst [vmem:[%s72 + $0x1b0] sm:$0xff] %v181
      %v183 = vld [vmem:[%s71 + $0x1b8] sm:$0xff]
      %184 = vst [vmem:[%s72 + $0x1b8] sm:$0xff] %v183
      %v185 = vld [vmem:[%s71 + $0x1c0] sm:$0xff]
      %186 = vst [vmem:[%s72 + $0x1c0] sm:$0xff] %v185
      %v187 = vld [vmem:[%s71 + $0x1c8] sm:$0xff]
      %188 = vst [vmem:[%s72 + $0x1c8] sm:$0xff] %v187
      %v189 = vld [vmem:[%s71 + $0x1d0] sm:$0xff]
      %190 = vst [vmem:[%s72 + $0x1d0] sm:$0xff] %v189
      %v191 = vld [vmem:[%s71 + $0x1d8] sm:$0xff]
      %192 = vst [vmem:[%s72 + $0x1d8] sm:$0xff] %v191
      %v193 = vld [vmem:[%s71 + $0x1e0] sm:$0xff]
      %194 = vst [vmem:[%s72 + $0x1e0] sm:$0xff] %v193
      %v195 = vld [vmem:[%s71 + $0x1e8] sm:$0xff]
      %196 = vst [vmem:[%s72 + $0x1e8] sm:$0xff] %v195
      %v197 = vld [vmem:[%s71 + $0x1f0] sm:$0xff]
      %198 = vst [vmem:[%s72 + $0x1f0] sm:$0xff] %v197
      %v199 = vld [vmem:[%s71 + $0x1f8] sm:$0xff]
      %200 = vst [vmem:[%s72 + $0x1f8] sm:$0xff] %v199
      %v201 = vld [vmem:[%s71 + $0x200] sm:$0xff]
      %202 = vst [vmem:[%s72 + $0x200] sm:$0xff] %v201
      %v203 = vld [vmem:[%s71 + $0x208] sm:$0xff]
      %204 = vst [vmem:[%s72 + $0x208] sm:$0xff] %v203
      %v205 = vld [vmem:[%s71 + $0x210] sm:$0xff]
      %206 = vst [vmem:[%s72 + $0x210] sm:$0xff] %v205
      %v207 = vld [vmem:[%s71 + $0x218] sm:$0xff]
      %208 = vst [vmem:[%s72 + $0x218] sm:$0xff] %v207
      %v209 = vld [vmem:[%s71 + $0x220] sm:$0xff]
      %210 = vst [vmem:[%s72 + $0x220] sm:$0xff] %v209
      %v211 = vld [vmem:[%s71 + $0x228] sm:$0xff]
      %212 = vst [vmem:[%s72 + $0x228] sm:$0xff] %v211
      %v213 = vld [vmem:[%s71 + $0x230] sm:$0xff]
      %214 = vst [vmem:[%s72 + $0x230] sm:$0xff] %v213
      %v215 = vld [vmem:[%s71 + $0x238] sm:$0xff]
      %216 = vst [vmem:[%s72 + $0x238] sm:$0xff] %v215
      %v217 = vld [vmem:[%s71 + $0x240] sm:$0xff]
      %218 = vst [vmem:[%s72 + $0x240] sm:$0xff] %v217
      %v219 = vld [vmem:[%s71 + $0x248] sm:$0xff]
      %220 = vst [vmem:[%s72 + $0x248] sm:$0xff] %v219
      %v221 = vld [vmem:[%s71 + $0x250] sm:$0xff]
      %222 = vst [vmem:[%s72 + $0x250] sm:$0xff] %v221
      %v223 = vld [vmem:[%s71 + $0x258] sm:$0xff]
      %224 = vst [vmem:[%s72 + $0x258] sm:$0xff] %v223
      %v225 = vld [vmem:[%s71 + $0x260] sm:$0xff]
      %226 = vst [vmem:[%s72 + $0x260] sm:$0xff] %v225
      %v227 = vld [vmem:[%s71 + $0x268] sm:$0xff]
      %228 = vst [vmem:[%s72 + $0x268] sm:$0xff] %v227
      %v229 = vld [vmem:[%s71 + $0x270] sm:$0xff]
      %230 = vst [vmem:[%s72 + $0x270] sm:$0xff] %v229
      %v231 = vld [vmem:[%s71 + $0x278] sm:$0xff]
      %232 = vst [vmem:[%s72 + $0x278] sm:$0xff] %v231
      %v233 = vld [vmem:[%s71 + $0x280] sm:$0xff]
      %234 = vst [vmem:[%s72 + $0x280] sm:$0xff] %v233
      %v235 = vld [vmem:[%s71 + $0x288] sm:$0xff]
      %236 = vst [vmem:[%s72 + $0x288] sm:$0xff] %v235
      %v237 = vld [vmem:[%s71 + $0x290] sm:$0xff]
      %238 = vst [vmem:[%s72 + $0x290] sm:$0xff] %v237
      %v239 = vld [vmem:[%s71 + $0x298] sm:$0xff]
      %240 = vst [vmem:[%s72 + $0x298] sm:$0xff] %v239
      %v241 = vld [vmem:[%s71 + $0x2a0] sm:$0xff]
      %242 = vst [vmem:[%s72 + $0x2a0] sm:$0xff] %v241
      %v243 = vld [vmem:[%s71 + $0x2a8] sm:$0xff]
      %244 = vst [vmem:[%s72 + $0x2a8] sm:$0xff] %v243
      %v245 = vld [vmem:[%s71 + $0x2b0] sm:$0xff]
      %246 = vst [vmem:[%s72 + $0x2b0] sm:$0xff] %v245
      %v247 = vld [vmem:[%s71 + $0x2b8] sm:$0xff]
      %248 = vst [vmem:[%s72 + $0x2b8] sm:$0xff] %v247
      %v249 = vld [vmem:[%s71 + $0x2c0] sm:$0xff]
      %250 = vst [vmem:[%s72 + $0x2c0] sm:$0xff] %v249
      %v251 = vld [vmem:[%s71 + $0x2c8] sm:$0xff]
      %252 = vst [vmem:[%s72 + $0x2c8] sm:$0xff] %v251
      %v253 = vld [vmem:[%s71 + $0x2d0] sm:$0xff]
      %254 = vst [vmem:[%s72 + $0x2d0] sm:$0xff] %v253
      %v255 = vld [vmem:[%s71 + $0x2d8] sm:$0xff]
      %256 = vst [vmem:[%s72 + $0x2d8] sm:$0xff] %v255
      %v257 = vld [vmem:[%s71 + $0x2e0] sm:$0xff]
      %258 = vst [vmem:[%s72 + $0x2e0] sm:$0xff] %v257
      %v259 = vld [vmem:[%s71 + $0x2e8] sm:$0xff]
      %260 = vst [vmem:[%s72 + $0x2e8] sm:$0xff] %v259
      %v261 = vld [vmem:[%s71 + $0x2f0] sm:$0xff]
      %262 = vst [vmem:[%s72 + $0x2f0] sm:$0xff] %v261
      %v263 = vld [vmem:[%s71 + $0x2f8] sm:$0xff]
      %264 = vst [vmem:[%s72 + $0x2f8] sm:$0xff] %v263
      %v265 = vld [vmem:[%s71 + $0x300] sm:$0xff]
      %266 = vst [vmem:[%s72 + $0x300] sm:$0xff] %v265
      %v267 = vld [vmem:[%s71 + $0x308] sm:$0xff]
      %268 = vst [vmem:[%s72 + $0x308] sm:$0xff] %v267
      %v269 = vld [vmem:[%s71 + $0x310] sm:$0xff]
      %270 = vst [vmem:[%s72 + $0x310] sm:$0xff] %v269
      %v271 = vld [vmem:[%s71 + $0x318] sm:$0xff]
      %272 = vst [vmem:[%s72 + $0x318] sm:$0xff] %v271
      %v273 = vld [vmem:[%s71 + $0x320] sm:$0xff]
      %274 = vst [vmem:[%s72 + $0x320] sm:$0xff] %v273
      %v275 = vld [vmem:[%s71 + $0x328] sm:$0xff]
      %276 = vst [vmem:[%s72 + $0x328] sm:$0xff] %v275
      %v277 = vld [vmem:[%s71 + $0x330] sm:$0xff]
      %278 = vst [vmem:[%s72 + $0x330] sm:$0xff] %v277
      %v279 = vld [vmem:[%s71 + $0x338] sm:$0xff]
      %280 = vst [vmem:[%s72 + $0x338] sm:$0xff] %v279
      %v281 = vld [vmem:[%s71 + $0x340] sm:$0xff]
      %282 = vst [vmem:[%s72 + $0x340] sm:$0xff] %v281
      %v283 = vld [vmem:[%s71 + $0x348] sm:$0xff]
      %284 = vst [vmem:[%s72 + $0x348] sm:$0xff] %v283
      %v285 = vld [vmem:[%s71 + $0x350] sm:$0xff]
      %286 = vst [vmem:[%s72 + $0x350] sm:$0xff] %v285
      %v287 = vld [vmem:[%s71 + $0x358] sm:$0xff]
      %288 = vst [vmem:[%s72 + $0x358] sm:$0xff] %v287
      %v289 = vld [vmem:[%s71 + $0x360] sm:$0xff]
      %290 = vst [vmem:[%s72 + $0x360] sm:$0xff] %v289
      %v291 = vld [vmem:[%s71 + $0x368] sm:$0xff]
      %292 = vst [vmem:[%s72 + $0x368] sm:$0xff] %v291
      %v293 = vld [vmem:[%s71 + $0x370] sm:$0xff]
      %294 = vst [vmem:[%s72 + $0x370] sm:$0xff] %v293
      %v295 = vld [vmem:[%s71 + $0x378] sm:$0xff]
      %296 = vst [vmem:[%s72 + $0x378] sm:$0xff] %v295
      %v297 = vld [vmem:[%s71 + $0x380] sm:$0xff]
      %298 = vst [vmem:[%s72 + $0x380] sm:$0xff] %v297
      %v299 = vld [vmem:[%s71 + $0x388] sm:$0xff]
      %300 = vst [vmem:[%s72 + $0x388] sm:$0xff] %v299
      %v301 = vld [vmem:[%s71 + $0x390] sm:$0xff]
      %302 = vst [vmem:[%s72 + $0x390] sm:$0xff] %v301
      %v303 = vld [vmem:[%s71 + $0x398] sm:$0xff]
      %304 = vst [vmem:[%s72 + $0x398] sm:$0xff] %v303
      %v305 = vld [vmem:[%s71 + $0x3a0] sm:$0xff]
      %306 = vst [vmem:[%s72 + $0x3a0] sm:$0xff] %v305
      %v307 = vld [vmem:[%s71 + $0x3a8] sm:$0xff]
      %308 = vst [vmem:[%s72 + $0x3a8] sm:$0xff] %v307
      %v309 = vld [vmem:[%s71 + $0x3b0] sm:$0xff]
      %310 = vst [vmem:[%s72 + $0x3b0] sm:$0xff] %v309
      %v311 = vld [vmem:[%s71 + $0x3b8] sm:$0xff]
      %312 = vst [vmem:[%s72 + $0x3b8] sm:$0xff] %v311
      %v313 = vld [vmem:[%s71 + $0x3c0] sm:$0xff]
      %314 = vst [vmem:[%s72 + $0x3c0] sm:$0xff] %v313
      %v315 = vld [vmem:[%s71 + $0x3c8] sm:$0xff]
      %316 = vst [vmem:[%s72 + $0x3c8] sm:$0xff] %v315
      %v317 = vld [vmem:[%s71 + $0x3d0] sm:$0xff]
      %318 = vst [vmem:[%s72 + $0x3d0] sm:$0xff] %v317
      %v319 = vld [vmem:[%s71 + $0x3d8] sm:$0xff]
      %320 = vst [vmem:[%s72 + $0x3d8] sm:$0xff] %v319
      %v321 = vld [vmem:[%s71 + $0x3e0] sm:$0xff]
      %322 = vst [vmem:[%s72 + $0x3e0] sm:$0xff] %v321
      %v323 = vld [vmem:[%s71 + $0x3e8] sm:$0xff]
      %324 = vst [vmem:[%s72 + $0x3e8] sm:$0xff] %v323
      %v325 = vld [vmem:[%s71 + $0x3f0] sm:$0xff]
      %326 = vst [vmem:[%s72 + $0x3f0] sm:$0xff] %v325
      %v327 = vld [vmem:[%s71 + $0x3f8] sm:$0xff]
      %328 = vst [vmem:[%s72 + $0x3f8] sm:$0xff] %v327
      %v329 = vld [vmem:[%s71 + $0x400] sm:$0xff]
      %330 = vst [vmem:[%s72 + $0x400] sm:$0xff] %v329
      %v331 = vld [vmem:[%s71 + $0x408] sm:$0xff]
      %332 = vst [vmem:[%s72 + $0x408] sm:$0xff] %v331
      %v333 = vld [vmem:[%s71 + $0x410] sm:$0xff]
      %334 = vst [vmem:[%s72 + $0x410] sm:$0xff] %v333
      %v335 = vld [vmem:[%s71 + $0x418] sm:$0xff]
      %336 = vst [vmem:[%s72 + $0x418] sm:$0xff] %v335
      %v337 = vld [vmem:[%s71 + $0x420] sm:$0xff]
      %338 = vst [vmem:[%s72 + $0x420] sm:$0xff] %v337
      %v339 = vld [vmem:[%s71 + $0x428] sm:$0xff]
      %340 = vst [vmem:[%s72 + $0x428] sm:$0xff] %v339
      %v341 = vld [vmem:[%s71 + $0x430] sm:$0xff]
      %342 = vst [vmem:[%s72 + $0x430] sm:$0xff] %v341
      %v343 = vld [vmem:[%s71 + $0x438] sm:$0xff]
      %344 = vst [vmem:[%s72 + $0x438] sm:$0xff] %v343
      %v345 = vld [vmem:[%s71 + $0x440] sm:$0xff]
      %346 = vst [vmem:[%s72 + $0x440] sm:$0xff] %v345
      %v347 = vld [vmem:[%s71 + $0x448] sm:$0xff]
      %348 = vst [vmem:[%s72 + $0x448] sm:$0xff] %v347
      %v349 = vld [vmem:[%s71 + $0x450] sm:$0xff]
      %350 = vst [vmem:[%s72 + $0x450] sm:$0xff] %v349
      %v351 = vld [vmem:[%s71 + $0x458] sm:$0xff]
      %352 = vst [vmem:[%s72 + $0x458] sm:$0xff] %v351
      %v353 = vld [vmem:[%s71 + $0x460] sm:$0xff]
      %354 = vst [vmem:[%s72 + $0x460] sm:$0xff] %v353
      %v355 = vld [vmem:[%s71 + $0x468] sm:$0xff]
      %356 = vst [vmem:[%s72 + $0x468] sm:$0xff] %v355
      %v357 = vld [vmem:[%s71 + $0x470] sm:$0xff]
      %358 = vst [vmem:[%s72 + $0x470] sm:$0xff] %v357
      %v359 = vld [vmem:[%s71 + $0x478] sm:$0xff]
      %360 = vst [vmem:[%s72 + $0x478] sm:$0xff] %v359
    $region78: #{cnn_model_forward.1} parent=72 // loop_footer
      %s70 = sadd.s32 1, %s66
    $region79: #{cnn_model_forward.1} parent=72 // loop_footer_branch
      %65 = sbr.rel target = $region75
    $region80: #{cnn_model_forward.1} parent=72 // loop_exit
      _
  $region73: #{cnn_model_forward.1} parent=0 // pred_fallthru
    _
  // Predicated region
  $region81: #{cnn_model_forward.1} parent=0 // pred_check
    _
  $region82: #{cnn_model_forward.1} parent=0 // pred_check_branch
    %362 = sbr.rel target = $region84
  $region83: #{cnn_model_forward.1} parent=0 // pred_region
    _
  $region84: #{cnn_model_forward.1} parent=0 // pred_fallthru
    _
  // Predicated region
  $region85: #{cnn_model_forward.1} parent=0 // pred_check
    _
  $region86: #{cnn_model_forward.1} parent=0 // pred_check_branch
    %365 = sbr.rel (0) target = $region88
  $region87: #{cnn_model_forward.1} parent=0 // pred_region
    %366 = vsyncadd [#allocation4], 18432
  $region88: #{cnn_model_forward.1} parent=0 // pred_fallthru
    _
  %s367 = scalar_lea.sflag [#allocation4], 1
  // Predicated region
  $region89: #{cnn_model_forward.1} parent=0 // pred_check
    _
  $region90: #{cnn_model_forward.1} parent=0 // pred_check_branch
    %369 = sbr.rel (0) target = $region92
  $region91: #{cnn_model_forward.1} parent=0 // pred_region
    loop: start=0, step=1, limit=1
    $region93: #{cnn_model_forward.1} parent=91 // loop_pre_header
      _
    $region94: #{cnn_model_forward.1} parent=91 // loop_header
      %s371 = sphi 0, %s375
      %p372 = scmp.ge.s32.totalorder %s371, 1
      %s376 = sphi %s11, %s11
      %s377 = sphi [#allocation3], [#allocation3]
    $region95: #{cnn_model_forward.1} parent=91 // loop_header_branch
      %374 = sbr.rel (%p372) target = $region99
    $region96: #{cnn_model_forward.1} parent=91 // loop_body
      %v378 = vld [vmem:[%s376] sm:$0xff]
      %379 = vst [vmem:[%s377] sm:$0xff] %v378
      %v380 = vld [vmem:[%s376 + $0x8] sm:$0xff]
      %381 = vst [vmem:[%s377 + $0x8] sm:$0xff] %v380
      %v382 = vld [vmem:[%s376 + $0x10] sm:$0xff]
      %383 = vst [vmem:[%s377 + $0x10] sm:$0xff] %v382
      %v384 = vld [vmem:[%s376 + $0x18] sm:$0xff]
      %385 = vst [vmem:[%s377 + $0x18] sm:$0xff] %v384
      %v386 = vld [vmem:[%s376 + $0x20] sm:$0xff]
      %387 = vst [vmem:[%s377 + $0x20] sm:$0xff] %v386
      %v388 = vld [vmem:[%s376 + $0x28] sm:$0xff]
      %389 = vst [vmem:[%s377 + $0x28] sm:$0xff] %v388
      %v390 = vld [vmem:[%s376 + $0x30] sm:$0xff]
      %391 = vst [vmem:[%s377 + $0x30] sm:$0xff] %v390
      %v392 = vld [vmem:[%s376 + $0x38] sm:$0xff]
      %393 = vst [vmem:[%s377 + $0x38] sm:$0xff] %v392
      %v394 = vld [vmem:[%s376 + $0x40] sm:$0xff]
      %395 = vst [vmem:[%s377 + $0x40] sm:$0xff] %v394
      %v396 = vld [vmem:[%s376 + $0x48] sm:$0xff]
      %397 = vst [vmem:[%s377 + $0x48] sm:$0xff] %v396
      %v398 = vld [vmem:[%s376 + $0x50] sm:$0xff]
      %399 = vst [vmem:[%s377 + $0x50] sm:$0xff] %v398
      %v400 = vld [vmem:[%s376 + $0x58] sm:$0xff]
      %401 = vst [vmem:[%s377 + $0x58] sm:$0xff] %v400
      %v402 = vld [vmem:[%s376 + $0x60] sm:$0xff]
      %403 = vst [vmem:[%s377 + $0x60] sm:$0xff] %v402
      %v404 = vld [vmem:[%s376 + $0x68] sm:$0xff]
      %405 = vst [vmem:[%s377 + $0x68] sm:$0xff] %v404
      %v406 = vld [vmem:[%s376 + $0x70] sm:$0xff]
      %407 = vst [vmem:[%s377 + $0x70] sm:$0xff] %v406
      %v408 = vld [vmem:[%s376 + $0x78] sm:$0xff]
      %409 = vst [vmem:[%s377 + $0x78] sm:$0xff] %v408
      %v410 = vld [vmem:[%s376 + $0x80] sm:$0xff]
      %411 = vst [vmem:[%s377 + $0x80] sm:$0xff] %v410
      %v412 = vld [vmem:[%s376 + $0x88] sm:$0xff]
      %413 = vst [vmem:[%s377 + $0x88] sm:$0xff] %v412
      %v414 = vld [vmem:[%s376 + $0x90] sm:$0xff]
      %415 = vst [vmem:[%s377 + $0x90] sm:$0xff] %v414
      %v416 = vld [vmem:[%s376 + $0x98] sm:$0xff]
      %417 = vst [vmem:[%s377 + $0x98] sm:$0xff] %v416
      %v418 = vld [vmem:[%s376 + $0xa0] sm:$0xff]
      %419 = vst [vmem:[%s377 + $0xa0] sm:$0xff] %v418
      %v420 = vld [vmem:[%s376 + $0xa8] sm:$0xff]
      %421 = vst [vmem:[%s377 + $0xa8] sm:$0xff] %v420
      %v422 = vld [vmem:[%s376 + $0xb0] sm:$0xff]
      %423 = vst [vmem:[%s377 + $0xb0] sm:$0xff] %v422
      %v424 = vld [vmem:[%s376 + $0xb8] sm:$0xff]
      %425 = vst [vmem:[%s377 + $0xb8] sm:$0xff] %v424
      %v426 = vld [vmem:[%s376 + $0xc0] sm:$0xff]
      %427 = vst [vmem:[%s377 + $0xc0] sm:$0xff] %v426
      %v428 = vld [vmem:[%s376 + $0xc8] sm:$0xff]
      %429 = vst [vmem:[%s377 + $0xc8] sm:$0xff] %v428
      %v430 = vld [vmem:[%s376 + $0xd0] sm:$0xff]
      %431 = vst [vmem:[%s377 + $0xd0] sm:$0xff] %v430
      %v432 = vld [vmem:[%s376 + $0xd8] sm:$0xff]
      %433 = vst [vmem:[%s377 + $0xd8] sm:$0xff] %v432
      %v434 = vld [vmem:[%s376 + $0xe0] sm:$0xff]
      %435 = vst [vmem:[%s377 + $0xe0] sm:$0xff] %v434
      %v436 = vld [vmem:[%s376 + $0xe8] sm:$0xff]
      %437 = vst [vmem:[%s377 + $0xe8] sm:$0xff] %v436
      %v438 = vld [vmem:[%s376 + $0xf0] sm:$0xff]
      %439 = vst [vmem:[%s377 + $0xf0] sm:$0xff] %v438
      %v440 = vld [vmem:[%s376 + $0xf8] sm:$0xff]
      %441 = vst [vmem:[%s377 + $0xf8] sm:$0xff] %v440
      %v442 = vld [vmem:[%s376 + $0x100] sm:$0xff]
      %443 = vst [vmem:[%s377 + $0x100] sm:$0xff] %v442
      %v444 = vld [vmem:[%s376 + $0x108] sm:$0xff]
      %445 = vst [vmem:[%s377 + $0x108] sm:$0xff] %v444
      %v446 = vld [vmem:[%s376 + $0x110] sm:$0xff]
      %447 = vst [vmem:[%s377 + $0x110] sm:$0xff] %v446
      %v448 = vld [vmem:[%s376 + $0x118] sm:$0xff]
      %449 = vst [vmem:[%s377 + $0x118] sm:$0xff] %v448
      %v450 = vld [vmem:[%s376 + $0x120] sm:$0xff]
      %451 = vst [vmem:[%s377 + $0x120] sm:$0xff] %v450
      %v452 = vld [vmem:[%s376 + $0x128] sm:$0xff]
      %453 = vst [vmem:[%s377 + $0x128] sm:$0xff] %v452
      %v454 = vld [vmem:[%s376 + $0x130] sm:$0xff]
      %455 = vst [vmem:[%s377 + $0x130] sm:$0xff] %v454
      %v456 = vld [vmem:[%s376 + $0x138] sm:$0xff]
      %457 = vst [vmem:[%s377 + $0x138] sm:$0xff] %v456
      %v458 = vld [vmem:[%s376 + $0x140] sm:$0xff]
      %459 = vst [vmem:[%s377 + $0x140] sm:$0xff] %v458
      %v460 = vld [vmem:[%s376 + $0x148] sm:$0xff]
      %461 = vst [vmem:[%s377 + $0x148] sm:$0xff] %v460
      %v462 = vld [vmem:[%s376 + $0x150] sm:$0xff]
      %463 = vst [vmem:[%s377 + $0x150] sm:$0xff] %v462
      %v464 = vld [vmem:[%s376 + $0x158] sm:$0xff]
      %465 = vst [vmem:[%s377 + $0x158] sm:$0xff] %v464
      %v466 = vld [vmem:[%s376 + $0x160] sm:$0xff]
      %467 = vst [vmem:[%s377 + $0x160] sm:$0xff] %v466
      %v468 = vld [vmem:[%s376 + $0x168] sm:$0xff]
      %469 = vst [vmem:[%s377 + $0x168] sm:$0xff] %v468
      %v470 = vld [vmem:[%s376 + $0x170] sm:$0xff]
      %471 = vst [vmem:[%s377 + $0x170] sm:$0xff] %v470
      %v472 = vld [vmem:[%s376 + $0x178] sm:$0xff]
      %473 = vst [vmem:[%s377 + $0x178] sm:$0xff] %v472
      %v474 = vld [vmem:[%s376 + $0x180] sm:$0xff]
      %475 = vst [vmem:[%s377 + $0x180] sm:$0xff] %v474
      %v476 = vld [vmem:[%s376 + $0x188] sm:$0xff]
      %477 = vst [vmem:[%s377 + $0x188] sm:$0xff] %v476
      %v478 = vld [vmem:[%s376 + $0x190] sm:$0xff]
      %479 = vst [vmem:[%s377 + $0x190] sm:$0xff] %v478
      %v480 = vld [vmem:[%s376 + $0x198] sm:$0xff]
      %481 = vst [vmem:[%s377 + $0x198] sm:$0xff] %v480
      %v482 = vld [vmem:[%s376 + $0x1a0] sm:$0xff]
      %483 = vst [vmem:[%s377 + $0x1a0] sm:$0xff] %v482
      %v484 = vld [vmem:[%s376 + $0x1a8] sm:$0xff]
      %485 = vst [vmem:[%s377 + $0x1a8] sm:$0xff] %v484
      %v486 = vld [vmem:[%s376 + $0x1b0] sm:$0xff]
      %487 = vst [vmem:[%s377 + $0x1b0] sm:$0xff] %v486
      %v488 = vld [vmem:[%s376 + $0x1b8] sm:$0xff]
      %489 = vst [vmem:[%s377 + $0x1b8] sm:$0xff] %v488
      %v490 = vld [vmem:[%s376 + $0x1c0] sm:$0xff]
      %491 = vst [vmem:[%s377 + $0x1c0] sm:$0xff] %v490
      %v492 = vld [vmem:[%s376 + $0x1c8] sm:$0xff]
      %493 = vst [vmem:[%s377 + $0x1c8] sm:$0xff] %v492
      %v494 = vld [vmem:[%s376 + $0x1d0] sm:$0xff]
      %495 = vst [vmem:[%s377 + $0x1d0] sm:$0xff] %v494
      %v496 = vld [vmem:[%s376 + $0x1d8] sm:$0xff]
      %497 = vst [vmem:[%s377 + $0x1d8] sm:$0xff] %v496
      %v498 = vld [vmem:[%s376 + $0x1e0] sm:$0xff]
      %499 = vst [vmem:[%s377 + $0x1e0] sm:$0xff] %v498
      %v500 = vld [vmem:[%s376 + $0x1e8] sm:$0xff]
      %501 = vst [vmem:[%s377 + $0x1e8] sm:$0xff] %v500
      %v502 = vld [vmem:[%s376 + $0x1f0] sm:$0xff]
      %503 = vst [vmem:[%s377 + $0x1f0] sm:$0xff] %v502
      %v504 = vld [vmem:[%s376 + $0x1f8] sm:$0xff]
      %505 = vst [vmem:[%s377 + $0x1f8] sm:$0xff] %v504
      %v506 = vld [vmem:[%s376 + $0x200] sm:$0xff]
      %507 = vst [vmem:[%s377 + $0x200] sm:$0xff] %v506
      %v508 = vld [vmem:[%s376 + $0x208] sm:$0xff]
      %509 = vst [vmem:[%s377 + $0x208] sm:$0xff] %v508
      %v510 = vld [vmem:[%s376 + $0x210] sm:$0xff]
      %511 = vst [vmem:[%s377 + $0x210] sm:$0xff] %v510
      %v512 = vld [vmem:[%s376 + $0x218] sm:$0xff]
      %513 = vst [vmem:[%s377 + $0x218] sm:$0xff] %v512
      %v514 = vld [vmem:[%s376 + $0x220] sm:$0xff]
      %515 = vst [vmem:[%s377 + $0x220] sm:$0xff] %v514
      %v516 = vld [vmem:[%s376 + $0x228] sm:$0xff]
      %517 = vst [vmem:[%s377 + $0x228] sm:$0xff] %v516
      %v518 = vld [vmem:[%s376 + $0x230] sm:$0xff]
      %519 = vst [vmem:[%s377 + $0x230] sm:$0xff] %v518
      %v520 = vld [vmem:[%s376 + $0x238] sm:$0xff]
      %521 = vst [vmem:[%s377 + $0x238] sm:$0xff] %v520
      %v522 = vld [vmem:[%s376 + $0x240] sm:$0xff]
      %523 = vst [vmem:[%s377 + $0x240] sm:$0xff] %v522
      %v524 = vld [vmem:[%s376 + $0x248] sm:$0xff]
      %525 = vst [vmem:[%s377 + $0x248] sm:$0xff] %v524
      %v526 = vld [vmem:[%s376 + $0x250] sm:$0xff]
      %527 = vst [vmem:[%s377 + $0x250] sm:$0xff] %v526
      %v528 = vld [vmem:[%s376 + $0x258] sm:$0xff]
      %529 = vst [vmem:[%s377 + $0x258] sm:$0xff] %v528
      %v530 = vld [vmem:[%s376 + $0x260] sm:$0xff]
      %531 = vst [vmem:[%s377 + $0x260] sm:$0xff] %v530
      %v532 = vld [vmem:[%s376 + $0x268] sm:$0xff]
      %533 = vst [vmem:[%s377 + $0x268] sm:$0xff] %v532
      %v534 = vld [vmem:[%s376 + $0x270] sm:$0xff]
      %535 = vst [vmem:[%s377 + $0x270] sm:$0xff] %v534
      %v536 = vld [vmem:[%s376 + $0x278] sm:$0xff]
      %537 = vst [vmem:[%s377 + $0x278] sm:$0xff] %v536
      %v538 = vld [vmem:[%s376 + $0x280] sm:$0xff]
      %539 = vst [vmem:[%s377 + $0x280] sm:$0xff] %v538
      %v540 = vld [vmem:[%s376 + $0x288] sm:$0xff]
      %541 = vst [vmem:[%s377 + $0x288] sm:$0xff] %v540
      %v542 = vld [vmem:[%s376 + $0x290] sm:$0xff]
      %543 = vst [vmem:[%s377 + $0x290] sm:$0xff] %v542
      %v544 = vld [vmem:[%s376 + $0x298] sm:$0xff]
      %545 = vst [vmem:[%s377 + $0x298] sm:$0xff] %v544
      %v546 = vld [vmem:[%s376 + $0x2a0] sm:$0xff]
      %547 = vst [vmem:[%s377 + $0x2a0] sm:$0xff] %v546
      %v548 = vld [vmem:[%s376 + $0x2a8] sm:$0xff]
      %549 = vst [vmem:[%s377 + $0x2a8] sm:$0xff] %v548
      %v550 = vld [vmem:[%s376 + $0x2b0] sm:$0xff]
      %551 = vst [vmem:[%s377 + $0x2b0] sm:$0xff] %v550
      %v552 = vld [vmem:[%s376 + $0x2b8] sm:$0xff]
      %553 = vst [vmem:[%s377 + $0x2b8] sm:$0xff] %v552
      %v554 = vld [vmem:[%s376 + $0x2c0] sm:$0xff]
      %555 = vst [vmem:[%s377 + $0x2c0] sm:$0xff] %v554
      %v556 = vld [vmem:[%s376 + $0x2c8] sm:$0xff]
      %557 = vst [vmem:[%s377 + $0x2c8] sm:$0xff] %v556
      %v558 = vld [vmem:[%s376 + $0x2d0] sm:$0xff]
      %559 = vst [vmem:[%s377 + $0x2d0] sm:$0xff] %v558
      %v560 = vld [vmem:[%s376 + $0x2d8] sm:$0xff]
      %561 = vst [vmem:[%s377 + $0x2d8] sm:$0xff] %v560
      %v562 = vld [vmem:[%s376 + $0x2e0] sm:$0xff]
      %563 = vst [vmem:[%s377 + $0x2e0] sm:$0xff] %v562
      %v564 = vld [vmem:[%s376 + $0x2e8] sm:$0xff]
      %565 = vst [vmem:[%s377 + $0x2e8] sm:$0xff] %v564
      %v566 = vld [vmem:[%s376 + $0x2f0] sm:$0xff]
      %567 = vst [vmem:[%s377 + $0x2f0] sm:$0xff] %v566
      %v568 = vld [vmem:[%s376 + $0x2f8] sm:$0xff]
      %569 = vst [vmem:[%s377 + $0x2f8] sm:$0xff] %v568
      %v570 = vld [vmem:[%s376 + $0x300] sm:$0xff]
      %571 = vst [vmem:[%s377 + $0x300] sm:$0xff] %v570
      %v572 = vld [vmem:[%s376 + $0x308] sm:$0xff]
      %573 = vst [vmem:[%s377 + $0x308] sm:$0xff] %v572
      %v574 = vld [vmem:[%s376 + $0x310] sm:$0xff]
      %575 = vst [vmem:[%s377 + $0x310] sm:$0xff] %v574
      %v576 = vld [vmem:[%s376 + $0x318] sm:$0xff]
      %577 = vst [vmem:[%s377 + $0x318] sm:$0xff] %v576
      %v578 = vld [vmem:[%s376 + $0x320] sm:$0xff]
      %579 = vst [vmem:[%s377 + $0x320] sm:$0xff] %v578
      %v580 = vld [vmem:[%s376 + $0x328] sm:$0xff]
      %581 = vst [vmem:[%s377 + $0x328] sm:$0xff] %v580
      %v582 = vld [vmem:[%s376 + $0x330] sm:$0xff]
      %583 = vst [vmem:[%s377 + $0x330] sm:$0xff] %v582
      %v584 = vld [vmem:[%s376 + $0x338] sm:$0xff]
      %585 = vst [vmem:[%s377 + $0x338] sm:$0xff] %v584
      %v586 = vld [vmem:[%s376 + $0x340] sm:$0xff]
      %587 = vst [vmem:[%s377 + $0x340] sm:$0xff] %v586
      %v588 = vld [vmem:[%s376 + $0x348] sm:$0xff]
      %589 = vst [vmem:[%s377 + $0x348] sm:$0xff] %v588
      %v590 = vld [vmem:[%s376 + $0x350] sm:$0xff]
      %591 = vst [vmem:[%s377 + $0x350] sm:$0xff] %v590
      %v592 = vld [vmem:[%s376 + $0x358] sm:$0xff]
      %593 = vst [vmem:[%s377 + $0x358] sm:$0xff] %v592
      %v594 = vld [vmem:[%s376 + $0x360] sm:$0xff]
      %595 = vst [vmem:[%s377 + $0x360] sm:$0xff] %v594
      %v596 = vld [vmem:[%s376 + $0x368] sm:$0xff]
      %597 = vst [vmem:[%s377 + $0x368] sm:$0xff] %v596
      %v598 = vld [vmem:[%s376 + $0x370] sm:$0xff]
      %599 = vst [vmem:[%s377 + $0x370] sm:$0xff] %v598
      %v600 = vld [vmem:[%s376 + $0x378] sm:$0xff]
      %601 = vst [vmem:[%s377 + $0x378] sm:$0xff] %v600
      %v602 = vld [vmem:[%s376 + $0x380] sm:$0xff]
      %603 = vst [vmem:[%s377 + $0x380] sm:$0xff] %v602
      %v604 = vld [vmem:[%s376 + $0x388] sm:$0xff]
      %605 = vst [vmem:[%s377 + $0x388] sm:$0xff] %v604
      %v606 = vld [vmem:[%s376 + $0x390] sm:$0xff]
      %607 = vst [vmem:[%s377 + $0x390] sm:$0xff] %v606
      %v608 = vld [vmem:[%s376 + $0x398] sm:$0xff]
      %609 = vst [vmem:[%s377 + $0x398] sm:$0xff] %v608
      %v610 = vld [vmem:[%s376 + $0x3a0] sm:$0xff]
      %611 = vst [vmem:[%s377 + $0x3a0] sm:$0xff] %v610
      %v612 = vld [vmem:[%s376 + $0x3a8] sm:$0xff]
      %613 = vst [vmem:[%s377 + $0x3a8] sm:$0xff] %v612
      %v614 = vld [vmem:[%s376 + $0x3b0] sm:$0xff]
      %615 = vst [vmem:[%s377 + $0x3b0] sm:$0xff] %v614
      %v616 = vld [vmem:[%s376 + $0x3b8] sm:$0xff]
      %617 = vst [vmem:[%s377 + $0x3b8] sm:$0xff] %v616
      %v618 = vld [vmem:[%s376 + $0x3c0] sm:$0xff]
      %619 = vst [vmem:[%s377 + $0x3c0] sm:$0xff] %v618
      %v620 = vld [vmem:[%s376 + $0x3c8] sm:$0xff]
      %621 = vst [vmem:[%s377 + $0x3c8] sm:$0xff] %v620
      %v622 = vld [vmem:[%s376 + $0x3d0] sm:$0xff]
      %623 = vst [vmem:[%s377 + $0x3d0] sm:$0xff] %v622
      %v624 = vld [vmem:[%s376 + $0x3d8] sm:$0xff]
      %625 = vst [vmem:[%s377 + $0x3d8] sm:$0xff] %v624
      %v626 = vld [vmem:[%s376 + $0x3e0] sm:$0xff]
      %627 = vst [vmem:[%s377 + $0x3e0] sm:$0xff] %v626
      %v628 = vld [vmem:[%s376 + $0x3e8] sm:$0xff]
      %629 = vst [vmem:[%s377 + $0x3e8] sm:$0xff] %v628
      %v630 = vld [vmem:[%s376 + $0x3f0] sm:$0xff]
      %631 = vst [vmem:[%s377 + $0x3f0] sm:$0xff] %v630
      %v632 = vld [vmem:[%s376 + $0x3f8] sm:$0xff]
      %633 = vst [vmem:[%s377 + $0x3f8] sm:$0xff] %v632
    $region97: #{cnn_model_forward.1} parent=91 // loop_footer
      %s375 = sadd.s32 1, %s371
    $region98: #{cnn_model_forward.1} parent=91 // loop_footer_branch
      %370 = sbr.rel target = $region94
    $region99: #{cnn_model_forward.1} parent=91 // loop_exit
      _
  $region92: #{cnn_model_forward.1} parent=0 // pred_fallthru
    _
  // Predicated region
  $region100: #{cnn_model_forward.1} parent=0 // pred_check
    _
  $region101: #{cnn_model_forward.1} parent=0 // pred_check_branch
    %635 = sbr.rel target = $region103
  $region102: #{cnn_model_forward.1} parent=0 // pred_region
    _
  $region103: #{cnn_model_forward.1} parent=0 // pred_fallthru
    _
  // Predicated region
  $region104: #{cnn_model_forward.1} parent=0 // pred_check
    _
  $region105: #{cnn_model_forward.1} parent=0 // pred_check_branch
    %638 = sbr.rel (0) target = $region107
  $region106: #{cnn_model_forward.1} parent=0 // pred_region
    %639 = vsyncadd %s367, 16384
  $region107: #{cnn_model_forward.1} parent=0 // pred_fallthru
    _
  %v640 = vlaneseq
  %v641 = vshrl.u32 %v640, 7
  %v642 = vadd.s32 %v641, 8
  %v643 = vadd.s32 %v641, 16
  %v644 = vadd.s32 %v641, 24
  %v645 = vadd.s32 %v641, 32
  %v646 = vadd.s32 %v641, 40
  %v647 = vadd.s32 %v641, 48
  %v648 = vadd.s32 %v641, 56
  %vm649 = vcmp.lt.s32.totalorder %v641, 0
  %v650 = vsub.s32 0, %v641
  %v651 = vsel %vm649, %v650, %v641
  %v652 = vshrl.u32 %v651, 3
  %v653 = vand.u32 %v651, 7
  %v654 = vsub.s32 0, %v653
  %v655 = vsel %vm649, %v654, %v653
  %vm656 = vcmp.lt.s32.totalorder %v642, 0
  %v657 = vsub.s32 0, %v642
  %v658 = vsel %vm656, %v657, %v642
  %v659 = vshrl.u32 %v658, 3
  %v660 = vand.u32 %v658, 7
  %v661 = vsub.s32 0, %v660
  %v662 = vsel %vm656, %v661, %v660
  %vm663 = vcmp.lt.s32.totalorder %v643, 0
  %v664 = vsub.s32 0, %v643
  %v665 = vsel %vm663, %v664, %v643
  %v666 = vshrl.u32 %v665, 3
  %v667 = vand.u32 %v665, 7
  %v668 = vsub.s32 0, %v667
  %v669 = vsel %vm663, %v668, %v667
  %vm670 = vcmp.lt.s32.totalorder %v644, 0
  %v671 = vsub.s32 0, %v644
  %v672 = vsel %vm670, %v671, %v644
  %v673 = vshrl.u32 %v672, 3
  %v674 = vand.u32 %v672, 7
  %v675 = vsub.s32 0, %v674
  %v676 = vsel %vm670, %v675, %v674
  %vm677 = vcmp.lt.s32.totalorder %v645, 0
  %v678 = vsub.s32 0, %v645
  %v679 = vsel %vm677, %v678, %v645
  %v680 = vshrl.u32 %v679, 3
  %v681 = vand.u32 %v679, 7
  %v682 = vsub.s32 0, %v681
  %v683 = vsel %vm677, %v682, %v681
  %vm684 = vcmp.lt.s32.totalorder %v646, 0
  %v685 = vsub.s32 0, %v646
  %v686 = vsel %vm684, %v685, %v646
  %v687 = vshrl.u32 %v686, 3
  %v688 = vand.u32 %v686, 7
  %v689 = vsub.s32 0, %v688
  %v690 = vsel %vm684, %v689, %v688
  %vm691 = vcmp.lt.s32.totalorder %v647, 0
  %v692 = vsub.s32 0, %v647
  %v693 = vsel %vm691, %v692, %v647
  %v694 = vshrl.u32 %v693, 3
  %v695 = vand.u32 %v693, 7
  %v696 = vsub.s32 0, %v695
  %v697 = vsel %vm691, %v696, %v695
  %vm698 = vcmp.lt.s32.totalorder %v648, 0
  %v699 = vsub.s32 0, %v648
  %v700 = vsel %vm698, %v699, %v648
  %v701 = vshrl.u32 %v700, 3
  %v702 = vand.u32 %v700, 7
  %v703 = vsub.s32 0, %v702
  %v704 = vsel %vm698, %v703, %v702
  %vm705 = vcmp.ne.s32.totalorder %v655, 0
  %vm706 = vcmp.ne.s32.totalorder %v662, 0
  %vm707 = vcmp.ne.s32.totalorder %v669, 0
  %vm708 = vcmp.ne.s32.totalorder %v676, 0
  %vm709 = vcmp.ne.s32.totalorder %v683, 0
  %vm710 = vcmp.ne.s32.totalorder %v690, 0
  %vm711 = vcmp.ne.s32.totalorder %v697, 0
  %vm712 = vcmp.ne.s32.totalorder %v704, 0
  %vm713 = vcmp.lt.s32.totalorder %v655, 0
  %vm714 = vcmp.lt.s32.totalorder %v662, 0
  %vm715 = vcmp.lt.s32.totalorder %v669, 0
  %vm716 = vcmp.lt.s32.totalorder %v676, 0
  %vm717 = vcmp.lt.s32.totalorder %v683, 0
  %vm718 = vcmp.lt.s32.totalorder %v690, 0
  %vm719 = vcmp.lt.s32.totalorder %v697, 0
  %vm720 = vcmp.lt.s32.totalorder %v704, 0
  %vm721 = vmand %vm713, %vm705
  %vm722 = vmand %vm714, %vm706
  %vm723 = vmand %vm715, %vm707
  %vm724 = vmand %vm716, %vm708
  %vm725 = vmand %vm717, %vm709
  %vm726 = vmand %vm718, %vm710
  %vm727 = vmand %vm719, %vm711
  %vm728 = vmand %vm720, %vm712
  %v729 = vadd.s32 %v655, 8
  %v730 = vadd.s32 %v662, 8
  %v731 = vadd.s32 %v669, 8
  %v732 = vadd.s32 %v676, 8
  %v733 = vadd.s32 %v683, 8
  %v734 = vadd.s32 %v690, 8
  %v735 = vadd.s32 %v697, 8
  %v736 = vadd.s32 %v704, 8
  %v737 = vsel %vm721, %v729, %v655
  %v738 = vsel %vm722, %v730, %v662
  %v739 = vsel %vm723, %v731, %v669
  %v740 = vsel %vm724, %v732, %v676
  %v741 = vsel %vm725, %v733, %v683
  %v742 = vsel %vm726, %v734, %v690
  %v743 = vsel %vm727, %v735, %v697
  %v744 = vsel %vm728, %v736, %v704
  %vm745 = vcmp.ge.s32.totalorder %v737, 1
  %vm746 = vcmp.ge.s32.totalorder %v738, 1
  %vm747 = vcmp.ge.s32.totalorder %v739, 1
  %vm748 = vcmp.ge.s32.totalorder %v740, 1
  %vm749 = vcmp.ge.s32.totalorder %v741, 1
  %vm750 = vcmp.ge.s32.totalorder %v742, 1
  %vm751 = vcmp.ge.s32.totalorder %v743, 1
  %vm752 = vcmp.ge.s32.totalorder %v744, 1
  %vm753 = vcmp.lt.s32.totalorder %v737, 7
  %vm754 = vcmp.lt.s32.totalorder %v738, 7
  %vm755 = vcmp.lt.s32.totalorder %v739, 7
  %vm756 = vcmp.lt.s32.totalorder %v740, 7
  %vm757 = vcmp.lt.s32.totalorder %v741, 7
  %vm758 = vcmp.lt.s32.totalorder %v742, 7
  %vm759 = vcmp.lt.s32.totalorder %v743, 7
  %vm760 = vcmp.lt.s32.totalorder %v744, 7
  %v761 = vld [vmem:[%s0] sm:$0xf]
  %v762 = vld [vmem:[%s0 + $0x4] sm:$0xf]
  %v763 = vld [vmem:[%s0 + $0x8] sm:$0xf]
  %v764 = vld [vmem:[%s0 + $0xc] sm:$0xf]
  %v765 = vld [vmem:[%s0 + $0x10] sm:$0xf]
  %v766 = vld [vmem:[%s0 + $0x14] sm:$0xf]
  %v767 = vld [vmem:[%s0 + $0x18] sm:$0xf]
  %v768 = vld [vmem:[%s0 + $0x1c] sm:$0xf]
  %v769 = vld [vmem:[%s1] sm:$0xf]
  %v770 = vld [vmem:[%s1 + $0x4] sm:$0xf]
  %v771 = vld [vmem:[%s1 + $0x8] sm:$0xf]
  %v772 = vld [vmem:[%s1 + $0xc] sm:$0xf]
  %v773 = vld [vmem:[%s1 + $0x10] sm:$0x3]
  %v774 = vld [vmem:[%s2] sm:$0x1]
  %v776 = vperm.slane %v774, 0
  %v786 = vunpack.c.l.b16 %v761
  %v787 = vunpack.c.l.b16 %v762
  %v788 = vunpack.c.l.b16 %v763
  %v789 = vunpack.c.l.b16 %v764
  %v790 = vunpack.c.l.b16 %v765
  %v791 = vunpack.c.l.b16 %v766
  %v792 = vunpack.c.l.b16 %v767
  %v793 = vunpack.c.l.b16 %v768
  %v794 = vpack.c.b16 %v787, %v786
  %v795 = vpack.c.b16 %v789, %v788
  %v796 = vpack.c.b16 %v791, %v790
  %v797 = vpack.c.b16 %v793, %v792
  %v803 = vunpack.c.l.b16 %v769
  %v804 = vunpack.c.l.b16 %v770
  %v805 = vunpack.c.l.b16 %v771
  %v806 = vunpack.c.l.b16 %v772
  %v807 = vunpack.c.l.b16 %v773
  %v808 = vpack.c.b16 %v804, %v803
  %v809 = vpack.c.b16 %v806, %v805
  %v810 = vpack.c.b16 %v807, %v807
  %vm813 = vcmask 293888
  %v815 = vsel %vm813, %v794, 0
  %v818 = vsel %vm813, %v795, 0
  %v821 = vsel %vm813, %v796, 0
  %v824 = vsel %vm813, %v797, 0
  %vm826 = vcmask 1041408
  %v828 = vsel %vm826, %v810, 0
  %830 = vmatpush.bf16.msra.mxu0 0
  %831 = vmatpush.bf16.msra.mxu0 0
  %832 = vmatpush.bf16.msra.mxu0 0
  %833 = vmatpush.bf16.msra.mxu0 0
  %834 = vmatpush.bf16.msra.mxu0 0
  %835 = vmatpush.bf16.msra.mxu0 %v828
  %836 = vmatpush.bf16.msra.mxu0 %v809
  %837 = vmatpush.bf16.msra.mxu0 %v808
  %838 = vmatmul.bf16.gmra.mxu0 %v815
  %v839 = vpop.f32.mrf.mxu0
  %v840 = vadd.f32 %v776, %v839
  %v841 = vpop.f32.mrf.mxu0
  %v842 = vadd.f32 %v776, %v841
  %843 = vmatmul.bf16.gmra.mxu0 %v818
  %v844 = vpop.f32.mrf.mxu0
  %v845 = vadd.f32 %v776, %v844
  %v846 = vpop.f32.mrf.mxu0
  %v847 = vadd.f32 %v776, %v846
  %848 = vmatmul.bf16.gmra.mxu0 %v821
  %v849 = vpop.f32.mrf.mxu0
  %v850 = vadd.f32 %v776, %v849
  %v851 = vpop.f32.mrf.mxu0
  %v852 = vadd.f32 %v776, %v851
  %853 = vmatmul.bf16.gmra.mxu0 %v824
  %v854 = vpop.f32.mrf.mxu0
  %v855 = vadd.f32 %v776, %v854
  %v856 = vpop.f32.mrf.mxu0
  %v857 = vadd.f32 %v776, %v856
  %858 = vdwg.mxu0
  %v859 = vmax.f32 %v840, 0.0
  %v860 = vmax.f32 %v842, 0.0
  %v861 = vmax.f32 %v845, 0.0
  %v862 = vmax.f32 %v847, 0.0
  %v863 = vmax.f32 %v850, 0.0
  %v864 = vmax.f32 %v852, 0.0
  %v865 = vmax.f32 %v855, 0.0
  %v866 = vmax.f32 %v857, 0.0
  %v867 = vld [vmem:[%s3] sm:$0xf]
  %v868 = vld [vmem:[%s3 + $0x4] sm:$0xf]
  %v869 = vld [vmem:[%s3 + $0x8] sm:$0xf]
  %v870 = vld [vmem:[%s3 + $0xc] sm:$0xf]
  %v871 = vld [vmem:[%s3 + $0x10] sm:$0xf]
  %v872 = vld [vmem:[%s3 + $0x14] sm:$0xf]
  %v873 = vld [vmem:[%s3 + $0x18] sm:$0xf]
  %v874 = vld [vmem:[%s3 + $0x1c] sm:$0xf]
  %v875 = vld [vmem:[%s3 + $0x20] sm:$0xf]
  %v876 = vld [vmem:[%s3 + $0x24] sm:$0xf]
  %v877 = vld [vmem:[%s3 + $0x28] sm:$0xf]
  %v878 = vld [vmem:[%s3 + $0x2c] sm:$0xf]
  %v879 = vld [vmem:[%s3 + $0x30] sm:$0xf]
  %v880 = vld [vmem:[%s3 + $0x34] sm:$0xf]
  %v881 = vld [vmem:[%s3 + $0x38] sm:$0xf]
  %v882 = vld [vmem:[%s3 + $0x3c] sm:$0xf]
  %v883 = vld [vmem:[%s3 + $0x40] sm:$0xf]
  %v884 = vld [vmem:[%s3 + $0x44] sm:$0xf]
  %v885 = vld [vmem:[%s4] sm:$0x1]
  %vm893 = vcmask 1040384
  %v894 = vrot.slane %v859, 7
  %v895 = vrot.slane %v860, 7
  %v896 = vsel %vm893, %v894, %v895
  %v897 = vrot.slane %v861, 7
  %v898 = vsel %vm893, %v895, %v897
  %v899 = vrot.slane %v862, 7
  %v900 = vsel %vm893, %v897, %v899
  %v901 = vrot.slane %v863, 7
  %v902 = vsel %vm893, %v899, %v901
  %v903 = vrot.slane %v864, 7
  %v904 = vsel %vm893, %v901, %v903
  %v905 = vrot.slane %v865, 7
  %v906 = vsel %vm893, %v903, %v905
  %v914 = vsel %vm893, 0.0, %v894
  %v915 = vsel %vm745, 1, 0
  %v916 = vsel %vm746, 1, 0
  %v917 = vsel %vm747, 1, 0
  %v918 = vsel %vm748, 1, 0
  %v919 = vsel %vm749, 1, 0
  %v920 = vsel %vm750, 1, 0
  %v921 = vsel %vm751, 1, 0
  %v922 = vsel %vm752, 1, 0
  %vm923 = vcmp.eq.s32.totalorder %v915, 1
  %vm924 = vcmp.eq.s32.totalorder %v916, 1
  %vm925 = vcmp.eq.s32.totalorder %v917, 1
  %vm926 = vcmp.eq.s32.totalorder %v918, 1
  %vm927 = vcmp.eq.s32.totalorder %v919, 1
  %vm928 = vcmp.eq.s32.totalorder %v920, 1
  %vm929 = vcmp.eq.s32.totalorder %v921, 1
  %vm930 = vcmp.eq.s32.totalorder %v922, 1
  %v931 = vsel %vm924, %v914, 0.0
  %v932 = vsel %vm925, %v896, 0.0
  %v933 = vsel %vm926, %v898, 0.0
  %v934 = vsel %vm927, %v900, 0.0
  %v935 = vsel %vm928, %v902, 0.0
  %v936 = vsel %vm929, %v904, 0.0
  %v937 = vsel %vm930, %v906, 0.0
  %v938 = vpack.c.bf16 0.0, 0.0
  %v939 = vpack.c.bf16 %v931, %v931
  %v940 = vpack.c.bf16 %v932, %v932
  %v941 = vpack.c.bf16 %v933, %v933
  %v942 = vpack.c.bf16 %v934, %v934
  %v943 = vpack.c.bf16 %v935, %v935
  %v944 = vpack.c.bf16 %v936, %v936
  %v945 = vpack.c.bf16 %v937, %v937
  %v946 = vpack.c.bf16 %v859, %v859
  %v947 = vpack.c.bf16 %v860, %v860
  %v948 = vpack.c.bf16 %v861, %v861
  %v949 = vpack.c.bf16 %v862, %v862
  %v950 = vpack.c.bf16 %v863, %v863
  %v951 = vpack.c.bf16 %v864, %v864
  %v952 = vpack.c.bf16 %v865, %v865
  %vm954 = vcmask 1046528
  %v955 = vrot.slane %v859, 1
  %v956 = vrot.slane %v860, 1
  %v957 = vsel %vm954, %v955, %v956
  %v958 = vrot.slane %v861, 1
  %v959 = vsel %vm954, %v956, %v958
  %v960 = vrot.slane %v862, 1
  %v961 = vsel %vm954, %v958, %v960
  %v962 = vrot.slane %v863, 1
  %v963 = vsel %vm954, %v960, %v962
  %v964 = vrot.slane %v864, 1
  %v965 = vsel %vm954, %v962, %v964
  %v966 = vrot.slane %v865, 1
  %v967 = vsel %vm954, %v964, %v966
  %v968 = vrot.slane %v866, 1
  %v969 = vsel %vm954, %v966, %v968
  %v978 = vsel %vm954, 0.0, %v955
  %v979 = vsel %vm753, 1, 0
  %v980 = vsel %vm754, 1, 0
  %v981 = vsel %vm755, 1, 0
  %v982 = vsel %vm756, 1, 0
  %v983 = vsel %vm757, 1, 0
  %v984 = vsel %vm758, 1, 0
  %v985 = vsel %vm759, 1, 0
  %v986 = vsel %vm760, 1, 0
  %vm987 = vcmp.eq.s32.totalorder %v979, 1
  %vm988 = vcmp.eq.s32.totalorder %v980, 1
  %vm989 = vcmp.eq.s32.totalorder %v981, 1
  %vm990 = vcmp.eq.s32.totalorder %v982, 1
  %vm991 = vcmp.eq.s32.totalorder %v983, 1
  %vm992 = vcmp.eq.s32.totalorder %v984, 1
  %vm993 = vcmp.eq.s32.totalorder %v985, 1
  %vm994 = vcmp.eq.s32.totalorder %v986, 1
  %v995 = vsel %vm987, %v978, 0.0
  %v996 = vsel %vm988, %v957, 0.0
  %v997 = vsel %vm989, %v959, 0.0
  %v998 = vsel %vm990, %v961, 0.0
  %v999 = vsel %vm991, %v963, 0.0
  %v1000 = vsel %vm992, %v965, 0.0
  %v1001 = vsel %vm993, %v967, 0.0
  %v1002 = vsel %vm994, %v969, 0.0
  %v1003 = vpack.c.bf16 %v995, %v995
  %v1004 = vpack.c.bf16 %v996, %v996
  %v1005 = vpack.c.bf16 %v997, %v997
  %v1006 = vpack.c.bf16 %v998, %v998
  %v1007 = vpack.c.bf16 %v999, %v999
  %v1008 = vpack.c.bf16 %v1000, %v1000
  %v1009 = vpack.c.bf16 %v1001, %v1001
  %v1010 = vpack.c.bf16 %v1002, %v1002
  %v1011 = vrot.slane %v866, 7
  %v1012 = vsel %vm893, %v905, %v1011
  %v1014 = vsel %vm923, %v914, 0.0
  %v1015 = vsel %vm924, %v896, 0.0
  %v1016 = vsel %vm925, %v898, 0.0
  %v1017 = vsel %vm926, %v900, 0.0
  %v1018 = vsel %vm927, %v902, 0.0
  %v1019 = vsel %vm928, %v904, 0.0
  %v1020 = vsel %vm929, %v906, 0.0
  %v1021 = vsel %vm930, %v1012, 0.0
  %v1022 = vpack.c.bf16 %v1014, %v1014
  %v1023 = vpack.c.bf16 %v1015, %v1015
  %v1024 = vpack.c.bf16 %v1016, %v1016
  %v1025 = vpack.c.bf16 %v1017, %v1017
  %v1026 = vpack.c.bf16 %v1018, %v1018
  %v1027 = vpack.c.bf16 %v1019, %v1019
  %v1028 = vpack.c.bf16 %v1020, %v1020
  %v1029 = vpack.c.bf16 %v1021, %v1021
  %v1030 = vpack.c.bf16 %v866, %v866
  %v1032 = vsel %vm954, %v968, 0.0
  %v1033 = vsel %vm987, %v957, 0.0
  %v1034 = vsel %vm988, %v959, 0.0
  %v1035 = vsel %vm989, %v961, 0.0
  %v1036 = vsel %vm990, %v963, 0.0
  %v1037 = vsel %vm991, %v965, 0.0
  %v1038 = vsel %vm992, %v967, 0.0
  %v1039 = vsel %vm993, %v969, 0.0
  %v1040 = vsel %vm994, %v1032, 0.0
  %v1041 = vpack.c.bf16 %v1033, %v1033
  %v1042 = vpack.c.bf16 %v1034, %v1034
  %v1043 = vpack.c.bf16 %v1035, %v1035
  %v1044 = vpack.c.bf16 %v1036, %v1036
  %v1045 = vpack.c.bf16 %v1037, %v1037
  %v1046 = vpack.c.bf16 %v1038, %v1038
  %v1047 = vpack.c.bf16 %v1039, %v1039
  %v1048 = vpack.c.bf16 %v1040, %v1040
  %v1050 = vsel %vm893, %v1011, 0.0
  %v1051 = vsel %vm923, %v896, 0.0
  %v1052 = vsel %vm924, %v898, 0.0
  %v1053 = vsel %vm925, %v900, 0.0
  %v1054 = vsel %vm926, %v902, 0.0
  %v1055 = vsel %vm927, %v904, 0.0
  %v1056 = vsel %vm928, %v906, 0.0
  %v1057 = vsel %vm929, %v1012, 0.0
  %v1058 = vsel %vm930, %v1050, 0.0
  %v1059 = vpack.c.bf16 %v1051, %v1051
  %v1060 = vpack.c.bf16 %v1052, %v1052
  %v1061 = vpack.c.bf16 %v1053, %v1053
  %v1062 = vpack.c.bf16 %v1054, %v1054
  %v1063 = vpack.c.bf16 %v1055, %v1055
  %v1064 = vpack.c.bf16 %v1056, %v1056
  %v1065 = vpack.c.bf16 %v1057, %v1057
  %v1066 = vpack.c.bf16 %v1058, %v1058
  %v1067 = vsel %vm987, %v959, 0.0
  %v1068 = vsel %vm988, %v961, 0.0
  %v1069 = vsel %vm989, %v963, 0.0
  %v1070 = vsel %vm990, %v965, 0.0
  %v1071 = vsel %vm991, %v967, 0.0
  %v1072 = vsel %vm992, %v969, 0.0
  %v1073 = vsel %vm993, %v1032, 0.0
  %v1074 = vpack.c.bf16 %v1067, %v1067
  %v1075 = vpack.c.bf16 %v1068, %v1068
  %v1076 = vpack.c.bf16 %v1069, %v1069
  %v1077 = vpack.c.bf16 %v1070, %v1070
  %v1078 = vpack.c.bf16 %v1071, %v1071
  %v1079 = vpack.c.bf16 %v1072, %v1072
  %v1080 = vpack.c.bf16 %v1073, %v1073
  %v1089 = vunpack.c.l.b16 %v938
  %v1090 = vunpack.c.l.b16 %v939
  %v1091 = vunpack.c.l.b16 %v940
  %v1092 = vunpack.c.l.b16 %v941
  %v1093 = vunpack.c.l.b16 %v942
  %v1094 = vunpack.c.l.b16 %v943
  %v1095 = vunpack.c.l.b16 %v944
  %v1096 = vunpack.c.l.b16 %v945
  %v1097 = vpack.c.b16 %v1090, %v1089
  %v1098 = vpack.c.b16 %v1092, %v1091
  %v1099 = vpack.c.b16 %v1094, %v1093
  %v1100 = vpack.c.b16 %v1096, %v1095
  %v1108 = vunpack.c.l.b16 %v946
  %v1109 = vunpack.c.l.b16 %v947
  %v1110 = vunpack.c.l.b16 %v948
  %v1111 = vunpack.c.l.b16 %v949
  %v1112 = vunpack.c.l.b16 %v950
  %v1113 = vunpack.c.l.b16 %v951
  %v1114 = vunpack.c.l.b16 %v952
  %v1115 = vpack.c.b16 %v1108, %v1089
  %v1116 = vpack.c.b16 %v1110, %v1109
  %v1117 = vpack.c.b16 %v1112, %v1111
  %v1118 = vpack.c.b16 %v1114, %v1113
  %1119 = vrot.lane.b32.xlu0 %v1115, 16
  %v1120 = vpop.permute.xlu0 %1119
  %1121 = vrot.lane.b32.xlu0 %v1116, 16
  %v1122 = vpop.permute.xlu0 %1121
  %1123 = vrot.lane.b32.xlu0 %v1117, 16
  %v1124 = vpop.permute.xlu0 %1123
  %1125 = vrot.lane.b32.xlu0 %v1118, 16
  %v1126 = vpop.permute.xlu0 %1125
  %v1135 = vunpack.c.l.b16 %v1003
  %v1136 = vunpack.c.l.b16 %v1004
  %v1137 = vunpack.c.l.b16 %v1005
  %v1138 = vunpack.c.l.b16 %v1006
  %v1139 = vunpack.c.l.b16 %v1007
  %v1140 = vunpack.c.l.b16 %v1008
  %v1141 = vunpack.c.l.b16 %v1009
  %v1142 = vunpack.c.l.b16 %v1010
  %v1143 = vpack.c.b16 %v1136, %v1135
  %v1144 = vpack.c.b16 %v1138, %v1137
  %v1145 = vpack.c.b16 %v1140, %v1139
  %v1146 = vpack.c.b16 %v1142, %v1141
  %1147 = vrot.lane.b32.xlu0 %v1143, 32
  %v1148 = vpop.permute.xlu0 %1147
  %1149 = vrot.lane.b32.xlu0 %v1144, 32
  %v1150 = vpop.permute.xlu0 %1149
  %1151 = vrot.lane.b32.xlu0 %v1145, 32
  %v1152 = vpop.permute.xlu0 %1151
  %1153 = vrot.lane.b32.xlu0 %v1146, 32
  %v1154 = vpop.permute.xlu0 %1153
  %v1163 = vunpack.c.l.b16 %v1022
  %v1164 = vunpack.c.l.b16 %v1023
  %v1165 = vunpack.c.l.b16 %v1024
  %v1166 = vunpack.c.l.b16 %v1025
  %v1167 = vunpack.c.l.b16 %v1026
  %v1168 = vunpack.c.l.b16 %v1027
  %v1169 = vunpack.c.l.b16 %v1028
  %v1170 = vunpack.c.l.b16 %v1029
  %v1171 = vpack.c.b16 %v1164, %v1163
  %v1172 = vpack.c.b16 %v1166, %v1165
  %v1173 = vpack.c.b16 %v1168, %v1167
  %v1174 = vpack.c.b16 %v1170, %v1169
  %1175 = vrot.lane.b32.xlu0 %v1171, 48
  %v1176 = vpop.permute.xlu0 %1175
  %1177 = vrot.lane.b32.xlu0 %v1172, 48
  %v1178 = vpop.permute.xlu0 %1177
  %1179 = vrot.lane.b32.xlu0 %v1173, 48
  %v1180 = vpop.permute.xlu0 %1179
  %1181 = vrot.lane.b32.xlu0 %v1174, 48
  %v1182 = vpop.permute.xlu0 %1181
  %v1184 = vunpack.c.l.b16 %v1030
  %v1185 = vpack.c.b16 %v1109, %v1108
  %v1186 = vpack.c.b16 %v1111, %v1110
  %v1187 = vpack.c.b16 %v1113, %v1112
  %v1188 = vpack.c.b16 %v1184, %v1114
  %1189 = vrot.lane.b32.xlu0 %v1185, 64
  %v1190 = vpop.permute.xlu0 %1189
  %1191 = vrot.lane.b32.xlu0 %v1186, 64
  %v1192 = vpop.permute.xlu0 %1191
  %1193 = vrot.lane.b32.xlu0 %v1187, 64
  %v1194 = vpop.permute.xlu0 %1193
  %1195 = vrot.lane.b32.xlu0 %v1188, 64
  %v1196 = vpop.permute.xlu0 %1195
  %v1205 = vunpack.c.l.b16 %v1041
  %v1206 = vunpack.c.l.b16 %v1042
  %v1207 = vunpack.c.l.b16 %v1043
  %v1208 = vunpack.c.l.b16 %v1044
  %v1209 = vunpack.c.l.b16 %v1045
  %v1210 = vunpack.c.l.b16 %v1046
  %v1211 = vunpack.c.l.b16 %v1047
  %v1212 = vunpack.c.l.b16 %v1048
  %v1213 = vpack.c.b16 %v1206, %v1205
  %v1214 = vpack.c.b16 %v1208, %v1207
  %v1215 = vpack.c.b16 %v1210, %v1209
  %v1216 = vpack.c.b16 %v1212, %v1211
  %1217 = vrot.lane.b32.xlu0 %v1213, 80
  %v1218 = vpop.permute.xlu0 %1217
  %1219 = vrot.lane.b32.xlu0 %v1214, 80
  %v1220 = vpop.permute.xlu0 %1219
  %1221 = vrot.lane.b32.xlu0 %v1215, 80
  %v1222 = vpop.permute.xlu0 %1221
  %1223 = vrot.lane.b32.xlu0 %v1216, 80
  %v1224 = vpop.permute.xlu0 %1223
  %v1233 = vunpack.c.l.b16 %v1059
  %v1234 = vunpack.c.l.b16 %v1060
  %v1235 = vunpack.c.l.b16 %v1061
  %v1236 = vunpack.c.l.b16 %v1062
  %v1237 = vunpack.c.l.b16 %v1063
  %v1238 = vunpack.c.l.b16 %v1064
  %v1239 = vunpack.c.l.b16 %v1065
  %v1240 = vunpack.c.l.b16 %v1066
  %v1241 = vpack.c.b16 %v1234, %v1233
  %v1242 = vpack.c.b16 %v1236, %v1235
  %v1243 = vpack.c.b16 %v1238, %v1237
  %v1244 = vpack.c.b16 %v1240, %v1239
  %1245 = vrot.lane.b32.xlu0 %v1241, 96
  %v1246 = vpop.permute.xlu0 %1245
  %1247 = vrot.lane.b32.xlu0 %v1242, 96
  %v1248 = vpop.permute.xlu0 %1247
  %1249 = vrot.lane.b32.xlu0 %v1243, 96
  %v1250 = vpop.permute.xlu0 %1249
  %1251 = vrot.lane.b32.xlu0 %v1244, 96
  %v1252 = vpop.permute.xlu0 %1251
  %v1253 = vpack.c.b16 %v1089, %v1184
  %1254 = vrot.lane.b32.xlu0 %v1116, 112
  %v1255 = vpop.permute.xlu0 %1254
  %1256 = vrot.lane.b32.xlu0 %v1117, 112
  %v1257 = vpop.permute.xlu0 %1256
  %1258 = vrot.lane.b32.xlu0 %v1118, 112
  %v1259 = vpop.permute.xlu0 %1258
  %1260 = vrot.lane.b32.xlu0 %v1253, 112
  %v1261 = vpop.permute.xlu0 %1260
  %v1269 = vunpack.c.l.b16 %v1074
  %v1270 = vunpack.c.l.b16 %v1075
  %v1271 = vunpack.c.l.b16 %v1076
  %v1272 = vunpack.c.l.b16 %v1077
  %v1273 = vunpack.c.l.b16 %v1078
  %v1274 = vunpack.c.l.b16 %v1079
  %v1275 = vunpack.c.l.b16 %v1080
  %v1276 = vpack.c.b16 %v1270, %v1269
  %v1277 = vpack.c.b16 %v1272, %v1271
  %v1278 = vpack.c.b16 %v1274, %v1273
  %v1279 = vpack.c.b16 %v1089, %v1275
  %vm1280 = vcmask 130048
  %v1283 = vsel %vm1280, %v1097, %v1120
  %v1286 = vsel %vm1280, %v1098, %v1122
  %v1289 = vsel %vm1280, %v1099, %v1124
  %v1292 = vsel %vm1280, %v1100, %v1126
  %vm1293 = vcmask 261120
  %v1295 = vsel %vm1293, %v1283, %v1148
  %v1297 = vsel %vm1293, %v1286, %v1150
  %v1299 = vsel %vm1293, %v1289, %v1152
  %v1301 = vsel %vm1293, %v1292, %v1154
  %vm1302 = vcmask 392192
  %v1304 = vsel %vm1302, %v1295, %v1176
  %v1306 = vsel %vm1302, %v1297, %v1178
  %v1308 = vsel %vm1302, %v1299, %v1180
  %v1310 = vsel %vm1302, %v1301, %v1182
  %vm1311 = vcmask 523264
  %v1313 = vsel %vm1311, %v1304, %v1190
  %v1315 = vsel %vm1311, %v1306, %v1192
  %v1317 = vsel %vm1311, %v1308, %v1194
  %v1319 = vsel %vm1311, %v1310, %v1196
  %vm1320 = vcmask 654336
  %v1322 = vsel %vm1320, %v1313, %v1218
  %v1324 = vsel %vm1320, %v1315, %v1220
  %v1326 = vsel %vm1320, %v1317, %v1222
  %v1328 = vsel %vm1320, %v1319, %v1224
  %vm1329 = vcmask 785408
  %v1331 = vsel %vm1329, %v1322, %v1246
  %v1333 = vsel %vm1329, %v1324, %v1248
  %v1335 = vsel %vm1329, %v1326, %v1250
  %v1337 = vsel %vm1329, %v1328, %v1252
  %vm1338 = vcmask 916480
  %v1340 = vsel %vm1338, %v1331, %v1255
  %v1343 = vsel %vm1338, %v1333, %v1257
  %v1346 = vsel %vm1338, %v1335, %v1259
  %v1349 = vsel %vm1338, %v1337, %v1261
  %v1352 = vperm.slane %v885, 0
  %v1372 = vunpack.c.l.b16 %v867
  %v1373 = vunpack.c.l.b16 %v868
  %v1374 = vunpack.c.l.b16 %v869
  %v1375 = vunpack.c.l.b16 %v870
  %v1376 = vunpack.c.l.b16 %v871
  %v1377 = vunpack.c.l.b16 %v872
  %v1378 = vunpack.c.l.b16 %v873
  %v1379 = vunpack.c.l.b16 %v874
  %v1380 = vunpack.c.l.b16 %v875
  %v1381 = vunpack.c.l.b16 %v876
  %v1382 = vunpack.c.l.b16 %v877
  %v1383 = vunpack.c.l.b16 %v878
  %v1384 = vunpack.c.l.b16 %v879
  %v1385 = vunpack.c.l.b16 %v880
  %v1386 = vunpack.c.l.b16 %v881
  %v1387 = vunpack.c.l.b16 %v882
  %v1388 = vunpack.c.l.b16 %v883
  %v1389 = vunpack.c.l.b16 %v884
  %v1390 = vpack.c.b16 %v1373, %v1372
  %v1391 = vpack.c.b16 %v1375, %v1374
  %v1392 = vpack.c.b16 %v1377, %v1376
  %v1393 = vpack.c.b16 %v1379, %v1378
  %v1394 = vpack.c.b16 %v1381, %v1380
  %v1395 = vpack.c.b16 %v1383, %v1382
  %v1396 = vpack.c.b16 %v1385, %v1384
  %v1397 = vpack.c.b16 %v1387, %v1386
  %v1398 = vpack.c.b16 %v1389, %v1388
  %v1409 = vsel %vm1280, %v1276, 0
  %v1412 = vsel %vm1280, %v1277, 0
  %v1415 = vsel %vm1280, %v1278, 0
  %v1418 = vsel %vm1280, %v1279, 0
  %1420 = vmatpush.bf16.msra.mxu0 %v1397
  %1421 = vmatpush.bf16.msra.mxu0 %v1396
  %1422 = vmatpush.bf16.msra.mxu0 %v1395
  %1423 = vmatpush.bf16.msra.mxu0 %v1394
  %1424 = vmatpush.bf16.msra.mxu0 %v1393
  %1425 = vmatpush.bf16.msra.mxu0 %v1392
  %1426 = vmatpush.bf16.msra.mxu0 %v1391
  %1427 = vmatpush.bf16.msra.mxu0 %v1390
  %1428 = vmatmul.bf16.gmra.mxu0 %v1340
  %v1429 = vpop.f32.mrf.mxu0
  %v1430 = vadd.f32 %v1352, %v1429
  %v1431 = vpop.f32.mrf.mxu0
  %v1432 = vadd.f32 %v1352, %v1431
  %1433 = vmatmul.bf16.gmra.mxu0 %v1343
  %v1434 = vpop.f32.mrf.mxu0
  %v1435 = vadd.f32 %v1352, %v1434
  %v1436 = vpop.f32.mrf.mxu0
  %v1437 = vadd.f32 %v1352, %v1436
  %1438 = vmatmul.bf16.gmra.mxu0 %v1346
  %v1439 = vpop.f32.mrf.mxu0
  %v1440 = vadd.f32 %v1352, %v1439
  %v1441 = vpop.f32.mrf.mxu0
  %v1442 = vadd.f32 %v1352, %v1441
  %1443 = vmatmul.bf16.gmra.mxu0 %v1349
  %v1444 = vpop.f32.mrf.mxu0
  %v1445 = vadd.f32 %v1352, %v1444
  %v1446 = vpop.f32.mrf.mxu0
  %v1447 = vadd.f32 %v1352, %v1446
  %1448 = vdwg.mxu0
  %1449 = vmatpush.bf16.msra.mxu0 0
  %1450 = vmatpush.bf16.msra.mxu0 0
  %1451 = vmatpush.bf16.msra.mxu0 0
  %1452 = vmatpush.bf16.msra.mxu0 0
  %1453 = vmatpush.bf16.msra.mxu0 0
  %1454 = vmatpush.bf16.msra.mxu0 0
  %1455 = vmatpush.bf16.msra.mxu0 0
  %1456 = vmatpush.bf16.msra.mxu0 %v1398
  %1457 = vmatmul.bf16.gmra.mxu0 %v1409
  %v1458 = vpop.f32.mrf.mxu0
  %v1459 = vadd.f32 %v1430, %v1458
  %v1460 = vpop.f32.mrf.mxu0
  %v1461 = vadd.f32 %v1432, %v1460
  %1462 = vmatmul.bf16.gmra.mxu0 %v1412
  %v1463 = vpop.f32.mrf.mxu0
  %v1464 = vadd.f32 %v1435, %v1463
  %v1465 = vpop.f32.mrf.mxu0
  %v1466 = vadd.f32 %v1437, %v1465
  %1467 = vmatmul.bf16.gmra.mxu0 %v1415
  %v1468 = vpop.f32.mrf.mxu0
  %v1469 = vadd.f32 %v1440, %v1468
  %v1470 = vpop.f32.mrf.mxu0
  %v1471 = vadd.f32 %v1442, %v1470
  %1472 = vmatmul.bf16.gmra.mxu0 %v1418
  %v1473 = vpop.f32.mrf.mxu0
  %v1474 = vadd.f32 %v1445, %v1473
  %v1475 = vpop.f32.mrf.mxu0
  %v1476 = vadd.f32 %v1447, %v1475
  %1477 = vdwg.mxu0
  %v1478 = vmax.f32 %v1459, 0.0
  %v1479 = vmax.f32 %v1461, 0.0
  %v1480 = vmax.f32 %v1464, 0.0
  %v1481 = vmax.f32 %v1466, 0.0
  %v1482 = vmax.f32 %v1469, 0.0
  %v1483 = vmax.f32 %v1471, 0.0
  %v1484 = vmax.f32 %v1474, 0.0
  %v1485 = vmax.f32 %v1476, 0.0
  %v1486 = vld [vmem:[%s5] sm:$0xf]
  %v1487 = vld [vmem:[%s5 + $0x4] sm:$0xf]
  %v1488 = vld [vmem:[%s5 + $0x8] sm:$0xf]
  %v1489 = vld [vmem:[%s5 + $0xc] sm:$0xf]
  %v1490 = vld [vmem:[%s5 + $0x10] sm:$0xf]
  %v1491 = vld [vmem:[%s5 + $0x14] sm:$0xf]
  %v1492 = vld [vmem:[%s5 + $0x18] sm:$0xf]
  %v1493 = vld [vmem:[%s5 + $0x1c] sm:$0xf]
  %v1494 = vld [vmem:[%s5 + $0x20] sm:$0xf]
  %v1495 = vld [vmem:[%s5 + $0x24] sm:$0xf]
  %v1496 = vld [vmem:[%s5 + $0x28] sm:$0xf]
  %v1497 = vld [vmem:[%s5 + $0x2c] sm:$0xf]
  %v1498 = vld [vmem:[%s5 + $0x30] sm:$0xf]
  %v1499 = vld [vmem:[%s5 + $0x34] sm:$0xf]
  %v1500 = vld [vmem:[%s5 + $0x38] sm:$0xf]
  %v1501 = vld [vmem:[%s5 + $0x3c] sm:$0xf]
  %v1502 = vld [vmem:[%s5 + $0x40] sm:$0xf]
  %v1503 = vld [vmem:[%s5 + $0x44] sm:$0xf]
  %v1504 = vld [vmem:[%s5 + $0x48] sm:$0xf]
  %v1505 = vld [vmem:[%s5 + $0x4c] sm:$0xf]
  %v1506 = vld [vmem:[%s5 + $0x50] sm:$0xf]
  %v1507 = vld [vmem:[%s5 + $0x54] sm:$0xf]
  %v1508 = vld [vmem:[%s5 + $0x58] sm:$0xf]
  %v1509 = vld [vmem:[%s5 + $0x5c] sm:$0xf]
  %v1510 = vld [vmem:[%s5 + $0x60] sm:$0xf]
  %v1511 = vld [vmem:[%s5 + $0x64] sm:$0xf]
  %v1512 = vld [vmem:[%s5 + $0x68] sm:$0xf]
  %v1513 = vld [vmem:[%s5 + $0x6c] sm:$0xf]
  %v1514 = vld [vmem:[%s5 + $0x70] sm:$0xf]
  %v1515 = vld [vmem:[%s5 + $0x74] sm:$0xf]
  %v1516 = vld [vmem:[%s5 + $0x78] sm:$0xf]
  %v1517 = vld [vmem:[%s5 + $0x7c] sm:$0xf]
  %v1518 = vld [vmem:[%s5 + $0x80] sm:$0xf]
  %v1519 = vld [vmem:[%s5 + $0x84] sm:$0xf]
  %v1520 = vld [vmem:[%s5 + $0x88] sm:$0xf]
  %v1521 = vld [vmem:[%s5 + $0x8c] sm:$0xf]
  %v1522 = vld [vmem:[%s6] sm:$0x1]
  %v1530 = vrot.slane %v1478, 7
  %v1531 = vrot.slane %v1479, 7
  %v1532 = vsel %vm893, %v1530, %v1531
  %v1533 = vrot.slane %v1480, 7
  %v1534 = vsel %vm893, %v1531, %v1533
  %v1535 = vrot.slane %v1481, 7
  %v1536 = vsel %vm893, %v1533, %v1535
  %v1537 = vrot.slane %v1482, 7
  %v1538 = vsel %vm893, %v1535, %v1537
  %v1539 = vrot.slane %v1483, 7
  %v1540 = vsel %vm893, %v1537, %v1539
  %v1541 = vrot.slane %v1484, 7
  %v1542 = vsel %vm893, %v1539, %v1541
  %v1550 = vsel %vm893, 0.0, %v1530
  %v1551 = vsel %vm924, %v1550, 0.0
  %v1552 = vsel %vm925, %v1532, 0.0
  %v1553 = vsel %vm926, %v1534, 0.0
  %v1554 = vsel %vm927, %v1536, 0.0
  %v1555 = vsel %vm928, %v1538, 0.0
  %v1556 = vsel %vm929, %v1540, 0.0
  %v1557 = vsel %vm930, %v1542, 0.0
  %v1558 = vpack.c.bf16 %v1551, %v1551
  %v1559 = vpack.c.bf16 %v1552, %v1552
  %v1560 = vpack.c.bf16 %v1553, %v1553
  %v1561 = vpack.c.bf16 %v1554, %v1554
  %v1562 = vpack.c.bf16 %v1555, %v1555
  %v1563 = vpack.c.bf16 %v1556, %v1556
  %v1564 = vpack.c.bf16 %v1557, %v1557
  %v1565 = vpack.c.bf16 %v1478, %v1478
  %v1566 = vpack.c.bf16 %v1479, %v1479
  %v1567 = vpack.c.bf16 %v1480, %v1480
  %v1568 = vpack.c.bf16 %v1481, %v1481
  %v1569 = vpack.c.bf16 %v1482, %v1482
  %v1570 = vpack.c.bf16 %v1483, %v1483
  %v1571 = vpack.c.bf16 %v1484, %v1484
  %v1573 = vrot.slane %v1478, 1
  %v1574 = vrot.slane %v1479, 1
  %v1575 = vsel %vm954, %v1573, %v1574
  %v1576 = vrot.slane %v1480, 1
  %v1577 = vsel %vm954, %v1574, %v1576
  %v1578 = vrot.slane %v1481, 1
  %v1579 = vsel %vm954, %v1576, %v1578
  %v1580 = vrot.slane %v1482, 1
  %v1581 = vsel %vm954, %v1578, %v1580
  %v1582 = vrot.slane %v1483, 1
  %v1583 = vsel %vm954, %v1580, %v1582
  %v1584 = vrot.slane %v1484, 1
  %v1585 = vsel %vm954, %v1582, %v1584
  %v1586 = vrot.slane %v1485, 1
  %v1587 = vsel %vm954, %v1584, %v1586
  %v1596 = vsel %vm954, 0.0, %v1573
  %v1597 = vsel %vm987, %v1596, 0.0
  %v1598 = vsel %vm988, %v1575, 0.0
  %v1599 = vsel %vm989, %v1577, 0.0
  %v1600 = vsel %vm990, %v1579, 0.0
  %v1601 = vsel %vm991, %v1581, 0.0
  %v1602 = vsel %vm992, %v1583, 0.0
  %v1603 = vsel %vm993, %v1585, 0.0
  %v1604 = vsel %vm994, %v1587, 0.0
  %v1605 = vpack.c.bf16 %v1597, %v1597
  %v1606 = vpack.c.bf16 %v1598, %v1598
  %v1607 = vpack.c.bf16 %v1599, %v1599
  %v1608 = vpack.c.bf16 %v1600, %v1600
  %v1609 = vpack.c.bf16 %v1601, %v1601
  %v1610 = vpack.c.bf16 %v1602, %v1602
  %v1611 = vpack.c.bf16 %v1603, %v1603
  %v1612 = vpack.c.bf16 %v1604, %v1604
  %v1613 = vrot.slane %v1485, 7
  %v1614 = vsel %vm893, %v1541, %v1613
  %v1616 = vsel %vm923, %v1550, 0.0
  %v1617 = vsel %vm924, %v1532, 0.0
  %v1618 = vsel %vm925, %v1534, 0.0
  %v1619 = vsel %vm926, %v1536, 0.0
  %v1620 = vsel %vm927, %v1538, 0.0
  %v1621 = vsel %vm928, %v1540, 0.0
  %v1622 = vsel %vm929, %v1542, 0.0
  %v1623 = vsel %vm930, %v1614, 0.0
  %v1624 = vpack.c.bf16 %v1616, %v1616
  %v1625 = vpack.c.bf16 %v1617, %v1617
  %v1626 = vpack.c.bf16 %v1618, %v1618
  %v1627 = vpack.c.bf16 %v1619, %v1619
  %v1628 = vpack.c.bf16 %v1620, %v1620
  %v1629 = vpack.c.bf16 %v1621, %v1621
  %v1630 = vpack.c.bf16 %v1622, %v1622
  %v1631 = vpack.c.bf16 %v1623, %v1623
  %v1632 = vpack.c.bf16 %v1485, %v1485
  %v1634 = vsel %vm954, %v1586, 0.0
  %v1635 = vsel %vm987, %v1575, 0.0
  %v1636 = vsel %vm988, %v1577, 0.0
  %v1637 = vsel %vm989, %v1579, 0.0
  %v1638 = vsel %vm990, %v1581, 0.0
  %v1639 = vsel %vm991, %v1583, 0.0
  %v1640 = vsel %vm992, %v1585, 0.0
  %v1641 = vsel %vm993, %v1587, 0.0
  %v1642 = vsel %vm994, %v1634, 0.0
  %v1643 = vpack.c.bf16 %v1635, %v1635
  %v1644 = vpack.c.bf16 %v1636, %v1636
  %v1645 = vpack.c.bf16 %v1637, %v1637
  %v1646 = vpack.c.bf16 %v1638, %v1638
  %v1647 = vpack.c.bf16 %v1639, %v1639
  %v1648 = vpack.c.bf16 %v1640, %v1640
  %v1649 = vpack.c.bf16 %v1641, %v1641
  %v1650 = vpack.c.bf16 %v1642, %v1642
  %v1652 = vsel %vm893, %v1613, 0.0
  %v1653 = vsel %vm923, %v1532, 0.0
  %v1654 = vsel %vm924, %v1534, 0.0
  %v1655 = vsel %vm925, %v1536, 0.0
  %v1656 = vsel %vm926, %v1538, 0.0
  %v1657 = vsel %vm927, %v1540, 0.0
  %v1658 = vsel %vm928, %v1542, 0.0
  %v1659 = vsel %vm929, %v1614, 0.0
  %v1660 = vsel %vm930, %v1652, 0.0
  %v1661 = vpack.c.bf16 %v1653, %v1653
  %v1662 = vpack.c.bf16 %v1654, %v1654
  %v1663 = vpack.c.bf16 %v1655, %v1655
  %v1664 = vpack.c.bf16 %v1656, %v1656
  %v1665 = vpack.c.bf16 %v1657, %v1657
  %v1666 = vpack.c.bf16 %v1658, %v1658
  %v1667 = vpack.c.bf16 %v1659, %v1659
  %v1668 = vpack.c.bf16 %v1660, %v1660
  %v1669 = vsel %vm987, %v1577, 0.0
  %v1670 = vsel %vm988, %v1579, 0.0
  %v1671 = vsel %vm989, %v1581, 0.0
  %v1672 = vsel %vm990, %v1583, 0.0
  %v1673 = vsel %vm991, %v1585, 0.0
  %v1674 = vsel %vm992, %v1587, 0.0
  %v1675 = vsel %vm993, %v1634, 0.0
  %v1676 = vpack.c.bf16 %v1669, %v1669
  %v1677 = vpack.c.bf16 %v1670, %v1670
  %v1678 = vpack.c.bf16 %v1671, %v1671
  %v1679 = vpack.c.bf16 %v1672, %v1672
  %v1680 = vpack.c.bf16 %v1673, %v1673
  %v1681 = vpack.c.bf16 %v1674, %v1674
  %v1682 = vpack.c.bf16 %v1675, %v1675
  %v1690 = vunpack.c.l.b16 %v1558
  %v1691 = vunpack.c.l.b16 %v1559
  %v1692 = vunpack.c.l.b16 %v1560
  %v1693 = vunpack.c.l.b16 %v1561
  %v1694 = vunpack.c.l.b16 %v1562
  %v1695 = vunpack.c.l.b16 %v1563
  %v1696 = vunpack.c.l.b16 %v1564
  %v1697 = vpack.c.b16 %v1690, %v1089
  %v1698 = vpack.c.b16 %v1692, %v1691
  %v1699 = vpack.c.b16 %v1694, %v1693
  %v1700 = vpack.c.b16 %v1696, %v1695
  %v1708 = vunpack.c.l.b16 %v1565
  %v1709 = vunpack.c.l.b16 %v1566
  %v1710 = vunpack.c.l.b16 %v1567
  %v1711 = vunpack.c.l.b16 %v1568
  %v1712 = vunpack.c.l.b16 %v1569
  %v1713 = vunpack.c.l.b16 %v1570
  %v1714 = vunpack.c.l.b16 %v1571
  %v1715 = vpack.c.b16 %v1708, %v1089
  %v1716 = vpack.c.b16 %v1710, %v1709
  %v1717 = vpack.c.b16 %v1712, %v1711
  %v1718 = vpack.c.b16 %v1714, %v1713
  %1719 = vrot.lane.b32.xlu0 %v1715, 32
  %v1720 = vpop.permute.xlu0 %1719
  %1721 = vrot.lane.b32.xlu0 %v1716, 32
  %v1722 = vpop.permute.xlu0 %1721
  %1723 = vrot.lane.b32.xlu0 %v1717, 32
  %v1724 = vpop.permute.xlu0 %1723
  %1725 = vrot.lane.b32.xlu0 %v1718, 32
  %v1726 = vpop.permute.xlu0 %1725
  %v1735 = vunpack.c.l.b16 %v1605
  %v1736 = vunpack.c.l.b16 %v1606
  %v1737 = vunpack.c.l.b16 %v1607
  %v1738 = vunpack.c.l.b16 %v1608
  %v1739 = vunpack.c.l.b16 %v1609
  %v1740 = vunpack.c.l.b16 %v1610
  %v1741 = vunpack.c.l.b16 %v1611
  %v1742 = vunpack.c.l.b16 %v1612
  %v1743 = vpack.c.b16 %v1736, %v1735
  %v1744 = vpack.c.b16 %v1738, %v1737
  %v1745 = vpack.c.b16 %v1740, %v1739
  %v1746 = vpack.c.b16 %v1742, %v1741
  %1747 = vrot.lane.b32.xlu0 %v1743, 64
  %v1748 = vpop.permute.xlu0 %1747
  %1749 = vrot.lane.b32.xlu0 %v1744, 64
  %v1750 = vpop.permute.xlu0 %1749
  %1751 = vrot.lane.b32.xlu0 %v1745, 64
  %v1752 = vpop.permute.xlu0 %1751
  %1753 = vrot.lane.b32.xlu0 %v1746, 64
  %v1754 = vpop.permute.xlu0 %1753
  %v1763 = vunpack.c.l.b16 %v1624
  %v1764 = vunpack.c.l.b16 %v1625
  %v1765 = vunpack.c.l.b16 %v1626
  %v1766 = vunpack.c.l.b16 %v1627
  %v1767 = vunpack.c.l.b16 %v1628
  %v1768 = vunpack.c.l.b16 %v1629
  %v1769 = vunpack.c.l.b16 %v1630
  %v1770 = vunpack.c.l.b16 %v1631
  %v1771 = vpack.c.b16 %v1764, %v1763
  %v1772 = vpack.c.b16 %v1766, %v1765
  %v1773 = vpack.c.b16 %v1768, %v1767
  %v1774 = vpack.c.b16 %v1770, %v1769
  %1775 = vrot.lane.b32.xlu0 %v1771, 96
  %v1776 = vpop.permute.xlu0 %1775
  %1777 = vrot.lane.b32.xlu0 %v1772, 96
  %v1778 = vpop.permute.xlu0 %1777
  %1779 = vrot.lane.b32.xlu0 %v1773, 96
  %v1780 = vpop.permute.xlu0 %1779
  %1781 = vrot.lane.b32.xlu0 %v1774, 96
  %v1782 = vpop.permute.xlu0 %1781
  %v1784 = vunpack.c.l.b16 %v1632
  %v1785 = vpack.c.b16 %v1709, %v1708
  %v1786 = vpack.c.b16 %v1711, %v1710
  %v1787 = vpack.c.b16 %v1713, %v1712
  %v1788 = vpack.c.b16 %v1784, %v1714
  %v1797 = vunpack.c.l.b16 %v1643
  %v1798 = vunpack.c.l.b16 %v1644
  %v1799 = vunpack.c.l.b16 %v1645
  %v1800 = vunpack.c.l.b16 %v1646
  %v1801 = vunpack.c.l.b16 %v1647
  %v1802 = vunpack.c.l.b16 %v1648
  %v1803 = vunpack.c.l.b16 %v1649
  %v1804 = vunpack.c.l.b16 %v1650
  %v1805 = vpack.c.b16 %v1798, %v1797
  %v1806 = vpack.c.b16 %v1800, %v1799
  %v1807 = vpack.c.b16 %v1802, %v1801
  %v1808 = vpack.c.b16 %v1804, %v1803
  %1809 = vrot.lane.b32.xlu0 %v1805, 32
  %v1810 = vpop.permute.xlu0 %1809
  %1811 = vrot.lane.b32.xlu0 %v1806, 32
  %v1812 = vpop.permute.xlu0 %1811
  %1813 = vrot.lane.b32.xlu0 %v1807, 32
  %v1814 = vpop.permute.xlu0 %1813
  %1815 = vrot.lane.b32.xlu0 %v1808, 32
  %v1816 = vpop.permute.xlu0 %1815
  %v1825 = vunpack.c.l.b16 %v1661
  %v1826 = vunpack.c.l.b16 %v1662
  %v1827 = vunpack.c.l.b16 %v1663
  %v1828 = vunpack.c.l.b16 %v1664
  %v1829 = vunpack.c.l.b16 %v1665
  %v1830 = vunpack.c.l.b16 %v1666
  %v1831 = vunpack.c.l.b16 %v1667
  %v1832 = vunpack.c.l.b16 %v1668
  %v1833 = vpack.c.b16 %v1826, %v1825
  %v1834 = vpack.c.b16 %v1828, %v1827
  %v1835 = vpack.c.b16 %v1830, %v1829
  %v1836 = vpack.c.b16 %v1832, %v1831
  %1837 = vrot.lane.b32.xlu0 %v1833, 64
  %v1838 = vpop.permute.xlu0 %1837
  %1839 = vrot.lane.b32.xlu0 %v1834, 64
  %v1840 = vpop.permute.xlu0 %1839
  %1841 = vrot.lane.b32.xlu0 %v1835, 64
  %v1842 = vpop.permute.xlu0 %1841
  %1843 = vrot.lane.b32.xlu0 %v1836, 64
  %v1844 = vpop.permute.xlu0 %1843
  %v1845 = vpack.c.b16 %v1089, %v1784
  %1846 = vrot.lane.b32.xlu0 %v1716, 96
  %v1847 = vpop.permute.xlu0 %1846
  %1848 = vrot.lane.b32.xlu0 %v1717, 96
  %v1849 = vpop.permute.xlu0 %1848
  %1850 = vrot.lane.b32.xlu0 %v1718, 96
  %v1851 = vpop.permute.xlu0 %1850
  %1852 = vrot.lane.b32.xlu0 %v1845, 96
  %v1853 = vpop.permute.xlu0 %1852
  %v1861 = vunpack.c.l.b16 %v1676
  %v1862 = vunpack.c.l.b16 %v1677
  %v1863 = vunpack.c.l.b16 %v1678
  %v1864 = vunpack.c.l.b16 %v1679
  %v1865 = vunpack.c.l.b16 %v1680
  %v1866 = vunpack.c.l.b16 %v1681
  %v1867 = vunpack.c.l.b16 %v1682
  %v1868 = vpack.c.b16 %v1862, %v1861
  %v1869 = vpack.c.b16 %v1864, %v1863
  %v1870 = vpack.c.b16 %v1866, %v1865
  %v1871 = vpack.c.b16 %v1089, %v1867
  %v1874 = vsel %vm1293, %v1697, %v1720
  %v1877 = vsel %vm1293, %v1698, %v1722
  %v1880 = vsel %vm1293, %v1699, %v1724
  %v1883 = vsel %vm1293, %v1700, %v1726
  %v1885 = vsel %vm1311, %v1874, %v1748
  %v1887 = vsel %vm1311, %v1877, %v1750
  %v1889 = vsel %vm1311, %v1880, %v1752
  %v1891 = vsel %vm1311, %v1883, %v1754
  %v1893 = vsel %vm1329, %v1885, %v1776
  %v1896 = vsel %vm1329, %v1887, %v1778
  %v1899 = vsel %vm1329, %v1889, %v1780
  %v1902 = vsel %vm1329, %v1891, %v1782
  %v1906 = vsel %vm1293, %v1785, %v1810
  %v1909 = vsel %vm1293, %v1786, %v1812
  %v1912 = vsel %vm1293, %v1787, %v1814
  %v1915 = vsel %vm1293, %v1788, %v1816
  %v1917 = vsel %vm1311, %v1906, %v1838
  %v1919 = vsel %vm1311, %v1909, %v1840
  %v1921 = vsel %vm1311, %v1912, %v1842
  %v1923 = vsel %vm1311, %v1915, %v1844
  %v1925 = vsel %vm1329, %v1917, %v1847
  %v1928 = vsel %vm1329, %v1919, %v1849
  %v1931 = vsel %vm1329, %v1921, %v1851
  %v1934 = vsel %vm1329, %v1923, %v1853
  %v1937 = vperm.slane %v1522, 0
  %v1975 = vunpack.c.l.b16 %v1486
  %v1976 = vunpack.c.l.b16 %v1487
  %v1977 = vunpack.c.l.b16 %v1488
  %v1978 = vunpack.c.l.b16 %v1489
  %v1979 = vunpack.c.l.b16 %v1490
  %v1980 = vunpack.c.l.b16 %v1491
  %v1981 = vunpack.c.l.b16 %v1492
  %v1982 = vunpack.c.l.b16 %v1493
  %v1983 = vunpack.c.l.b16 %v1494
  %v1984 = vunpack.c.l.b16 %v1495
  %v1985 = vunpack.c.l.b16 %v1496
  %v1986 = vunpack.c.l.b16 %v1497
  %v1987 = vunpack.c.l.b16 %v1498
  %v1988 = vunpack.c.l.b16 %v1499
  %v1989 = vunpack.c.l.b16 %v1500
  %v1990 = vunpack.c.l.b16 %v1501
  %v1991 = vunpack.c.l.b16 %v1502
  %v1992 = vunpack.c.l.b16 %v1503
  %v1993 = vunpack.c.l.b16 %v1504
  %v1994 = vunpack.c.l.b16 %v1505
  %v1995 = vunpack.c.l.b16 %v1506
  %v1996 = vunpack.c.l.b16 %v1507
  %v1997 = vunpack.c.l.b16 %v1508
  %v1998 = vunpack.c.l.b16 %v1509
  %v1999 = vunpack.c.l.b16 %v1510
  %v2000 = vunpack.c.l.b16 %v1511
  %v2001 = vunpack.c.l.b16 %v1512
  %v2002 = vunpack.c.l.b16 %v1513
  %v2003 = vunpack.c.l.b16 %v1514
  %v2004 = vunpack.c.l.b16 %v1515
  %v2005 = vunpack.c.l.b16 %v1516
  %v2006 = vunpack.c.l.b16 %v1517
  %v2007 = vunpack.c.l.b16 %v1518
  %v2008 = vunpack.c.l.b16 %v1519
  %v2009 = vunpack.c.l.b16 %v1520
  %v2010 = vunpack.c.l.b16 %v1521
  %v2011 = vpack.c.b16 %v1976, %v1975
  %v2012 = vpack.c.b16 %v1978, %v1977
  %v2013 = vpack.c.b16 %v1980, %v1979
  %v2014 = vpack.c.b16 %v1982, %v1981
  %v2015 = vpack.c.b16 %v1984, %v1983
  %v2016 = vpack.c.b16 %v1986, %v1985
  %v2017 = vpack.c.b16 %v1988, %v1987
  %v2018 = vpack.c.b16 %v1990, %v1989
  %v2019 = vpack.c.b16 %v1992, %v1991
  %v2020 = vpack.c.b16 %v1994, %v1993
  %v2021 = vpack.c.b16 %v1996, %v1995
  %v2022 = vpack.c.b16 %v1998, %v1997
  %v2023 = vpack.c.b16 %v2000, %v1999
  %v2024 = vpack.c.b16 %v2002, %v2001
  %v2025 = vpack.c.b16 %v2004, %v2003
  %v2026 = vpack.c.b16 %v2006, %v2005
  %v2027 = vpack.c.b16 %v2008, %v2007
  %v2028 = vpack.c.b16 %v2010, %v2009
  %v2048 = vsel %vm1293, %v1868, 0
  %v2051 = vsel %vm1293, %v1869, 0
  %v2054 = vsel %vm1293, %v1870, 0
  %v2057 = vsel %vm1293, %v1871, 0
  %2059 = vmatpush.bf16.msra.mxu0 %v2018
  %2060 = vmatpush.bf16.msra.mxu0 %v2017
  %2061 = vmatpush.bf16.msra.mxu0 %v2016
  %2062 = vmatpush.bf16.msra.mxu0 %v2015
  %2063 = vmatpush.bf16.msra.mxu0 %v2014
  %2064 = vmatpush.bf16.msra.mxu0 %v2013
  %2065 = vmatpush.bf16.msra.mxu0 %v2012
  %2066 = vmatpush.bf16.msra.mxu0 %v2011
  %2067 = vmatmul.bf16.gmra.mxu0 %v1893
  %v2068 = vpop.f32.mrf.mxu0
  %v2069 = vadd.f32 %v1937, %v2068
  %v2070 = vpop.f32.mrf.mxu0
  %v2071 = vadd.f32 %v1937, %v2070
  %2072 = vmatmul.bf16.gmra.mxu0 %v1896
  %v2073 = vpop.f32.mrf.mxu0
  %v2074 = vadd.f32 %v1937, %v2073
  %v2075 = vpop.f32.mrf.mxu0
  %v2076 = vadd.f32 %v1937, %v2075
  %2077 = vmatmul.bf16.gmra.mxu0 %v1899
  %v2078 = vpop.f32.mrf.mxu0
  %v2079 = vadd.f32 %v1937, %v2078
  %v2080 = vpop.f32.mrf.mxu0
  %v2081 = vadd.f32 %v1937, %v2080
  %2082 = vmatmul.bf16.gmra.mxu0 %v1902
  %v2083 = vpop.f32.mrf.mxu0
  %v2084 = vadd.f32 %v1937, %v2083
  %v2085 = vpop.f32.mrf.mxu0
  %v2086 = vadd.f32 %v1937, %v2085
  %2087 = vdwg.mxu0
  %2088 = vmatpush.bf16.msra.mxu0 %v2026
  %2089 = vmatpush.bf16.msra.mxu0 %v2025
  %2090 = vmatpush.bf16.msra.mxu0 %v2024
  %2091 = vmatpush.bf16.msra.mxu0 %v2023
  %2092 = vmatpush.bf16.msra.mxu0 %v2022
  %2093 = vmatpush.bf16.msra.mxu0 %v2021
  %2094 = vmatpush.bf16.msra.mxu0 %v2020
  %2095 = vmatpush.bf16.msra.mxu0 %v2019
  %2096 = vmatmul.bf16.gmra.mxu0 %v1925
  %v2097 = vpop.f32.mrf.mxu0
  %v2098 = vadd.f32 %v2069, %v2097
  %v2099 = vpop.f32.mrf.mxu0
  %v2100 = vadd.f32 %v2071, %v2099
  %2101 = vmatmul.bf16.gmra.mxu0 %v1928
  %v2102 = vpop.f32.mrf.mxu0
  %v2103 = vadd.f32 %v2074, %v2102
  %v2104 = vpop.f32.mrf.mxu0
  %v2105 = vadd.f32 %v2076, %v2104
  %2106 = vmatmul.bf16.gmra.mxu0 %v1931
  %v2107 = vpop.f32.mrf.mxu0
  %v2108 = vadd.f32 %v2079, %v2107
  %v2109 = vpop.f32.mrf.mxu0
  %v2110 = vadd.f32 %v2081, %v2109
  %2111 = vmatmul.bf16.gmra.mxu0 %v1934
  %v2112 = vpop.f32.mrf.mxu0
  %v2113 = vadd.f32 %v2084, %v2112
  %v2114 = vpop.f32.mrf.mxu0
  %v2115 = vadd.f32 %v2086, %v2114
  %2116 = vdwg.mxu0
  %2117 = vmatpush.bf16.msra.mxu0 0
  %2118 = vmatpush.bf16.msra.mxu0 0
  %2119 = vmatpush.bf16.msra.mxu0 0
  %2120 = vmatpush.bf16.msra.mxu0 0
  %2121 = vmatpush.bf16.msra.mxu0 0
  %2122 = vmatpush.bf16.msra.mxu0 0
  %2123 = vmatpush.bf16.msra.mxu0 %v2028
  %2124 = vmatpush.bf16.msra.mxu0 %v2027
  %2125 = vmatmul.bf16.gmra.mxu0 %v2048
  %v2126 = vpop.f32.mrf.mxu0
  %v2127 = vadd.f32 %v2098, %v2126
  %v2128 = vpop.f32.mrf.mxu0
  %v2129 = vadd.f32 %v2100, %v2128
  %2130 = vmatmul.bf16.gmra.mxu0 %v2051
  %v2131 = vpop.f32.mrf.mxu0
  %v2132 = vadd.f32 %v2103, %v2131
  %v2133 = vpop.f32.mrf.mxu0
  %v2134 = vadd.f32 %v2105, %v2133
  %2135 = vmatmul.bf16.gmra.mxu0 %v2054
  %v2136 = vpop.f32.mrf.mxu0
  %v2137 = vadd.f32 %v2108, %v2136
  %v2138 = vpop.f32.mrf.mxu0
  %v2139 = vadd.f32 %v2110, %v2138
  %2140 = vmatmul.bf16.gmra.mxu0 %v2057
  %v2141 = vpop.f32.mrf.mxu0
  %v2142 = vadd.f32 %v2113, %v2141
  %v2143 = vpop.f32.mrf.mxu0
  %v2144 = vadd.f32 %v2115, %v2143
  %2145 = vdwg.mxu0
  %v2146 = vmax.f32 %v2127, 0.0
  %v2147 = vmax.f32 %v2129, 0.0
  %v2148 = vmax.f32 %v2132, 0.0
  %v2149 = vmax.f32 %v2134, 0.0
  %v2150 = vmax.f32 %v2137, 0.0
  %v2151 = vmax.f32 %v2139, 0.0
  %v2152 = vmax.f32 %v2142, 0.0
  %v2153 = vmax.f32 %v2144, 0.0
  %v2154 = vld [vmem:[%s7] sm:$0xf]
  %v2155 = vld [vmem:[%s7 + $0x4] sm:$0xf]
  %v2156 = vld [vmem:[%s7 + $0x8] sm:$0xf]
  %v2157 = vld [vmem:[%s7 + $0xc] sm:$0xf]
  %v2158 = vld [vmem:[%s7 + $0x10] sm:$0xf]
  %v2159 = vld [vmem:[%s7 + $0x14] sm:$0xf]
  %v2160 = vld [vmem:[%s7 + $0x18] sm:$0xf]
  %v2161 = vld [vmem:[%s7 + $0x1c] sm:$0xf]
  %v2162 = vld [vmem:[%s7 + $0x20] sm:$0xf]
  %v2163 = vld [vmem:[%s7 + $0x24] sm:$0xf]
  %v2164 = vld [vmem:[%s7 + $0x28] sm:$0xf]
  %v2165 = vld [vmem:[%s7 + $0x2c] sm:$0xf]
  %v2166 = vld [vmem:[%s7 + $0x30] sm:$0xf]
  %v2167 = vld [vmem:[%s7 + $0x34] sm:$0xf]
  %v2168 = vld [vmem:[%s7 + $0x38] sm:$0xf]
  %v2169 = vld [vmem:[%s7 + $0x3c] sm:$0xf]
  %v2170 = vld [vmem:[%s7 + $0x40] sm:$0xf]
  %v2171 = vld [vmem:[%s7 + $0x44] sm:$0xf]
  %v2172 = vld [vmem:[%s7 + $0x48] sm:$0xf]
  %v2173 = vld [vmem:[%s7 + $0x4c] sm:$0xf]
  %v2174 = vld [vmem:[%s7 + $0x50] sm:$0xf]
  %v2175 = vld [vmem:[%s7 + $0x54] sm:$0xf]
  %v2176 = vld [vmem:[%s7 + $0x58] sm:$0xf]
  %v2177 = vld [vmem:[%s7 + $0x5c] sm:$0xf]
  %v2178 = vld [vmem:[%s7 + $0x60] sm:$0xf]
  %v2179 = vld [vmem:[%s7 + $0x64] sm:$0xf]
  %v2180 = vld [vmem:[%s7 + $0x68] sm:$0xf]
  %v2181 = vld [vmem:[%s7 + $0x6c] sm:$0xf]
  %v2182 = vld [vmem:[%s7 + $0x70] sm:$0xf]
  %v2183 = vld [vmem:[%s7 + $0x74] sm:$0xf]
  %v2184 = vld [vmem:[%s7 + $0x78] sm:$0xf]
  %v2185 = vld [vmem:[%s7 + $0x7c] sm:$0xf]
  %v2186 = vld [vmem:[%s7 + $0x80] sm:$0xf]
  %v2187 = vld [vmem:[%s7 + $0x84] sm:$0xf]
  %v2188 = vld [vmem:[%s7 + $0x88] sm:$0xf]
  %v2189 = vld [vmem:[%s7 + $0x8c] sm:$0xf]
  %v2190 = vld [vmem:[%s7 + $0x90] sm:$0xf]
  %v2191 = vld [vmem:[%s7 + $0x94] sm:$0xf]
  %v2192 = vld [vmem:[%s7 + $0x98] sm:$0xf]
  %v2193 = vld [vmem:[%s7 + $0x9c] sm:$0xf]
  %v2194 = vld [vmem:[%s7 + $0xa0] sm:$0xf]
  %v2195 = vld [vmem:[%s7 + $0xa4] sm:$0xf]
  %v2196 = vld [vmem:[%s7 + $0xa8] sm:$0xf]
  %v2197 = vld [vmem:[%s7 + $0xac] sm:$0xf]
  %v2198 = vld [vmem:[%s7 + $0xb0] sm:$0xf]
  %v2199 = vld [vmem:[%s7 + $0xb4] sm:$0xf]
  %v2200 = vld [vmem:[%s7 + $0xb8] sm:$0xf]
  %v2201 = vld [vmem:[%s7 + $0xbc] sm:$0xf]
  %v2202 = vld [vmem:[%s7 + $0xc0] sm:$0xf]
  %v2203 = vld [vmem:[%s7 + $0xc4] sm:$0xf]
  %v2204 = vld [vmem:[%s7 + $0xc8] sm:$0xf]
  %v2205 = vld [vmem:[%s7 + $0xcc] sm:$0xf]
  %v2206 = vld [vmem:[%s7 + $0xd0] sm:$0xf]
  %v2207 = vld [vmem:[%s7 + $0xd4] sm:$0xf]
  %v2208 = vld [vmem:[%s7 + $0xd8] sm:$0xf]
  %v2209 = vld [vmem:[%s7 + $0xdc] sm:$0xf]
  %v2210 = vld [vmem:[%s7 + $0xe0] sm:$0xf]
  %v2211 = vld [vmem:[%s7 + $0xe4] sm:$0xf]
  %v2212 = vld [vmem:[%s7 + $0xe8] sm:$0xf]
  %v2213 = vld [vmem:[%s7 + $0xec] sm:$0xf]
  %v2214 = vld [vmem:[%s7 + $0xf0] sm:$0xf]
  %v2215 = vld [vmem:[%s7 + $0xf4] sm:$0xf]
  %v2216 = vld [vmem:[%s7 + $0xf8] sm:$0xf]
  %v2217 = vld [vmem:[%s7 + $0xfc] sm:$0xf]
  %v2218 = vld [vmem:[%s7 + $0x100] sm:$0xf]
  %v2219 = vld [vmem:[%s7 + $0x104] sm:$0xf]
  %v2220 = vld [vmem:[%s7 + $0x108] sm:$0xf]
  %v2221 = vld [vmem:[%s7 + $0x10c] sm:$0xf]
  %v2222 = vld [vmem:[%s7 + $0x110] sm:$0xf]
  %v2223 = vld [vmem:[%s7 + $0x114] sm:$0xf]
  %v2224 = vld [vmem:[%s7 + $0x118] sm:$0xf]
  %v2225 = vld [vmem:[%s7 + $0x11c] sm:$0xf]
  %v2226 = vld [vmem:[%s8] sm:$0x1]
  %v2234 = vrot.slane %v2146, 7
  %v2235 = vrot.slane %v2147, 7
  %v2236 = vsel %vm893, %v2234, %v2235
  %v2237 = vrot.slane %v2148, 7
  %v2238 = vsel %vm893, %v2235, %v2237
  %v2239 = vrot.slane %v2149, 7
  %v2240 = vsel %vm893, %v2237, %v2239
  %v2241 = vrot.slane %v2150, 7
  %v2242 = vsel %vm893, %v2239, %v2241
  %v2243 = vrot.slane %v2151, 7
  %v2244 = vsel %vm893, %v2241, %v2243
  %v2245 = vrot.slane %v2152, 7
  %v2246 = vsel %vm893, %v2243, %v2245
  %v2254 = vsel %vm893, 0.0, %v2234
  %v2255 = vsel %vm924, %v2254, 0.0
  %v2256 = vsel %vm925, %v2236, 0.0
  %v2257 = vsel %vm926, %v2238, 0.0
  %v2258 = vsel %vm927, %v2240, 0.0
  %v2259 = vsel %vm928, %v2242, 0.0
  %v2260 = vsel %vm929, %v2244, 0.0
  %v2261 = vsel %vm930, %v2246, 0.0
  %v2262 = vpack.c.bf16 %v2255, %v2255
  %v2263 = vpack.c.bf16 %v2256, %v2256
  %v2264 = vpack.c.bf16 %v2257, %v2257
  %v2265 = vpack.c.bf16 %v2258, %v2258
  %v2266 = vpack.c.bf16 %v2259, %v2259
  %v2267 = vpack.c.bf16 %v2260, %v2260
  %v2268 = vpack.c.bf16 %v2261, %v2261
  %v2269 = vpack.c.bf16 %v2146, %v2146
  %v2270 = vpack.c.bf16 %v2147, %v2147
  %v2271 = vpack.c.bf16 %v2148, %v2148
  %v2272 = vpack.c.bf16 %v2149, %v2149
  %v2273 = vpack.c.bf16 %v2150, %v2150
  %v2274 = vpack.c.bf16 %v2151, %v2151
  %v2275 = vpack.c.bf16 %v2152, %v2152
  %v2277 = vrot.slane %v2146, 1
  %v2278 = vrot.slane %v2147, 1
  %v2279 = vsel %vm954, %v2277, %v2278
  %v2280 = vrot.slane %v2148, 1
  %v2281 = vsel %vm954, %v2278, %v2280
  %v2282 = vrot.slane %v2149, 1
  %v2283 = vsel %vm954, %v2280, %v2282
  %v2284 = vrot.slane %v2150, 1
  %v2285 = vsel %vm954, %v2282, %v2284
  %v2286 = vrot.slane %v2151, 1
  %v2287 = vsel %vm954, %v2284, %v2286
  %v2288 = vrot.slane %v2152, 1
  %v2289 = vsel %vm954, %v2286, %v2288
  %v2290 = vrot.slane %v2153, 1
  %v2291 = vsel %vm954, %v2288, %v2290
  %v2300 = vsel %vm954, 0.0, %v2277
  %v2301 = vsel %vm987, %v2300, 0.0
  %v2302 = vsel %vm988, %v2279, 0.0
  %v2303 = vsel %vm989, %v2281, 0.0
  %v2304 = vsel %vm990, %v2283, 0.0
  %v2305 = vsel %vm991, %v2285, 0.0
  %v2306 = vsel %vm992, %v2287, 0.0
  %v2307 = vsel %vm993, %v2289, 0.0
  %v2308 = vsel %vm994, %v2291, 0.0
  %v2309 = vpack.c.bf16 %v2301, %v2301
  %v2310 = vpack.c.bf16 %v2302, %v2302
  %v2311 = vpack.c.bf16 %v2303, %v2303
  %v2312 = vpack.c.bf16 %v2304, %v2304
  %v2313 = vpack.c.bf16 %v2305, %v2305
  %v2314 = vpack.c.bf16 %v2306, %v2306
  %v2315 = vpack.c.bf16 %v2307, %v2307
  %v2316 = vpack.c.bf16 %v2308, %v2308
  %v2317 = vrot.slane %v2153, 7
  %v2318 = vsel %vm893, %v2245, %v2317
  %v2320 = vsel %vm923, %v2254, 0.0
  %v2321 = vsel %vm924, %v2236, 0.0
  %v2322 = vsel %vm925, %v2238, 0.0
  %v2323 = vsel %vm926, %v2240, 0.0
  %v2324 = vsel %vm927, %v2242, 0.0
  %v2325 = vsel %vm928, %v2244, 0.0
  %v2326 = vsel %vm929, %v2246, 0.0
  %v2327 = vsel %vm930, %v2318, 0.0
  %v2328 = vpack.c.bf16 %v2320, %v2320
  %v2329 = vpack.c.bf16 %v2321, %v2321
  %v2330 = vpack.c.bf16 %v2322, %v2322
  %v2331 = vpack.c.bf16 %v2323, %v2323
  %v2332 = vpack.c.bf16 %v2324, %v2324
  %v2333 = vpack.c.bf16 %v2325, %v2325
  %v2334 = vpack.c.bf16 %v2326, %v2326
  %v2335 = vpack.c.bf16 %v2327, %v2327
  %v2336 = vpack.c.bf16 %v2153, %v2153
  %v2338 = vsel %vm954, %v2290, 0.0
  %v2339 = vsel %vm987, %v2279, 0.0
  %v2340 = vsel %vm988, %v2281, 0.0
  %v2341 = vsel %vm989, %v2283, 0.0
  %v2342 = vsel %vm990, %v2285, 0.0
  %v2343 = vsel %vm991, %v2287, 0.0
  %v2344 = vsel %vm992, %v2289, 0.0
  %v2345 = vsel %vm993, %v2291, 0.0
  %v2346 = vsel %vm994, %v2338, 0.0
  %v2347 = vpack.c.bf16 %v2339, %v2339
  %v2348 = vpack.c.bf16 %v2340, %v2340
  %v2349 = vpack.c.bf16 %v2341, %v2341
  %v2350 = vpack.c.bf16 %v2342, %v2342
  %v2351 = vpack.c.bf16 %v2343, %v2343
  %v2352 = vpack.c.bf16 %v2344, %v2344
  %v2353 = vpack.c.bf16 %v2345, %v2345
  %v2354 = vpack.c.bf16 %v2346, %v2346
  %v2356 = vsel %vm893, %v2317, 0.0
  %v2357 = vsel %vm923, %v2236, 0.0
  %v2358 = vsel %vm924, %v2238, 0.0
  %v2359 = vsel %vm925, %v2240, 0.0
  %v2360 = vsel %vm926, %v2242, 0.0
  %v2361 = vsel %vm927, %v2244, 0.0
  %v2362 = vsel %vm928, %v2246, 0.0
  %v2363 = vsel %vm929, %v2318, 0.0
  %v2364 = vsel %vm930, %v2356, 0.0
  %v2365 = vpack.c.bf16 %v2357, %v2357
  %v2366 = vpack.c.bf16 %v2358, %v2358
  %v2367 = vpack.c.bf16 %v2359, %v2359
  %v2368 = vpack.c.bf16 %v2360, %v2360
  %v2369 = vpack.c.bf16 %v2361, %v2361
  %v2370 = vpack.c.bf16 %v2362, %v2362
  %v2371 = vpack.c.bf16 %v2363, %v2363
  %v2372 = vpack.c.bf16 %v2364, %v2364
  %v2373 = vsel %vm987, %v2281, 0.0
  %v2374 = vsel %vm988, %v2283, 0.0
  %v2375 = vsel %vm989, %v2285, 0.0
  %v2376 = vsel %vm990, %v2287, 0.0
  %v2377 = vsel %vm991, %v2289, 0.0
  %v2378 = vsel %vm992, %v2291, 0.0
  %v2379 = vsel %vm993, %v2338, 0.0
  %v2380 = vpack.c.bf16 %v2373, %v2373
  %v2381 = vpack.c.bf16 %v2374, %v2374
  %v2382 = vpack.c.bf16 %v2375, %v2375
  %v2383 = vpack.c.bf16 %v2376, %v2376
  %v2384 = vpack.c.bf16 %v2377, %v2377
  %v2385 = vpack.c.bf16 %v2378, %v2378
  %v2386 = vpack.c.bf16 %v2379, %v2379
  %v2394 = vunpack.c.l.b16 %v2262
  %v2395 = vunpack.c.l.b16 %v2263
  %v2396 = vunpack.c.l.b16 %v2264
  %v2397 = vunpack.c.l.b16 %v2265
  %v2398 = vunpack.c.l.b16 %v2266
  %v2399 = vunpack.c.l.b16 %v2267
  %v2400 = vunpack.c.l.b16 %v2268
  %v2401 = vpack.c.b16 %v2394, %v1089
  %v2402 = vpack.c.b16 %v2396, %v2395
  %v2403 = vpack.c.b16 %v2398, %v2397
  %v2404 = vpack.c.b16 %v2400, %v2399
  %v2412 = vunpack.c.l.b16 %v2269
  %v2413 = vunpack.c.l.b16 %v2270
  %v2414 = vunpack.c.l.b16 %v2271
  %v2415 = vunpack.c.l.b16 %v2272
  %v2416 = vunpack.c.l.b16 %v2273
  %v2417 = vunpack.c.l.b16 %v2274
  %v2418 = vunpack.c.l.b16 %v2275
  %v2419 = vpack.c.b16 %v2412, %v1089
  %v2420 = vpack.c.b16 %v2414, %v2413
  %v2421 = vpack.c.b16 %v2416, %v2415
  %v2422 = vpack.c.b16 %v2418, %v2417
  %2423 = vrot.lane.b32.xlu0 %v2419, 64
  %v2424 = vpop.permute.xlu0 %2423
  %2425 = vrot.lane.b32.xlu0 %v2420, 64
  %v2426 = vpop.permute.xlu0 %2425
  %2427 = vrot.lane.b32.xlu0 %v2421, 64
  %v2428 = vpop.permute.xlu0 %2427
  %2429 = vrot.lane.b32.xlu0 %v2422, 64
  %v2430 = vpop.permute.xlu0 %2429
  %v2439 = vunpack.c.l.b16 %v2309
  %v2440 = vunpack.c.l.b16 %v2310
  %v2441 = vunpack.c.l.b16 %v2311
  %v2442 = vunpack.c.l.b16 %v2312
  %v2443 = vunpack.c.l.b16 %v2313
  %v2444 = vunpack.c.l.b16 %v2314
  %v2445 = vunpack.c.l.b16 %v2315
  %v2446 = vunpack.c.l.b16 %v2316
  %v2447 = vpack.c.b16 %v2440, %v2439
  %v2448 = vpack.c.b16 %v2442, %v2441
  %v2449 = vpack.c.b16 %v2444, %v2443
  %v2450 = vpack.c.b16 %v2446, %v2445
  %v2459 = vunpack.c.l.b16 %v2328
  %v2460 = vunpack.c.l.b16 %v2329
  %v2461 = vunpack.c.l.b16 %v2330
  %v2462 = vunpack.c.l.b16 %v2331
  %v2463 = vunpack.c.l.b16 %v2332
  %v2464 = vunpack.c.l.b16 %v2333
  %v2465 = vunpack.c.l.b16 %v2334
  %v2466 = vunpack.c.l.b16 %v2335
  %v2467 = vpack.c.b16 %v2460, %v2459
  %v2468 = vpack.c.b16 %v2462, %v2461
  %v2469 = vpack.c.b16 %v2464, %v2463
  %v2470 = vpack.c.b16 %v2466, %v2465
  %2471 = vrot.lane.b32.xlu0 %v2467, 64
  %v2472 = vpop.permute.xlu0 %2471
  %2473 = vrot.lane.b32.xlu0 %v2468, 64
  %v2474 = vpop.permute.xlu0 %2473
  %2475 = vrot.lane.b32.xlu0 %v2469, 64
  %v2476 = vpop.permute.xlu0 %2475
  %2477 = vrot.lane.b32.xlu0 %v2470, 64
  %v2478 = vpop.permute.xlu0 %2477
  %v2480 = vunpack.c.l.b16 %v2336
  %v2481 = vpack.c.b16 %v2413, %v2412
  %v2482 = vpack.c.b16 %v2415, %v2414
  %v2483 = vpack.c.b16 %v2417, %v2416
  %v2484 = vpack.c.b16 %v2480, %v2418
  %v2493 = vunpack.c.l.b16 %v2347
  %v2494 = vunpack.c.l.b16 %v2348
  %v2495 = vunpack.c.l.b16 %v2349
  %v2496 = vunpack.c.l.b16 %v2350
  %v2497 = vunpack.c.l.b16 %v2351
  %v2498 = vunpack.c.l.b16 %v2352
  %v2499 = vunpack.c.l.b16 %v2353
  %v2500 = vunpack.c.l.b16 %v2354
  %v2501 = vpack.c.b16 %v2494, %v2493
  %v2502 = vpack.c.b16 %v2496, %v2495
  %v2503 = vpack.c.b16 %v2498, %v2497
  %v2504 = vpack.c.b16 %v2500, %v2499
  %2505 = vrot.lane.b32.xlu0 %v2501, 64
  %v2506 = vpop.permute.xlu0 %2505
  %2507 = vrot.lane.b32.xlu0 %v2502, 64
  %v2508 = vpop.permute.xlu0 %2507
  %2509 = vrot.lane.b32.xlu0 %v2503, 64
  %v2510 = vpop.permute.xlu0 %2509
  %2511 = vrot.lane.b32.xlu0 %v2504, 64
  %v2512 = vpop.permute.xlu0 %2511
  %v2521 = vunpack.c.l.b16 %v2365
  %v2522 = vunpack.c.l.b16 %v2366
  %v2523 = vunpack.c.l.b16 %v2367
  %v2524 = vunpack.c.l.b16 %v2368
  %v2525 = vunpack.c.l.b16 %v2369
  %v2526 = vunpack.c.l.b16 %v2370
  %v2527 = vunpack.c.l.b16 %v2371
  %v2528 = vunpack.c.l.b16 %v2372
  %v2529 = vpack.c.b16 %v2522, %v2521
  %v2530 = vpack.c.b16 %v2524, %v2523
  %v2531 = vpack.c.b16 %v2526, %v2525
  %v2532 = vpack.c.b16 %v2528, %v2527
  %v2533 = vpack.c.b16 %v1089, %v2480
  %2534 = vrot.lane.b32.xlu0 %v2533, 64
  %v2535 = vpop.permute.xlu0 %2534
  %v2543 = vunpack.c.l.b16 %v2380
  %v2544 = vunpack.c.l.b16 %v2381
  %v2545 = vunpack.c.l.b16 %v2382
  %v2546 = vunpack.c.l.b16 %v2383
  %v2547 = vunpack.c.l.b16 %v2384
  %v2548 = vunpack.c.l.b16 %v2385
  %v2549 = vunpack.c.l.b16 %v2386
  %v2550 = vpack.c.b16 %v2544, %v2543
  %v2551 = vpack.c.b16 %v2546, %v2545
  %v2552 = vpack.c.b16 %v2548, %v2547
  %v2553 = vpack.c.b16 %v1089, %v2549
  %v2556 = vsel %vm1311, %v2401, %v2424
  %v2560 = vsel %vm1311, %v2402, %v2426
  %v2564 = vsel %vm1311, %v2403, %v2428
  %v2568 = vsel %vm1311, %v2404, %v2430
  %v2572 = vsel %vm1311, %v2447, %v2472
  %v2576 = vsel %vm1311, %v2448, %v2474
  %v2580 = vsel %vm1311, %v2449, %v2476
  %v2584 = vsel %vm1311, %v2450, %v2478
  %v2588 = vsel %vm1311, %v2481, %v2506
  %v2592 = vsel %vm1311, %v2482, %v2508
  %v2596 = vsel %vm1311, %v2483, %v2510
  %v2600 = vsel %vm1311, %v2484, %v2512
  %v2603 = vsel %vm1311, %v2529, %v2426
  %v2606 = vsel %vm1311, %v2530, %v2428
  %v2609 = vsel %vm1311, %v2531, %v2430
  %v2613 = vsel %vm1311, %v2532, %v2535
  %v2616 = vperm.slane %v2226, 0
  %v2690 = vunpack.c.l.b16 %v2154
  %v2691 = vunpack.c.l.b16 %v2155
  %v2692 = vunpack.c.l.b16 %v2156
  %v2693 = vunpack.c.l.b16 %v2157
  %v2694 = vunpack.c.l.b16 %v2158
  %v2695 = vunpack.c.l.b16 %v2159
  %v2696 = vunpack.c.l.b16 %v2160
  %v2697 = vunpack.c.l.b16 %v2161
  %v2698 = vunpack.c.l.b16 %v2162
  %v2699 = vunpack.c.l.b16 %v2163
  %v2700 = vunpack.c.l.b16 %v2164
  %v2701 = vunpack.c.l.b16 %v2165
  %v2702 = vunpack.c.l.b16 %v2166
  %v2703 = vunpack.c.l.b16 %v2167
  %v2704 = vunpack.c.l.b16 %v2168
  %v2705 = vunpack.c.l.b16 %v2169
  %v2706 = vunpack.c.l.b16 %v2170
  %v2707 = vunpack.c.l.b16 %v2171
  %v2708 = vunpack.c.l.b16 %v2172
  %v2709 = vunpack.c.l.b16 %v2173
  %v2710 = vunpack.c.l.b16 %v2174
  %v2711 = vunpack.c.l.b16 %v2175
  %v2712 = vunpack.c.l.b16 %v2176
  %v2713 = vunpack.c.l.b16 %v2177
  %v2714 = vunpack.c.l.b16 %v2178
  %v2715 = vunpack.c.l.b16 %v2179
  %v2716 = vunpack.c.l.b16 %v2180
  %v2717 = vunpack.c.l.b16 %v2181
  %v2718 = vunpack.c.l.b16 %v2182
  %v2719 = vunpack.c.l.b16 %v2183
  %v2720 = vunpack.c.l.b16 %v2184
  %v2721 = vunpack.c.l.b16 %v2185
  %v2722 = vunpack.c.l.b16 %v2186
  %v2723 = vunpack.c.l.b16 %v2187
  %v2724 = vunpack.c.l.b16 %v2188
  %v2725 = vunpack.c.l.b16 %v2189
  %v2726 = vunpack.c.l.b16 %v2190
  %v2727 = vunpack.c.l.b16 %v2191
  %v2728 = vunpack.c.l.b16 %v2192
  %v2729 = vunpack.c.l.b16 %v2193
  %v2730 = vunpack.c.l.b16 %v2194
  %v2731 = vunpack.c.l.b16 %v2195
  %v2732 = vunpack.c.l.b16 %v2196
  %v2733 = vunpack.c.l.b16 %v2197
  %v2734 = vunpack.c.l.b16 %v2198
  %v2735 = vunpack.c.l.b16 %v2199
  %v2736 = vunpack.c.l.b16 %v2200
  %v2737 = vunpack.c.l.b16 %v2201
  %v2738 = vunpack.c.l.b16 %v2202
  %v2739 = vunpack.c.l.b16 %v2203
  %v2740 = vunpack.c.l.b16 %v2204
  %v2741 = vunpack.c.l.b16 %v2205
  %v2742 = vunpack.c.l.b16 %v2206
  %v2743 = vunpack.c.l.b16 %v2207
  %v2744 = vunpack.c.l.b16 %v2208
  %v2745 = vunpack.c.l.b16 %v2209
  %v2746 = vunpack.c.l.b16 %v2210
  %v2747 = vunpack.c.l.b16 %v2211
  %v2748 = vunpack.c.l.b16 %v2212
  %v2749 = vunpack.c.l.b16 %v2213
  %v2750 = vunpack.c.l.b16 %v2214
  %v2751 = vunpack.c.l.b16 %v2215
  %v2752 = vunpack.c.l.b16 %v2216
  %v2753 = vunpack.c.l.b16 %v2217
  %v2754 = vunpack.c.l.b16 %v2218
  %v2755 = vunpack.c.l.b16 %v2219
  %v2756 = vunpack.c.l.b16 %v2220
  %v2757 = vunpack.c.l.b16 %v2221
  %v2758 = vunpack.c.l.b16 %v2222
  %v2759 = vunpack.c.l.b16 %v2223
  %v2760 = vunpack.c.l.b16 %v2224
  %v2761 = vunpack.c.l.b16 %v2225
  %v2762 = vpack.c.b16 %v2691, %v2690
  %v2763 = vpack.c.b16 %v2693, %v2692
  %v2764 = vpack.c.b16 %v2695, %v2694
  %v2765 = vpack.c.b16 %v2697, %v2696
  %v2766 = vpack.c.b16 %v2699, %v2698
  %v2767 = vpack.c.b16 %v2701, %v2700
  %v2768 = vpack.c.b16 %v2703, %v2702
  %v2769 = vpack.c.b16 %v2705, %v2704
  %v2770 = vpack.c.b16 %v2707, %v2706
  %v2771 = vpack.c.b16 %v2709, %v2708
  %v2772 = vpack.c.b16 %v2711, %v2710
  %v2773 = vpack.c.b16 %v2713, %v2712
  %v2774 = vpack.c.b16 %v2715, %v2714
  %v2775 = vpack.c.b16 %v2717, %v2716
  %v2776 = vpack.c.b16 %v2719, %v2718
  %v2777 = vpack.c.b16 %v2721, %v2720
  %v2778 = vpack.c.b16 %v2723, %v2722
  %v2779 = vpack.c.b16 %v2725, %v2724
  %v2780 = vpack.c.b16 %v2727, %v2726
  %v2781 = vpack.c.b16 %v2729, %v2728
  %v2782 = vpack.c.b16 %v2731, %v2730
  %v2783 = vpack.c.b16 %v2733, %v2732
  %v2784 = vpack.c.b16 %v2735, %v2734
  %v2785 = vpack.c.b16 %v2737, %v2736
  %v2786 = vpack.c.b16 %v2739, %v2738
  %v2787 = vpack.c.b16 %v2741, %v2740
  %v2788 = vpack.c.b16 %v2743, %v2742
  %v2789 = vpack.c.b16 %v2745, %v2744
  %v2790 = vpack.c.b16 %v2747, %v2746
  %v2791 = vpack.c.b16 %v2749, %v2748
  %v2792 = vpack.c.b16 %v2751, %v2750
  %v2793 = vpack.c.b16 %v2753, %v2752
  %v2794 = vpack.c.b16 %v2755, %v2754
  %v2795 = vpack.c.b16 %v2757, %v2756
  %v2796 = vpack.c.b16 %v2759, %v2758
  %v2797 = vpack.c.b16 %v2761, %v2760
  %v2835 = vsel %vm1311, %v2550, 0
  %v2838 = vsel %vm1311, %v2551, 0
  %v2841 = vsel %vm1311, %v2552, 0
  %v2844 = vsel %vm1311, %v2553, 0
  %2846 = vmatpush.bf16.msra.mxu0 %v2769
  %2847 = vmatpush.bf16.msra.mxu0 %v2768
  %2848 = vmatpush.bf16.msra.mxu0 %v2767
  %2849 = vmatpush.bf16.msra.mxu0 %v2766
  %2850 = vmatpush.bf16.msra.mxu0 %v2765
  %2851 = vmatpush.bf16.msra.mxu0 %v2764
  %2852 = vmatpush.bf16.msra.mxu0 %v2763
  %2853 = vmatpush.bf16.msra.mxu0 %v2762
  %2854 = vmatmul.bf16.gmra.mxu0 %v2556
  %v2855 = vpop.f32.mrf.mxu0
  %v2856 = vadd.f32 %v2616, %v2855
  %v2857 = vpop.f32.mrf.mxu0
  %v2858 = vadd.f32 %v2616, %v2857
  %2859 = vmatmul.bf16.gmra.mxu0 %v2560
  %v2860 = vpop.f32.mrf.mxu0
  %v2861 = vadd.f32 %v2616, %v2860
  %v2862 = vpop.f32.mrf.mxu0
  %v2863 = vadd.f32 %v2616, %v2862
  %2864 = vmatmul.bf16.gmra.mxu0 %v2564
  %v2865 = vpop.f32.mrf.mxu0
  %v2866 = vadd.f32 %v2616, %v2865
  %v2867 = vpop.f32.mrf.mxu0
  %v2868 = vadd.f32 %v2616, %v2867
  %2869 = vmatmul.bf16.gmra.mxu0 %v2568
  %v2870 = vpop.f32.mrf.mxu0
  %v2871 = vadd.f32 %v2616, %v2870
  %v2872 = vpop.f32.mrf.mxu0
  %v2873 = vadd.f32 %v2616, %v2872
  %2874 = vdwg.mxu0
  %2875 = vmatpush.bf16.msra.mxu0 %v2777
  %2876 = vmatpush.bf16.msra.mxu0 %v2776
  %2877 = vmatpush.bf16.msra.mxu0 %v2775
  %2878 = vmatpush.bf16.msra.mxu0 %v2774
  %2879 = vmatpush.bf16.msra.mxu0 %v2773
  %2880 = vmatpush.bf16.msra.mxu0 %v2772
  %2881 = vmatpush.bf16.msra.mxu0 %v2771
  %2882 = vmatpush.bf16.msra.mxu0 %v2770
  %2883 = vmatmul.bf16.gmra.mxu0 %v2572
  %v2884 = vpop.f32.mrf.mxu0
  %v2885 = vadd.f32 %v2856, %v2884
  %v2886 = vpop.f32.mrf.mxu0
  %v2887 = vadd.f32 %v2858, %v2886
  %2888 = vmatmul.bf16.gmra.mxu0 %v2576
  %v2889 = vpop.f32.mrf.mxu0
  %v2890 = vadd.f32 %v2861, %v2889
  %v2891 = vpop.f32.mrf.mxu0
  %v2892 = vadd.f32 %v2863, %v2891
  %2893 = vmatmul.bf16.gmra.mxu0 %v2580
  %v2894 = vpop.f32.mrf.mxu0
  %v2895 = vadd.f32 %v2866, %v2894
  %v2896 = vpop.f32.mrf.mxu0
  %v2897 = vadd.f32 %v2868, %v2896
  %2898 = vmatmul.bf16.gmra.mxu0 %v2584
  %v2899 = vpop.f32.mrf.mxu0
  %v2900 = vadd.f32 %v2871, %v2899
  %v2901 = vpop.f32.mrf.mxu0
  %v2902 = vadd.f32 %v2873, %v2901
  %2903 = vdwg.mxu0
  %2904 = vmatpush.bf16.msra.mxu0 %v2785
  %2905 = vmatpush.bf16.msra.mxu0 %v2784
  %2906 = vmatpush.bf16.msra.mxu0 %v2783
  %2907 = vmatpush.bf16.msra.mxu0 %v2782
  %2908 = vmatpush.bf16.msra.mxu0 %v2781
  %2909 = vmatpush.bf16.msra.mxu0 %v2780
  %2910 = vmatpush.bf16.msra.mxu0 %v2779
  %2911 = vmatpush.bf16.msra.mxu0 %v2778
  %2912 = vmatmul.bf16.gmra.mxu0 %v2588
  %v2913 = vpop.f32.mrf.mxu0
  %v2914 = vadd.f32 %v2885, %v2913
  %v2915 = vpop.f32.mrf.mxu0
  %v2916 = vadd.f32 %v2887, %v2915
  %2917 = vmatmul.bf16.gmra.mxu0 %v2592
  %v2918 = vpop.f32.mrf.mxu0
  %v2919 = vadd.f32 %v2890, %v2918
  %v2920 = vpop.f32.mrf.mxu0
  %v2921 = vadd.f32 %v2892, %v2920
  %2922 = vmatmul.bf16.gmra.mxu0 %v2596
  %v2923 = vpop.f32.mrf.mxu0
  %v2924 = vadd.f32 %v2895, %v2923
  %v2925 = vpop.f32.mrf.mxu0
  %v2926 = vadd.f32 %v2897, %v2925
  %2927 = vmatmul.bf16.gmra.mxu0 %v2600
  %v2928 = vpop.f32.mrf.mxu0
  %v2929 = vadd.f32 %v2900, %v2928
  %v2930 = vpop.f32.mrf.mxu0
  %v2931 = vadd.f32 %v2902, %v2930
  %2932 = vdwg.mxu0
  %2933 = vmatpush.bf16.msra.mxu0 %v2793
  %2934 = vmatpush.bf16.msra.mxu0 %v2792
  %2935 = vmatpush.bf16.msra.mxu0 %v2791
  %2936 = vmatpush.bf16.msra.mxu0 %v2790
  %2937 = vmatpush.bf16.msra.mxu0 %v2789
  %2938 = vmatpush.bf16.msra.mxu0 %v2788
  %2939 = vmatpush.bf16.msra.mxu0 %v2787
  %2940 = vmatpush.bf16.msra.mxu0 %v2786
  %2941 = vmatmul.bf16.gmra.mxu0 %v2603
  %v2942 = vpop.f32.mrf.mxu0
  %v2943 = vadd.f32 %v2914, %v2942
  %v2944 = vpop.f32.mrf.mxu0
  %v2945 = vadd.f32 %v2916, %v2944
  %2946 = vmatmul.bf16.gmra.mxu0 %v2606
  %v2947 = vpop.f32.mrf.mxu0
  %v2948 = vadd.f32 %v2919, %v2947
  %v2949 = vpop.f32.mrf.mxu0
  %v2950 = vadd.f32 %v2921, %v2949
  %2951 = vmatmul.bf16.gmra.mxu0 %v2609
  %v2952 = vpop.f32.mrf.mxu0
  %v2953 = vadd.f32 %v2924, %v2952
  %v2954 = vpop.f32.mrf.mxu0
  %v2955 = vadd.f32 %v2926, %v2954
  %2956 = vmatmul.bf16.gmra.mxu0 %v2613
  %v2957 = vpop.f32.mrf.mxu0
  %v2958 = vadd.f32 %v2929, %v2957
  %v2959 = vpop.f32.mrf.mxu0
  %v2960 = vadd.f32 %v2931, %v2959
  %2961 = vdwg.mxu0
  %2962 = vmatpush.bf16.msra.mxu0 0
  %2963 = vmatpush.bf16.msra.mxu0 0
  %2964 = vmatpush.bf16.msra.mxu0 0
  %2965 = vmatpush.bf16.msra.mxu0 0
  %2966 = vmatpush.bf16.msra.mxu0 %v2797
  %2967 = vmatpush.bf16.msra.mxu0 %v2796
  %2968 = vmatpush.bf16.msra.mxu0 %v2795
  %2969 = vmatpush.bf16.msra.mxu0 %v2794
  %2970 = vmatmul.bf16.gmra.mxu0 %v2835
  %v2971 = vpop.f32.mrf.mxu0
  %v2972 = vadd.f32 %v2943, %v2971
  %v2973 = vpop.f32.mrf.mxu0
  %v2974 = vadd.f32 %v2945, %v2973
  %2975 = vmatmul.bf16.gmra.mxu0 %v2838
  %v2976 = vpop.f32.mrf.mxu0
  %v2977 = vadd.f32 %v2948, %v2976
  %v2978 = vpop.f32.mrf.mxu0
  %v2979 = vadd.f32 %v2950, %v2978
  %2980 = vmatmul.bf16.gmra.mxu0 %v2841
  %v2981 = vpop.f32.mrf.mxu0
  %v2982 = vadd.f32 %v2953, %v2981
  %v2983 = vpop.f32.mrf.mxu0
  %v2984 = vadd.f32 %v2955, %v2983
  %2985 = vmatmul.bf16.gmra.mxu0 %v2844
  %v2986 = vpop.f32.mrf.mxu0
  %v2987 = vadd.f32 %v2958, %v2986
  %v2988 = vpop.f32.mrf.mxu0
  %v2989 = vadd.f32 %v2960, %v2988
  %2990 = vdwg.mxu0
  %v2991 = vmax.f32 %v2972, 0.0
  %v2992 = vmax.f32 %v2974, 0.0
  %v2993 = vmax.f32 %v2977, 0.0
  %v2994 = vmax.f32 %v2979, 0.0
  %v2995 = vmax.f32 %v2982, 0.0
  %v2996 = vmax.f32 %v2984, 0.0
  %v2997 = vmax.f32 %v2987, 0.0
  %v2998 = vmax.f32 %v2989, 0.0
  %s2999 = smul.u32 4, 144
  %s3000 = smul.u32 %s2999, 2
  %s3001 = sshll.u32 %s3000, 4
  %3002 = dma.done [#allocation4], %s3001
  %v3003 = vld [vmem:[#allocation2] sm:$0xff]
  %v3004 = vld [vmem:[#allocation2 + $0x8] sm:$0xff]
  %v3005 = vld [vmem:[#allocation2 + $0x10] sm:$0xff]
  %v3006 = vld [vmem:[#allocation2 + $0x18] sm:$0xff]
  %v3007 = vld [vmem:[#allocation2 + $0x20] sm:$0xff]
  %v3008 = vld [vmem:[#allocation2 + $0x28] sm:$0xff]
  %v3009 = vld [vmem:[#allocation2 + $0x30] sm:$0xff]
  %v3010 = vld [vmem:[#allocation2 + $0x38] sm:$0xff]
  %v3011 = vld [vmem:[#allocation2 + $0x40] sm:$0xff]
  %v3012 = vld [vmem:[#allocation2 + $0x48] sm:$0xff]
  %v3013 = vld [vmem:[#allocation2 + $0x50] sm:$0xff]
  %v3014 = vld [vmem:[#allocation2 + $0x58] sm:$0xff]
  %v3015 = vld [vmem:[#allocation2 + $0x60] sm:$0xff]
  %v3016 = vld [vmem:[#allocation2 + $0x68] sm:$0xff]
  %v3017 = vld [vmem:[#allocation2 + $0x70] sm:$0xff]
  %v3018 = vld [vmem:[#allocation2 + $0x78] sm:$0xff]
  %v3019 = vld [vmem:[#allocation2 + $0x80] sm:$0xff]
  %v3020 = vld [vmem:[#allocation2 + $0x88] sm:$0xff]
  %v3021 = vld [vmem:[#allocation2 + $0x90] sm:$0xff]
  %v3022 = vld [vmem:[#allocation2 + $0x98] sm:$0xff]
  %v3023 = vld [vmem:[#allocation2 + $0xa0] sm:$0xff]
  %v3024 = vld [vmem:[#allocation2 + $0xa8] sm:$0xff]
  %v3025 = vld [vmem:[#allocation2 + $0xb0] sm:$0xff]
  %v3026 = vld [vmem:[#allocation2 + $0xb8] sm:$0xff]
  %v3027 = vld [vmem:[#allocation2 + $0xc0] sm:$0xff]
  %v3028 = vld [vmem:[#allocation2 + $0xc8] sm:$0xff]
  %v3029 = vld [vmem:[#allocation2 + $0xd0] sm:$0xff]
  %v3030 = vld [vmem:[#allocation2 + $0xd8] sm:$0xff]
  %v3031 = vld [vmem:[#allocation2 + $0xe0] sm:$0xff]
  %v3032 = vld [vmem:[#allocation2 + $0xe8] sm:$0xff]
  %v3033 = vld [vmem:[#allocation2 + $0xf0] sm:$0xff]
  %v3034 = vld [vmem:[#allocation2 + $0xf8] sm:$0xff]
  %v3035 = vld [vmem:[#allocation2 + $0x100] sm:$0xff]
  %v3036 = vld [vmem:[#allocation2 + $0x108] sm:$0xff]
  %v3037 = vld [vmem:[#allocation2 + $0x110] sm:$0xff]
  %v3038 = vld [vmem:[#allocation2 + $0x118] sm:$0xff]
  %v3039 = vld [vmem:[#allocation2 + $0x120] sm:$0xff]
  %v3040 = vld [vmem:[#allocation2 + $0x128] sm:$0xff]
  %v3041 = vld [vmem:[#allocation2 + $0x130] sm:$0xff]
  %v3042 = vld [vmem:[#allocation2 + $0x138] sm:$0xff]
  %v3043 = vld [vmem:[#allocation2 + $0x140] sm:$0xff]
  %v3044 = vld [vmem:[#allocation2 + $0x148] sm:$0xff]
  %v3045 = vld [vmem:[#allocation2 + $0x150] sm:$0xff]
  %v3046 = vld [vmem:[#allocation2 + $0x158] sm:$0xff]
  %v3047 = vld [vmem:[#allocation2 + $0x160] sm:$0xff]
  %v3048 = vld [vmem:[#allocation2 + $0x168] sm:$0xff]
  %v3049 = vld [vmem:[#allocation2 + $0x170] sm:$0xff]
  %v3050 = vld [vmem:[#allocation2 + $0x178] sm:$0xff]
  %v3051 = vld [vmem:[#allocation2 + $0x180] sm:$0xff]
  %v3052 = vld [vmem:[#allocation2 + $0x188] sm:$0xff]
  %v3053 = vld [vmem:[#allocation2 + $0x190] sm:$0xff]
  %v3054 = vld [vmem:[#allocation2 + $0x198] sm:$0xff]
  %v3055 = vld [vmem:[#allocation2 + $0x1a0] sm:$0xff]
  %v3056 = vld [vmem:[#allocation2 + $0x1a8] sm:$0xff]
  %v3057 = vld [vmem:[#allocation2 + $0x1b0] sm:$0xff]
  %v3058 = vld [vmem:[#allocation2 + $0x1b8] sm:$0xff]
  %v3059 = vld [vmem:[#allocation2 + $0x1c0] sm:$0xff]
  %v3060 = vld [vmem:[#allocation2 + $0x1c8] sm:$0xff]
  %v3061 = vld [vmem:[#allocation2 + $0x1d0] sm:$0xff]
  %v3062 = vld [vmem:[#allocation2 + $0x1d8] sm:$0xff]
  %v3063 = vld [vmem:[#allocation2 + $0x1e0] sm:$0xff]
  %v3064 = vld [vmem:[#allocation2 + $0x1e8] sm:$0xff]
  %v3065 = vld [vmem:[#allocation2 + $0x1f0] sm:$0xff]
  %v3066 = vld [vmem:[#allocation2 + $0x1f8] sm:$0xff]
  %v3067 = vld [vmem:[#allocation2 + $0x200] sm:$0xff]
  %v3068 = vld [vmem:[#allocation2 + $0x208] sm:$0xff]
  %v3069 = vld [vmem:[#allocation2 + $0x210] sm:$0xff]
  %v3070 = vld [vmem:[#allocation2 + $0x218] sm:$0xff]
  %v3071 = vld [vmem:[#allocation2 + $0x220] sm:$0xff]
  %v3072 = vld [vmem:[#allocation2 + $0x228] sm:$0xff]
  %v3073 = vld [vmem:[#allocation2 + $0x230] sm:$0xff]
  %v3074 = vld [vmem:[#allocation2 + $0x238] sm:$0xff]
  %v3075 = vld [vmem:[#allocation2 + $0x240] sm:$0xff]
  %v3076 = vld [vmem:[#allocation2 + $0x248] sm:$0xff]
  %v3077 = vld [vmem:[#allocation2 + $0x250] sm:$0xff]
  %v3078 = vld [vmem:[#allocation2 + $0x258] sm:$0xff]
  %v3079 = vld [vmem:[#allocation2 + $0x260] sm:$0xff]
  %v3080 = vld [vmem:[#allocation2 + $0x268] sm:$0xff]
  %v3081 = vld [vmem:[#allocation2 + $0x270] sm:$0xff]
  %v3082 = vld [vmem:[#allocation2 + $0x278] sm:$0xff]
  %v3083 = vld [vmem:[#allocation2 + $0x280] sm:$0xff]
  %v3084 = vld [vmem:[#allocation2 + $0x288] sm:$0xff]
  %v3085 = vld [vmem:[#allocation2 + $0x290] sm:$0xff]
  %v3086 = vld [vmem:[#allocation2 + $0x298] sm:$0xff]
  %v3087 = vld [vmem:[#allocation2 + $0x2a0] sm:$0xff]
  %v3088 = vld [vmem:[#allocation2 + $0x2a8] sm:$0xff]
  %v3089 = vld [vmem:[#allocation2 + $0x2b0] sm:$0xff]
  %v3090 = vld [vmem:[#allocation2 + $0x2b8] sm:$0xff]
  %v3091 = vld [vmem:[#allocation2 + $0x2c0] sm:$0xff]
  %v3092 = vld [vmem:[#allocation2 + $0x2c8] sm:$0xff]
  %v3093 = vld [vmem:[#allocation2 + $0x2d0] sm:$0xff]
  %v3094 = vld [vmem:[#allocation2 + $0x2d8] sm:$0xff]
  %v3095 = vld [vmem:[#allocation2 + $0x2e0] sm:$0xff]
  %v3096 = vld [vmem:[#allocation2 + $0x2e8] sm:$0xff]
  %v3097 = vld [vmem:[#allocation2 + $0x2f0] sm:$0xff]
  %v3098 = vld [vmem:[#allocation2 + $0x2f8] sm:$0xff]
  %v3099 = vld [vmem:[#allocation2 + $0x300] sm:$0xff]
  %v3100 = vld [vmem:[#allocation2 + $0x308] sm:$0xff]
  %v3101 = vld [vmem:[#allocation2 + $0x310] sm:$0xff]
  %v3102 = vld [vmem:[#allocation2 + $0x318] sm:$0xff]
  %v3103 = vld [vmem:[#allocation2 + $0x320] sm:$0xff]
  %v3104 = vld [vmem:[#allocation2 + $0x328] sm:$0xff]
  %v3105 = vld [vmem:[#allocation2 + $0x330] sm:$0xff]
  %v3106 = vld [vmem:[#allocation2 + $0x338] sm:$0xff]
  %v3107 = vld [vmem:[#allocation2 + $0x340] sm:$0xff]
  %v3108 = vld [vmem:[#allocation2 + $0x348] sm:$0xff]
  %v3109 = vld [vmem:[#allocation2 + $0x350] sm:$0xff]
  %v3110 = vld [vmem:[#allocation2 + $0x358] sm:$0xff]
  %v3111 = vld [vmem:[#allocation2 + $0x360] sm:$0xff]
  %v3112 = vld [vmem:[#allocation2 + $0x368] sm:$0xff]
  %v3113 = vld [vmem:[#allocation2 + $0x370] sm:$0xff]
  %v3114 = vld [vmem:[#allocation2 + $0x378] sm:$0xff]
  %v3115 = vld [vmem:[#allocation2 + $0x380] sm:$0xff]
  %v3116 = vld [vmem:[#allocation2 + $0x388] sm:$0xff]
  %v3117 = vld [vmem:[#allocation2 + $0x390] sm:$0xff]
  %v3118 = vld [vmem:[#allocation2 + $0x398] sm:$0xff]
  %v3119 = vld [vmem:[#allocation2 + $0x3a0] sm:$0xff]
  %v3120 = vld [vmem:[#allocation2 + $0x3a8] sm:$0xff]
  %v3121 = vld [vmem:[#allocation2 + $0x3b0] sm:$0xff]
  %v3122 = vld [vmem:[#allocation2 + $0x3b8] sm:$0xff]
  %v3123 = vld [vmem:[#allocation2 + $0x3c0] sm:$0xff]
  %v3124 = vld [vmem:[#allocation2 + $0x3c8] sm:$0xff]
  %v3125 = vld [vmem:[#allocation2 + $0x3d0] sm:$0xff]
  %v3126 = vld [vmem:[#allocation2 + $0x3d8] sm:$0xff]
  %v3127 = vld [vmem:[#allocation2 + $0x3e0] sm:$0xff]
  %v3128 = vld [vmem:[#allocation2 + $0x3e8] sm:$0xff]
  %v3129 = vld [vmem:[#allocation2 + $0x3f0] sm:$0xff]
  %v3130 = vld [vmem:[#allocation2 + $0x3f8] sm:$0xff]
  %v3131 = vld [vmem:[#allocation2 + $0x400] sm:$0xff]
  %v3132 = vld [vmem:[#allocation2 + $0x408] sm:$0xff]
  %v3133 = vld [vmem:[#allocation2 + $0x410] sm:$0xff]
  %v3134 = vld [vmem:[#allocation2 + $0x418] sm:$0xff]
  %v3135 = vld [vmem:[#allocation2 + $0x420] sm:$0xff]
  %v3136 = vld [vmem:[#allocation2 + $0x428] sm:$0xff]
  %v3137 = vld [vmem:[#allocation2 + $0x430] sm:$0xff]
  %v3138 = vld [vmem:[#allocation2 + $0x438] sm:$0xff]
  %v3139 = vld [vmem:[#allocation2 + $0x440] sm:$0xff]
  %v3140 = vld [vmem:[#allocation2 + $0x448] sm:$0xff]
  %v3141 = vld [vmem:[#allocation2 + $0x450] sm:$0xff]
  %v3142 = vld [vmem:[#allocation2 + $0x458] sm:$0xff]
  %v3143 = vld [vmem:[#allocation2 + $0x460] sm:$0xff]
  %v3144 = vld [vmem:[#allocation2 + $0x468] sm:$0xff]
  %v3145 = vld [vmem:[#allocation2 + $0x470] sm:$0xff]
  %v3146 = vld [vmem:[#allocation2 + $0x478] sm:$0xff]
  %v3147 = vld [vmem:[%s10] sm:$0x3]
  %v3155 = vrot.slane %v2991, 7
  %v3156 = vrot.slane %v2992, 7
  %v3157 = vsel %vm893, %v3155, %v3156
  %v3158 = vrot.slane %v2993, 7
  %v3159 = vsel %vm893, %v3156, %v3158
  %v3160 = vrot.slane %v2994, 7
  %v3161 = vsel %vm893, %v3158, %v3160
  %v3162 = vrot.slane %v2995, 7
  %v3163 = vsel %vm893, %v3160, %v3162
  %v3164 = vrot.slane %v2996, 7
  %v3165 = vsel %vm893, %v3162, %v3164
  %v3166 = vrot.slane %v2997, 7
  %v3167 = vsel %vm893, %v3164, %v3166
  %v3175 = vsel %vm893, 0.0, %v3155
  %v3176 = vsel %vm924, %v3175, 0.0
  %v3177 = vsel %vm925, %v3157, 0.0
  %v3178 = vsel %vm926, %v3159, 0.0
  %v3179 = vsel %vm927, %v3161, 0.0
  %v3180 = vsel %vm928, %v3163, 0.0
  %v3181 = vsel %vm929, %v3165, 0.0
  %v3182 = vsel %vm930, %v3167, 0.0
  %v3183 = vpack.c.bf16 %v3176, %v3176
  %v3184 = vpack.c.bf16 %v3177, %v3177
  %v3185 = vpack.c.bf16 %v3178, %v3178
  %v3186 = vpack.c.bf16 %v3179, %v3179
  %v3187 = vpack.c.bf16 %v3180, %v3180
  %v3188 = vpack.c.bf16 %v3181, %v3181
  %v3189 = vpack.c.bf16 %v3182, %v3182
  %v3190 = vpack.c.bf16 %v2991, %v2991
  %v3191 = vpack.c.bf16 %v2992, %v2992
  %v3192 = vpack.c.bf16 %v2993, %v2993
  %v3193 = vpack.c.bf16 %v2994, %v2994
  %v3194 = vpack.c.bf16 %v2995, %v2995
  %v3195 = vpack.c.bf16 %v2996, %v2996
  %v3196 = vpack.c.bf16 %v2997, %v2997
  %v3198 = vrot.slane %v2991, 1
  %v3199 = vrot.slane %v2992, 1
  %v3200 = vsel %vm954, %v3198, %v3199
  %v3201 = vrot.slane %v2993, 1
  %v3202 = vsel %vm954, %v3199, %v3201
  %v3203 = vrot.slane %v2994, 1
  %v3204 = vsel %vm954, %v3201, %v3203
  %v3205 = vrot.slane %v2995, 1
  %v3206 = vsel %vm954, %v3203, %v3205
  %v3207 = vrot.slane %v2996, 1
  %v3208 = vsel %vm954, %v3205, %v3207
  %v3209 = vrot.slane %v2997, 1
  %v3210 = vsel %vm954, %v3207, %v3209
  %v3211 = vrot.slane %v2998, 1
  %v3212 = vsel %vm954, %v3209, %v3211
  %v3221 = vsel %vm954, 0.0, %v3198
  %v3222 = vsel %vm987, %v3221, 0.0
  %v3223 = vsel %vm988, %v3200, 0.0
  %v3224 = vsel %vm989, %v3202, 0.0
  %v3225 = vsel %vm990, %v3204, 0.0
  %v3226 = vsel %vm991, %v3206, 0.0
  %v3227 = vsel %vm992, %v3208, 0.0
  %v3228 = vsel %vm993, %v3210, 0.0
  %v3229 = vsel %vm994, %v3212, 0.0
  %v3230 = vpack.c.bf16 %v3222, %v3222
  %v3231 = vpack.c.bf16 %v3223, %v3223
  %v3232 = vpack.c.bf16 %v3224, %v3224
  %v3233 = vpack.c.bf16 %v3225, %v3225
  %v3234 = vpack.c.bf16 %v3226, %v3226
  %v3235 = vpack.c.bf16 %v3227, %v3227
  %v3236 = vpack.c.bf16 %v3228, %v3228
  %v3237 = vpack.c.bf16 %v3229, %v3229
  %v3238 = vrot.slane %v2998, 7
  %v3239 = vsel %vm893, %v3166, %v3238
  %v3241 = vsel %vm923, %v3175, 0.0
  %v3242 = vsel %vm924, %v3157, 0.0
  %v3243 = vsel %vm925, %v3159, 0.0
  %v3244 = vsel %vm926, %v3161, 0.0
  %v3245 = vsel %vm927, %v3163, 0.0
  %v3246 = vsel %vm928, %v3165, 0.0
  %v3247 = vsel %vm929, %v3167, 0.0
  %v3248 = vsel %vm930, %v3239, 0.0
  %v3249 = vpack.c.bf16 %v3241, %v3241
  %v3250 = vpack.c.bf16 %v3242, %v3242
  %v3251 = vpack.c.bf16 %v3243, %v3243
  %v3252 = vpack.c.bf16 %v3244, %v3244
  %v3253 = vpack.c.bf16 %v3245, %v3245
  %v3254 = vpack.c.bf16 %v3246, %v3246
  %v3255 = vpack.c.bf16 %v3247, %v3247
  %v3256 = vpack.c.bf16 %v3248, %v3248
  %v3257 = vpack.c.bf16 %v2998, %v2998
  %v3259 = vsel %vm954, %v3211, 0.0
  %v3260 = vsel %vm987, %v3200, 0.0
  %v3261 = vsel %vm988, %v3202, 0.0
  %v3262 = vsel %vm989, %v3204, 0.0
  %v3263 = vsel %vm990, %v3206, 0.0
  %v3264 = vsel %vm991, %v3208, 0.0
  %v3265 = vsel %vm992, %v3210, 0.0
  %v3266 = vsel %vm993, %v3212, 0.0
  %v3267 = vsel %vm994, %v3259, 0.0
  %v3268 = vpack.c.bf16 %v3260, %v3260
  %v3269 = vpack.c.bf16 %v3261, %v3261
  %v3270 = vpack.c.bf16 %v3262, %v3262
  %v3271 = vpack.c.bf16 %v3263, %v3263
  %v3272 = vpack.c.bf16 %v3264, %v3264
  %v3273 = vpack.c.bf16 %v3265, %v3265
  %v3274 = vpack.c.bf16 %v3266, %v3266
  %v3275 = vpack.c.bf16 %v3267, %v3267
  %v3277 = vsel %vm893, %v3238, 0.0
  %v3278 = vsel %vm923, %v3157, 0.0
  %v3279 = vsel %vm924, %v3159, 0.0
  %v3280 = vsel %vm925, %v3161, 0.0
  %v3281 = vsel %vm926, %v3163, 0.0
  %v3282 = vsel %vm927, %v3165, 0.0
  %v3283 = vsel %vm928, %v3167, 0.0
  %v3284 = vsel %vm929, %v3239, 0.0
  %v3285 = vsel %vm930, %v3277, 0.0
  %v3286 = vpack.c.bf16 %v3278, %v3278
  %v3287 = vpack.c.bf16 %v3279, %v3279
  %v3288 = vpack.c.bf16 %v3280, %v3280
  %v3289 = vpack.c.bf16 %v3281, %v3281
  %v3290 = vpack.c.bf16 %v3282, %v3282
  %v3291 = vpack.c.bf16 %v3283, %v3283
  %v3292 = vpack.c.bf16 %v3284, %v3284
  %v3293 = vpack.c.bf16 %v3285, %v3285
  %v3294 = vsel %vm987, %v3202, 0.0
  %v3295 = vsel %vm988, %v3204, 0.0
  %v3296 = vsel %vm989, %v3206, 0.0
  %v3297 = vsel %vm990, %v3208, 0.0
  %v3298 = vsel %vm991, %v3210, 0.0
  %v3299 = vsel %vm992, %v3212, 0.0
  %v3300 = vsel %vm993, %v3259, 0.0
  %v3301 = vpack.c.bf16 %v3294, %v3294
  %v3302 = vpack.c.bf16 %v3295, %v3295
  %v3303 = vpack.c.bf16 %v3296, %v3296
  %v3304 = vpack.c.bf16 %v3297, %v3297
  %v3305 = vpack.c.bf16 %v3298, %v3298
  %v3306 = vpack.c.bf16 %v3299, %v3299
  %v3307 = vpack.c.bf16 %v3300, %v3300
  %v3315 = vunpack.c.l.b16 %v3183
  %v3316 = vunpack.c.l.b16 %v3184
  %v3317 = vunpack.c.l.b16 %v3185
  %v3318 = vunpack.c.l.b16 %v3186
  %v3319 = vunpack.c.l.b16 %v3187
  %v3320 = vunpack.c.l.b16 %v3188
  %v3321 = vunpack.c.l.b16 %v3189
  %v3322 = vpack.c.b16 %v3315, %v1089
  %v3323 = vpack.c.b16 %v3317, %v3316
  %v3324 = vpack.c.b16 %v3319, %v3318
  %v3325 = vpack.c.b16 %v3321, %v3320
  %v3337 = vunpack.c.l.b16 %v3190
  %v3338 = vunpack.c.l.b16 %v3191
  %v3339 = vunpack.c.l.b16 %v3192
  %v3340 = vunpack.c.l.b16 %v3193
  %v3341 = vunpack.c.l.b16 %v3194
  %v3342 = vunpack.c.l.b16 %v3195
  %v3343 = vunpack.c.l.b16 %v3196
  %v3344 = vpack.c.b16 %v3337, %v1089
  %v3345 = vpack.c.b16 %v3339, %v3338
  %v3346 = vpack.c.b16 %v3341, %v3340
  %v3347 = vpack.c.b16 %v3343, %v3342
  %v3360 = vunpack.c.l.b16 %v3230
  %v3361 = vunpack.c.l.b16 %v3231
  %v3362 = vunpack.c.l.b16 %v3232
  %v3363 = vunpack.c.l.b16 %v3233
  %v3364 = vunpack.c.l.b16 %v3234
  %v3365 = vunpack.c.l.b16 %v3235
  %v3366 = vunpack.c.l.b16 %v3236
  %v3367 = vunpack.c.l.b16 %v3237
  %v3368 = vpack.c.b16 %v3361, %v3360
  %v3369 = vpack.c.b16 %v3363, %v3362
  %v3370 = vpack.c.b16 %v3365, %v3364
  %v3371 = vpack.c.b16 %v3367, %v3366
  %v3384 = vunpack.c.l.b16 %v3249
  %v3385 = vunpack.c.l.b16 %v3250
  %v3386 = vunpack.c.l.b16 %v3251
  %v3387 = vunpack.c.l.b16 %v3252
  %v3388 = vunpack.c.l.b16 %v3253
  %v3389 = vunpack.c.l.b16 %v3254
  %v3390 = vunpack.c.l.b16 %v3255
  %v3391 = vunpack.c.l.b16 %v3256
  %v3392 = vpack.c.b16 %v3385, %v3384
  %v3393 = vpack.c.b16 %v3387, %v3386
  %v3394 = vpack.c.b16 %v3389, %v3388
  %v3395 = vpack.c.b16 %v3391, %v3390
  %v3401 = vunpack.c.l.b16 %v3257
  %v3402 = vpack.c.b16 %v3338, %v3337
  %v3403 = vpack.c.b16 %v3340, %v3339
  %v3404 = vpack.c.b16 %v3342, %v3341
  %v3405 = vpack.c.b16 %v3401, %v3343
  %v3418 = vunpack.c.l.b16 %v3268
  %v3419 = vunpack.c.l.b16 %v3269
  %v3420 = vunpack.c.l.b16 %v3270
  %v3421 = vunpack.c.l.b16 %v3271
  %v3422 = vunpack.c.l.b16 %v3272
  %v3423 = vunpack.c.l.b16 %v3273
  %v3424 = vunpack.c.l.b16 %v3274
  %v3425 = vunpack.c.l.b16 %v3275
  %v3426 = vpack.c.b16 %v3419, %v3418
  %v3427 = vpack.c.b16 %v3421, %v3420
  %v3428 = vpack.c.b16 %v3423, %v3422
  %v3429 = vpack.c.b16 %v3425, %v3424
  %v3442 = vunpack.c.l.b16 %v3286
  %v3443 = vunpack.c.l.b16 %v3287
  %v3444 = vunpack.c.l.b16 %v3288
  %v3445 = vunpack.c.l.b16 %v3289
  %v3446 = vunpack.c.l.b16 %v3290
  %v3447 = vunpack.c.l.b16 %v3291
  %v3448 = vunpack.c.l.b16 %v3292
  %v3449 = vunpack.c.l.b16 %v3293
  %v3450 = vpack.c.b16 %v3443, %v3442
  %v3451 = vpack.c.b16 %v3445, %v3444
  %v3452 = vpack.c.b16 %v3447, %v3446
  %v3453 = vpack.c.b16 %v3449, %v3448
  %v3458 = vpack.c.b16 %v1089, %v3401
  %v3467 = vunpack.c.l.b16 %v3301
  %v3468 = vunpack.c.l.b16 %v3302
  %v3469 = vunpack.c.l.b16 %v3303
  %v3470 = vunpack.c.l.b16 %v3304
  %v3471 = vunpack.c.l.b16 %v3305
  %v3472 = vunpack.c.l.b16 %v3306
  %v3473 = vunpack.c.l.b16 %v3307
  %v3474 = vpack.c.b16 %v3468, %v3467
  %v3475 = vpack.c.b16 %v3470, %v3469
  %v3476 = vpack.c.b16 %v3472, %v3471
  %v3477 = vpack.c.b16 %v1089, %v3473
  %v3483 = vperm.slane %v3147, 0
  %v3484 = vperm.slane %v3147, 1
  %v3631 = vunpack.c.l.b16 %v3003
  %v3632 = vunpack.c.h.b16 %v3003
  %v3633 = vunpack.c.l.b16 %v3004
  %v3634 = vunpack.c.h.b16 %v3004
  %v3635 = vunpack.c.l.b16 %v3005
  %v3636 = vunpack.c.h.b16 %v3005
  %v3637 = vunpack.c.l.b16 %v3006
  %v3638 = vunpack.c.h.b16 %v3006
  %v3639 = vunpack.c.l.b16 %v3007
  %v3640 = vunpack.c.h.b16 %v3007
  %v3641 = vunpack.c.l.b16 %v3008
  %v3642 = vunpack.c.h.b16 %v3008
  %v3643 = vunpack.c.l.b16 %v3009
  %v3644 = vunpack.c.h.b16 %v3009
  %v3645 = vunpack.c.l.b16 %v3010
  %v3646 = vunpack.c.h.b16 %v3010
  %v3647 = vunpack.c.l.b16 %v3011
  %v3648 = vunpack.c.h.b16 %v3011
  %v3649 = vunpack.c.l.b16 %v3012
  %v3650 = vunpack.c.h.b16 %v3012
  %v3651 = vunpack.c.l.b16 %v3013
  %v3652 = vunpack.c.h.b16 %v3013
  %v3653 = vunpack.c.l.b16 %v3014
  %v3654 = vunpack.c.h.b16 %v3014
  %v3655 = vunpack.c.l.b16 %v3015
  %v3656 = vunpack.c.h.b16 %v3015
  %v3657 = vunpack.c.l.b16 %v3016
  %v3658 = vunpack.c.h.b16 %v3016
  %v3659 = vunpack.c.l.b16 %v3017
  %v3660 = vunpack.c.h.b16 %v3017
  %v3661 = vunpack.c.l.b16 %v3018
  %v3662 = vunpack.c.h.b16 %v3018
  %v3663 = vunpack.c.l.b16 %v3019
  %v3664 = vunpack.c.h.b16 %v3019
  %v3665 = vunpack.c.l.b16 %v3020
  %v3666 = vunpack.c.h.b16 %v3020
  %v3667 = vunpack.c.l.b16 %v3021
  %v3668 = vunpack.c.h.b16 %v3021
  %v3669 = vunpack.c.l.b16 %v3022
  %v3670 = vunpack.c.h.b16 %v3022
  %v3671 = vunpack.c.l.b16 %v3023
  %v3672 = vunpack.c.h.b16 %v3023
  %v3673 = vunpack.c.l.b16 %v3024
  %v3674 = vunpack.c.h.b16 %v3024
  %v3675 = vunpack.c.l.b16 %v3025
  %v3676 = vunpack.c.h.b16 %v3025
  %v3677 = vunpack.c.l.b16 %v3026
  %v3678 = vunpack.c.h.b16 %v3026
  %v3679 = vunpack.c.l.b16 %v3027
  %v3680 = vunpack.c.h.b16 %v3027
  %v3681 = vunpack.c.l.b16 %v3028
  %v3682 = vunpack.c.h.b16 %v3028
  %v3683 = vunpack.c.l.b16 %v3029
  %v3684 = vunpack.c.h.b16 %v3029
  %v3685 = vunpack.c.l.b16 %v3030
  %v3686 = vunpack.c.h.b16 %v3030
  %v3687 = vunpack.c.l.b16 %v3031
  %v3688 = vunpack.c.h.b16 %v3031
  %v3689 = vunpack.c.l.b16 %v3032
  %v3690 = vunpack.c.h.b16 %v3032
  %v3691 = vunpack.c.l.b16 %v3033
  %v3692 = vunpack.c.h.b16 %v3033
  %v3693 = vunpack.c.l.b16 %v3034
  %v3694 = vunpack.c.h.b16 %v3034
  %v3695 = vunpack.c.l.b16 %v3035
  %v3696 = vunpack.c.h.b16 %v3035
  %v3697 = vunpack.c.l.b16 %v3036
  %v3698 = vunpack.c.h.b16 %v3036
  %v3699 = vunpack.c.l.b16 %v3037
  %v3700 = vunpack.c.h.b16 %v3037
  %v3701 = vunpack.c.l.b16 %v3038
  %v3702 = vunpack.c.h.b16 %v3038
  %v3703 = vunpack.c.l.b16 %v3039
  %v3704 = vunpack.c.h.b16 %v3039
  %v3705 = vunpack.c.l.b16 %v3040
  %v3706 = vunpack.c.h.b16 %v3040
  %v3707 = vunpack.c.l.b16 %v3041
  %v3708 = vunpack.c.h.b16 %v3041
  %v3709 = vunpack.c.l.b16 %v3042
  %v3710 = vunpack.c.h.b16 %v3042
  %v3711 = vunpack.c.l.b16 %v3043
  %v3712 = vunpack.c.h.b16 %v3043
  %v3713 = vunpack.c.l.b16 %v3044
  %v3714 = vunpack.c.h.b16 %v3044
  %v3715 = vunpack.c.l.b16 %v3045
  %v3716 = vunpack.c.h.b16 %v3045
  %v3717 = vunpack.c.l.b16 %v3046
  %v3718 = vunpack.c.h.b16 %v3046
  %v3719 = vunpack.c.l.b16 %v3047
  %v3720 = vunpack.c.h.b16 %v3047
  %v3721 = vunpack.c.l.b16 %v3048
  %v3722 = vunpack.c.h.b16 %v3048
  %v3723 = vunpack.c.l.b16 %v3049
  %v3724 = vunpack.c.h.b16 %v3049
  %v3725 = vunpack.c.l.b16 %v3050
  %v3726 = vunpack.c.h.b16 %v3050
  %v3727 = vunpack.c.l.b16 %v3051
  %v3728 = vunpack.c.h.b16 %v3051
  %v3729 = vunpack.c.l.b16 %v3052
  %v3730 = vunpack.c.h.b16 %v3052
  %v3731 = vunpack.c.l.b16 %v3053
  %v3732 = vunpack.c.h.b16 %v3053
  %v3733 = vunpack.c.l.b16 %v3054
  %v3734 = vunpack.c.h.b16 %v3054
  %v3735 = vunpack.c.l.b16 %v3055
  %v3736 = vunpack.c.h.b16 %v3055
  %v3737 = vunpack.c.l.b16 %v3056
  %v3738 = vunpack.c.h.b16 %v3056
  %v3739 = vunpack.c.l.b16 %v3057
  %v3740 = vunpack.c.h.b16 %v3057
  %v3741 = vunpack.c.l.b16 %v3058
  %v3742 = vunpack.c.h.b16 %v3058
  %v3743 = vunpack.c.l.b16 %v3059
  %v3744 = vunpack.c.h.b16 %v3059
  %v3745 = vunpack.c.l.b16 %v3060
  %v3746 = vunpack.c.h.b16 %v3060
  %v3747 = vunpack.c.l.b16 %v3061
  %v3748 = vunpack.c.h.b16 %v3061
  %v3749 = vunpack.c.l.b16 %v3062
  %v3750 = vunpack.c.h.b16 %v3062
  %v3751 = vunpack.c.l.b16 %v3063
  %v3752 = vunpack.c.h.b16 %v3063
  %v3753 = vunpack.c.l.b16 %v3064
  %v3754 = vunpack.c.h.b16 %v3064
  %v3755 = vunpack.c.l.b16 %v3065
  %v3756 = vunpack.c.h.b16 %v3065
  %v3757 = vunpack.c.l.b16 %v3066
  %v3758 = vunpack.c.h.b16 %v3066
  %v3759 = vunpack.c.l.b16 %v3067
  %v3760 = vunpack.c.h.b16 %v3067
  %v3761 = vunpack.c.l.b16 %v3068
  %v3762 = vunpack.c.h.b16 %v3068
  %v3763 = vunpack.c.l.b16 %v3069
  %v3764 = vunpack.c.h.b16 %v3069
  %v3765 = vunpack.c.l.b16 %v3070
  %v3766 = vunpack.c.h.b16 %v3070
  %v3767 = vunpack.c.l.b16 %v3071
  %v3768 = vunpack.c.h.b16 %v3071
  %v3769 = vunpack.c.l.b16 %v3072
  %v3770 = vunpack.c.h.b16 %v3072
  %v3771 = vunpack.c.l.b16 %v3073
  %v3772 = vunpack.c.h.b16 %v3073
  %v3773 = vunpack.c.l.b16 %v3074
  %v3774 = vunpack.c.h.b16 %v3074
  %v3775 = vunpack.c.l.b16 %v3075
  %v3776 = vunpack.c.h.b16 %v3075
  %v3777 = vunpack.c.l.b16 %v3076
  %v3778 = vunpack.c.h.b16 %v3076
  %v3779 = vunpack.c.l.b16 %v3077
  %v3780 = vunpack.c.h.b16 %v3077
  %v3781 = vunpack.c.l.b16 %v3078
  %v3782 = vunpack.c.h.b16 %v3078
  %v3783 = vunpack.c.l.b16 %v3079
  %v3784 = vunpack.c.h.b16 %v3079
  %v3785 = vunpack.c.l.b16 %v3080
  %v3786 = vunpack.c.h.b16 %v3080
  %v3787 = vunpack.c.l.b16 %v3081
  %v3788 = vunpack.c.h.b16 %v3081
  %v3789 = vunpack.c.l.b16 %v3082
  %v3790 = vunpack.c.h.b16 %v3082
  %v3791 = vunpack.c.l.b16 %v3083
  %v3792 = vunpack.c.h.b16 %v3083
  %v3793 = vunpack.c.l.b16 %v3084
  %v3794 = vunpack.c.h.b16 %v3084
  %v3795 = vunpack.c.l.b16 %v3085
  %v3796 = vunpack.c.h.b16 %v3085
  %v3797 = vunpack.c.l.b16 %v3086
  %v3798 = vunpack.c.h.b16 %v3086
  %v3799 = vunpack.c.l.b16 %v3087
  %v3800 = vunpack.c.h.b16 %v3087
  %v3801 = vunpack.c.l.b16 %v3088
  %v3802 = vunpack.c.h.b16 %v3088
  %v3803 = vunpack.c.l.b16 %v3089
  %v3804 = vunpack.c.h.b16 %v3089
  %v3805 = vunpack.c.l.b16 %v3090
  %v3806 = vunpack.c.h.b16 %v3090
  %v3807 = vunpack.c.l.b16 %v3091
  %v3808 = vunpack.c.h.b16 %v3091
  %v3809 = vunpack.c.l.b16 %v3092
  %v3810 = vunpack.c.h.b16 %v3092
  %v3811 = vunpack.c.l.b16 %v3093
  %v3812 = vunpack.c.h.b16 %v3093
  %v3813 = vunpack.c.l.b16 %v3094
  %v3814 = vunpack.c.h.b16 %v3094
  %v3815 = vunpack.c.l.b16 %v3095
  %v3816 = vunpack.c.h.b16 %v3095
  %v3817 = vunpack.c.l.b16 %v3096
  %v3818 = vunpack.c.h.b16 %v3096
  %v3819 = vunpack.c.l.b16 %v3097
  %v3820 = vunpack.c.h.b16 %v3097
  %v3821 = vunpack.c.l.b16 %v3098
  %v3822 = vunpack.c.h.b16 %v3098
  %v3823 = vunpack.c.l.b16 %v3099
  %v3824 = vunpack.c.h.b16 %v3099
  %v3825 = vunpack.c.l.b16 %v3100
  %v3826 = vunpack.c.h.b16 %v3100
  %v3827 = vunpack.c.l.b16 %v3101
  %v3828 = vunpack.c.h.b16 %v3101
  %v3829 = vunpack.c.l.b16 %v3102
  %v3830 = vunpack.c.h.b16 %v3102
  %v3831 = vunpack.c.l.b16 %v3103
  %v3832 = vunpack.c.h.b16 %v3103
  %v3833 = vunpack.c.l.b16 %v3104
  %v3834 = vunpack.c.h.b16 %v3104
  %v3835 = vunpack.c.l.b16 %v3105
  %v3836 = vunpack.c.h.b16 %v3105
  %v3837 = vunpack.c.l.b16 %v3106
  %v3838 = vunpack.c.h.b16 %v3106
  %v3839 = vunpack.c.l.b16 %v3107
  %v3840 = vunpack.c.h.b16 %v3107
  %v3841 = vunpack.c.l.b16 %v3108
  %v3842 = vunpack.c.h.b16 %v3108
  %v3843 = vunpack.c.l.b16 %v3109
  %v3844 = vunpack.c.h.b16 %v3109
  %v3845 = vunpack.c.l.b16 %v3110
  %v3846 = vunpack.c.h.b16 %v3110
  %v3847 = vunpack.c.l.b16 %v3111
  %v3848 = vunpack.c.h.b16 %v3111
  %v3849 = vunpack.c.l.b16 %v3112
  %v3850 = vunpack.c.h.b16 %v3112
  %v3851 = vunpack.c.l.b16 %v3113
  %v3852 = vunpack.c.h.b16 %v3113
  %v3853 = vunpack.c.l.b16 %v3114
  %v3854 = vunpack.c.h.b16 %v3114
  %v3855 = vunpack.c.l.b16 %v3115
  %v3856 = vunpack.c.h.b16 %v3115
  %v3857 = vunpack.c.l.b16 %v3116
  %v3858 = vunpack.c.h.b16 %v3116
  %v3859 = vunpack.c.l.b16 %v3117
  %v3860 = vunpack.c.h.b16 %v3117
  %v3861 = vunpack.c.l.b16 %v3118
  %v3862 = vunpack.c.h.b16 %v3118
  %v3863 = vunpack.c.l.b16 %v3119
  %v3864 = vunpack.c.h.b16 %v3119
  %v3865 = vunpack.c.l.b16 %v3120
  %v3866 = vunpack.c.h.b16 %v3120
  %v3867 = vunpack.c.l.b16 %v3121
  %v3868 = vunpack.c.h.b16 %v3121
  %v3869 = vunpack.c.l.b16 %v3122
  %v3870 = vunpack.c.h.b16 %v3122
  %v3871 = vunpack.c.l.b16 %v3123
  %v3872 = vunpack.c.h.b16 %v3123
  %v3873 = vunpack.c.l.b16 %v3124
  %v3874 = vunpack.c.h.b16 %v3124
  %v3875 = vunpack.c.l.b16 %v3125
  %v3876 = vunpack.c.h.b16 %v3125
  %v3877 = vunpack.c.l.b16 %v3126
  %v3878 = vunpack.c.h.b16 %v3126
  %v3879 = vunpack.c.l.b16 %v3127
  %v3880 = vunpack.c.h.b16 %v3127
  %v3881 = vunpack.c.l.b16 %v3128
  %v3882 = vunpack.c.h.b16 %v3128
  %v3883 = vunpack.c.l.b16 %v3129
  %v3884 = vunpack.c.h.b16 %v3129
  %v3885 = vunpack.c.l.b16 %v3130
  %v3886 = vunpack.c.h.b16 %v3130
  %v3887 = vunpack.c.l.b16 %v3131
  %v3888 = vunpack.c.h.b16 %v3131
  %v3889 = vunpack.c.l.b16 %v3132
  %v3890 = vunpack.c.h.b16 %v3132
  %v3891 = vunpack.c.l.b16 %v3133
  %v3892 = vunpack.c.h.b16 %v3133
  %v3893 = vunpack.c.l.b16 %v3134
  %v3894 = vunpack.c.h.b16 %v3134
  %v3895 = vunpack.c.l.b16 %v3135
  %v3896 = vunpack.c.h.b16 %v3135
  %v3897 = vunpack.c.l.b16 %v3136
  %v3898 = vunpack.c.h.b16 %v3136
  %v3899 = vunpack.c.l.b16 %v3137
  %v3900 = vunpack.c.h.b16 %v3137
  %v3901 = vunpack.c.l.b16 %v3138
  %v3902 = vunpack.c.h.b16 %v3138
  %v3903 = vunpack.c.l.b16 %v3139
  %v3904 = vunpack.c.h.b16 %v3139
  %v3905 = vunpack.c.l.b16 %v3140
  %v3906 = vunpack.c.h.b16 %v3140
  %v3907 = vunpack.c.l.b16 %v3141
  %v3908 = vunpack.c.h.b16 %v3141
  %v3909 = vunpack.c.l.b16 %v3142
  %v3910 = vunpack.c.h.b16 %v3142
  %v3911 = vunpack.c.l.b16 %v3143
  %v3912 = vunpack.c.h.b16 %v3143
  %v3913 = vunpack.c.l.b16 %v3144
  %v3914 = vunpack.c.h.b16 %v3144
  %v3915 = vunpack.c.l.b16 %v3145
  %v3916 = vunpack.c.h.b16 %v3145
  %v3917 = vunpack.c.l.b16 %v3146
  %v3918 = vunpack.c.h.b16 %v3146
  %v3919 = vpack.c.b16 %v3633, %v3631
  %v3920 = vpack.c.b16 %v3634, %v3632
  %v3921 = vpack.c.b16 %v3637, %v3635
  %v3922 = vpack.c.b16 %v3638, %v3636
  %v3923 = vpack.c.b16 %v3641, %v3639
  %v3924 = vpack.c.b16 %v3642, %v3640
  %v3925 = vpack.c.b16 %v3645, %v3643
  %v3926 = vpack.c.b16 %v3646, %v3644
  %v3927 = vpack.c.b16 %v3649, %v3647
  %v3928 = vpack.c.b16 %v3650, %v3648
  %v3929 = vpack.c.b16 %v3653, %v3651
  %v3930 = vpack.c.b16 %v3654, %v3652
  %v3931 = vpack.c.b16 %v3657, %v3655
  %v3932 = vpack.c.b16 %v3658, %v3656
  %v3933 = vpack.c.b16 %v3661, %v3659
  %v3934 = vpack.c.b16 %v3662, %v3660
  %v3935 = vpack.c.b16 %v3665, %v3663
  %v3936 = vpack.c.b16 %v3666, %v3664
  %v3937 = vpack.c.b16 %v3669, %v3667
  %v3938 = vpack.c.b16 %v3670, %v3668
  %v3939 = vpack.c.b16 %v3673, %v3671
  %v3940 = vpack.c.b16 %v3674, %v3672
  %v3941 = vpack.c.b16 %v3677, %v3675
  %v3942 = vpack.c.b16 %v3678, %v3676
  %v3943 = vpack.c.b16 %v3681, %v3679
  %v3944 = vpack.c.b16 %v3682, %v3680
  %v3945 = vpack.c.b16 %v3685, %v3683
  %v3946 = vpack.c.b16 %v3686, %v3684
  %v3947 = vpack.c.b16 %v3689, %v3687
  %v3948 = vpack.c.b16 %v3690, %v3688
  %v3949 = vpack.c.b16 %v3693, %v3691
  %v3950 = vpack.c.b16 %v3694, %v3692
  %v3951 = vpack.c.b16 %v3697, %v3695
  %v3952 = vpack.c.b16 %v3698, %v3696
  %v3953 = vpack.c.b16 %v3701, %v3699
  %v3954 = vpack.c.b16 %v3702, %v3700
  %v3955 = vpack.c.b16 %v3705, %v3703
  %v3956 = vpack.c.b16 %v3706, %v3704
  %v3957 = vpack.c.b16 %v3709, %v3707
  %v3958 = vpack.c.b16 %v3710, %v3708
  %v3959 = vpack.c.b16 %v3713, %v3711
  %v3960 = vpack.c.b16 %v3714, %v3712
  %v3961 = vpack.c.b16 %v3717, %v3715
  %v3962 = vpack.c.b16 %v3718, %v3716
  %v3963 = vpack.c.b16 %v3721, %v3719
  %v3964 = vpack.c.b16 %v3722, %v3720
  %v3965 = vpack.c.b16 %v3725, %v3723
  %v3966 = vpack.c.b16 %v3726, %v3724
  %v3967 = vpack.c.b16 %v3729, %v3727
  %v3968 = vpack.c.b16 %v3730, %v3728
  %v3969 = vpack.c.b16 %v3733, %v3731
  %v3970 = vpack.c.b16 %v3734, %v3732
  %v3971 = vpack.c.b16 %v3737, %v3735
  %v3972 = vpack.c.b16 %v3738, %v3736
  %v3973 = vpack.c.b16 %v3741, %v3739
  %v3974 = vpack.c.b16 %v3742, %v3740
  %v3975 = vpack.c.b16 %v3745, %v3743
  %v3976 = vpack.c.b16 %v3746, %v3744
  %v3977 = vpack.c.b16 %v3749, %v3747
  %v3978 = vpack.c.b16 %v3750, %v3748
  %v3979 = vpack.c.b16 %v3753, %v3751
  %v3980 = vpack.c.b16 %v3754, %v3752
  %v3981 = vpack.c.b16 %v3757, %v3755
  %v3982 = vpack.c.b16 %v3758, %v3756
  %v3983 = vpack.c.b16 %v3761, %v3759
  %v3984 = vpack.c.b16 %v3762, %v3760
  %v3985 = vpack.c.b16 %v3765, %v3763
  %v3986 = vpack.c.b16 %v3766, %v3764
  %v3987 = vpack.c.b16 %v3769, %v3767
  %v3988 = vpack.c.b16 %v3770, %v3768
  %v3989 = vpack.c.b16 %v3773, %v3771
  %v3990 = vpack.c.b16 %v3774, %v3772
  %v3991 = vpack.c.b16 %v3777, %v3775
  %v3992 = vpack.c.b16 %v3778, %v3776
  %v3993 = vpack.c.b16 %v3781, %v3779
  %v3994 = vpack.c.b16 %v3782, %v3780
  %v3995 = vpack.c.b16 %v3785, %v3783
  %v3996 = vpack.c.b16 %v3786, %v3784
  %v3997 = vpack.c.b16 %v3789, %v3787
  %v3998 = vpack.c.b16 %v3790, %v3788
  %v3999 = vpack.c.b16 %v3793, %v3791
  %v4000 = vpack.c.b16 %v3794, %v3792
  %v4001 = vpack.c.b16 %v3797, %v3795
  %v4002 = vpack.c.b16 %v3798, %v3796
  %v4003 = vpack.c.b16 %v3801, %v3799
  %v4004 = vpack.c.b16 %v3802, %v3800
  %v4005 = vpack.c.b16 %v3805, %v3803
  %v4006 = vpack.c.b16 %v3806, %v3804
  %v4007 = vpack.c.b16 %v3809, %v3807
  %v4008 = vpack.c.b16 %v3810, %v3808
  %v4009 = vpack.c.b16 %v3813, %v3811
  %v4010 = vpack.c.b16 %v3814, %v3812
  %v4011 = vpack.c.b16 %v3817, %v3815
  %v4012 = vpack.c.b16 %v3818, %v3816
  %v4013 = vpack.c.b16 %v3821, %v3819
  %v4014 = vpack.c.b16 %v3822, %v3820
  %v4015 = vpack.c.b16 %v3825, %v3823
  %v4016 = vpack.c.b16 %v3826, %v3824
  %v4017 = vpack.c.b16 %v3829, %v3827
  %v4018 = vpack.c.b16 %v3830, %v3828
  %v4019 = vpack.c.b16 %v3833, %v3831
  %v4020 = vpack.c.b16 %v3834, %v3832
  %v4021 = vpack.c.b16 %v3837, %v3835
  %v4022 = vpack.c.b16 %v3838, %v3836
  %v4023 = vpack.c.b16 %v3841, %v3839
  %v4024 = vpack.c.b16 %v3842, %v3840
  %v4025 = vpack.c.b16 %v3845, %v3843
  %v4026 = vpack.c.b16 %v3846, %v3844
  %v4027 = vpack.c.b16 %v3849, %v3847
  %v4028 = vpack.c.b16 %v3850, %v3848
  %v4029 = vpack.c.b16 %v3853, %v3851
  %v4030 = vpack.c.b16 %v3854, %v3852
  %v4031 = vpack.c.b16 %v3857, %v3855
  %v4032 = vpack.c.b16 %v3858, %v3856
  %v4033 = vpack.c.b16 %v3861, %v3859
  %v4034 = vpack.c.b16 %v3862, %v3860
  %v4035 = vpack.c.b16 %v3865, %v3863
  %v4036 = vpack.c.b16 %v3866, %v3864
  %v4037 = vpack.c.b16 %v3869, %v3867
  %v4038 = vpack.c.b16 %v3870, %v3868
  %v4039 = vpack.c.b16 %v3873, %v3871
  %v4040 = vpack.c.b16 %v3874, %v3872
  %v4041 = vpack.c.b16 %v3877, %v3875
  %v4042 = vpack.c.b16 %v3878, %v3876
  %v4043 = vpack.c.b16 %v3881, %v3879
  %v4044 = vpack.c.b16 %v3882, %v3880
  %v4045 = vpack.c.b16 %v3885, %v3883
  %v4046 = vpack.c.b16 %v3886, %v3884
  %v4047 = vpack.c.b16 %v3889, %v3887
  %v4048 = vpack.c.b16 %v3890, %v3888
  %v4049 = vpack.c.b16 %v3893, %v3891
  %v4050 = vpack.c.b16 %v3894, %v3892
  %v4051 = vpack.c.b16 %v3897, %v3895
  %v4052 = vpack.c.b16 %v3898, %v3896
  %v4053 = vpack.c.b16 %v3901, %v3899
  %v4054 = vpack.c.b16 %v3902, %v3900
  %v4055 = vpack.c.b16 %v3905, %v3903
  %v4056 = vpack.c.b16 %v3906, %v3904
  %v4057 = vpack.c.b16 %v3909, %v3907
  %v4058 = vpack.c.b16 %v3910, %v3908
  %v4059 = vpack.c.b16 %v3913, %v3911
  %v4060 = vpack.c.b16 %v3914, %v3912
  %v4061 = vpack.c.b16 %v3917, %v3915
  %v4062 = vpack.c.b16 %v3918, %v3916
  %4207 = vmatpush.bf16.msra.mxu0 %v3933
  %4208 = vmatpush.bf16.msra.mxu0 %v3931
  %4209 = vmatpush.bf16.msra.mxu0 %v3929
  %4210 = vmatpush.bf16.msra.mxu0 %v3927
  %4211 = vmatpush.bf16.msra.mxu0 %v3925
  %4212 = vmatpush.bf16.msra.mxu0 %v3923
  %4213 = vmatpush.bf16.msra.mxu0 %v3921
  %4214 = vmatpush.bf16.msra.mxu0 %v3919
  %4215 = vmatmul.bf16.gmra.mxu0 %v3322
  %v4216 = vpop.f32.mrf.mxu0
  %v4217 = vadd.f32 %v3483, %v4216
  %v4218 = vpop.f32.mrf.mxu0
  %v4219 = vadd.f32 %v3483, %v4218
  %4220 = vmatmul.bf16.gmra.mxu0 %v3323
  %v4221 = vpop.f32.mrf.mxu0
  %v4222 = vadd.f32 %v3483, %v4221
  %v4223 = vpop.f32.mrf.mxu0
  %v4224 = vadd.f32 %v3483, %v4223
  %4225 = vmatmul.bf16.gmra.mxu0 %v3324
  %v4226 = vpop.f32.mrf.mxu0
  %v4227 = vadd.f32 %v3483, %v4226
  %v4228 = vpop.f32.mrf.mxu0
  %v4229 = vadd.f32 %v3483, %v4228
  %4230 = vmatmul.bf16.gmra.mxu0 %v3325
  %v4231 = vpop.f32.mrf.mxu0
  %v4232 = vadd.f32 %v3483, %v4231
  %v4233 = vpop.f32.mrf.mxu0
  %v4234 = vadd.f32 %v3483, %v4233
  %4235 = vdwg.mxu0
  %4236 = vmatpush.bf16.msra.mxu0 %v3949
  %4237 = vmatpush.bf16.msra.mxu0 %v3947
  %4238 = vmatpush.bf16.msra.mxu0 %v3945
  %4239 = vmatpush.bf16.msra.mxu0 %v3943
  %4240 = vmatpush.bf16.msra.mxu0 %v3941
  %4241 = vmatpush.bf16.msra.mxu0 %v3939
  %4242 = vmatpush.bf16.msra.mxu0 %v3937
  %4243 = vmatpush.bf16.msra.mxu0 %v3935
  %4244 = vmatmul.bf16.gmra.mxu0 %v3344
  %v4245 = vpop.f32.mrf.mxu0
  %v4246 = vadd.f32 %v4217, %v4245
  %v4247 = vpop.f32.mrf.mxu0
  %v4248 = vadd.f32 %v4219, %v4247
  %4249 = vmatmul.bf16.gmra.mxu0 %v3345
  %v4250 = vpop.f32.mrf.mxu0
  %v4251 = vadd.f32 %v4222, %v4250
  %v4252 = vpop.f32.mrf.mxu0
  %v4253 = vadd.f32 %v4224, %v4252
  %4254 = vmatmul.bf16.gmra.mxu0 %v3346
  %v4255 = vpop.f32.mrf.mxu0
  %v4256 = vadd.f32 %v4227, %v4255
  %v4257 = vpop.f32.mrf.mxu0
  %v4258 = vadd.f32 %v4229, %v4257
  %4259 = vmatmul.bf16.gmra.mxu0 %v3347
  %v4260 = vpop.f32.mrf.mxu0
  %v4261 = vadd.f32 %v4232, %v4260
  %v4262 = vpop.f32.mrf.mxu0
  %v4263 = vadd.f32 %v4234, %v4262
  %4264 = vdwg.mxu0
  %4265 = vmatpush.bf16.msra.mxu0 %v3965
  %4266 = vmatpush.bf16.msra.mxu0 %v3963
  %4267 = vmatpush.bf16.msra.mxu0 %v3961
  %4268 = vmatpush.bf16.msra.mxu0 %v3959
  %4269 = vmatpush.bf16.msra.mxu0 %v3957
  %4270 = vmatpush.bf16.msra.mxu0 %v3955
  %4271 = vmatpush.bf16.msra.mxu0 %v3953
  %4272 = vmatpush.bf16.msra.mxu0 %v3951
  %4273 = vmatmul.bf16.gmra.mxu0 %v3368
  %v4274 = vpop.f32.mrf.mxu0
  %v4275 = vadd.f32 %v4246, %v4274
  %v4276 = vpop.f32.mrf.mxu0
  %v4277 = vadd.f32 %v4248, %v4276
  %4278 = vmatmul.bf16.gmra.mxu0 %v3369
  %v4279 = vpop.f32.mrf.mxu0
  %v4280 = vadd.f32 %v4251, %v4279
  %v4281 = vpop.f32.mrf.mxu0
  %v4282 = vadd.f32 %v4253, %v4281
  %4283 = vmatmul.bf16.gmra.mxu0 %v3370
  %v4284 = vpop.f32.mrf.mxu0
  %v4285 = vadd.f32 %v4256, %v4284
  %v4286 = vpop.f32.mrf.mxu0
  %v4287 = vadd.f32 %v4258, %v4286
  %4288 = vmatmul.bf16.gmra.mxu0 %v3371
  %v4289 = vpop.f32.mrf.mxu0
  %v4290 = vadd.f32 %v4261, %v4289
  %v4291 = vpop.f32.mrf.mxu0
  %v4292 = vadd.f32 %v4263, %v4291
  %4293 = vdwg.mxu0
  %4294 = vmatpush.bf16.msra.mxu0 %v3981
  %4295 = vmatpush.bf16.msra.mxu0 %v3979
  %4296 = vmatpush.bf16.msra.mxu0 %v3977
  %4297 = vmatpush.bf16.msra.mxu0 %v3975
  %4298 = vmatpush.bf16.msra.mxu0 %v3973
  %4299 = vmatpush.bf16.msra.mxu0 %v3971
  %4300 = vmatpush.bf16.msra.mxu0 %v3969
  %4301 = vmatpush.bf16.msra.mxu0 %v3967
  %4302 = vmatmul.bf16.gmra.mxu0 %v3392
  %v4303 = vpop.f32.mrf.mxu0
  %v4304 = vadd.f32 %v4275, %v4303
  %v4305 = vpop.f32.mrf.mxu0
  %v4306 = vadd.f32 %v4277, %v4305
  %4307 = vmatmul.bf16.gmra.mxu0 %v3393
  %v4308 = vpop.f32.mrf.mxu0
  %v4309 = vadd.f32 %v4280, %v4308
  %v4310 = vpop.f32.mrf.mxu0
  %v4311 = vadd.f32 %v4282, %v4310
  %4312 = vmatmul.bf16.gmra.mxu0 %v3394
  %v4313 = vpop.f32.mrf.mxu0
  %v4314 = vadd.f32 %v4285, %v4313
  %v4315 = vpop.f32.mrf.mxu0
  %v4316 = vadd.f32 %v4287, %v4315
  %4317 = vmatmul.bf16.gmra.mxu0 %v3395
  %v4318 = vpop.f32.mrf.mxu0
  %v4319 = vadd.f32 %v4290, %v4318
  %v4320 = vpop.f32.mrf.mxu0
  %v4321 = vadd.f32 %v4292, %v4320
  %4322 = vdwg.mxu0
  %4323 = vmatpush.bf16.msra.mxu0 %v3997
  %4324 = vmatpush.bf16.msra.mxu0 %v3995
  %4325 = vmatpush.bf16.msra.mxu0 %v3993
  %4326 = vmatpush.bf16.msra.mxu0 %v3991
  %4327 = vmatpush.bf16.msra.mxu0 %v3989
  %4328 = vmatpush.bf16.msra.mxu0 %v3987
  %4329 = vmatpush.bf16.msra.mxu0 %v3985
  %4330 = vmatpush.bf16.msra.mxu0 %v3983
  %4331 = vmatmul.bf16.gmra.mxu0 %v3402
  %v4332 = vpop.f32.mrf.mxu0
  %v4333 = vadd.f32 %v4304, %v4332
  %v4334 = vpop.f32.mrf.mxu0
  %v4335 = vadd.f32 %v4306, %v4334
  %4336 = vmatmul.bf16.gmra.mxu0 %v3403
  %v4337 = vpop.f32.mrf.mxu0
  %v4338 = vadd.f32 %v4309, %v4337
  %v4339 = vpop.f32.mrf.mxu0
  %v4340 = vadd.f32 %v4311, %v4339
  %4341 = vmatmul.bf16.gmra.mxu0 %v3404
  %v4342 = vpop.f32.mrf.mxu0
  %v4343 = vadd.f32 %v4314, %v4342
  %v4344 = vpop.f32.mrf.mxu0
  %v4345 = vadd.f32 %v4316, %v4344
  %4346 = vmatmul.bf16.gmra.mxu0 %v3405
  %v4347 = vpop.f32.mrf.mxu0
  %v4348 = vadd.f32 %v4319, %v4347
  %v4349 = vpop.f32.mrf.mxu0
  %v4350 = vadd.f32 %v4321, %v4349
  %4351 = vdwg.mxu0
  %4352 = vmatpush.bf16.msra.mxu0 %v4013
  %4353 = vmatpush.bf16.msra.mxu0 %v4011
  %4354 = vmatpush.bf16.msra.mxu0 %v4009
  %4355 = vmatpush.bf16.msra.mxu0 %v4007
  %4356 = vmatpush.bf16.msra.mxu0 %v4005
  %4357 = vmatpush.bf16.msra.mxu0 %v4003
  %4358 = vmatpush.bf16.msra.mxu0 %v4001
  %4359 = vmatpush.bf16.msra.mxu0 %v3999
  %4360 = vmatmul.bf16.gmra.mxu0 %v3426
  %v4361 = vpop.f32.mrf.mxu0
  %v4362 = vadd.f32 %v4333, %v4361
  %v4363 = vpop.f32.mrf.mxu0
  %v4364 = vadd.f32 %v4335, %v4363
  %4365 = vmatmul.bf16.gmra.mxu0 %v3427
  %v4366 = vpop.f32.mrf.mxu0
  %v4367 = vadd.f32 %v4338, %v4366
  %v4368 = vpop.f32.mrf.mxu0
  %v4369 = vadd.f32 %v4340, %v4368
  %4370 = vmatmul.bf16.gmra.mxu0 %v3428
  %v4371 = vpop.f32.mrf.mxu0
  %v4372 = vadd.f32 %v4343, %v4371
  %v4373 = vpop.f32.mrf.mxu0
  %v4374 = vadd.f32 %v4345, %v4373
  %4375 = vmatmul.bf16.gmra.mxu0 %v3429
  %v4376 = vpop.f32.mrf.mxu0
  %v4377 = vadd.f32 %v4348, %v4376
  %v4378 = vpop.f32.mrf.mxu0
  %v4379 = vadd.f32 %v4350, %v4378
  %4380 = vdwg.mxu0
  %4381 = vmatpush.bf16.msra.mxu0 %v4029
  %4382 = vmatpush.bf16.msra.mxu0 %v4027
  %4383 = vmatpush.bf16.msra.mxu0 %v4025
  %4384 = vmatpush.bf16.msra.mxu0 %v4023
  %4385 = vmatpush.bf16.msra.mxu0 %v4021
  %4386 = vmatpush.bf16.msra.mxu0 %v4019
  %4387 = vmatpush.bf16.msra.mxu0 %v4017
  %4388 = vmatpush.bf16.msra.mxu0 %v4015
  %4389 = vmatmul.bf16.gmra.mxu0 %v3450
  %v4390 = vpop.f32.mrf.mxu0
  %v4391 = vadd.f32 %v4362, %v4390
  %v4392 = vpop.f32.mrf.mxu0
  %v4393 = vadd.f32 %v4364, %v4392
  %4394 = vmatmul.bf16.gmra.mxu0 %v3451
  %v4395 = vpop.f32.mrf.mxu0
  %v4396 = vadd.f32 %v4367, %v4395
  %v4397 = vpop.f32.mrf.mxu0
  %v4398 = vadd.f32 %v4369, %v4397
  %4399 = vmatmul.bf16.gmra.mxu0 %v3452
  %v4400 = vpop.f32.mrf.mxu0
  %v4401 = vadd.f32 %v4372, %v4400
  %v4402 = vpop.f32.mrf.mxu0
  %v4403 = vadd.f32 %v4374, %v4402
  %4404 = vmatmul.bf16.gmra.mxu0 %v3453
  %v4405 = vpop.f32.mrf.mxu0
  %v4406 = vadd.f32 %v4377, %v4405
  %v4407 = vpop.f32.mrf.mxu0
  %v4408 = vadd.f32 %v4379, %v4407
  %4409 = vdwg.mxu0
  %4410 = vmatpush.bf16.msra.mxu0 %v4045
  %4411 = vmatpush.bf16.msra.mxu0 %v4043
  %4412 = vmatpush.bf16.msra.mxu0 %v4041
  %4413 = vmatpush.bf16.msra.mxu0 %v4039
  %4414 = vmatpush.bf16.msra.mxu0 %v4037
  %4415 = vmatpush.bf16.msra.mxu0 %v4035
  %4416 = vmatpush.bf16.msra.mxu0 %v4033
  %4417 = vmatpush.bf16.msra.mxu0 %v4031
  %4418 = vmatmul.bf16.gmra.mxu0 %v3345
  %v4419 = vpop.f32.mrf.mxu0
  %v4420 = vadd.f32 %v4391, %v4419
  %v4421 = vpop.f32.mrf.mxu0
  %v4422 = vadd.f32 %v4393, %v4421
  %4423 = vmatmul.bf16.gmra.mxu0 %v3346
  %v4424 = vpop.f32.mrf.mxu0
  %v4425 = vadd.f32 %v4396, %v4424
  %v4426 = vpop.f32.mrf.mxu0
  %v4427 = vadd.f32 %v4398, %v4426
  %4428 = vmatmul.bf16.gmra.mxu0 %v3347
  %v4429 = vpop.f32.mrf.mxu0
  %v4430 = vadd.f32 %v4401, %v4429
  %v4431 = vpop.f32.mrf.mxu0
  %v4432 = vadd.f32 %v4403, %v4431
  %4433 = vmatmul.bf16.gmra.mxu0 %v3458
  %v4434 = vpop.f32.mrf.mxu0
  %v4435 = vadd.f32 %v4406, %v4434
  %v4436 = vpop.f32.mrf.mxu0
  %v4437 = vadd.f32 %v4408, %v4436
  %4438 = vdwg.mxu0
  %4439 = vmatpush.bf16.msra.mxu0 %v4061
  %4440 = vmatpush.bf16.msra.mxu0 %v4059
  %4441 = vmatpush.bf16.msra.mxu0 %v4057
  %4442 = vmatpush.bf16.msra.mxu0 %v4055
  %4443 = vmatpush.bf16.msra.mxu0 %v4053
  %4444 = vmatpush.bf16.msra.mxu0 %v4051
  %4445 = vmatpush.bf16.msra.mxu0 %v4049
  %4446 = vmatpush.bf16.msra.mxu0 %v4047
  %4447 = vmatmul.bf16.gmra.mxu0 %v3474
  %v4448 = vpop.f32.mrf.mxu0
  %v4449 = vadd.f32 %v4420, %v4448
  %v4450 = vpop.f32.mrf.mxu0
  %v4451 = vadd.f32 %v4422, %v4450
  %4452 = vmatmul.bf16.gmra.mxu0 %v3475
  %v4453 = vpop.f32.mrf.mxu0
  %v4454 = vadd.f32 %v4425, %v4453
  %v4455 = vpop.f32.mrf.mxu0
  %v4456 = vadd.f32 %v4427, %v4455
  %4457 = vmatmul.bf16.gmra.mxu0 %v3476
  %v4458 = vpop.f32.mrf.mxu0
  %v4459 = vadd.f32 %v4430, %v4458
  %v4460 = vpop.f32.mrf.mxu0
  %v4461 = vadd.f32 %v4432, %v4460
  %4462 = vmatmul.bf16.gmra.mxu0 %v3477
  %v4463 = vpop.f32.mrf.mxu0
  %v4464 = vadd.f32 %v4435, %v4463
  %v4465 = vpop.f32.mrf.mxu0
  %v4466 = vadd.f32 %v4437, %v4465
  %4467 = vdwg.mxu0
  %4468 = vmatpush.bf16.msra.mxu0 %v3934
  %4469 = vmatpush.bf16.msra.mxu0 %v3932
  %4470 = vmatpush.bf16.msra.mxu0 %v3930
  %4471 = vmatpush.bf16.msra.mxu0 %v3928
  %4472 = vmatpush.bf16.msra.mxu0 %v3926
  %4473 = vmatpush.bf16.msra.mxu0 %v3924
  %4474 = vmatpush.bf16.msra.mxu0 %v3922
  %4475 = vmatpush.bf16.msra.mxu0 %v3920
  %4476 = vmatmul.bf16.gmra.mxu0 %v3322
  %v4477 = vpop.f32.mrf.mxu0
  %v4478 = vadd.f32 %v3484, %v4477
  %v4479 = vpop.f32.mrf.mxu0
  %v4480 = vadd.f32 %v3484, %v4479
  %4481 = vmatmul.bf16.gmra.mxu0 %v3323
  %v4482 = vpop.f32.mrf.mxu0
  %v4483 = vadd.f32 %v3484, %v4482
  %v4484 = vpop.f32.mrf.mxu0
  %v4485 = vadd.f32 %v3484, %v4484
  %4486 = vmatmul.bf16.gmra.mxu0 %v3324
  %v4487 = vpop.f32.mrf.mxu0
  %v4488 = vadd.f32 %v3484, %v4487
  %v4489 = vpop.f32.mrf.mxu0
  %v4490 = vadd.f32 %v3484, %v4489
  %4491 = vmatmul.bf16.gmra.mxu0 %v3325
  %v4492 = vpop.f32.mrf.mxu0
  %v4493 = vadd.f32 %v3484, %v4492
  %v4494 = vpop.f32.mrf.mxu0
  %v4495 = vadd.f32 %v3484, %v4494
  %4496 = vdwg.mxu0
  %4497 = vmatpush.bf16.msra.mxu0 %v3950
  %4498 = vmatpush.bf16.msra.mxu0 %v3948
  %4499 = vmatpush.bf16.msra.mxu0 %v3946
  %4500 = vmatpush.bf16.msra.mxu0 %v3944
  %4501 = vmatpush.bf16.msra.mxu0 %v3942
  %4502 = vmatpush.bf16.msra.mxu0 %v3940
  %4503 = vmatpush.bf16.msra.mxu0 %v3938
  %4504 = vmatpush.bf16.msra.mxu0 %v3936
  %4505 = vmatmul.bf16.gmra.mxu0 %v3344
  %v4506 = vpop.f32.mrf.mxu0
  %v4507 = vadd.f32 %v4478, %v4506
  %v4508 = vpop.f32.mrf.mxu0
  %v4509 = vadd.f32 %v4480, %v4508
  %4510 = vmatmul.bf16.gmra.mxu0 %v3345
  %v4511 = vpop.f32.mrf.mxu0
  %v4512 = vadd.f32 %v4483, %v4511
  %v4513 = vpop.f32.mrf.mxu0
  %v4514 = vadd.f32 %v4485, %v4513
  %4515 = vmatmul.bf16.gmra.mxu0 %v3346
  %v4516 = vpop.f32.mrf.mxu0
  %v4517 = vadd.f32 %v4488, %v4516
  %v4518 = vpop.f32.mrf.mxu0
  %v4519 = vadd.f32 %v4490, %v4518
  %4520 = vmatmul.bf16.gmra.mxu0 %v3347
  %v4521 = vpop.f32.mrf.mxu0
  %v4522 = vadd.f32 %v4493, %v4521
  %v4523 = vpop.f32.mrf.mxu0
  %v4524 = vadd.f32 %v4495, %v4523
  %4525 = vdwg.mxu0
  %4526 = vmatpush.bf16.msra.mxu0 %v3966
  %4527 = vmatpush.bf16.msra.mxu0 %v3964
  %4528 = vmatpush.bf16.msra.mxu0 %v3962
  %4529 = vmatpush.bf16.msra.mxu0 %v3960
  %4530 = vmatpush.bf16.msra.mxu0 %v3958
  %4531 = vmatpush.bf16.msra.mxu0 %v3956
  %4532 = vmatpush.bf16.msra.mxu0 %v3954
  %4533 = vmatpush.bf16.msra.mxu0 %v3952
  %4534 = vmatmul.bf16.gmra.mxu0 %v3368
  %v4535 = vpop.f32.mrf.mxu0
  %v4536 = vadd.f32 %v4507, %v4535
  %v4537 = vpop.f32.mrf.mxu0
  %v4538 = vadd.f32 %v4509, %v4537
  %4539 = vmatmul.bf16.gmra.mxu0 %v3369
  %v4540 = vpop.f32.mrf.mxu0
  %v4541 = vadd.f32 %v4512, %v4540
  %v4542 = vpop.f32.mrf.mxu0
  %v4543 = vadd.f32 %v4514, %v4542
  %4544 = vmatmul.bf16.gmra.mxu0 %v3370
  %v4545 = vpop.f32.mrf.mxu0
  %v4546 = vadd.f32 %v4517, %v4545
  %v4547 = vpop.f32.mrf.mxu0
  %v4548 = vadd.f32 %v4519, %v4547
  %4549 = vmatmul.bf16.gmra.mxu0 %v3371
  %v4550 = vpop.f32.mrf.mxu0
  %v4551 = vadd.f32 %v4522, %v4550
  %v4552 = vpop.f32.mrf.mxu0
  %v4553 = vadd.f32 %v4524, %v4552
  %4554 = vdwg.mxu0
  %4555 = vmatpush.bf16.msra.mxu0 %v3982
  %4556 = vmatpush.bf16.msra.mxu0 %v3980
  %4557 = vmatpush.bf16.msra.mxu0 %v3978
  %4558 = vmatpush.bf16.msra.mxu0 %v3976
  %4559 = vmatpush.bf16.msra.mxu0 %v3974
  %4560 = vmatpush.bf16.msra.mxu0 %v3972
  %4561 = vmatpush.bf16.msra.mxu0 %v3970
  %4562 = vmatpush.bf16.msra.mxu0 %v3968
  %4563 = vmatmul.bf16.gmra.mxu0 %v3392
  %v4564 = vpop.f32.mrf.mxu0
  %v4565 = vadd.f32 %v4536, %v4564
  %v4566 = vpop.f32.mrf.mxu0
  %v4567 = vadd.f32 %v4538, %v4566
  %4568 = vmatmul.bf16.gmra.mxu0 %v3393
  %v4569 = vpop.f32.mrf.mxu0
  %v4570 = vadd.f32 %v4541, %v4569
  %v4571 = vpop.f32.mrf.mxu0
  %v4572 = vadd.f32 %v4543, %v4571
  %4573 = vmatmul.bf16.gmra.mxu0 %v3394
  %v4574 = vpop.f32.mrf.mxu0
  %v4575 = vadd.f32 %v4546, %v4574
  %v4576 = vpop.f32.mrf.mxu0
  %v4577 = vadd.f32 %v4548, %v4576
  %4578 = vmatmul.bf16.gmra.mxu0 %v3395
  %v4579 = vpop.f32.mrf.mxu0
  %v4580 = vadd.f32 %v4551, %v4579
  %v4581 = vpop.f32.mrf.mxu0
  %v4582 = vadd.f32 %v4553, %v4581
  %4583 = vdwg.mxu0
  %4584 = vmatpush.bf16.msra.mxu0 %v3998
  %4585 = vmatpush.bf16.msra.mxu0 %v3996
  %4586 = vmatpush.bf16.msra.mxu0 %v3994
  %4587 = vmatpush.bf16.msra.mxu0 %v3992
  %4588 = vmatpush.bf16.msra.mxu0 %v3990
  %4589 = vmatpush.bf16.msra.mxu0 %v3988
  %4590 = vmatpush.bf16.msra.mxu0 %v3986
  %4591 = vmatpush.bf16.msra.mxu0 %v3984
  %4592 = vmatmul.bf16.gmra.mxu0 %v3402
  %v4593 = vpop.f32.mrf.mxu0
  %v4594 = vadd.f32 %v4565, %v4593
  %v4595 = vpop.f32.mrf.mxu0
  %v4596 = vadd.f32 %v4567, %v4595
  %4597 = vmatmul.bf16.gmra.mxu0 %v3403
  %v4598 = vpop.f32.mrf.mxu0
  %v4599 = vadd.f32 %v4570, %v4598
  %v4600 = vpop.f32.mrf.mxu0
  %v4601 = vadd.f32 %v4572, %v4600
  %4602 = vmatmul.bf16.gmra.mxu0 %v3404
  %v4603 = vpop.f32.mrf.mxu0
  %v4604 = vadd.f32 %v4575, %v4603
  %v4605 = vpop.f32.mrf.mxu0
  %v4606 = vadd.f32 %v4577, %v4605
  %4607 = vmatmul.bf16.gmra.mxu0 %v3405
  %v4608 = vpop.f32.mrf.mxu0
  %v4609 = vadd.f32 %v4580, %v4608
  %v4610 = vpop.f32.mrf.mxu0
  %v4611 = vadd.f32 %v4582, %v4610
  %4612 = vdwg.mxu0
  %4613 = vmatpush.bf16.msra.mxu0 %v4014
  %4614 = vmatpush.bf16.msra.mxu0 %v4012
  %4615 = vmatpush.bf16.msra.mxu0 %v4010
  %4616 = vmatpush.bf16.msra.mxu0 %v4008
  %4617 = vmatpush.bf16.msra.mxu0 %v4006
  %4618 = vmatpush.bf16.msra.mxu0 %v4004
  %4619 = vmatpush.bf16.msra.mxu0 %v4002
  %4620 = vmatpush.bf16.msra.mxu0 %v4000
  %4621 = vmatmul.bf16.gmra.mxu0 %v3426
  %v4622 = vpop.f32.mrf.mxu0
  %v4623 = vadd.f32 %v4594, %v4622
  %v4624 = vpop.f32.mrf.mxu0
  %v4625 = vadd.f32 %v4596, %v4624
  %4626 = vmatmul.bf16.gmra.mxu0 %v3427
  %v4627 = vpop.f32.mrf.mxu0
  %v4628 = vadd.f32 %v4599, %v4627
  %v4629 = vpop.f32.mrf.mxu0
  %v4630 = vadd.f32 %v4601, %v4629
  %4631 = vmatmul.bf16.gmra.mxu0 %v3428
  %v4632 = vpop.f32.mrf.mxu0
  %v4633 = vadd.f32 %v4604, %v4632
  %v4634 = vpop.f32.mrf.mxu0
  %v4635 = vadd.f32 %v4606, %v4634
  %4636 = vmatmul.bf16.gmra.mxu0 %v3429
  %v4637 = vpop.f32.mrf.mxu0
  %v4638 = vadd.f32 %v4609, %v4637
  %v4639 = vpop.f32.mrf.mxu0
  %v4640 = vadd.f32 %v4611, %v4639
  %4641 = vdwg.mxu0
  %4642 = vmatpush.bf16.msra.mxu0 %v4030
  %4643 = vmatpush.bf16.msra.mxu0 %v4028
  %4644 = vmatpush.bf16.msra.mxu0 %v4026
  %4645 = vmatpush.bf16.msra.mxu0 %v4024
  %4646 = vmatpush.bf16.msra.mxu0 %v4022
  %4647 = vmatpush.bf16.msra.mxu0 %v4020
  %4648 = vmatpush.bf16.msra.mxu0 %v4018
  %4649 = vmatpush.bf16.msra.mxu0 %v4016
  %4650 = vmatmul.bf16.gmra.mxu0 %v3450
  %v4651 = vpop.f32.mrf.mxu0
  %v4652 = vadd.f32 %v4623, %v4651
  %v4653 = vpop.f32.mrf.mxu0
  %v4654 = vadd.f32 %v4625, %v4653
  %4655 = vmatmul.bf16.gmra.mxu0 %v3451
  %v4656 = vpop.f32.mrf.mxu0
  %v4657 = vadd.f32 %v4628, %v4656
  %v4658 = vpop.f32.mrf.mxu0
  %v4659 = vadd.f32 %v4630, %v4658
  %4660 = vmatmul.bf16.gmra.mxu0 %v3452
  %v4661 = vpop.f32.mrf.mxu0
  %v4662 = vadd.f32 %v4633, %v4661
  %v4663 = vpop.f32.mrf.mxu0
  %v4664 = vadd.f32 %v4635, %v4663
  %4665 = vmatmul.bf16.gmra.mxu0 %v3453
  %v4666 = vpop.f32.mrf.mxu0
  %v4667 = vadd.f32 %v4638, %v4666
  %v4668 = vpop.f32.mrf.mxu0
  %v4669 = vadd.f32 %v4640, %v4668
  %4670 = vdwg.mxu0
  %4671 = vmatpush.bf16.msra.mxu0 %v4046
  %4672 = vmatpush.bf16.msra.mxu0 %v4044
  %4673 = vmatpush.bf16.msra.mxu0 %v4042
  %4674 = vmatpush.bf16.msra.mxu0 %v4040
  %4675 = vmatpush.bf16.msra.mxu0 %v4038
  %4676 = vmatpush.bf16.msra.mxu0 %v4036
  %4677 = vmatpush.bf16.msra.mxu0 %v4034
  %4678 = vmatpush.bf16.msra.mxu0 %v4032
  %4679 = vmatmul.bf16.gmra.mxu0 %v3345
  %v4680 = vpop.f32.mrf.mxu0
  %v4681 = vadd.f32 %v4652, %v4680
  %v4682 = vpop.f32.mrf.mxu0
  %v4683 = vadd.f32 %v4654, %v4682
  %4684 = vmatmul.bf16.gmra.mxu0 %v3346
  %v4685 = vpop.f32.mrf.mxu0
  %v4686 = vadd.f32 %v4657, %v4685
  %v4687 = vpop.f32.mrf.mxu0
  %v4688 = vadd.f32 %v4659, %v4687
  %4689 = vmatmul.bf16.gmra.mxu0 %v3347
  %v4690 = vpop.f32.mrf.mxu0
  %v4691 = vadd.f32 %v4662, %v4690
  %v4692 = vpop.f32.mrf.mxu0
  %v4693 = vadd.f32 %v4664, %v4692
  %4694 = vmatmul.bf16.gmra.mxu0 %v3458
  %v4695 = vpop.f32.mrf.mxu0
  %v4696 = vadd.f32 %v4667, %v4695
  %v4697 = vpop.f32.mrf.mxu0
  %v4698 = vadd.f32 %v4669, %v4697
  %4699 = vdwg.mxu0
  %4700 = vmatpush.bf16.msra.mxu0 %v4062
  %4701 = vmatpush.bf16.msra.mxu0 %v4060
  %4702 = vmatpush.bf16.msra.mxu0 %v4058
  %4703 = vmatpush.bf16.msra.mxu0 %v4056
  %4704 = vmatpush.bf16.msra.mxu0 %v4054
  %4705 = vmatpush.bf16.msra.mxu0 %v4052
  %4706 = vmatpush.bf16.msra.mxu0 %v4050
  %4707 = vmatpush.bf16.msra.mxu0 %v4048
  %4708 = vmatmul.bf16.gmra.mxu0 %v3474
  %v4709 = vpop.f32.mrf.mxu0
  %v4710 = vadd.f32 %v4681, %v4709
  %v4711 = vpop.f32.mrf.mxu0
  %v4712 = vadd.f32 %v4683, %v4711
  %4713 = vmatmul.bf16.gmra.mxu0 %v3475
  %v4714 = vpop.f32.mrf.mxu0
  %v4715 = vadd.f32 %v4686, %v4714
  %v4716 = vpop.f32.mrf.mxu0
  %v4717 = vadd.f32 %v4688, %v4716
  %4718 = vmatmul.bf16.gmra.mxu0 %v3476
  %v4719 = vpop.f32.mrf.mxu0
  %v4720 = vadd.f32 %v4691, %v4719
  %v4721 = vpop.f32.mrf.mxu0
  %v4722 = vadd.f32 %v4693, %v4721
  %4723 = vmatmul.bf16.gmra.mxu0 %v3477
  %v4724 = vpop.f32.mrf.mxu0
  %v4725 = vadd.f32 %v4696, %v4724
  %v4726 = vpop.f32.mrf.mxu0
  %v4727 = vadd.f32 %v4698, %v4726
  %4728 = vdwg.mxu0
  %v4729 = vmax.f32 %v4449, 0.0
  %v4730 = vmax.f32 %v4710, 0.0
  %v4731 = vmax.f32 %v4451, 0.0
  %v4732 = vmax.f32 %v4712, 0.0
  %v4733 = vmax.f32 %v4454, 0.0
  %v4734 = vmax.f32 %v4715, 0.0
  %v4735 = vmax.f32 %v4456, 0.0
  %v4736 = vmax.f32 %v4717, 0.0
  %v4737 = vmax.f32 %v4459, 0.0
  %v4738 = vmax.f32 %v4720, 0.0
  %v4739 = vmax.f32 %v4461, 0.0
  %v4740 = vmax.f32 %v4722, 0.0
  %v4741 = vmax.f32 %v4464, 0.0
  %v4742 = vmax.f32 %v4725, 0.0
  %v4743 = vmax.f32 %v4466, 0.0
  %v4744 = vmax.f32 %v4727, 0.0
  %4745 = vxpose.xlu0.b32.start [1/16] %v4729, 128
  %4746 = vxpose.xlu0.b32.cont [2/16] %v4731, 128
  %4747 = vxpose.xlu0.b32.cont [3/16] %v4733, 128
  %4748 = vxpose.xlu0.b32.cont [4/16] %v4735, 128
  %4749 = vxpose.xlu0.b32.cont [5/16] %v4737, 128
  %4750 = vxpose.xlu0.b32.cont [6/16] %v4739, 128
  %4751 = vxpose.xlu0.b32.cont [7/16] %v4741, 128
  %4752 = vxpose.xlu0.b32.cont [8/16] %v4743, 128
  %4753 = vxpose.xlu0.b32.cont [9/16] 0.0, 128
  %4754 = vxpose.xlu0.b32.cont [10/16] 0.0, 128
  %4755 = vxpose.xlu0.b32.cont [11/16] 0.0, 128
  %4756 = vxpose.xlu0.b32.cont [12/16] 0.0, 128
  %4757 = vxpose.xlu0.b32.cont [13/16] 0.0, 128
  %4758 = vxpose.xlu0.b32.cont [14/16] 0.0, 128
  %4759 = vxpose.xlu0.b32.cont [15/16] 0.0, 128
  %4760 = vxpose.xlu0.b32.end [16/16] 0.0, 128
  %v4761 = vpop.trf.xlu0
  %v4762 = vpop.trf.xlu0
  %v4763 = vpop.trf.xlu0
  %v4764 = vpop.trf.xlu0
  %v4765 = vpop.trf.xlu0
  %v4766 = vpop.trf.xlu0
  %v4767 = vpop.trf.xlu0
  %v4768 = vpop.trf.xlu0
  %v4769 = vpop.trf.xlu0
  %v4770 = vpop.trf.xlu0
  %v4771 = vpop.trf.xlu0
  %v4772 = vpop.trf.xlu0
  %v4773 = vpop.trf.xlu0
  %v4774 = vpop.trf.xlu0
  %v4775 = vpop.trf.xlu0
  %v4776 = vpop.trf.xlu0
  %4777 = vxpose.xlu0.b32.start [1/16] %v4730, 128
  %4778 = vxpose.xlu0.b32.cont [2/16] %v4732, 128
  %4779 = vxpose.xlu0.b32.cont [3/16] %v4734, 128
  %4780 = vxpose.xlu0.b32.cont [4/16] %v4736, 128
  %4781 = vxpose.xlu0.b32.cont [5/16] %v4738, 128
  %4782 = vxpose.xlu0.b32.cont [6/16] %v4740, 128
  %4783 = vxpose.xlu0.b32.cont [7/16] %v4742, 128
  %4784 = vxpose.xlu0.b32.cont [8/16] %v4744, 128
  %4785 = vxpose.xlu0.b32.cont [9/16] 0.0, 128
  %4786 = vxpose.xlu0.b32.cont [10/16] 0.0, 128
  %4787 = vxpose.xlu0.b32.cont [11/16] 0.0, 128
  %4788 = vxpose.xlu0.b32.cont [12/16] 0.0, 128
  %4789 = vxpose.xlu0.b32.cont [13/16] 0.0, 128
  %4790 = vxpose.xlu0.b32.cont [14/16] 0.0, 128
  %4791 = vxpose.xlu0.b32.cont [15/16] 0.0, 128
  %4792 = vxpose.xlu0.b32.end [16/16] 0.0, 128
  %v4793 = vpop.trf.xlu0
  %v4794 = vpop.trf.xlu0
  %v4795 = vpop.trf.xlu0
  %v4796 = vpop.trf.xlu0
  %v4797 = vpop.trf.xlu0
  %v4798 = vpop.trf.xlu0
  %v4799 = vpop.trf.xlu0
  %v4800 = vpop.trf.xlu0
  %v4801 = vpop.trf.xlu0
  %v4802 = vpop.trf.xlu0
  %v4803 = vpop.trf.xlu0
  %v4804 = vpop.trf.xlu0
  %v4805 = vpop.trf.xlu0
  %v4806 = vpop.trf.xlu0
  %v4807 = vpop.trf.xlu0
  %v4808 = vpop.trf.xlu0
  %v4817 = vrot.slane %v4765, 7
  %vm4818 = vcmask 1041409
  %v4819 = vsel %vm4818, %v4817, %v4761
  %v4820 = vrot.slane %v4769, 6
  %vm4821 = vcmask 1042434
  %v4822 = vsel %vm4821, %v4820, %v4819
  %v4823 = vrot.slane %v4773, 5
  %vm4824 = vcmask 1043459
  %v4825 = vsel %vm4824, %v4823, %v4822
  %v4826 = vrot.slane %v4793, 4
  %vm4827 = vcmask 1044484
  %v4828 = vsel %vm4827, %v4826, %v4825
  %v4829 = vrot.slane %v4797, 3
  %vm4830 = vcmask 1045509
  %v4831 = vsel %vm4830, %v4829, %v4828
  %v4832 = vrot.slane %v4801, 2
  %vm4833 = vcmask 1046534
  %v4834 = vsel %vm4833, %v4832, %v4831
  %v4835 = vrot.slane %v4805, 1
  %vm4836 = vcmask 1047559
  %v4837 = vsel %vm4836, %v4835, %v4834
  %v4839 = vrot.slane %v4761, 1
  %v4840 = vsel %vm4818, %v4765, %v4839
  %v4841 = vrot.slane %v4769, 7
  %v4842 = vsel %vm4821, %v4841, %v4840
  %v4843 = vrot.slane %v4773, 6
  %v4844 = vsel %vm4824, %v4843, %v4842
  %v4845 = vrot.slane %v4793, 5
  %v4846 = vsel %vm4827, %v4845, %v4844
  %v4847 = vrot.slane %v4797, 4
  %v4848 = vsel %vm4830, %v4847, %v4846
  %v4849 = vrot.slane %v4801, 3
  %v4850 = vsel %vm4833, %v4849, %v4848
  %v4851 = vrot.slane %v4805, 2
  %v4852 = vsel %vm4836, %v4851, %v4850
  %4853 = vrot.lane.b32.xlu0 %v4852, 64
  %v4854 = vpop.permute.xlu0 %4853
  %v4856 = vrot.slane %v4761, 2
  %v4857 = vrot.slane %v4765, 1
  %v4858 = vsel %vm4818, %v4857, %v4856
  %v4859 = vsel %vm4821, %v4769, %v4858
  %v4860 = vrot.slane %v4773, 7
  %v4861 = vsel %vm4824, %v4860, %v4859
  %v4862 = vrot.slane %v4793, 6
  %v4863 = vsel %vm4827, %v4862, %v4861
  %v4864 = vrot.slane %v4797, 5
  %v4865 = vsel %vm4830, %v4864, %v4863
  %v4866 = vrot.slane %v4801, 4
  %v4867 = vsel %vm4833, %v4866, %v4865
  %v4868 = vrot.slane %v4805, 3
  %v4869 = vsel %vm4836, %v4868, %v4867
  %v4871 = vrot.slane %v4761, 3
  %v4872 = vrot.slane %v4765, 2
  %v4873 = vsel %vm4818, %v4872, %v4871
  %v4874 = vrot.slane %v4769, 1
  %v4875 = vsel %vm4821, %v4874, %v4873
  %v4876 = vsel %vm4824, %v4773, %v4875
  %v4877 = vrot.slane %v4793, 7
  %v4878 = vsel %vm4827, %v4877, %v4876
  %v4879 = vrot.slane %v4797, 6
  %v4880 = vsel %vm4830, %v4879, %v4878
  %v4881 = vrot.slane %v4801, 5
  %v4882 = vsel %vm4833, %v4881, %v4880
  %v4883 = vrot.slane %v4805, 4
  %v4884 = vsel %vm4836, %v4883, %v4882
  %4885 = vrot.lane.b32.xlu0 %v4884, 64
  %v4886 = vpop.permute.xlu0 %4885
  %v4888 = vrot.slane %v4761, 4
  %v4889 = vrot.slane %v4765, 3
  %v4890 = vsel %vm4818, %v4889, %v4888
  %v4891 = vrot.slane %v4769, 2
  %v4892 = vsel %vm4821, %v4891, %v4890
  %v4893 = vrot.slane %v4773, 1
  %v4894 = vsel %vm4824, %v4893, %v4892
  %v4895 = vsel %vm4827, %v4793, %v4894
  %v4896 = vrot.slane %v4797, 7
  %v4897 = vsel %vm4830, %v4896, %v4895
  %v4898 = vrot.slane %v4801, 6
  %v4899 = vsel %vm4833, %v4898, %v4897
  %v4900 = vrot.slane %v4805, 5
  %v4901 = vsel %vm4836, %v4900, %v4899
  %v4903 = vrot.slane %v4761, 5
  %v4904 = vrot.slane %v4765, 4
  %v4905 = vsel %vm4818, %v4904, %v4903
  %v4906 = vrot.slane %v4769, 3
  %v4907 = vsel %vm4821, %v4906, %v4905
  %v4908 = vrot.slane %v4773, 2
  %v4909 = vsel %vm4824, %v4908, %v4907
  %v4910 = vrot.slane %v4793, 1
  %v4911 = vsel %vm4827, %v4910, %v4909
  %v4912 = vsel %vm4830, %v4797, %v4911
  %v4913 = vrot.slane %v4801, 7
  %v4914 = vsel %vm4833, %v4913, %v4912
  %v4915 = vrot.slane %v4805, 6
  %v4916 = vsel %vm4836, %v4915, %v4914
  %4917 = vrot.lane.b32.xlu0 %v4916, 64
  %v4918 = vpop.permute.xlu0 %4917
  %v4920 = vrot.slane %v4761, 6
  %v4921 = vrot.slane %v4765, 5
  %v4922 = vsel %vm4818, %v4921, %v4920
  %v4923 = vrot.slane %v4769, 4
  %v4924 = vsel %vm4821, %v4923, %v4922
  %v4925 = vrot.slane %v4773, 3
  %v4926 = vsel %vm4824, %v4925, %v4924
  %v4927 = vrot.slane %v4793, 2
  %v4928 = vsel %vm4827, %v4927, %v4926
  %v4929 = vrot.slane %v4797, 1
  %v4930 = vsel %vm4830, %v4929, %v4928
  %v4931 = vsel %vm4833, %v4801, %v4930
  %v4932 = vrot.slane %v4805, 7
  %v4933 = vsel %vm4836, %v4932, %v4931
  %v4935 = vrot.slane %v4761, 7
  %v4936 = vrot.slane %v4765, 6
  %v4937 = vsel %vm4818, %v4936, %v4935
  %v4938 = vrot.slane %v4769, 5
  %v4939 = vsel %vm4821, %v4938, %v4937
  %v4940 = vrot.slane %v4773, 4
  %v4941 = vsel %vm4824, %v4940, %v4939
  %v4942 = vrot.slane %v4793, 3
  %v4943 = vsel %vm4827, %v4942, %v4941
  %v4944 = vrot.slane %v4797, 2
  %v4945 = vsel %vm4830, %v4944, %v4943
  %v4946 = vrot.slane %v4801, 1
  %v4947 = vsel %vm4833, %v4946, %v4945
  %v4948 = vsel %vm4836, %v4805, %v4947
  %4949 = vrot.lane.b32.xlu0 %v4948, 64
  %v4950 = vpop.permute.xlu0 %4949
  %v4960 = vrot.slane %v4766, 7
  %v4961 = vsel %vm4818, %v4960, %v4762
  %v4962 = vrot.slane %v4770, 6
  %v4963 = vsel %vm4821, %v4962, %v4961
  %v4964 = vrot.slane %v4774, 5
  %v4965 = vsel %vm4824, %v4964, %v4963
  %v4966 = vrot.slane %v4794, 4
  %v4967 = vsel %vm4827, %v4966, %v4965
  %v4968 = vrot.slane %v4798, 3
  %v4969 = vsel %vm4830, %v4968, %v4967
  %v4970 = vrot.slane %v4802, 2
  %v4971 = vsel %vm4833, %v4970, %v4969
  %v4972 = vrot.slane %v4806, 1
  %v4973 = vsel %vm4836, %v4972, %v4971
  %v4975 = vrot.slane %v4762, 1
  %v4976 = vsel %vm4818, %v4766, %v4975
  %v4977 = vrot.slane %v4770, 7
  %v4978 = vsel %vm4821, %v4977, %v4976
  %v4979 = vrot.slane %v4774, 6
  %v4980 = vsel %vm4824, %v4979, %v4978
  %v4981 = vrot.slane %v4794, 5
  %v4982 = vsel %vm4827, %v4981, %v4980
  %v4983 = vrot.slane %v4798, 4
  %v4984 = vsel %vm4830, %v4983, %v4982
  %v4985 = vrot.slane %v4802, 3
  %v4986 = vsel %vm4833, %v4985, %v4984
  %v4987 = vrot.slane %v4806, 2
  %v4988 = vsel %vm4836, %v4987, %v4986
  %4989 = vrot.lane.b32.xlu0 %v4988, 64
  %v4990 = vpop.permute.xlu0 %4989
  %v4992 = vrot.slane %v4762, 2
  %v4993 = vrot.slane %v4766, 1
  %v4994 = vsel %vm4818, %v4993, %v4992
  %v4995 = vsel %vm4821, %v4770, %v4994
  %v4996 = vrot.slane %v4774, 7
  %v4997 = vsel %vm4824, %v4996, %v4995
  %v4998 = vrot.slane %v4794, 6
  %v4999 = vsel %vm4827, %v4998, %v4997
  %v5000 = vrot.slane %v4798, 5
  %v5001 = vsel %vm4830, %v5000, %v4999
  %v5002 = vrot.slane %v4802, 4
  %v5003 = vsel %vm4833, %v5002, %v5001
  %v5004 = vrot.slane %v4806, 3
  %v5005 = vsel %vm4836, %v5004, %v5003
  %v5007 = vrot.slane %v4762, 3
  %v5008 = vrot.slane %v4766, 2
  %v5009 = vsel %vm4818, %v5008, %v5007
  %v5010 = vrot.slane %v4770, 1
  %v5011 = vsel %vm4821, %v5010, %v5009
  %v5012 = vsel %vm4824, %v4774, %v5011
  %v5013 = vrot.slane %v4794, 7
  %v5014 = vsel %vm4827, %v5013, %v5012
  %v5015 = vrot.slane %v4798, 6
  %v5016 = vsel %vm4830, %v5015, %v5014
  %v5017 = vrot.slane %v4802, 5
  %v5018 = vsel %vm4833, %v5017, %v5016
  %v5019 = vrot.slane %v4806, 4
  %v5020 = vsel %vm4836, %v5019, %v5018
  %5021 = vrot.lane.b32.xlu0 %v5020, 64
  %v5022 = vpop.permute.xlu0 %5021
  %v5024 = vrot.slane %v4762, 4
  %v5025 = vrot.slane %v4766, 3
  %v5026 = vsel %vm4818, %v5025, %v5024
  %v5027 = vrot.slane %v4770, 2
  %v5028 = vsel %vm4821, %v5027, %v5026
  %v5029 = vrot.slane %v4774, 1
  %v5030 = vsel %vm4824, %v5029, %v5028
  %v5031 = vsel %vm4827, %v4794, %v5030
  %v5032 = vrot.slane %v4798, 7
  %v5033 = vsel %vm4830, %v5032, %v5031
  %v5034 = vrot.slane %v4802, 6
  %v5035 = vsel %vm4833, %v5034, %v5033
  %v5036 = vrot.slane %v4806, 5
  %v5037 = vsel %vm4836, %v5036, %v5035
  %v5039 = vrot.slane %v4762, 5
  %v5040 = vrot.slane %v4766, 4
  %v5041 = vsel %vm4818, %v5040, %v5039
  %v5042 = vrot.slane %v4770, 3
  %v5043 = vsel %vm4821, %v5042, %v5041
  %v5044 = vrot.slane %v4774, 2
  %v5045 = vsel %vm4824, %v5044, %v5043
  %v5046 = vrot.slane %v4794, 1
  %v5047 = vsel %vm4827, %v5046, %v5045
  %v5048 = vsel %vm4830, %v4798, %v5047
  %v5049 = vrot.slane %v4802, 7
  %v5050 = vsel %vm4833, %v5049, %v5048
  %v5051 = vrot.slane %v4806, 6
  %v5052 = vsel %vm4836, %v5051, %v5050
  %5053 = vrot.lane.b32.xlu0 %v5052, 64
  %v5054 = vpop.permute.xlu0 %5053
  %v5056 = vrot.slane %v4762, 6
  %v5057 = vrot.slane %v4766, 5
  %v5058 = vsel %vm4818, %v5057, %v5056
  %v5059 = vrot.slane %v4770, 4
  %v5060 = vsel %vm4821, %v5059, %v5058
  %v5061 = vrot.slane %v4774, 3
  %v5062 = vsel %vm4824, %v5061, %v5060
  %v5063 = vrot.slane %v4794, 2
  %v5064 = vsel %vm4827, %v5063, %v5062
  %v5065 = vrot.slane %v4798, 1
  %v5066 = vsel %vm4830, %v5065, %v5064
  %v5067 = vsel %vm4833, %v4802, %v5066
  %v5068 = vrot.slane %v4806, 7
  %v5069 = vsel %vm4836, %v5068, %v5067
  %v5071 = vrot.slane %v4762, 7
  %v5072 = vrot.slane %v4766, 6
  %v5073 = vsel %vm4818, %v5072, %v5071
  %v5074 = vrot.slane %v4770, 5
  %v5075 = vsel %vm4821, %v5074, %v5073
  %v5076 = vrot.slane %v4774, 4
  %v5077 = vsel %vm4824, %v5076, %v5075
  %v5078 = vrot.slane %v4794, 3
  %v5079 = vsel %vm4827, %v5078, %v5077
  %v5080 = vrot.slane %v4798, 2
  %v5081 = vsel %vm4830, %v5080, %v5079
  %v5082 = vrot.slane %v4802, 1
  %v5083 = vsel %vm4833, %v5082, %v5081
  %v5084 = vsel %vm4836, %v4806, %v5083
  %5085 = vrot.lane.b32.xlu0 %v5084, 64
  %v5086 = vpop.permute.xlu0 %5085
  %v5088 = vsel %vm1311, %v4837, %v4854
  %v5089 = vsel %vm1311, %v4869, %v4886
  %v5090 = vsel %vm1311, %v4901, %v4918
  %v5091 = vsel %vm1311, %v4933, %v4950
  %v5092 = vsel %vm1311, %v4973, %v4990
  %v5093 = vsel %vm1311, %v5005, %v5022
  %v5094 = vsel %vm1311, %v5037, %v5054
  %v5095 = vsel %vm1311, %v5069, %v5086
  %v5104 = vrot.slane %v4767, 7
  %v5105 = vsel %vm4818, %v5104, %v4763
  %v5106 = vrot.slane %v4771, 6
  %v5107 = vsel %vm4821, %v5106, %v5105
  %v5108 = vrot.slane %v4775, 5
  %v5109 = vsel %vm4824, %v5108, %v5107
  %v5110 = vrot.slane %v4795, 4
  %v5111 = vsel %vm4827, %v5110, %v5109
  %v5112 = vrot.slane %v4799, 3
  %v5113 = vsel %vm4830, %v5112, %v5111
  %v5114 = vrot.slane %v4803, 2
  %v5115 = vsel %vm4833, %v5114, %v5113
  %v5116 = vrot.slane %v4807, 1
  %v5117 = vsel %vm4836, %v5116, %v5115
  %v5119 = vrot.slane %v4763, 1
  %v5120 = vsel %vm4818, %v4767, %v5119
  %v5121 = vrot.slane %v4771, 7
  %v5122 = vsel %vm4821, %v5121, %v5120
  %v5123 = vrot.slane %v4775, 6
  %v5124 = vsel %vm4824, %v5123, %v5122
  %v5125 = vrot.slane %v4795, 5
  %v5126 = vsel %vm4827, %v5125, %v5124
  %v5127 = vrot.slane %v4799, 4
  %v5128 = vsel %vm4830, %v5127, %v5126
  %v5129 = vrot.slane %v4803, 3
  %v5130 = vsel %vm4833, %v5129, %v5128
  %v5131 = vrot.slane %v4807, 2
  %v5132 = vsel %vm4836, %v5131, %v5130
  %5133 = vrot.lane.b32.xlu0 %v5132, 64
  %v5134 = vpop.permute.xlu0 %5133
  %v5136 = vrot.slane %v4763, 2
  %v5137 = vrot.slane %v4767, 1
  %v5138 = vsel %vm4818, %v5137, %v5136
  %v5139 = vsel %vm4821, %v4771, %v5138
  %v5140 = vrot.slane %v4775, 7
  %v5141 = vsel %vm4824, %v5140, %v5139
  %v5142 = vrot.slane %v4795, 6
  %v5143 = vsel %vm4827, %v5142, %v5141
  %v5144 = vrot.slane %v4799, 5
  %v5145 = vsel %vm4830, %v5144, %v5143
  %v5146 = vrot.slane %v4803, 4
  %v5147 = vsel %vm4833, %v5146, %v5145
  %v5148 = vrot.slane %v4807, 3
  %v5149 = vsel %vm4836, %v5148, %v5147
  %v5151 = vrot.slane %v4763, 3
  %v5152 = vrot.slane %v4767, 2
  %v5153 = vsel %vm4818, %v5152, %v5151
  %v5154 = vrot.slane %v4771, 1
  %v5155 = vsel %vm4821, %v5154, %v5153
  %v5156 = vsel %vm4824, %v4775, %v5155
  %v5157 = vrot.slane %v4795, 7
  %v5158 = vsel %vm4827, %v5157, %v5156
  %v5159 = vrot.slane %v4799, 6
  %v5160 = vsel %vm4830, %v5159, %v5158
  %v5161 = vrot.slane %v4803, 5
  %v5162 = vsel %vm4833, %v5161, %v5160
  %v5163 = vrot.slane %v4807, 4
  %v5164 = vsel %vm4836, %v5163, %v5162
  %5165 = vrot.lane.b32.xlu0 %v5164, 64
  %v5166 = vpop.permute.xlu0 %5165
  %v5168 = vrot.slane %v4763, 4
  %v5169 = vrot.slane %v4767, 3
  %v5170 = vsel %vm4818, %v5169, %v5168
  %v5171 = vrot.slane %v4771, 2
  %v5172 = vsel %vm4821, %v5171, %v5170
  %v5173 = vrot.slane %v4775, 1
  %v5174 = vsel %vm4824, %v5173, %v5172
  %v5175 = vsel %vm4827, %v4795, %v5174
  %v5176 = vrot.slane %v4799, 7
  %v5177 = vsel %vm4830, %v5176, %v5175
  %v5178 = vrot.slane %v4803, 6
  %v5179 = vsel %vm4833, %v5178, %v5177
  %v5180 = vrot.slane %v4807, 5
  %v5181 = vsel %vm4836, %v5180, %v5179
  %v5183 = vrot.slane %v4763, 5
  %v5184 = vrot.slane %v4767, 4
  %v5185 = vsel %vm4818, %v5184, %v5183
  %v5186 = vrot.slane %v4771, 3
  %v5187 = vsel %vm4821, %v5186, %v5185
  %v5188 = vrot.slane %v4775, 2
  %v5189 = vsel %vm4824, %v5188, %v5187
  %v5190 = vrot.slane %v4795, 1
  %v5191 = vsel %vm4827, %v5190, %v5189
  %v5192 = vsel %vm4830, %v4799, %v5191
  %v5193 = vrot.slane %v4803, 7
  %v5194 = vsel %vm4833, %v5193, %v5192
  %v5195 = vrot.slane %v4807, 6
  %v5196 = vsel %vm4836, %v5195, %v5194
  %5197 = vrot.lane.b32.xlu0 %v5196, 64
  %v5198 = vpop.permute.xlu0 %5197
  %v5200 = vrot.slane %v4763, 6
  %v5201 = vrot.slane %v4767, 5
  %v5202 = vsel %vm4818, %v5201, %v5200
  %v5203 = vrot.slane %v4771, 4
  %v5204 = vsel %vm4821, %v5203, %v5202
  %v5205 = vrot.slane %v4775, 3
  %v5206 = vsel %vm4824, %v5205, %v5204
  %v5207 = vrot.slane %v4795, 2
  %v5208 = vsel %vm4827, %v5207, %v5206
  %v5209 = vrot.slane %v4799, 1
  %v5210 = vsel %vm4830, %v5209, %v5208
  %v5211 = vsel %vm4833, %v4803, %v5210
  %v5212 = vrot.slane %v4807, 7
  %v5213 = vsel %vm4836, %v5212, %v5211
  %v5215 = vrot.slane %v4763, 7
  %v5216 = vrot.slane %v4767, 6
  %v5217 = vsel %vm4818, %v5216, %v5215
  %v5218 = vrot.slane %v4771, 5
  %v5219 = vsel %vm4821, %v5218, %v5217
  %v5220 = vrot.slane %v4775, 4
  %v5221 = vsel %vm4824, %v5220, %v5219
  %v5222 = vrot.slane %v4795, 3
  %v5223 = vsel %vm4827, %v5222, %v5221
  %v5224 = vrot.slane %v4799, 2
  %v5225 = vsel %vm4830, %v5224, %v5223
  %v5226 = vrot.slane %v4803, 1
  %v5227 = vsel %vm4833, %v5226, %v5225
  %v5228 = vsel %vm4836, %v4807, %v5227
  %5229 = vrot.lane.b32.xlu0 %v5228, 64
  %v5230 = vpop.permute.xlu0 %5229
  %v5240 = vrot.slane %v4768, 7
  %v5241 = vsel %vm4818, %v5240, %v4764
  %v5242 = vrot.slane %v4772, 6
  %v5243 = vsel %vm4821, %v5242, %v5241
  %v5244 = vrot.slane %v4776, 5
  %v5245 = vsel %vm4824, %v5244, %v5243
  %v5246 = vrot.slane %v4796, 4
  %v5247 = vsel %vm4827, %v5246, %v5245
  %v5248 = vrot.slane %v4800, 3
  %v5249 = vsel %vm4830, %v5248, %v5247
  %v5250 = vrot.slane %v4804, 2
  %v5251 = vsel %vm4833, %v5250, %v5249
  %v5252 = vrot.slane %v4808, 1
  %v5253 = vsel %vm4836, %v5252, %v5251
  %v5255 = vrot.slane %v4764, 1
  %v5256 = vsel %vm4818, %v4768, %v5255
  %v5257 = vrot.slane %v4772, 7
  %v5258 = vsel %vm4821, %v5257, %v5256
  %v5259 = vrot.slane %v4776, 6
  %v5260 = vsel %vm4824, %v5259, %v5258
  %v5261 = vrot.slane %v4796, 5
  %v5262 = vsel %vm4827, %v5261, %v5260
  %v5263 = vrot.slane %v4800, 4
  %v5264 = vsel %vm4830, %v5263, %v5262
  %v5265 = vrot.slane %v4804, 3
  %v5266 = vsel %vm4833, %v5265, %v5264
  %v5267 = vrot.slane %v4808, 2
  %v5268 = vsel %vm4836, %v5267, %v5266
  %5269 = vrot.lane.b32.xlu0 %v5268, 64
  %v5270 = vpop.permute.xlu0 %5269
  %v5272 = vrot.slane %v4764, 2
  %v5273 = vrot.slane %v4768, 1
  %v5274 = vsel %vm4818, %v5273, %v5272
  %v5275 = vsel %vm4821, %v4772, %v5274
  %v5276 = vrot.slane %v4776, 7
  %v5277 = vsel %vm4824, %v5276, %v5275
  %v5278 = vrot.slane %v4796, 6
  %v5279 = vsel %vm4827, %v5278, %v5277
  %v5280 = vrot.slane %v4800, 5
  %v5281 = vsel %vm4830, %v5280, %v5279
  %v5282 = vrot.slane %v4804, 4
  %v5283 = vsel %vm4833, %v5282, %v5281
  %v5284 = vrot.slane %v4808, 3
  %v5285 = vsel %vm4836, %v5284, %v5283
  %v5287 = vrot.slane %v4764, 3
  %v5288 = vrot.slane %v4768, 2
  %v5289 = vsel %vm4818, %v5288, %v5287
  %v5290 = vrot.slane %v4772, 1
  %v5291 = vsel %vm4821, %v5290, %v5289
  %v5292 = vsel %vm4824, %v4776, %v5291
  %v5293 = vrot.slane %v4796, 7
  %v5294 = vsel %vm4827, %v5293, %v5292
  %v5295 = vrot.slane %v4800, 6
  %v5296 = vsel %vm4830, %v5295, %v5294
  %v5297 = vrot.slane %v4804, 5
  %v5298 = vsel %vm4833, %v5297, %v5296
  %v5299 = vrot.slane %v4808, 4
  %v5300 = vsel %vm4836, %v5299, %v5298
  %5301 = vrot.lane.b32.xlu0 %v5300, 64
  %v5302 = vpop.permute.xlu0 %5301
  %v5304 = vrot.slane %v4764, 4
  %v5305 = vrot.slane %v4768, 3
  %v5306 = vsel %vm4818, %v5305, %v5304
  %v5307 = vrot.slane %v4772, 2
  %v5308 = vsel %vm4821, %v5307, %v5306
  %v5309 = vrot.slane %v4776, 1
  %v5310 = vsel %vm4824, %v5309, %v5308
  %v5311 = vsel %vm4827, %v4796, %v5310
  %v5312 = vrot.slane %v4800, 7
  %v5313 = vsel %vm4830, %v5312, %v5311
  %v5314 = vrot.slane %v4804, 6
  %v5315 = vsel %vm4833, %v5314, %v5313
  %v5316 = vrot.slane %v4808, 5
  %v5317 = vsel %vm4836, %v5316, %v5315
  %v5319 = vrot.slane %v4764, 5
  %v5320 = vrot.slane %v4768, 4
  %v5321 = vsel %vm4818, %v5320, %v5319
  %v5322 = vrot.slane %v4772, 3
  %v5323 = vsel %vm4821, %v5322, %v5321
  %v5324 = vrot.slane %v4776, 2
  %v5325 = vsel %vm4824, %v5324, %v5323
  %v5326 = vrot.slane %v4796, 1
  %v5327 = vsel %vm4827, %v5326, %v5325
  %v5328 = vsel %vm4830, %v4800, %v5327
  %v5329 = vrot.slane %v4804, 7
  %v5330 = vsel %vm4833, %v5329, %v5328
  %v5331 = vrot.slane %v4808, 6
  %v5332 = vsel %vm4836, %v5331, %v5330
  %5333 = vrot.lane.b32.xlu0 %v5332, 64
  %v5334 = vpop.permute.xlu0 %5333
  %v5336 = vrot.slane %v4764, 6
  %v5337 = vrot.slane %v4768, 5
  %v5338 = vsel %vm4818, %v5337, %v5336
  %v5339 = vrot.slane %v4772, 4
  %v5340 = vsel %vm4821, %v5339, %v5338
  %v5341 = vrot.slane %v4776, 3
  %v5342 = vsel %vm4824, %v5341, %v5340
  %v5343 = vrot.slane %v4796, 2
  %v5344 = vsel %vm4827, %v5343, %v5342
  %v5345 = vrot.slane %v4800, 1
  %v5346 = vsel %vm4830, %v5345, %v5344
  %v5347 = vsel %vm4833, %v4804, %v5346
  %v5348 = vrot.slane %v4808, 7
  %v5349 = vsel %vm4836, %v5348, %v5347
  %v5351 = vrot.slane %v4764, 7
  %v5352 = vrot.slane %v4768, 6
  %v5353 = vsel %vm4818, %v5352, %v5351
  %v5354 = vrot.slane %v4772, 5
  %v5355 = vsel %vm4821, %v5354, %v5353
  %v5356 = vrot.slane %v4776, 4
  %v5357 = vsel %vm4824, %v5356, %v5355
  %v5358 = vrot.slane %v4796, 3
  %v5359 = vsel %vm4827, %v5358, %v5357
  %v5360 = vrot.slane %v4800, 2
  %v5361 = vsel %vm4830, %v5360, %v5359
  %v5362 = vrot.slane %v4804, 1
  %v5363 = vsel %vm4833, %v5362, %v5361
  %v5364 = vsel %vm4836, %v4808, %v5363
  %5365 = vrot.lane.b32.xlu0 %v5364, 64
  %v5366 = vpop.permute.xlu0 %5365
  %v5368 = vsel %vm1311, %v5117, %v5134
  %v5369 = vsel %vm1311, %v5149, %v5166
  %v5370 = vsel %vm1311, %v5181, %v5198
  %v5371 = vsel %vm1311, %v5213, %v5230
  %v5372 = vsel %vm1311, %v5253, %v5270
  %v5373 = vsel %vm1311, %v5285, %v5302
  %v5374 = vsel %vm1311, %v5317, %v5334
  %v5375 = vsel %vm1311, %v5349, %v5366
  %v5376 = vpack.c.bf16 %v5088, %v5088
  %v5377 = vpack.c.bf16 %v5089, %v5089
  %v5378 = vpack.c.bf16 %v5090, %v5090
  %v5379 = vpack.c.bf16 %v5091, %v5091
  %v5380 = vpack.c.bf16 %v5092, %v5092
  %v5381 = vpack.c.bf16 %v5093, %v5093
  %v5382 = vpack.c.bf16 %v5094, %v5094
  %v5383 = vpack.c.bf16 %v5095, %v5095
  %v5384 = vpack.c.bf16 %v5368, %v5368
  %v5385 = vpack.c.bf16 %v5369, %v5369
  %v5386 = vpack.c.bf16 %v5370, %v5370
  %v5387 = vpack.c.bf16 %v5371, %v5371
  %v5388 = vpack.c.bf16 %v5372, %v5372
  %v5389 = vpack.c.bf16 %v5373, %v5373
  %v5390 = vpack.c.bf16 %v5374, %v5374
  %v5391 = vpack.c.bf16 %v5375, %v5375
  %s5392 = smul.u32 4, 256
  %s5393 = smul.u32 %s5392, 1
  %s5394 = sshll.u32 %s5393, 4
  %5395 = dma.done %s367, %s5394
  %v5396 = vld [vmem:[#allocation3] sm:$0xf]
  %v5397 = vld [vmem:[#allocation3 + $0x4] sm:$0xf]
  %v5398 = vld [vmem:[#allocation3 + $0x8] sm:$0xf]
  %v5399 = vld [vmem:[#allocation3 + $0xc] sm:$0xf]
  %v5400 = vld [vmem:[#allocation3 + $0x10] sm:$0xf]
  %v5401 = vld [vmem:[#allocation3 + $0x14] sm:$0xf]
  %v5402 = vld [vmem:[#allocation3 + $0x18] sm:$0xf]
  %v5403 = vld [vmem:[#allocation3 + $0x1c] sm:$0xf]
  %v5404 = vld [vmem:[#allocation3 + $0x20] sm:$0xf]
  %v5405 = vld [vmem:[#allocation3 + $0x24] sm:$0xf]
  %v5406 = vld [vmem:[#allocation3 + $0x28] sm:$0xf]
  %v5407 = vld [vmem:[#allocation3 + $0x2c] sm:$0xf]
  %v5408 = vld [vmem:[#allocation3 + $0x30] sm:$0xf]
  %v5409 = vld [vmem:[#allocation3 + $0x34] sm:$0xf]
  %v5410 = vld [vmem:[#allocation3 + $0x38] sm:$0xf]
  %v5411 = vld [vmem:[#allocation3 + $0x3c] sm:$0xf]
  %v5412 = vld [vmem:[#allocation3 + $0x40] sm:$0xf]
  %v5413 = vld [vmem:[#allocation3 + $0x44] sm:$0xf]
  %v5414 = vld [vmem:[#allocation3 + $0x48] sm:$0xf]
  %v5415 = vld [vmem:[#allocation3 + $0x4c] sm:$0xf]
  %v5416 = vld [vmem:[#allocation3 + $0x50] sm:$0xf]
  %v5417 = vld [vmem:[#allocation3 + $0x54] sm:$0xf]
  %v5418 = vld [vmem:[#allocation3 + $0x58] sm:$0xf]
  %v5419 = vld [vmem:[#allocation3 + $0x5c] sm:$0xf]
  %v5420 = vld [vmem:[#allocation3 + $0x60] sm:$0xf]
  %v5421 = vld [vmem:[#allocation3 + $0x64] sm:$0xf]
  %v5422 = vld [vmem:[#allocation3 + $0x68] sm:$0xf]
  %v5423 = vld [vmem:[#allocation3 + $0x6c] sm:$0xf]
  %v5424 = vld [vmem:[#allocation3 + $0x70] sm:$0xf]
  %v5425 = vld [vmem:[#allocation3 + $0x74] sm:$0xf]
  %v5426 = vld [vmem:[#allocation3 + $0x78] sm:$0xf]
  %v5427 = vld [vmem:[#allocation3 + $0x7c] sm:$0xf]
  %v5428 = vld [vmem:[#allocation3 + $0x80] sm:$0xf]
  %v5429 = vld [vmem:[#allocation3 + $0x84] sm:$0xf]
  %v5430 = vld [vmem:[#allocation3 + $0x88] sm:$0xf]
  %v5431 = vld [vmem:[#allocation3 + $0x8c] sm:$0xf]
  %v5432 = vld [vmem:[#allocation3 + $0x90] sm:$0xf]
  %v5433 = vld [vmem:[#allocation3 + $0x94] sm:$0xf]
  %v5434 = vld [vmem:[#allocation3 + $0x98] sm:$0xf]
  %v5435 = vld [vmem:[#allocation3 + $0x9c] sm:$0xf]
  %v5436 = vld [vmem:[#allocation3 + $0xa0] sm:$0xf]
  %v5437 = vld [vmem:[#allocation3 + $0xa4] sm:$0xf]
  %v5438 = vld [vmem:[#allocation3 + $0xa8] sm:$0xf]
  %v5439 = vld [vmem:[#allocation3 + $0xac] sm:$0xf]
  %v5440 = vld [vmem:[#allocation3 + $0xb0] sm:$0xf]
  %v5441 = vld [vmem:[#allocation3 + $0xb4] sm:$0xf]
  %v5442 = vld [vmem:[#allocation3 + $0xb8] sm:$0xf]
  %v5443 = vld [vmem:[#allocation3 + $0xbc] sm:$0xf]
  %v5444 = vld [vmem:[#allocation3 + $0xc0] sm:$0xf]
  %v5445 = vld [vmem:[#allocation3 + $0xc4] sm:$0xf]
  %v5446 = vld [vmem:[#allocation3 + $0xc8] sm:$0xf]
  %v5447 = vld [vmem:[#allocation3 + $0xcc] sm:$0xf]
  %v5448 = vld [vmem:[#allocation3 + $0xd0] sm:$0xf]
  %v5449 = vld [vmem:[#allocation3 + $0xd4] sm:$0xf]
  %v5450 = vld [vmem:[#allocation3 + $0xd8] sm:$0xf]
  %v5451 = vld [vmem:[#allocation3 + $0xdc] sm:$0xf]
  %v5452 = vld [vmem:[#allocation3 + $0xe0] sm:$0xf]
  %v5453 = vld [vmem:[#allocation3 + $0xe4] sm:$0xf]
  %v5454 = vld [vmem:[#allocation3 + $0xe8] sm:$0xf]
  %v5455 = vld [vmem:[#allocation3 + $0xec] sm:$0xf]
  %v5456 = vld [vmem:[#allocation3 + $0xf0] sm:$0xf]
  %v5457 = vld [vmem:[#allocation3 + $0xf4] sm:$0xf]
  %v5458 = vld [vmem:[#allocation3 + $0xf8] sm:$0xf]
  %v5459 = vld [vmem:[#allocation3 + $0xfc] sm:$0xf]
  %v5460 = vld [vmem:[#allocation3 + $0x100] sm:$0xf]
  %v5461 = vld [vmem:[#allocation3 + $0x104] sm:$0xf]
  %v5462 = vld [vmem:[#allocation3 + $0x108] sm:$0xf]
  %v5463 = vld [vmem:[#allocation3 + $0x10c] sm:$0xf]
  %v5464 = vld [vmem:[#allocation3 + $0x110] sm:$0xf]
  %v5465 = vld [vmem:[#allocation3 + $0x114] sm:$0xf]
  %v5466 = vld [vmem:[#allocation3 + $0x118] sm:$0xf]
  %v5467 = vld [vmem:[#allocation3 + $0x11c] sm:$0xf]
  %v5468 = vld [vmem:[#allocation3 + $0x120] sm:$0xf]
  %v5469 = vld [vmem:[#allocation3 + $0x124] sm:$0xf]
  %v5470 = vld [vmem:[#allocation3 + $0x128] sm:$0xf]
  %v5471 = vld [vmem:[#allocation3 + $0x12c] sm:$0xf]
  %v5472 = vld [vmem:[#allocation3 + $0x130] sm:$0xf]
  %v5473 = vld [vmem:[#allocation3 + $0x134] sm:$0xf]
  %v5474 = vld [vmem:[#allocation3 + $0x138] sm:$0xf]
  %v5475 = vld [vmem:[#allocation3 + $0x13c] sm:$0xf]
  %v5476 = vld [vmem:[#allocation3 + $0x140] sm:$0xf]
  %v5477 = vld [vmem:[#allocation3 + $0x144] sm:$0xf]
  %v5478 = vld [vmem:[#allocation3 + $0x148] sm:$0xf]
  %v5479 = vld [vmem:[#allocation3 + $0x14c] sm:$0xf]
  %v5480 = vld [vmem:[#allocation3 + $0x150] sm:$0xf]
  %v5481 = vld [vmem:[#allocation3 + $0x154] sm:$0xf]
  %v5482 = vld [vmem:[#allocation3 + $0x158] sm:$0xf]
  %v5483 = vld [vmem:[#allocation3 + $0x15c] sm:$0xf]
  %v5484 = vld [vmem:[#allocation3 + $0x160] sm:$0xf]
  %v5485 = vld [vmem:[#allocation3 + $0x164] sm:$0xf]
  %v5486 = vld [vmem:[#allocation3 + $0x168] sm:$0xf]
  %v5487 = vld [vmem:[#allocation3 + $0x16c] sm:$0xf]
  %v5488 = vld [vmem:[#allocation3 + $0x170] sm:$0xf]
  %v5489 = vld [vmem:[#allocation3 + $0x174] sm:$0xf]
  %v5490 = vld [vmem:[#allocation3 + $0x178] sm:$0xf]
  %v5491 = vld [vmem:[#allocation3 + $0x17c] sm:$0xf]
  %v5492 = vld [vmem:[#allocation3 + $0x180] sm:$0xf]
  %v5493 = vld [vmem:[#allocation3 + $0x184] sm:$0xf]
  %v5494 = vld [vmem:[#allocation3 + $0x188] sm:$0xf]
  %v5495 = vld [vmem:[#allocation3 + $0x18c] sm:$0xf]
  %v5496 = vld [vmem:[#allocation3 + $0x190] sm:$0xf]
  %v5497 = vld [vmem:[#allocation3 + $0x194] sm:$0xf]
  %v5498 = vld [vmem:[#allocation3 + $0x198] sm:$0xf]
  %v5499 = vld [vmem:[#allocation3 + $0x19c] sm:$0xf]
  %v5500 = vld [vmem:[#allocation3 + $0x1a0] sm:$0xf]
  %v5501 = vld [vmem:[#allocation3 + $0x1a4] sm:$0xf]
  %v5502 = vld [vmem:[#allocation3 + $0x1a8] sm:$0xf]
  %v5503 = vld [vmem:[#allocation3 + $0x1ac] sm:$0xf]
  %v5504 = vld [vmem:[#allocation3 + $0x1b0] sm:$0xf]
  %v5505 = vld [vmem:[#allocation3 + $0x1b4] sm:$0xf]
  %v5506 = vld [vmem:[#allocation3 + $0x1b8] sm:$0xf]
  %v5507 = vld [vmem:[#allocation3 + $0x1bc] sm:$0xf]
  %v5508 = vld [vmem:[#allocation3 + $0x1c0] sm:$0xf]
  %v5509 = vld [vmem:[#allocation3 + $0x1c4] sm:$0xf]
  %v5510 = vld [vmem:[#allocation3 + $0x1c8] sm:$0xf]
  %v5511 = vld [vmem:[#allocation3 + $0x1cc] sm:$0xf]
  %v5512 = vld [vmem:[#allocation3 + $0x1d0] sm:$0xf]
  %v5513 = vld [vmem:[#allocation3 + $0x1d4] sm:$0xf]
  %v5514 = vld [vmem:[#allocation3 + $0x1d8] sm:$0xf]
  %v5515 = vld [vmem:[#allocation3 + $0x1dc] sm:$0xf]
  %v5516 = vld [vmem:[#allocation3 + $0x1e0] sm:$0xf]
  %v5517 = vld [vmem:[#allocation3 + $0x1e4] sm:$0xf]
  %v5518 = vld [vmem:[#allocation3 + $0x1e8] sm:$0xf]
  %v5519 = vld [vmem:[#allocation3 + $0x1ec] sm:$0xf]
  %v5520 = vld [vmem:[#allocation3 + $0x1f0] sm:$0xf]
  %v5521 = vld [vmem:[#allocation3 + $0x1f4] sm:$0xf]
  %v5522 = vld [vmem:[#allocation3 + $0x1f8] sm:$0xf]
  %v5523 = vld [vmem:[#allocation3 + $0x1fc] sm:$0xf]
  %v5524 = vld [vmem:[#allocation3 + $0x200] sm:$0xf]
  %v5525 = vld [vmem:[#allocation3 + $0x204] sm:$0xf]
  %v5526 = vld [vmem:[#allocation3 + $0x208] sm:$0xf]
  %v5527 = vld [vmem:[#allocation3 + $0x20c] sm:$0xf]
  %v5528 = vld [vmem:[#allocation3 + $0x210] sm:$0xf]
  %v5529 = vld [vmem:[#allocation3 + $0x214] sm:$0xf]
  %v5530 = vld [vmem:[#allocation3 + $0x218] sm:$0xf]
  %v5531 = vld [vmem:[#allocation3 + $0x21c] sm:$0xf]
  %v5532 = vld [vmem:[#allocation3 + $0x220] sm:$0xf]
  %v5533 = vld [vmem:[#allocation3 + $0x224] sm:$0xf]
  %v5534 = vld [vmem:[#allocation3 + $0x228] sm:$0xf]
  %v5535 = vld [vmem:[#allocation3 + $0x22c] sm:$0xf]
  %v5536 = vld [vmem:[#allocation3 + $0x230] sm:$0xf]
  %v5537 = vld [vmem:[#allocation3 + $0x234] sm:$0xf]
  %v5538 = vld [vmem:[#allocation3 + $0x238] sm:$0xf]
  %v5539 = vld [vmem:[#allocation3 + $0x23c] sm:$0xf]
  %v5540 = vld [vmem:[#allocation3 + $0x240] sm:$0xf]
  %v5541 = vld [vmem:[#allocation3 + $0x244] sm:$0xf]
  %v5542 = vld [vmem:[#allocation3 + $0x248] sm:$0xf]
  %v5543 = vld [vmem:[#allocation3 + $0x24c] sm:$0xf]
  %v5544 = vld [vmem:[#allocation3 + $0x250] sm:$0xf]
  %v5545 = vld [vmem:[#allocation3 + $0x254] sm:$0xf]
  %v5546 = vld [vmem:[#allocation3 + $0x258] sm:$0xf]
  %v5547 = vld [vmem:[#allocation3 + $0x25c] sm:$0xf]
  %v5548 = vld [vmem:[#allocation3 + $0x260] sm:$0xf]
  %v5549 = vld [vmem:[#allocation3 + $0x264] sm:$0xf]
  %v5550 = vld [vmem:[#allocation3 + $0x268] sm:$0xf]
  %v5551 = vld [vmem:[#allocation3 + $0x26c] sm:$0xf]
  %v5552 = vld [vmem:[#allocation3 + $0x270] sm:$0xf]
  %v5553 = vld [vmem:[#allocation3 + $0x274] sm:$0xf]
  %v5554 = vld [vmem:[#allocation3 + $0x278] sm:$0xf]
  %v5555 = vld [vmem:[#allocation3 + $0x27c] sm:$0xf]
  %v5556 = vld [vmem:[#allocation3 + $0x280] sm:$0xf]
  %v5557 = vld [vmem:[#allocation3 + $0x284] sm:$0xf]
  %v5558 = vld [vmem:[#allocation3 + $0x288] sm:$0xf]
  %v5559 = vld [vmem:[#allocation3 + $0x28c] sm:$0xf]
  %v5560 = vld [vmem:[#allocation3 + $0x290] sm:$0xf]
  %v5561 = vld [vmem:[#allocation3 + $0x294] sm:$0xf]
  %v5562 = vld [vmem:[#allocation3 + $0x298] sm:$0xf]
  %v5563 = vld [vmem:[#allocation3 + $0x29c] sm:$0xf]
  %v5564 = vld [vmem:[#allocation3 + $0x2a0] sm:$0xf]
  %v5565 = vld [vmem:[#allocation3 + $0x2a4] sm:$0xf]
  %v5566 = vld [vmem:[#allocation3 + $0x2a8] sm:$0xf]
  %v5567 = vld [vmem:[#allocation3 + $0x2ac] sm:$0xf]
  %v5568 = vld [vmem:[#allocation3 + $0x2b0] sm:$0xf]
  %v5569 = vld [vmem:[#allocation3 + $0x2b4] sm:$0xf]
  %v5570 = vld [vmem:[#allocation3 + $0x2b8] sm:$0xf]
  %v5571 = vld [vmem:[#allocation3 + $0x2bc] sm:$0xf]
  %v5572 = vld [vmem:[#allocation3 + $0x2c0] sm:$0xf]
  %v5573 = vld [vmem:[#allocation3 + $0x2c4] sm:$0xf]
  %v5574 = vld [vmem:[#allocation3 + $0x2c8] sm:$0xf]
  %v5575 = vld [vmem:[#allocation3 + $0x2cc] sm:$0xf]
  %v5576 = vld [vmem:[#allocation3 + $0x2d0] sm:$0xf]
  %v5577 = vld [vmem:[#allocation3 + $0x2d4] sm:$0xf]
  %v5578 = vld [vmem:[#allocation3 + $0x2d8] sm:$0xf]
  %v5579 = vld [vmem:[#allocation3 + $0x2dc] sm:$0xf]
  %v5580 = vld [vmem:[#allocation3 + $0x2e0] sm:$0xf]
  %v5581 = vld [vmem:[#allocation3 + $0x2e4] sm:$0xf]
  %v5582 = vld [vmem:[#allocation3 + $0x2e8] sm:$0xf]
  %v5583 = vld [vmem:[#allocation3 + $0x2ec] sm:$0xf]
  %v5584 = vld [vmem:[#allocation3 + $0x2f0] sm:$0xf]
  %v5585 = vld [vmem:[#allocation3 + $0x2f4] sm:$0xf]
  %v5586 = vld [vmem:[#allocation3 + $0x2f8] sm:$0xf]
  %v5587 = vld [vmem:[#allocation3 + $0x2fc] sm:$0xf]
  %v5588 = vld [vmem:[#allocation3 + $0x300] sm:$0xf]
  %v5589 = vld [vmem:[#allocation3 + $0x304] sm:$0xf]
  %v5590 = vld [vmem:[#allocation3 + $0x308] sm:$0xf]
  %v5591 = vld [vmem:[#allocation3 + $0x30c] sm:$0xf]
  %v5592 = vld [vmem:[#allocation3 + $0x310] sm:$0xf]
  %v5593 = vld [vmem:[#allocation3 + $0x314] sm:$0xf]
  %v5594 = vld [vmem:[#allocation3 + $0x318] sm:$0xf]
  %v5595 = vld [vmem:[#allocation3 + $0x31c] sm:$0xf]
  %v5596 = vld [vmem:[#allocation3 + $0x320] sm:$0xf]
  %v5597 = vld [vmem:[#allocation3 + $0x324] sm:$0xf]
  %v5598 = vld [vmem:[#allocation3 + $0x328] sm:$0xf]
  %v5599 = vld [vmem:[#allocation3 + $0x32c] sm:$0xf]
  %v5600 = vld [vmem:[#allocation3 + $0x330] sm:$0xf]
  %v5601 = vld [vmem:[#allocation3 + $0x334] sm:$0xf]
  %v5602 = vld [vmem:[#allocation3 + $0x338] sm:$0xf]
  %v5603 = vld [vmem:[#allocation3 + $0x33c] sm:$0xf]
  %v5604 = vld [vmem:[#allocation3 + $0x340] sm:$0xf]
  %v5605 = vld [vmem:[#allocation3 + $0x344] sm:$0xf]
  %v5606 = vld [vmem:[#allocation3 + $0x348] sm:$0xf]
  %v5607 = vld [vmem:[#allocation3 + $0x34c] sm:$0xf]
  %v5608 = vld [vmem:[#allocation3 + $0x350] sm:$0xf]
  %v5609 = vld [vmem:[#allocation3 + $0x354] sm:$0xf]
  %v5610 = vld [vmem:[#allocation3 + $0x358] sm:$0xf]
  %v5611 = vld [vmem:[#allocation3 + $0x35c] sm:$0xf]
  %v5612 = vld [vmem:[#allocation3 + $0x360] sm:$0xf]
  %v5613 = vld [vmem:[#allocation3 + $0x364] sm:$0xf]
  %v5614 = vld [vmem:[#allocation3 + $0x368] sm:$0xf]
  %v5615 = vld [vmem:[#allocation3 + $0x36c] sm:$0xf]
  %v5616 = vld [vmem:[#allocation3 + $0x370] sm:$0xf]
  %v5617 = vld [vmem:[#allocation3 + $0x374] sm:$0xf]
  %v5618 = vld [vmem:[#allocation3 + $0x378] sm:$0xf]
  %v5619 = vld [vmem:[#allocation3 + $0x37c] sm:$0xf]
  %v5620 = vld [vmem:[#allocation3 + $0x380] sm:$0xf]
  %v5621 = vld [vmem:[#allocation3 + $0x384] sm:$0xf]
  %v5622 = vld [vmem:[#allocation3 + $0x388] sm:$0xf]
  %v5623 = vld [vmem:[#allocation3 + $0x38c] sm:$0xf]
  %v5624 = vld [vmem:[#allocation3 + $0x390] sm:$0xf]
  %v5625 = vld [vmem:[#allocation3 + $0x394] sm:$0xf]
  %v5626 = vld [vmem:[#allocation3 + $0x398] sm:$0xf]
  %v5627 = vld [vmem:[#allocation3 + $0x39c] sm:$0xf]
  %v5628 = vld [vmem:[#allocation3 + $0x3a0] sm:$0xf]
  %v5629 = vld [vmem:[#allocation3 + $0x3a4] sm:$0xf]
  %v5630 = vld [vmem:[#allocation3 + $0x3a8] sm:$0xf]
  %v5631 = vld [vmem:[#allocation3 + $0x3ac] sm:$0xf]
  %v5632 = vld [vmem:[#allocation3 + $0x3b0] sm:$0xf]
  %v5633 = vld [vmem:[#allocation3 + $0x3b4] sm:$0xf]
  %v5634 = vld [vmem:[#allocation3 + $0x3b8] sm:$0xf]
  %v5635 = vld [vmem:[#allocation3 + $0x3bc] sm:$0xf]
  %v5636 = vld [vmem:[#allocation3 + $0x3c0] sm:$0xf]
  %v5637 = vld [vmem:[#allocation3 + $0x3c4] sm:$0xf]
  %v5638 = vld [vmem:[#allocation3 + $0x3c8] sm:$0xf]
  %v5639 = vld [vmem:[#allocation3 + $0x3cc] sm:$0xf]
  %v5640 = vld [vmem:[#allocation3 + $0x3d0] sm:$0xf]
  %v5641 = vld [vmem:[#allocation3 + $0x3d4] sm:$0xf]
  %v5642 = vld [vmem:[#allocation3 + $0x3d8] sm:$0xf]
  %v5643 = vld [vmem:[#allocation3 + $0x3dc] sm:$0xf]
  %v5644 = vld [vmem:[#allocation3 + $0x3e0] sm:$0xf]
  %v5645 = vld [vmem:[#allocation3 + $0x3e4] sm:$0xf]
  %v5646 = vld [vmem:[#allocation3 + $0x3e8] sm:$0xf]
  %v5647 = vld [vmem:[#allocation3 + $0x3ec] sm:$0xf]
  %v5648 = vld [vmem:[#allocation3 + $0x3f0] sm:$0xf]
  %v5649 = vld [vmem:[#allocation3 + $0x3f4] sm:$0xf]
  %v5650 = vld [vmem:[#allocation3 + $0x3f8] sm:$0xf]
  %v5651 = vld [vmem:[#allocation3 + $0x3fc] sm:$0xf]
  %v5652 = vld [vmem:[%s12] sm:$0x1]
  %v5654 = vperm.slane %v5652, 0
  %v5912 = vunpack.c.l.b16 %v5396
  %v5913 = vunpack.c.l.b16 %v5397
  %v5914 = vunpack.c.l.b16 %v5398
  %v5915 = vunpack.c.l.b16 %v5399
  %v5916 = vunpack.c.l.b16 %v5400
  %v5917 = vunpack.c.l.b16 %v5401
  %v5918 = vunpack.c.l.b16 %v5402
  %v5919 = vunpack.c.l.b16 %v5403
  %v5920 = vunpack.c.l.b16 %v5404
  %v5921 = vunpack.c.l.b16 %v5405
  %v5922 = vunpack.c.l.b16 %v5406
  %v5923 = vunpack.c.l.b16 %v5407
  %v5924 = vunpack.c.l.b16 %v5408
  %v5925 = vunpack.c.l.b16 %v5409
  %v5926 = vunpack.c.l.b16 %v5410
  %v5927 = vunpack.c.l.b16 %v5411
  %v5928 = vunpack.c.l.b16 %v5412
  %v5929 = vunpack.c.l.b16 %v5413
  %v5930 = vunpack.c.l.b16 %v5414
  %v5931 = vunpack.c.l.b16 %v5415
  %v5932 = vunpack.c.l.b16 %v5416
  %v5933 = vunpack.c.l.b16 %v5417
  %v5934 = vunpack.c.l.b16 %v5418
  %v5935 = vunpack.c.l.b16 %v5419
  %v5936 = vunpack.c.l.b16 %v5420
  %v5937 = vunpack.c.l.b16 %v5421
  %v5938 = vunpack.c.l.b16 %v5422
  %v5939 = vunpack.c.l.b16 %v5423
  %v5940 = vunpack.c.l.b16 %v5424
  %v5941 = vunpack.c.l.b16 %v5425
  %v5942 = vunpack.c.l.b16 %v5426
  %v5943 = vunpack.c.l.b16 %v5427
  %v5944 = vunpack.c.l.b16 %v5428
  %v5945 = vunpack.c.l.b16 %v5429
  %v5946 = vunpack.c.l.b16 %v5430
  %v5947 = vunpack.c.l.b16 %v5431
  %v5948 = vunpack.c.l.b16 %v5432
  %v5949 = vunpack.c.l.b16 %v5433
  %v5950 = vunpack.c.l.b16 %v5434
  %v5951 = vunpack.c.l.b16 %v5435
  %v5952 = vunpack.c.l.b16 %v5436
  %v5953 = vunpack.c.l.b16 %v5437
  %v5954 = vunpack.c.l.b16 %v5438
  %v5955 = vunpack.c.l.b16 %v5439
  %v5956 = vunpack.c.l.b16 %v5440
  %v5957 = vunpack.c.l.b16 %v5441
  %v5958 = vunpack.c.l.b16 %v5442
  %v5959 = vunpack.c.l.b16 %v5443
  %v5960 = vunpack.c.l.b16 %v5444
  %v5961 = vunpack.c.l.b16 %v5445
  %v5962 = vunpack.c.l.b16 %v5446
  %v5963 = vunpack.c.l.b16 %v5447
  %v5964 = vunpack.c.l.b16 %v5448
  %v5965 = vunpack.c.l.b16 %v5449
  %v5966 = vunpack.c.l.b16 %v5450
  %v5967 = vunpack.c.l.b16 %v5451
  %v5968 = vunpack.c.l.b16 %v5452
  %v5969 = vunpack.c.l.b16 %v5453
  %v5970 = vunpack.c.l.b16 %v5454
  %v5971 = vunpack.c.l.b16 %v5455
  %v5972 = vunpack.c.l.b16 %v5456
  %v5973 = vunpack.c.l.b16 %v5457
  %v5974 = vunpack.c.l.b16 %v5458
  %v5975 = vunpack.c.l.b16 %v5459
  %v5976 = vunpack.c.l.b16 %v5460
  %v5977 = vunpack.c.l.b16 %v5461
  %v5978 = vunpack.c.l.b16 %v5462
  %v5979 = vunpack.c.l.b16 %v5463
  %v5980 = vunpack.c.l.b16 %v5464
  %v5981 = vunpack.c.l.b16 %v5465
  %v5982 = vunpack.c.l.b16 %v5466
  %v5983 = vunpack.c.l.b16 %v5467
  %v5984 = vunpack.c.l.b16 %v5468
  %v5985 = vunpack.c.l.b16 %v5469
  %v5986 = vunpack.c.l.b16 %v5470
  %v5987 = vunpack.c.l.b16 %v5471
  %v5988 = vunpack.c.l.b16 %v5472
  %v5989 = vunpack.c.l.b16 %v5473
  %v5990 = vunpack.c.l.b16 %v5474
  %v5991 = vunpack.c.l.b16 %v5475
  %v5992 = vunpack.c.l.b16 %v5476
  %v5993 = vunpack.c.l.b16 %v5477
  %v5994 = vunpack.c.l.b16 %v5478
  %v5995 = vunpack.c.l.b16 %v5479
  %v5996 = vunpack.c.l.b16 %v5480
  %v5997 = vunpack.c.l.b16 %v5481
  %v5998 = vunpack.c.l.b16 %v5482
  %v5999 = vunpack.c.l.b16 %v5483
  %v6000 = vunpack.c.l.b16 %v5484
  %v6001 = vunpack.c.l.b16 %v5485
  %v6002 = vunpack.c.l.b16 %v5486
  %v6003 = vunpack.c.l.b16 %v5487
  %v6004 = vunpack.c.l.b16 %v5488
  %v6005 = vunpack.c.l.b16 %v5489
  %v6006 = vunpack.c.l.b16 %v5490
  %v6007 = vunpack.c.l.b16 %v5491
  %v6008 = vunpack.c.l.b16 %v5492
  %v6009 = vunpack.c.l.b16 %v5493
  %v6010 = vunpack.c.l.b16 %v5494
  %v6011 = vunpack.c.l.b16 %v5495
  %v6012 = vunpack.c.l.b16 %v5496
  %v6013 = vunpack.c.l.b16 %v5497
  %v6014 = vunpack.c.l.b16 %v5498
  %v6015 = vunpack.c.l.b16 %v5499
  %v6016 = vunpack.c.l.b16 %v5500
  %v6017 = vunpack.c.l.b16 %v5501
  %v6018 = vunpack.c.l.b16 %v5502
  %v6019 = vunpack.c.l.b16 %v5503
  %v6020 = vunpack.c.l.b16 %v5504
  %v6021 = vunpack.c.l.b16 %v5505
  %v6022 = vunpack.c.l.b16 %v5506
  %v6023 = vunpack.c.l.b16 %v5507
  %v6024 = vunpack.c.l.b16 %v5508
  %v6025 = vunpack.c.l.b16 %v5509
  %v6026 = vunpack.c.l.b16 %v5510
  %v6027 = vunpack.c.l.b16 %v5511
  %v6028 = vunpack.c.l.b16 %v5512
  %v6029 = vunpack.c.l.b16 %v5513
  %v6030 = vunpack.c.l.b16 %v5514
  %v6031 = vunpack.c.l.b16 %v5515
  %v6032 = vunpack.c.l.b16 %v5516
  %v6033 = vunpack.c.l.b16 %v5517
  %v6034 = vunpack.c.l.b16 %v5518
  %v6035 = vunpack.c.l.b16 %v5519
  %v6036 = vunpack.c.l.b16 %v5520
  %v6037 = vunpack.c.l.b16 %v5521
  %v6038 = vunpack.c.l.b16 %v5522
  %v6039 = vunpack.c.l.b16 %v5523
  %v6040 = vunpack.c.l.b16 %v5524
  %v6041 = vunpack.c.l.b16 %v5525
  %v6042 = vunpack.c.l.b16 %v5526
  %v6043 = vunpack.c.l.b16 %v5527
  %v6044 = vunpack.c.l.b16 %v5528
  %v6045 = vunpack.c.l.b16 %v5529
  %v6046 = vunpack.c.l.b16 %v5530
  %v6047 = vunpack.c.l.b16 %v5531
  %v6048 = vunpack.c.l.b16 %v5532
  %v6049 = vunpack.c.l.b16 %v5533
  %v6050 = vunpack.c.l.b16 %v5534
  %v6051 = vunpack.c.l.b16 %v5535
  %v6052 = vunpack.c.l.b16 %v5536
  %v6053 = vunpack.c.l.b16 %v5537
  %v6054 = vunpack.c.l.b16 %v5538
  %v6055 = vunpack.c.l.b16 %v5539
  %v6056 = vunpack.c.l.b16 %v5540
  %v6057 = vunpack.c.l.b16 %v5541
  %v6058 = vunpack.c.l.b16 %v5542
  %v6059 = vunpack.c.l.b16 %v5543
  %v6060 = vunpack.c.l.b16 %v5544
  %v6061 = vunpack.c.l.b16 %v5545
  %v6062 = vunpack.c.l.b16 %v5546
  %v6063 = vunpack.c.l.b16 %v5547
  %v6064 = vunpack.c.l.b16 %v5548
  %v6065 = vunpack.c.l.b16 %v5549
  %v6066 = vunpack.c.l.b16 %v5550
  %v6067 = vunpack.c.l.b16 %v5551
  %v6068 = vunpack.c.l.b16 %v5552
  %v6069 = vunpack.c.l.b16 %v5553
  %v6070 = vunpack.c.l.b16 %v5554
  %v6071 = vunpack.c.l.b16 %v5555
  %v6072 = vunpack.c.l.b16 %v5556
  %v6073 = vunpack.c.l.b16 %v5557
  %v6074 = vunpack.c.l.b16 %v5558
  %v6075 = vunpack.c.l.b16 %v5559
  %v6076 = vunpack.c.l.b16 %v5560
  %v6077 = vunpack.c.l.b16 %v5561
  %v6078 = vunpack.c.l.b16 %v5562
  %v6079 = vunpack.c.l.b16 %v5563
  %v6080 = vunpack.c.l.b16 %v5564
  %v6081 = vunpack.c.l.b16 %v5565
  %v6082 = vunpack.c.l.b16 %v5566
  %v6083 = vunpack.c.l.b16 %v5567
  %v6084 = vunpack.c.l.b16 %v5568
  %v6085 = vunpack.c.l.b16 %v5569
  %v6086 = vunpack.c.l.b16 %v5570
  %v6087 = vunpack.c.l.b16 %v5571
  %v6088 = vunpack.c.l.b16 %v5572
  %v6089 = vunpack.c.l.b16 %v5573
  %v6090 = vunpack.c.l.b16 %v5574
  %v6091 = vunpack.c.l.b16 %v5575
  %v6092 = vunpack.c.l.b16 %v5576
  %v6093 = vunpack.c.l.b16 %v5577
  %v6094 = vunpack.c.l.b16 %v5578
  %v6095 = vunpack.c.l.b16 %v5579
  %v6096 = vunpack.c.l.b16 %v5580
  %v6097 = vunpack.c.l.b16 %v5581
  %v6098 = vunpack.c.l.b16 %v5582
  %v6099 = vunpack.c.l.b16 %v5583
  %v6100 = vunpack.c.l.b16 %v5584
  %v6101 = vunpack.c.l.b16 %v5585
  %v6102 = vunpack.c.l.b16 %v5586
  %v6103 = vunpack.c.l.b16 %v5587
  %v6104 = vunpack.c.l.b16 %v5588
  %v6105 = vunpack.c.l.b16 %v5589
  %v6106 = vunpack.c.l.b16 %v5590
  %v6107 = vunpack.c.l.b16 %v5591
  %v6108 = vunpack.c.l.b16 %v5592
  %v6109 = vunpack.c.l.b16 %v5593
  %v6110 = vunpack.c.l.b16 %v5594
  %v6111 = vunpack.c.l.b16 %v5595
  %v6112 = vunpack.c.l.b16 %v5596
  %v6113 = vunpack.c.l.b16 %v5597
  %v6114 = vunpack.c.l.b16 %v5598
  %v6115 = vunpack.c.l.b16 %v5599
  %v6116 = vunpack.c.l.b16 %v5600
  %v6117 = vunpack.c.l.b16 %v5601
  %v6118 = vunpack.c.l.b16 %v5602
  %v6119 = vunpack.c.l.b16 %v5603
  %v6120 = vunpack.c.l.b16 %v5604
  %v6121 = vunpack.c.l.b16 %v5605
  %v6122 = vunpack.c.l.b16 %v5606
  %v6123 = vunpack.c.l.b16 %v5607
  %v6124 = vunpack.c.l.b16 %v5608
  %v6125 = vunpack.c.l.b16 %v5609
  %v6126 = vunpack.c.l.b16 %v5610
  %v6127 = vunpack.c.l.b16 %v5611
  %v6128 = vunpack.c.l.b16 %v5612
  %v6129 = vunpack.c.l.b16 %v5613
  %v6130 = vunpack.c.l.b16 %v5614
  %v6131 = vunpack.c.l.b16 %v5615
  %v6132 = vunpack.c.l.b16 %v5616
  %v6133 = vunpack.c.l.b16 %v5617
  %v6134 = vunpack.c.l.b16 %v5618
  %v6135 = vunpack.c.l.b16 %v5619
  %v6136 = vunpack.c.l.b16 %v5620
  %v6137 = vunpack.c.l.b16 %v5621
  %v6138 = vunpack.c.l.b16 %v5622
  %v6139 = vunpack.c.l.b16 %v5623
  %v6140 = vunpack.c.l.b16 %v5624
  %v6141 = vunpack.c.l.b16 %v5625
  %v6142 = vunpack.c.l.b16 %v5626
  %v6143 = vunpack.c.l.b16 %v5627
  %v6144 = vunpack.c.l.b16 %v5628
  %v6145 = vunpack.c.l.b16 %v5629
  %v6146 = vunpack.c.l.b16 %v5630
  %v6147 = vunpack.c.l.b16 %v5631
  %v6148 = vunpack.c.l.b16 %v5632
  %v6149 = vunpack.c.l.b16 %v5633
  %v6150 = vunpack.c.l.b16 %v5634
  %v6151 = vunpack.c.l.b16 %v5635
  %v6152 = vunpack.c.l.b16 %v5636
  %v6153 = vunpack.c.l.b16 %v5637
  %v6154 = vunpack.c.l.b16 %v5638
  %v6155 = vunpack.c.l.b16 %v5639
  %v6156 = vunpack.c.l.b16 %v5640
  %v6157 = vunpack.c.l.b16 %v5641
  %v6158 = vunpack.c.l.b16 %v5642
  %v6159 = vunpack.c.l.b16 %v5643
  %v6160 = vunpack.c.l.b16 %v5644
  %v6161 = vunpack.c.l.b16 %v5645
  %v6162 = vunpack.c.l.b16 %v5646
  %v6163 = vunpack.c.l.b16 %v5647
  %v6164 = vunpack.c.l.b16 %v5648
  %v6165 = vunpack.c.l.b16 %v5649
  %v6166 = vunpack.c.l.b16 %v5650
  %v6167 = vunpack.c.l.b16 %v5651
  %v6168 = vpack.c.b16 %v5913, %v5912
  %v6169 = vpack.c.b16 %v5915, %v5914
  %v6170 = vpack.c.b16 %v5917, %v5916
  %v6171 = vpack.c.b16 %v5919, %v5918
  %v6172 = vpack.c.b16 %v5921, %v5920
  %v6173 = vpack.c.b16 %v5923, %v5922
  %v6174 = vpack.c.b16 %v5925, %v5924
  %v6175 = vpack.c.b16 %v5927, %v5926
  %v6176 = vpack.c.b16 %v5929, %v5928
  %v6177 = vpack.c.b16 %v5931, %v5930
  %v6178 = vpack.c.b16 %v5933, %v5932
  %v6179 = vpack.c.b16 %v5935, %v5934
  %v6180 = vpack.c.b16 %v5937, %v5936
  %v6181 = vpack.c.b16 %v5939, %v5938
  %v6182 = vpack.c.b16 %v5941, %v5940
  %v6183 = vpack.c.b16 %v5943, %v5942
  %v6184 = vpack.c.b16 %v5945, %v5944
  %v6185 = vpack.c.b16 %v5947, %v5946
  %v6186 = vpack.c.b16 %v5949, %v5948
  %v6187 = vpack.c.b16 %v5951, %v5950
  %v6188 = vpack.c.b16 %v5953, %v5952
  %v6189 = vpack.c.b16 %v5955, %v5954
  %v6190 = vpack.c.b16 %v5957, %v5956
  %v6191 = vpack.c.b16 %v5959, %v5958
  %v6192 = vpack.c.b16 %v5961, %v5960
  %v6193 = vpack.c.b16 %v5963, %v5962
  %v6194 = vpack.c.b16 %v5965, %v5964
  %v6195 = vpack.c.b16 %v5967, %v5966
  %v6196 = vpack.c.b16 %v5969, %v5968
  %v6197 = vpack.c.b16 %v5971, %v5970
  %v6198 = vpack.c.b16 %v5973, %v5972
  %v6199 = vpack.c.b16 %v5975, %v5974
  %v6200 = vpack.c.b16 %v5977, %v5976
  %v6201 = vpack.c.b16 %v5979, %v5978
  %v6202 = vpack.c.b16 %v5981, %v5980
  %v6203 = vpack.c.b16 %v5983, %v5982
  %v6204 = vpack.c.b16 %v5985, %v5984
  %v6205 = vpack.c.b16 %v5987, %v5986
  %v6206 = vpack.c.b16 %v5989, %v5988
  %v6207 = vpack.c.b16 %v5991, %v5990
  %v6208 = vpack.c.b16 %v5993, %v5992
  %v6209 = vpack.c.b16 %v5995, %v5994
  %v6210 = vpack.c.b16 %v5997, %v5996
  %v6211 = vpack.c.b16 %v5999, %v5998
  %v6212 = vpack.c.b16 %v6001, %v6000
  %v6213 = vpack.c.b16 %v6003, %v6002
  %v6214 = vpack.c.b16 %v6005, %v6004
  %v6215 = vpack.c.b16 %v6007, %v6006
  %v6216 = vpack.c.b16 %v6009, %v6008
  %v6217 = vpack.c.b16 %v6011, %v6010
  %v6218 = vpack.c.b16 %v6013, %v6012
  %v6219 = vpack.c.b16 %v6015, %v6014
  %v6220 = vpack.c.b16 %v6017, %v6016
  %v6221 = vpack.c.b16 %v6019, %v6018
  %v6222 = vpack.c.b16 %v6021, %v6020
  %v6223 = vpack.c.b16 %v6023, %v6022
  %v6224 = vpack.c.b16 %v6025, %v6024
  %v6225 = vpack.c.b16 %v6027, %v6026
  %v6226 = vpack.c.b16 %v6029, %v6028
  %v6227 = vpack.c.b16 %v6031, %v6030
  %v6228 = vpack.c.b16 %v6033, %v6032
  %v6229 = vpack.c.b16 %v6035, %v6034
  %v6230 = vpack.c.b16 %v6037, %v6036
  %v6231 = vpack.c.b16 %v6039, %v6038
  %v6232 = vpack.c.b16 %v6041, %v6040
  %v6233 = vpack.c.b16 %v6043, %v6042
  %v6234 = vpack.c.b16 %v6045, %v6044
  %v6235 = vpack.c.b16 %v6047, %v6046
  %v6236 = vpack.c.b16 %v6049, %v6048
  %v6237 = vpack.c.b16 %v6051, %v6050
  %v6238 = vpack.c.b16 %v6053, %v6052
  %v6239 = vpack.c.b16 %v6055, %v6054
  %v6240 = vpack.c.b16 %v6057, %v6056
  %v6241 = vpack.c.b16 %v6059, %v6058
  %v6242 = vpack.c.b16 %v6061, %v6060
  %v6243 = vpack.c.b16 %v6063, %v6062
  %v6244 = vpack.c.b16 %v6065, %v6064
  %v6245 = vpack.c.b16 %v6067, %v6066
  %v6246 = vpack.c.b16 %v6069, %v6068
  %v6247 = vpack.c.b16 %v6071, %v6070
  %v6248 = vpack.c.b16 %v6073, %v6072
  %v6249 = vpack.c.b16 %v6075, %v6074
  %v6250 = vpack.c.b16 %v6077, %v6076
  %v6251 = vpack.c.b16 %v6079, %v6078
  %v6252 = vpack.c.b16 %v6081, %v6080
  %v6253 = vpack.c.b16 %v6083, %v6082
  %v6254 = vpack.c.b16 %v6085, %v6084
  %v6255 = vpack.c.b16 %v6087, %v6086
  %v6256 = vpack.c.b16 %v6089, %v6088
  %v6257 = vpack.c.b16 %v6091, %v6090
  %v6258 = vpack.c.b16 %v6093, %v6092
  %v6259 = vpack.c.b16 %v6095, %v6094
  %v6260 = vpack.c.b16 %v6097, %v6096
  %v6261 = vpack.c.b16 %v6099, %v6098
  %v6262 = vpack.c.b16 %v6101, %v6100
  %v6263 = vpack.c.b16 %v6103, %v6102
  %v6264 = vpack.c.b16 %v6105, %v6104
  %v6265 = vpack.c.b16 %v6107, %v6106
  %v6266 = vpack.c.b16 %v6109, %v6108
  %v6267 = vpack.c.b16 %v6111, %v6110
  %v6268 = vpack.c.b16 %v6113, %v6112
  %v6269 = vpack.c.b16 %v6115, %v6114
  %v6270 = vpack.c.b16 %v6117, %v6116
  %v6271 = vpack.c.b16 %v6119, %v6118
  %v6272 = vpack.c.b16 %v6121, %v6120
  %v6273 = vpack.c.b16 %v6123, %v6122
  %v6274 = vpack.c.b16 %v6125, %v6124
  %v6275 = vpack.c.b16 %v6127, %v6126
  %v6276 = vpack.c.b16 %v6129, %v6128
  %v6277 = vpack.c.b16 %v6131, %v6130
  %v6278 = vpack.c.b16 %v6133, %v6132
  %v6279 = vpack.c.b16 %v6135, %v6134
  %v6280 = vpack.c.b16 %v6137, %v6136
  %v6281 = vpack.c.b16 %v6139, %v6138
  %v6282 = vpack.c.b16 %v6141, %v6140
  %v6283 = vpack.c.b16 %v6143, %v6142
  %v6284 = vpack.c.b16 %v6145, %v6144
  %v6285 = vpack.c.b16 %v6147, %v6146
  %v6286 = vpack.c.b16 %v6149, %v6148
  %v6287 = vpack.c.b16 %v6151, %v6150
  %v6288 = vpack.c.b16 %v6153, %v6152
  %v6289 = vpack.c.b16 %v6155, %v6154
  %v6290 = vpack.c.b16 %v6157, %v6156
  %v6291 = vpack.c.b16 %v6159, %v6158
  %v6292 = vpack.c.b16 %v6161, %v6160
  %v6293 = vpack.c.b16 %v6163, %v6162
  %v6294 = vpack.c.b16 %v6165, %v6164
  %v6295 = vpack.c.b16 %v6167, %v6166
  %6424 = vmatpush.bf16.msra.mxu0 %v6175
  %6425 = vmatpush.bf16.msra.mxu0 %v6174
  %6426 = vmatpush.bf16.msra.mxu0 %v6173
  %6427 = vmatpush.bf16.msra.mxu0 %v6172
  %6428 = vmatpush.bf16.msra.mxu0 %v6171
  %6429 = vmatpush.bf16.msra.mxu0 %v6170
  %6430 = vmatpush.bf16.msra.mxu0 %v6169
  %6431 = vmatpush.bf16.msra.mxu0 %v6168
  %6432 = vmatmul.bf16.gmra.mxu0 %v5376
  %v6433 = vpop.f32.mrf.mxu0
  %v6434 = vadd.f32 %v5654, %v6433
  %v6435 = vpop.f32.mrf.mxu0
  %6436 = vdwg.mxu0
  %6437 = vmatpush.bf16.msra.mxu0 %v6183
  %6438 = vmatpush.bf16.msra.mxu0 %v6182
  %6439 = vmatpush.bf16.msra.mxu0 %v6181
  %6440 = vmatpush.bf16.msra.mxu0 %v6180
  %6441 = vmatpush.bf16.msra.mxu0 %v6179
  %6442 = vmatpush.bf16.msra.mxu0 %v6178
  %6443 = vmatpush.bf16.msra.mxu0 %v6177
  %6444 = vmatpush.bf16.msra.mxu0 %v6176
  %6445 = vmatmul.bf16.gmra.mxu0 %v5377
  %v6446 = vpop.f32.mrf.mxu0
  %v6447 = vadd.f32 %v6434, %v6446
  %v6448 = vpop.f32.mrf.mxu0
  %6449 = vdwg.mxu0
  %6450 = vmatpush.bf16.msra.mxu0 %v6191
  %6451 = vmatpush.bf16.msra.mxu0 %v6190
  %6452 = vmatpush.bf16.msra.mxu0 %v6189
  %6453 = vmatpush.bf16.msra.mxu0 %v6188
  %6454 = vmatpush.bf16.msra.mxu0 %v6187
  %6455 = vmatpush.bf16.msra.mxu0 %v6186
  %6456 = vmatpush.bf16.msra.mxu0 %v6185
  %6457 = vmatpush.bf16.msra.mxu0 %v6184
  %6458 = vmatmul.bf16.gmra.mxu0 %v5378
  %v6459 = vpop.f32.mrf.mxu0
  %v6460 = vadd.f32 %v6447, %v6459
  %v6461 = vpop.f32.mrf.mxu0
  %6462 = vdwg.mxu0
  %6463 = vmatpush.bf16.msra.mxu0 %v6199
  %6464 = vmatpush.bf16.msra.mxu0 %v6198
  %6465 = vmatpush.bf16.msra.mxu0 %v6197
  %6466 = vmatpush.bf16.msra.mxu0 %v6196
  %6467 = vmatpush.bf16.msra.mxu0 %v6195
  %6468 = vmatpush.bf16.msra.mxu0 %v6194
  %6469 = vmatpush.bf16.msra.mxu0 %v6193
  %6470 = vmatpush.bf16.msra.mxu0 %v6192
  %6471 = vmatmul.bf16.gmra.mxu0 %v5379
  %v6472 = vpop.f32.mrf.mxu0
  %v6473 = vadd.f32 %v6460, %v6472
  %v6474 = vpop.f32.mrf.mxu0
  %6475 = vdwg.mxu0
  %6476 = vmatpush.bf16.msra.mxu0 %v6207
  %6477 = vmatpush.bf16.msra.mxu0 %v6206
  %6478 = vmatpush.bf16.msra.mxu0 %v6205
  %6479 = vmatpush.bf16.msra.mxu0 %v6204
  %6480 = vmatpush.bf16.msra.mxu0 %v6203
  %6481 = vmatpush.bf16.msra.mxu0 %v6202
  %6482 = vmatpush.bf16.msra.mxu0 %v6201
  %6483 = vmatpush.bf16.msra.mxu0 %v6200
  %6484 = vmatmul.bf16.gmra.mxu0 %v5380
  %v6485 = vpop.f32.mrf.mxu0
  %v6486 = vadd.f32 %v6473, %v6485
  %v6487 = vpop.f32.mrf.mxu0
  %6488 = vdwg.mxu0
  %6489 = vmatpush.bf16.msra.mxu0 %v6215
  %6490 = vmatpush.bf16.msra.mxu0 %v6214
  %6491 = vmatpush.bf16.msra.mxu0 %v6213
  %6492 = vmatpush.bf16.msra.mxu0 %v6212
  %6493 = vmatpush.bf16.msra.mxu0 %v6211
  %6494 = vmatpush.bf16.msra.mxu0 %v6210
  %6495 = vmatpush.bf16.msra.mxu0 %v6209
  %6496 = vmatpush.bf16.msra.mxu0 %v6208
  %6497 = vmatmul.bf16.gmra.mxu0 %v5381
  %v6498 = vpop.f32.mrf.mxu0
  %v6499 = vadd.f32 %v6486, %v6498
  %v6500 = vpop.f32.mrf.mxu0
  %6501 = vdwg.mxu0
  %6502 = vmatpush.bf16.msra.mxu0 %v6223
  %6503 = vmatpush.bf16.msra.mxu0 %v6222
  %6504 = vmatpush.bf16.msra.mxu0 %v6221
  %6505 = vmatpush.bf16.msra.mxu0 %v6220
  %6506 = vmatpush.bf16.msra.mxu0 %v6219
  %6507 = vmatpush.bf16.msra.mxu0 %v6218
  %6508 = vmatpush.bf16.msra.mxu0 %v6217
  %6509 = vmatpush.bf16.msra.mxu0 %v6216
  %6510 = vmatmul.bf16.gmra.mxu0 %v5382
  %v6511 = vpop.f32.mrf.mxu0
  %v6512 = vadd.f32 %v6499, %v6511
  %v6513 = vpop.f32.mrf.mxu0
  %6514 = vdwg.mxu0
  %6515 = vmatpush.bf16.msra.mxu0 %v6231
  %6516 = vmatpush.bf16.msra.mxu0 %v6230
  %6517 = vmatpush.bf16.msra.mxu0 %v6229
  %6518 = vmatpush.bf16.msra.mxu0 %v6228
  %6519 = vmatpush.bf16.msra.mxu0 %v6227
  %6520 = vmatpush.bf16.msra.mxu0 %v6226
  %6521 = vmatpush.bf16.msra.mxu0 %v6225
  %6522 = vmatpush.bf16.msra.mxu0 %v6224
  %6523 = vmatmul.bf16.gmra.mxu0 %v5383
  %v6524 = vpop.f32.mrf.mxu0
  %v6525 = vadd.f32 %v6512, %v6524
  %v6526 = vpop.f32.mrf.mxu0
  %6527 = vdwg.mxu0
  %6528 = vmatpush.bf16.msra.mxu0 %v6239
  %6529 = vmatpush.bf16.msra.mxu0 %v6238
  %6530 = vmatpush.bf16.msra.mxu0 %v6237
  %6531 = vmatpush.bf16.msra.mxu0 %v6236
  %6532 = vmatpush.bf16.msra.mxu0 %v6235
  %6533 = vmatpush.bf16.msra.mxu0 %v6234
  %6534 = vmatpush.bf16.msra.mxu0 %v6233
  %6535 = vmatpush.bf16.msra.mxu0 %v6232
  %6536 = vmatmul.bf16.gmra.mxu0 %v5384
  %v6537 = vpop.f32.mrf.mxu0
  %v6538 = vadd.f32 %v6525, %v6537
  %v6539 = vpop.f32.mrf.mxu0
  %6540 = vdwg.mxu0
  %6541 = vmatpush.bf16.msra.mxu0 %v6247
  %6542 = vmatpush.bf16.msra.mxu0 %v6246
  %6543 = vmatpush.bf16.msra.mxu0 %v6245
  %6544 = vmatpush.bf16.msra.mxu0 %v6244
  %6545 = vmatpush.bf16.msra.mxu0 %v6243
  %6546 = vmatpush.bf16.msra.mxu0 %v6242
  %6547 = vmatpush.bf16.msra.mxu0 %v6241
  %6548 = vmatpush.bf16.msra.mxu0 %v6240
  %6549 = vmatmul.bf16.gmra.mxu0 %v5385
  %v6550 = vpop.f32.mrf.mxu0
  %v6551 = vadd.f32 %v6538, %v6550
  %v6552 = vpop.f32.mrf.mxu0
  %6553 = vdwg.mxu0
  %6554 = vmatpush.bf16.msra.mxu0 %v6255
  %6555 = vmatpush.bf16.msra.mxu0 %v6254
  %6556 = vmatpush.bf16.msra.mxu0 %v6253
  %6557 = vmatpush.bf16.msra.mxu0 %v6252
  %6558 = vmatpush.bf16.msra.mxu0 %v6251
  %6559 = vmatpush.bf16.msra.mxu0 %v6250
  %6560 = vmatpush.bf16.msra.mxu0 %v6249
  %6561 = vmatpush.bf16.msra.mxu0 %v6248
  %6562 = vmatmul.bf16.gmra.mxu0 %v5386
  %v6563 = vpop.f32.mrf.mxu0
  %v6564 = vadd.f32 %v6551, %v6563
  %v6565 = vpop.f32.mrf.mxu0
  %6566 = vdwg.mxu0
  %6567 = vmatpush.bf16.msra.mxu0 %v6263
  %6568 = vmatpush.bf16.msra.mxu0 %v6262
  %6569 = vmatpush.bf16.msra.mxu0 %v6261
  %6570 = vmatpush.bf16.msra.mxu0 %v6260
  %6571 = vmatpush.bf16.msra.mxu0 %v6259
  %6572 = vmatpush.bf16.msra.mxu0 %v6258
  %6573 = vmatpush.bf16.msra.mxu0 %v6257
  %6574 = vmatpush.bf16.msra.mxu0 %v6256
  %6575 = vmatmul.bf16.gmra.mxu0 %v5387
  %v6576 = vpop.f32.mrf.mxu0
  %v6577 = vadd.f32 %v6564, %v6576
  %v6578 = vpop.f32.mrf.mxu0
  %6579 = vdwg.mxu0
  %6580 = vmatpush.bf16.msra.mxu0 %v6271
  %6581 = vmatpush.bf16.msra.mxu0 %v6270
  %6582 = vmatpush.bf16.msra.mxu0 %v6269
  %6583 = vmatpush.bf16.msra.mxu0 %v6268
  %6584 = vmatpush.bf16.msra.mxu0 %v6267
  %6585 = vmatpush.bf16.msra.mxu0 %v6266
  %6586 = vmatpush.bf16.msra.mxu0 %v6265
  %6587 = vmatpush.bf16.msra.mxu0 %v6264
  %6588 = vmatmul.bf16.gmra.mxu0 %v5388
  %v6589 = vpop.f32.mrf.mxu0
  %v6590 = vadd.f32 %v6577, %v6589
  %v6591 = vpop.f32.mrf.mxu0
  %6592 = vdwg.mxu0
  %6593 = vmatpush.bf16.msra.mxu0 %v6279
  %6594 = vmatpush.bf16.msra.mxu0 %v6278
  %6595 = vmatpush.bf16.msra.mxu0 %v6277
  %6596 = vmatpush.bf16.msra.mxu0 %v6276
  %6597 = vmatpush.bf16.msra.mxu0 %v6275
  %6598 = vmatpush.bf16.msra.mxu0 %v6274
  %6599 = vmatpush.bf16.msra.mxu0 %v6273
  %6600 = vmatpush.bf16.msra.mxu0 %v6272
  %6601 = vmatmul.bf16.gmra.mxu0 %v5389
  %v6602 = vpop.f32.mrf.mxu0
  %v6603 = vadd.f32 %v6590, %v6602
  %v6604 = vpop.f32.mrf.mxu0
  %6605 = vdwg.mxu0
  %6606 = vmatpush.bf16.msra.mxu0 %v6287
  %6607 = vmatpush.bf16.msra.mxu0 %v6286
  %6608 = vmatpush.bf16.msra.mxu0 %v6285
  %6609 = vmatpush.bf16.msra.mxu0 %v6284
  %6610 = vmatpush.bf16.msra.mxu0 %v6283
  %6611 = vmatpush.bf16.msra.mxu0 %v6282
  %6612 = vmatpush.bf16.msra.mxu0 %v6281
  %6613 = vmatpush.bf16.msra.mxu0 %v6280
  %6614 = vmatmul.bf16.gmra.mxu0 %v5390
  %v6615 = vpop.f32.mrf.mxu0
  %v6616 = vadd.f32 %v6603, %v6615
  %v6617 = vpop.f32.mrf.mxu0
  %6618 = vdwg.mxu0
  %6619 = vmatpush.bf16.msra.mxu0 %v6295
  %6620 = vmatpush.bf16.msra.mxu0 %v6294
  %6621 = vmatpush.bf16.msra.mxu0 %v6293
  %6622 = vmatpush.bf16.msra.mxu0 %v6292
  %6623 = vmatpush.bf16.msra.mxu0 %v6291
  %6624 = vmatpush.bf16.msra.mxu0 %v6290
  %6625 = vmatpush.bf16.msra.mxu0 %v6289
  %6626 = vmatpush.bf16.msra.mxu0 %v6288
  %6627 = vmatmul.bf16.gmra.mxu0 %v5391
  %v6628 = vpop.f32.mrf.mxu0
  %v6629 = vadd.f32 %v6616, %v6628
  %v6630 = vpop.f32.mrf.mxu0
  %6631 = vdwg.mxu0
  %v6632 = vmax.f32 %v6629, 0.0
  %v6633 = vpack.c.bf16 %v6632, %v6632
  %v6634 = vld [vmem:[%s13] sm:$0xf]
  %v6635 = vld [vmem:[%s13 + $0x4] sm:$0xf]
  %v6636 = vld [vmem:[%s13 + $0x8] sm:$0xf]
  %v6637 = vld [vmem:[%s13 + $0xc] sm:$0xf]
  %v6638 = vld [vmem:[%s13 + $0x10] sm:$0xf]
  %v6639 = vld [vmem:[%s13 + $0x14] sm:$0xf]
  %v6640 = vld [vmem:[%s13 + $0x18] sm:$0xf]
  %v6641 = vld [vmem:[%s13 + $0x1c] sm:$0xf]
  %v6642 = vld [vmem:[%s13 + $0x20] sm:$0xf]
  %v6643 = vld [vmem:[%s13 + $0x24] sm:$0xf]
  %v6644 = vld [vmem:[%s13 + $0x28] sm:$0xf]
  %v6645 = vld [vmem:[%s13 + $0x2c] sm:$0xf]
  %v6646 = vld [vmem:[%s13 + $0x30] sm:$0x3]
  %v6647 = vld [vmem:[%s14] sm:$0x1]
  %v6649 = vperm.slane %v6647, 0
  %v6664 = vunpack.c.l.b16 %v6634
  %v6665 = vunpack.c.l.b16 %v6635
  %v6666 = vunpack.c.l.b16 %v6636
  %v6667 = vunpack.c.l.b16 %v6637
  %v6668 = vunpack.c.l.b16 %v6638
  %v6669 = vunpack.c.l.b16 %v6639
  %v6670 = vunpack.c.l.b16 %v6640
  %v6671 = vunpack.c.l.b16 %v6641
  %v6672 = vunpack.c.l.b16 %v6642
  %v6673 = vunpack.c.l.b16 %v6643
  %v6674 = vunpack.c.l.b16 %v6644
  %v6675 = vunpack.c.l.b16 %v6645
  %v6676 = vunpack.c.l.b16 %v6646
  %v6677 = vpack.c.b16 %v6665, %v6664
  %v6678 = vpack.c.b16 %v6667, %v6666
  %v6679 = vpack.c.b16 %v6669, %v6668
  %v6680 = vpack.c.b16 %v6671, %v6670
  %v6681 = vpack.c.b16 %v6673, %v6672
  %v6682 = vpack.c.b16 %v6675, %v6674
  %v6683 = vpack.c.b16 %v6676, %v6676
  %vm6690 = vcmask 818176
  %v6692 = vsel %vm6690, %v6633, 0
  %v6695 = vsel %vm826, %v6683, 0
  %6697 = vmatpush.bf16.msra.mxu0 0
  %6698 = vmatpush.bf16.msra.mxu0 %v6695
  %6699 = vmatpush.bf16.msra.mxu0 %v6682
  %6700 = vmatpush.bf16.msra.mxu0 %v6681
  %6701 = vmatpush.bf16.msra.mxu0 %v6680
  %6702 = vmatpush.bf16.msra.mxu0 %v6679
  %6703 = vmatpush.bf16.msra.mxu0 %v6678
  %6704 = vmatpush.bf16.msra.mxu0 %v6677
  %6705 = vmatmul.bf16.gmra.mxu0 %v6692
  %v6706 = vpop.f32.mrf.mxu0
  %v6707 = vadd.f32 %v6649, %v6706
  %v6708 = vpop.f32.mrf.mxu0
  %6709 = vdwg.mxu0
  %v6710 = vpack.c.bf16 %v6707, %v6707
  %v6711 = vld [vmem:[%s15] sm:$0xf]
  %v6712 = vld [vmem:[%s15 + $0x4] sm:$0xf]
  %v6713 = vld [vmem:[%s15 + $0x8] sm:$0xf]
  %v6714 = vld [vmem:[%s15 + $0xc] sm:$0xf]
  %v6715 = vld [vmem:[%s15 + $0x10] sm:$0xf]
  %v6716 = vld [vmem:[%s15 + $0x14] sm:$0xf]
  %v6717 = vld [vmem:[%s15 + $0x18] sm:$0x1]
  %v6718 = vld [vmem:[#allocation5] sm:$0x1]
  %v6720 = vperm.slane %v6718, 0
  %v6729 = vunpack.c.l.b16 %v6711
  %v6730 = vunpack.c.l.b16 %v6712
  %v6731 = vunpack.c.l.b16 %v6713
  %v6732 = vunpack.c.l.b16 %v6714
  %v6733 = vunpack.c.l.b16 %v6715
  %v6734 = vunpack.c.l.b16 %v6716
  %v6735 = vunpack.c.l.b16 %v6717
  %v6736 = vpack.c.b16 %v6730, %v6729
  %v6737 = vpack.c.b16 %v6732, %v6731
  %v6738 = vpack.c.b16 %v6734, %v6733
  %v6739 = vpack.c.b16 %v6735, %v6735
  %vm6743 = vcmask 408576
  %v6745 = vsel %vm6743, %v6710, 0
  %v6748 = vsel %vm893, %v6739, 0
  %6750 = vmatpush.bf16.msra.mxu0 0
  %6751 = vmatpush.bf16.msra.mxu0 0
  %6752 = vmatpush.bf16.msra.mxu0 0
  %6753 = vmatpush.bf16.msra.mxu0 0
  %6754 = vmatpush.bf16.msra.mxu0 %v6748
  %6755 = vmatpush.bf16.msra.mxu0 %v6738
  %6756 = vmatpush.bf16.msra.mxu0 %v6737
  %6757 = vmatpush.bf16.msra.mxu0 %v6736
  %6758 = vmatmul.bf16.gmra.mxu0 %v6745
  %v6759 = vpop.f32.mrf.mxu0
  %v6760 = vadd.f32 %v6720, %v6759
  %v6761 = vpop.f32.mrf.mxu0
  %6762 = vdwg.mxu0
  %v6763 = vsub.f32 0.0, %v6760
  %v6764 = vmul.f32 %v6763, 1.442695
  %v6765 = vpow.pop %v6764
  %v6766 = vadd.f32 %v6765, 1.0
  %v6767 = vrcp.pop %v6766
  %v6768 = vmul.f32 %v6766, %v6767
  %v6769 = vsub.f32 1.0, %v6768
  %v6770 = vmul.f32 %v6767, %v6769
  %v6771 = vadd.f32 %v6767, %v6770
  %vm6772 = vweird.f32 %v6766
  %vm6773 = vweird.f32 %v6767
  %vm6774 = vmor %vm6772, %vm6773
  %v6775 = vsel %vm6774, %v6767, %v6771
  %v6776 = vand.u32 2147483647, %v6766
  %vm6777 = vcmp.eq.f32.partialorder %v6776, 8.507059e+37
  %v6778 = vand.u32 %v6766, 2147483648
  %v6779 = vor.u32 1.1754944e-38, %v6778
  %v6780 = vsel %vm6777, %v6779, %v6775
  %v6781 = vmul.f32 1.0, %v6780
  %vm6782 = vcmask 7168
  %6783 = vst.msk [vmem:[%s19] sm:$0xff] %vm6782, %v6781
  %v6784 = vld [vmem:[%s17] sm:$0xf]
  %v6785 = vld [vmem:[%s17 + $0x4] sm:$0xf]
  %v6786 = vld [vmem:[%s17 + $0x8] sm:$0xf]
  %v6787 = vld [vmem:[%s17 + $0xc] sm:$0xf]
  %v6788 = vld [vmem:[%s17 + $0x10] sm:$0xf]
  %v6789 = vld [vmem:[%s17 + $0x14] sm:$0xf]
  %v6790 = vld [vmem:[%s17 + $0x18] sm:$0x1]
  %v6791 = vld [vmem:[%s18] sm:$0x1]
  %v6793 = vperm.slane %v6791, 0
  %v6802 = vunpack.c.l.b16 %v6784
  %v6803 = vunpack.c.l.b16 %v6785
  %v6804 = vunpack.c.l.b16 %v6786
  %v6805 = vunpack.c.l.b16 %v6787
  %v6806 = vunpack.c.l.b16 %v6788
  %v6807 = vunpack.c.l.b16 %v6789
  %v6808 = vunpack.c.l.b16 %v6790
  %v6809 = vpack.c.b16 %v6803, %v6802
  %v6810 = vpack.c.b16 %v6805, %v6804
  %v6811 = vpack.c.b16 %v6807, %v6806
  %v6812 = vpack.c.b16 %v6808, %v6808
  %v6817 = vsel %vm893, %v6812, 0
  %6819 = vmatpush.bf16.msra.mxu0 0
  %6820 = vmatpush.bf16.msra.mxu0 0
  %6821 = vmatpush.bf16.msra.mxu0 0
  %6822 = vmatpush.bf16.msra.mxu0 0
  %6823 = vmatpush.bf16.msra.mxu0 %v6817
  %6824 = vmatpush.bf16.msra.mxu0 %v6811
  %6825 = vmatpush.bf16.msra.mxu0 %v6810
  %6826 = vmatpush.bf16.msra.mxu0 %v6809
  %6827 = vmatmul.bf16.gmra.mxu0 %v6745
  %v6828 = vpop.f32.mrf.mxu0
  %v6829 = vadd.f32 %v6793, %v6828
  %v6830 = vpop.f32.mrf.mxu0
  %6831 = vdwg.mxu0
  %vm6832 = vcmask 31744
  %v6833 = vsel %vm6832, %v6829, -inf
  %6834 = vmax.xlane.f32.xlu0 %v6833
  %v6835 = vpop.xlane.xlu0 %6834
  %v6836 = vsub.f32 %v6829, %v6835
  %v6837 = vmul.f32 %v6836, 1.442695
  %v6838 = vpow.pop %v6837
  %v6839 = vsel %vm6832, %v6838, 0.0
  %6840 = vadd.xlane.f32.xlu0 %v6839
  %v6841 = vpop.xlane.xlu0 %6840
  %v6842 = vrcp.pop %v6841
  %v6843 = vmul.f32 %v6841, %v6842
  %v6844 = vsub.f32 1.0, %v6843
  %v6845 = vmul.f32 %v6842, %v6844
  %v6846 = vadd.f32 %v6842, %v6845
  %vm6847 = vweird.f32 %v6841
  %vm6848 = vweird.f32 %v6842
  %vm6849 = vmor %vm6847, %vm6848
  %v6850 = vsel %vm6849, %v6842, %v6846
  %v6851 = vand.u32 2147483647, %v6841
  %vm6852 = vcmp.eq.f32.partialorder %v6851, 8.507059e+37
  %v6853 = vand.u32 %v6841, 2147483648
  %v6854 = vor.u32 1.1754944e-38, %v6853
  %v6855 = vsel %vm6852, %v6854, %v6850
  %v6856 = vmul.f32 %v6838, %v6855
  %6857 = vst.msk [vmem:[%s20] sm:$0xff] %vm6832, %v6856
  // Predicated region
  $region108: #{cnn_model_forward.1} parent=0 // pred_check
    _
  $region109: #{cnn_model_forward.1} parent=0 // pred_check_branch
    %6859 = sbr.rel (0) target = $region111
  $region110: #{cnn_model_forward.1} parent=0 // pred_region
    _
  $region111: #{cnn_model_forward.1} parent=0 // pred_fallthru
    _
  // Predicated region
  $region112: #{cnn_model_forward.1} parent=0 // pred_check
    _
  $region113: #{cnn_model_forward.1} parent=0 // pred_check_branch
    %6861 = sbr.rel (0) target = $region115
  $region114: #{cnn_model_forward.1} parent=0 // pred_region
    _
  $region115: #{cnn_model_forward.1} parent=0 // pred_fallthru
    _
  // Predicated region
  $region116: #{cnn_model_forward.1} parent=0 // pred_check
    _
  $region117: #{cnn_model_forward.1} parent=0 // pred_check_branch
    %6863 = sbr.rel (0) target = $region119
  $region118: #{cnn_model_forward.1} parent=0 // pred_region
    _
  $region119: #{cnn_model_forward.1} parent=0 // pred_fallthru
    _
  // Predicated region
  $region120: #{cnn_model_forward.1} parent=0 // pred_check
    _
  $region121: #{cnn_model_forward.1} parent=0 // pred_check_branch
    %6865 = sbr.rel (0) target = $region123
  $region122: #{cnn_model_forward.1} parent=0 // pred_region
    _
  $region123: #{cnn_model_forward.1} parent=0 // pred_fallthru
    _
  %6866 = vsyncmov [#allocation4]
  %s6867 = vpop.sfrf %6866
  %p6868 = scmp.eq.s32.totalorder %s6867, 0
  %p6869 = pneg %p6868
  %6871 = shalt.err (%p6869)
  %s6872 = scalar_lea.sflag [#allocation4], 1
  %6873 = vsyncmov %s6872
  %s6874 = vpop.sfrf %6873
  %p6875 = scmp.eq.s32.totalorder %s6874, 0
  %p6876 = pneg %p6875
  %6878 = shalt.err (%p6876)

</llo_original>
